<compile_context>
chip_gen: v6e
topology: v6e:2x2x1
jax: 0.10.0
libtpu: 0.0.40
codegen_flags: <defaults>
</compile_context>

<pallas_src>
from functools import partial

import jax
import jax.numpy as jnp
from jax.experimental import pallas as pl
from jax.experimental.pallas import tpu as pltpu


# ============================================================================
# Kernel 1: fused g(3x3) + theta(1x1 as centre tap) projections, all heads.
# ============================================================================
def _fused_proj_kernel(x_ref, w_ref, b_ref, o_ref, *, H, W):
    # x_ref: (1, H+2, W+2, C) f32    padded NHWC image of one batch element
    # w_ref: (9, C, Nout)     bf16   per-tap weights, Nout = n_heads*2*inter
    # b_ref: (1, Nout)        f32
    # o_ref: (1, H*W, Nout)   bf16   lane-dense output
    C = x_ref.shape[-1]
    Nout = w_ref.shape[-1]
    acc = jnp.zeros((H * W, Nout), jnp.float32)
    for t in range(9):                       # 9 shifted accumulating matmuls
        di, dj = divmod(t, 3)
        xs = x_ref[0, di:di + H, dj:dj + W, :]            # (H, W, C)
        xs = xs.reshape(H * W, C).astype(jnp.bfloat16)    # tile-aligned merge
        acc = acc + jnp.dot(xs, w_ref[t], preferred_element_type=jnp.float32)
    o_ref[0] = (acc + b_ref[...]).astype(o_ref.dtype)


def fused_projection(x_pad, proj_w, proj_b, *, H, W):
    B, Hp, Wp, C = x_pad.shape
    Nout = proj_w.shape[-1]
    return pl.pallas_call(
        partial(_fused_proj_kernel, H=H, W=W),
        out_shape=jax.ShapeDtypeStruct((B, H * W, Nout), jnp.bfloat16),
        grid=(B,),
        in_specs=[
            pl.BlockSpec((1, Hp, Wp, C), lambda b: (b, 0, 0, 0)),
            pl.BlockSpec((9, C, Nout), lambda b: (0, 0, 0)),
            pl.BlockSpec((1, Nout), lambda b: (0, 0)),
        ],
        out_specs=pl.BlockSpec((1, H * W, Nout), lambda b: (b, 0, 0)),
        compiler_params=pltpu.CompilerParams(
            dimension_semantics=("parallel",)),
    )(x_pad, proj_w, proj_b)


# ============================================================================
# Kernel 2: GFAM attention (one grid step per head, whole batch folded into M)
#   fc1|fc2 (fused) + ELU + L2-normalize + per-batch score + thr/bias conv +
#   thresholded mask + softmax + (score @ pi) @ Graph_W
# ============================================================================
def _gfam_attention_kernel(wi_ref, pi_ref, xp_ref, fcw_ref, fcb_ref,
                           tbw_ref, tbb_ref, gw_ref, out_ref,
                           *, B, L1, inter, softmax_scale):
    M = wi_ref.shape[1]          # B * L1
    D = wi_ref.shape[2]          # inter * k * k

    wi = wi_ref[0]                                           # (M, D) bf16

    # fc1 | fc2 fused into one lane-dense N = 2*inter matmul, then ELU (f32).
    f = (jnp.dot(wi, fcw_ref[0], preferred_element_type=jnp.float32)
         + fcb_ref[0])                                       # (M, 2*inter)
    f = jnp.where(f > 0.0, f, jnp.exp(f) - 1.0)              # ELU

    def l2norm(v):   # rows; matches F.normalize(p=2, eps=1e-12)
        s = jnp.sum(v * v, axis=-1, keepdims=True)
        return v * jax.lax.rsqrt(jnp.maximum(s, 1e-24))      # EUP rsqrt

    wi_f = l2norm(f[:, :inter]).reshape(B, L1, inter).astype(jnp.bfloat16)
    xi_f = l2norm(f[:, inter:]).reshape(B, L1, inter).astype(jnp.bfloat16)

    # thr_conv / bias_conv folded in: one (M, C*k*k) @ (C*k*k, 2) dot.
    tb = (jnp.dot(xp_ref[...], tbw_ref[0], preferred_element_type=jnp.float32)
          + tbb_ref[0])                                      # (M, 2) f32
    thr = tb[:, 0:1].reshape(B, L1, 1)
    bia = tb[:, 1:2].reshape(B, L1, 1)

    # Per-batch score maps (batch stays block-diagonal via the einsum).
    score = jnp.einsum("bqd,bkd->bqk", wi_f, xi_f,
                       preferred_element_type=jnp.float32)   # (B, L1, L1)

    mean = jnp.mean(score, axis=-1, keepdims=True)
    mask = jnp.maximum(score - mean * thr + bia, 0.0)
    mask_b = (mask != 0.0).astype(jnp.float32)

    # Same order as the reference: softmax over score*mask*scale (zeros
    # included), then re-mask.
    yi = score * mask * softmax_scale
    yi = yi - jnp.max(yi, axis=-1, keepdims=True)
    e = jnp.exp(yi)
    yi = e * pl.reciprocal(jnp.sum(e, axis=-1, keepdims=True), approx=True)
    yi = yi * mask_b

    pv = jnp.einsum("bqk,bkd->bqd", yi.astype(pi_ref.dtype), pi_ref[0],
                    preferred_element_type=jnp.float32)      # (B, L1, D)

    # Graph_W matmul with the batch folded into M (M = B*L1).
    out = jnp.dot(pv.reshape(M, D).astype(jnp.bfloat16), gw_ref[0],
                  preferred_element_type=jnp.float32)        # (M, D)
    out_ref[0] = out.astype(out_ref.dtype)


def gfam_attention(wi_all, pi_all, xpat, fc12_wT, fc12_b, tb_w, tb_b, graph_w,
                   *, B, L1, inter, softmax_scale):
    n_heads, M, D = wi_all.shape
    Ck2 = xpat.shape[-1]
    kern = partial(_gfam_attention_kernel, B=B, L1=L1, inter=inter,
                   softmax_scale=softmax_scale)
    return pl.pallas_call(
        kern,
        out_shape=jax.ShapeDtypeStruct((n_heads, M, D), jnp.bfloat16),
        grid=(n_heads,),
        in_specs=[
            pl.BlockSpec((1, M, D), lambda h: (h, 0, 0)),
            pl.BlockSpec((1, B, L1, D), lambda h: (h, 0, 0, 0)),
            pl.BlockSpec((M, Ck2), lambda h: (0, 0)),
            pl.BlockSpec((1, D, 2 * inter), lambda h: (h, 0, 0)),
            pl.BlockSpec((1, 1, 2 * inter), lambda h: (h, 0, 0)),
            pl.BlockSpec((1, Ck2, 2), lambda h: (h, 0, 0)),
            pl.BlockSpec((1, 1, 2), lambda h: (h, 0, 0)),
            pl.BlockSpec((1, D, D), lambda h: (h, 0, 0)),
        ],
        out_specs=pl.BlockSpec((1, M, D), lambda h: (h, 0, 0)),
        compiler_params=pltpu.CompilerParams(
            dimension_semantics=("parallel",)),
    )(wi_all, pi_all, xpat, fc12_wT, fc12_b, tb_w, tb_b, graph_w)


# ============================================================================
# Kernel 3: merge 1x1 conv + residual, tiled over M ("parallel").
# ============================================================================
def _merge_residual_kernel(c_ref, w_ref, b_ref, r_ref, o_ref):
    o_ref[...] = (jnp.dot(c_ref[...], w_ref[...],
                          preferred_element_type=jnp.float32)
                  + b_ref[...] + r_ref[...]).astype(o_ref.dtype)


def merge_residual(cat, w, b, resid):
    M, Ct = cat.shape
    Cout = w.shape[-1]
    tm = 256 if M % 256 == 0 else M
    return pl.pallas_call(
        _merge_residual_kernel,
        out_shape=jax.ShapeDtypeStruct((M, Cout), jnp.float32),
        grid=(M // tm,),
        in_specs=[
            pl.BlockSpec((tm, Ct), lambda i: (i, 0)),
            pl.BlockSpec((Ct, Cout), lambda i: (0, 0)),
            pl.BlockSpec((1, Cout), lambda i: (0, 0)),
            pl.BlockSpec((tm, Cout), lambda i: (i, 0)),
        ],
        out_specs=pl.BlockSpec((tm, Cout), lambda i: (i, 0)),
        compiler_params=pltpu.CompilerParams(
            dimension_semantics=("parallel",)),
    )(cat, w, b, resid)


# ============================================================================
# JAX layout plumbing (pure reshapes / transposes)
# ============================================================================
def extract_patches_nonoverlap_nhwc(x, k):
    # torch Unfold(kernel=k, stride=k); patch vector ordered (kh, kw, C).
    B, H, W, C = x.shape
    oh, ow = H // k, W // k
    p = x.reshape(B, oh, k, ow, k, C).transpose(0, 1, 3, 2, 4, 5)
    return p.reshape(B, oh * ow, k * k * C)


def proj_to_patches(proj, B, H, W, k, n_heads, inter):
    # proj: (B, H*W, n_heads*2*inter) -> wi_all (n_heads, B*L1, D) for g,
    #                                    pi_all (n_heads, B, L1, D) for theta.
    oh, ow = H // k, W // k
    L1, D = oh * ow, inter * k * k
    p = proj.reshape(B, oh, k, ow, k, n_heads, 2, inter)
    p = p.transpose(5, 6, 0, 1, 3, 2, 4, 7)     # (nh, 2, B, oh, ow, kh, kw, c)
    p = p.reshape(n_heads, 2, B, L1, D)
    return p[:, 0].reshape(n_heads, B * L1, D), p[:, 1]


def fold_heads_to_nhwc(y_all, B, H, W, k, inter):
    # Non-overlapping F.fold of every head + channel concat (head-major),
    # directly in NHWC.  out_mask renormalisation == 1 here -> identity.
    n_heads = y_all.shape[0]
    oh, ow = H // k, W // k
    p = y_all.reshape(n_heads, B, oh, ow, k, k, inter)
    p = p.transpose(1, 2, 4, 3, 5, 0, 6)        # (B, oh, kh, ow, kw, nh, c)
    return p.reshape(B, H, W, n_heads * inter)


# ============================================================================
# Parameter preparation: torch-layout params -> kernel layouts (bf16, stacked)
# ============================================================================
def prepare_params(params):
    heads = params["heads"]
    n_heads = len(heads)
    inter, nc = heads[0]["g_w"].shape[0], heads[0]["g_w"].shape[1]
    k = heads[0]["thr_w"].shape[-1]
    D, Ck2 = inter * k * k, nc * k * k

    def chw_to_hwc_cols(w2d, ch):
        o = w2d.shape[0]
        return w2d.reshape(o, ch, k, k).transpose(0, 2, 3, 1).reshape(o, -1)

    w_all, b_all = [], []
    fcw, fcb, tbw, tbb, gws = [], [], [], [], []
    for hp in heads:
        # theta(1x1) expressed as a 3x3 centre-tap kernel, fused with g(3x3).
        tw3 = jnp.zeros((inter, nc, 3, 3), jnp.float32)
        tw3 = tw3.at[:, :, 1, 1].set(hp["theta_w"][:, :, 0, 0])
        w_all.append(jnp.concatenate([hp["g_w"], tw3], axis=0))
        b_all.append(jnp.concatenate([hp["g_b"], hp["theta_b"]]))

        fc1 = chw_to_hwc_cols(hp["fc1_w"], inter)           # (inter, D)
        fc2 = chw_to_hwc_cols(hp["fc2_w"], inter)
        fcw.append(jnp.concatenate([fc1, fc2], axis=0).T)   # (D, 2*inter)
        fcb.append(jnp.concatenate([hp["fc1_b"], hp["fc2_b"]]).reshape(1, -1))

        thr = chw_to_hwc_cols(hp["thr_w"].reshape(1, Ck2), nc)
        bias = chw_to_hwc_cols(hp["bias_w"].reshape(1, Ck2), nc)
        tbw.append(jnp.concatenate([thr, bias], axis=0).T)  # (Ck2, 2)
        tbb.append(jnp.concatenate([hp["thr_b"], hp["bias_b"]]).reshape(1, 2))

        g = hp["graph_w"].reshape(inter, k, k, inter, k, k)
        gws.append(g.transpose(1, 2, 0, 4, 5, 3).reshape(D, D))

    w_all = jnp.concatenate(w_all, axis=0)                  # (Nout, nc, 3, 3)
    Nout = n_heads * 2 * inter
    proj_w = (jnp.transpose(w_all, (2, 3, 1, 0))
              .reshape(9, nc, Nout).astype(jnp.bfloat16))
    proj_b = jnp.concatenate(b_all).reshape(1, Nout).astype(jnp.float32)

    return dict(
        proj_w=proj_w, proj_b=proj_b,
        fc12_wT=jnp.stack(fcw).astype(jnp.bfloat16),
        fc12_b=jnp.stack(fcb).astype(jnp.float32),
        tb_w=jnp.stack(tbw).astype(jnp.bfloat16),
        tb_b=jnp.stack(tbb).astype(jnp.float32),
        graph_w=jnp.stack(gws).astype(jnp.bfloat16),
        merge_wT=(params["merge_w"]
                  .reshape(params["merge_w"].shape[0], -1).T
                  .astype(jnp.bfloat16)),
        merge_b=params["merge_b"].reshape(1, -1).astype(jnp.float32),
    )


# ============================================================================
# Forward
# ============================================================================
def fem_and_gfam_forward(x, params, *, ksize, stride_1, stride_2,
                         softmax_scale=10.0):
    assert stride_1 == ksize and stride_2 == ksize, \
        "this kernel covers the FEM_and_GFAM config (stride == ksize)"
    B, C, H, W = x.shape
    assert H % ksize == 0 and W % ksize == 0
    n_heads = len(params["heads"])
    inter = params["heads"][0]["g_w"].shape[0]
    L1 = (H // ksize) * (W // ksize)
    M = B * L1

    kp = prepare_params(params)

    # TODO(synk): FEM ResBlocks are skipped - their output is overwritten in
    # the reference forward (and B.ResBlock is not defined in the given code).
    x_nhwc = jnp.transpose(x, (0, 2, 3, 1))                  # (B, H, W, C)
    x_pad = jnp.pad(x_nhwc, ((0, 0), (1, 1), (1, 1), (0, 0)))

    # Fused g/theta projections for all heads (one N=128 lane-dense matmul).
    proj = fused_projection(x_pad, kp["proj_w"], kp["proj_b"], H=H, W=W)

    wi_all, pi_all = proj_to_patches(proj, B, H, W, ksize, n_heads, inter)
    xpat = (extract_patches_nonoverlap_nhwc(x_nhwc, ksize)
            .reshape(M, C * ksize * ksize).astype(jnp.bfloat16))

    y_all = gfam_attention(wi_all, pi_all, xpat,
                           kp["fc12_wT"], kp["fc12_b"],
                           kp["tb_w"], kp["tb_b"], kp["graph_w"],
                           B=B, L1=L1, inter=inter,
                           softmax_scale=softmax_scale)      # (nh, M, D) bf16

    cat = fold_heads_to_nhwc(y_all, B, H, W, ksize, inter)   # (B, H, W, nh*nc)
    out = merge_residual(cat.reshape(B * H * W, n_heads * inter),
                         kp["merge_wT"], kp["merge_b"],
                         x_nhwc.reshape(B * H * W, C))       # merge + residual
    return jnp.transpose(out.reshape(B, H, W, C), (0, 3, 1, 2))


# ============================================================================
# Deterministic synthetic parameters (torch-layout shapes from __init__)
# ============================================================================
def init_params(key, nc, inter, ksize, n_heads):
    D = inter * ksize * ksize
    keys = jax.random.split(key, n_heads + 1)
    heads = []
    for h in range(n_heads):
        k = jax.random.split(keys[h], 13)
        heads.append(dict(
            g_w=0.05 * jax.random.normal(k[0], (inter, nc, 3, 3), jnp.float32),
            g_b=0.05 * jax.random.normal(k[1], (inter,), jnp.float32),
            theta_w=0.05 * jax.random.normal(k[2], (inter, nc, 1, 1), jnp.float32),
            theta_b=0.05 * jax.random.normal(k[3], (inter,), jnp.float32),
            fc1_w=0.05 * jax.random.normal(k[4], (inter, D), jnp.float32),
            fc1_b=0.05 * jax.random.normal(k[5], (inter,), jnp.float32),
            fc2_w=0.05 * jax.random.normal(k[6], (inter, D), jnp.float32),
            fc2_b=0.05 * jax.random.normal(k[7], (inter,), jnp.float32),
            thr_w=0.05 * jax.random.normal(k[8], (1, nc, ksize, ksize), jnp.float32),
            thr_b=0.05 * jax.random.normal(k[9], (1,), jnp.float32),
            bias_w=0.05 * jax.random.normal(k[10], (1, nc, ksize, ksize), jnp.float32),
            bias_b=0.05 * jax.random.normal(k[11], (1,), jnp.float32),
            # Reference __init__ sets Graph_W = zeros; small random values are
            # used so the matmul hot path does real work (synthetic weights).
            graph_w=0.02 * jax.random.normal(k[12], (D, D), jnp.float32),
        ))
    km = jax.random.split(keys[-1], 2)
    return dict(
        heads=heads,
        merge_w=0.05 * jax.random.normal(km[0], (nc, nc * n_heads, 1, 1),
                                         jnp.float32),
        merge_b=0.05 * jax.random.normal(km[1], (nc,), jnp.float32),
    )


if __name__ == "__main__":
    # Small config consistent with the module (inter_channels = nc,
    # ksize == stride_1 == stride_2).
    B, NC, H, W = 2, 32, 16, 16
    N_HEADS, KSIZE, STRIDE = 2, 4, 4
    INTER = NC

    key = jax.random.PRNGKey(0)
    kx, kp = jax.random.split(key)
    x = jax.random.normal(kx, (B, NC, H, W), jnp.float32)
    params = init_params(kp, NC, INTER, KSIZE, N_HEADS)

    fwd = jax.jit(partial(fem_and_gfam_forward, ksize=KSIZE,
                          stride_1=STRIDE, stride_2=STRIDE,
                          softmax_scale=10.0))
    out = jax.block_until_ready(fwd(x, params))

    assert out.shape == (B, NC, H, W), out.shape
    assert bool(jnp.isfinite(out).all())
    print("KERNEL_OK")
</pallas_src>

<mosaic_0001>
module attributes {stable_mosaic.version = 11 : i64} {
  func.func @_fused_proj_kernel(%arg0: i32, %arg1: memref<1x18x18x32xf32, #tpu.memory_space<vmem>>, %arg2: memref<9x32x128xbf16, #tpu.memory_space<vmem>>, %arg3: memref<1x128xf32, #tpu.memory_space<vmem>>, %arg4: memref<1x256x128xbf16, #tpu.memory_space<vmem>>) attributes {dimension_semantics = [#tpu.dimension_semantics<parallel>], iteration_bounds = array<i64: 2>, scalar_prefetch = 0 : i64, scratch_operands = 0 : i64, tpu.core_type = #tpu.core_type<tc>, window_params = [{transform_indices = @transform_0, window_bounds = array<i64: 1, 18, 18, 32>}, {pipeline_mode = #tpu.pipeline_mode<synchronous>, transform_indices = @transform_1, window_bounds = array<i64: 9, 32, 128>}, {pipeline_mode = #tpu.pipeline_mode<synchronous>, transform_indices = @transform_2, window_bounds = array<i64: 1, 128>}, {transform_indices = @transform_3, window_bounds = array<i64: 1, 256, 128>}]} {
    %cst = arith.constant 0.000000e+00 : f32
    %0 = vector.broadcast %cst : f32 to vector<256x128xf32>
    %c0 = arith.constant 0 : index
    %c0_0 = arith.constant 0 : index
    %c0_1 = arith.constant 0 : index
    %c0_2 = arith.constant 0 : index
    %1 = vector.load %arg1[%c0, %c0_0, %c0_1, %c0_2] : memref<1x18x18x32xf32, #tpu.memory_space<vmem>>, vector<1x16x16x32xf32>
    %2 = vector.shape_cast %1 : vector<1x16x16x32xf32> to vector<16x16x32xf32>
    %3 = vector.shape_cast %2 : vector<16x16x32xf32> to vector<256x32xf32>
    %4 = arith.truncf %3 : vector<256x32xf32> to vector<256x32xbf16>
    %c0_3 = arith.constant 0 : index
    %c0_4 = arith.constant 0 : index
    %c0_5 = arith.constant 0 : index
    %5 = vector.load %arg2[%c0_3, %c0_4, %c0_5] : memref<9x32x128xbf16, #tpu.memory_space<vmem>>, vector<1x32x128xbf16>
    %6 = vector.shape_cast %5 : vector<1x32x128xbf16> to vector<32x128xbf16>
    %cst_6 = arith.constant dense<0.000000e+00> : vector<256x128xf32>
    %7 = tpu.matmul %4, %6, %cst_6 {dimension_numbers = #tpu.dot_dimension_numbers<[1], [0], [0], [1], [0, 0, 1, 1], [], []>} : vector<256x32xbf16>, vector<32x128xbf16>, vector<256x128xf32> -> vector<256x128xf32>
    %8 = arith.addf %0, %7 : vector<256x128xf32>
    %c0_7 = arith.constant 0 : index
    %c0_8 = arith.constant 0 : index
    %c1 = arith.constant 1 : index
    %c0_9 = arith.constant 0 : index
    %9 = vector.load %arg1[%c0_7, %c0_8, %c1, %c0_9] : memref<1x18x18x32xf32, #tpu.memory_space<vmem>>, vector<1x16x16x32xf32>
    %10 = vector.shape_cast %9 : vector<1x16x16x32xf32> to vector<16x16x32xf32>
    %11 = vector.shape_cast %10 : vector<16x16x32xf32> to vector<256x32xf32>
    %12 = arith.truncf %11 : vector<256x32xf32> to vector<256x32xbf16>
    %c1_10 = arith.constant 1 : index
    %c0_11 = arith.constant 0 : index
    %c0_12 = arith.constant 0 : index
    %13 = vector.load %arg2[%c1_10, %c0_11, %c0_12] : memref<9x32x128xbf16, #tpu.memory_space<vmem>>, vector<1x32x128xbf16>
    %14 = vector.shape_cast %13 : vector<1x32x128xbf16> to vector<32x128xbf16>
    %cst_13 = arith.constant dense<0.000000e+00> : vector<256x128xf32>
    %15 = tpu.matmul %12, %14, %cst_13 {dimension_numbers = #tpu.dot_dimension_numbers<[1], [0], [0], [1], [0, 0, 1, 1], [], []>} : vector<256x32xbf16>, vector<32x128xbf16>, vector<256x128xf32> -> vector<256x128xf32>
    %16 = arith.addf %8, %15 : vector<256x128xf32>
    %c0_14 = arith.constant 0 : index
    %c0_15 = arith.constant 0 : index
    %c2 = arith.constant 2 : index
    %c0_16 = arith.constant 0 : index
    %17 = vector.load %arg1[%c0_14, %c0_15, %c2, %c0_16] : memref<1x18x18x32xf32, #tpu.memory_space<vmem>>, vector<1x16x16x32xf32>
    %18 = vector.shape_cast %17 : vector<1x16x16x32xf32> to vector<16x16x32xf32>
    %19 = vector.shape_cast %18 : vector<16x16x32xf32> to vector<256x32xf32>
    %20 = arith.truncf %19 : vector<256x32xf32> to vector<256x32xbf16>
    %c2_17 = arith.constant 2 : index
    %c0_18 = arith.constant 0 : index
    %c0_19 = arith.constant 0 : index
    %21 = vector.load %arg2[%c2_17, %c0_18, %c0_19] : memref<9x32x128xbf16, #tpu.memory_space<vmem>>, vector<1x32x128xbf16>
    %22 = vector.shape_cast %21 : vector<1x32x128xbf16> to vector<32x128xbf16>
    %cst_20 = arith.constant dense<0.000000e+00> : vector<256x128xf32>
    %23 = tpu.matmul %20, %22, %cst_20 {dimension_numbers = #tpu.dot_dimension_numbers<[1], [0], [0], [1], [0, 0, 1, 1], [], []>} : vector<256x32xbf16>, vector<32x128xbf16>, vector<256x128xf32> -> vector<256x128xf32>
    %24 = arith.addf %16, %23 : vector<256x128xf32>
    %c0_21 = arith.constant 0 : index
    %c1_22 = arith.constant 1 : index
    %c0_23 = arith.constant 0 : index
    %c0_24 = arith.constant 0 : index
    %25 = vector.load %arg1[%c0_21, %c1_22, %c0_23, %c0_24] : memref<1x18x18x32xf32, #tpu.memory_space<vmem>>, vector<1x16x16x32xf32>
    %26 = vector.shape_cast %25 : vector<1x16x16x32xf32> to vector<16x16x32xf32>
    %27 = vector.shape_cast %26 : vector<16x16x32xf32> to vector<256x32xf32>
    %28 = arith.truncf %27 : vector<256x32xf32> to vector<256x32xbf16>
    %c3 = arith.constant 3 : index
    %c0_25 = arith.constant 0 : index
    %c0_26 = arith.constant 0 : index
    %29 = vector.load %arg2[%c3, %c0_25, %c0_26] : memref<9x32x128xbf16, #tpu.memory_space<vmem>>, vector<1x32x128xbf16>
    %30 = vector.shape_cast %29 : vector<1x32x128xbf16> to vector<32x128xbf16>
    %cst_27 = arith.constant dense<0.000000e+00> : vector<256x128xf32>
    %31 = tpu.matmul %28, %30, %cst_27 {dimension_numbers = #tpu.dot_dimension_numbers<[1], [0], [0], [1], [0, 0, 1, 1], [], []>} : vector<256x32xbf16>, vector<32x128xbf16>, vector<256x128xf32> -> vector<256x128xf32>
    %32 = arith.addf %24, %31 : vector<256x128xf32>
    %c0_28 = arith.constant 0 : index
    %c1_29 = arith.constant 1 : index
    %c1_30 = arith.constant 1 : index
    %c0_31 = arith.constant 0 : index
    %33 = vector.load %arg1[%c0_28, %c1_29, %c1_30, %c0_31] : memref<1x18x18x32xf32, #tpu.memory_space<vmem>>, vector<1x16x16x32xf32>
    %34 = vector.shape_cast %33 : vector<1x16x16x32xf32> to vector<16x16x32xf32>
    %35 = vector.shape_cast %34 : vector<16x16x32xf32> to vector<256x32xf32>
    %36 = arith.truncf %35 : vector<256x32xf32> to vector<256x32xbf16>
    %c4 = arith.constant 4 : index
    %c0_32 = arith.constant 0 : index
    %c0_33 = arith.constant 0 : index
    %37 = vector.load %arg2[%c4, %c0_32, %c0_33] : memref<9x32x128xbf16, #tpu.memory_space<vmem>>, vector<1x32x128xbf16>
    %38 = vector.shape_cast %37 : vector<1x32x128xbf16> to vector<32x128xbf16>
    %cst_34 = arith.constant dense<0.000000e+00> : vector<256x128xf32>
    %39 = tpu.matmul %36, %38, %cst_34 {dimension_numbers = #tpu.dot_dimension_numbers<[1], [0], [0], [1], [0, 0, 1, 1], [], []>} : vector<256x32xbf16>, vector<32x128xbf16>, vector<256x128xf32> -> vector<256x128xf32>
    %40 = arith.addf %32, %39 : vector<256x128xf32>
    %c0_35 = arith.constant 0 : index
    %c1_36 = arith.constant 1 : index
    %c2_37 = arith.constant 2 : index
    %c0_38 = arith.constant 0 : index
    %41 = vector.load %arg1[%c0_35, %c1_36, %c2_37, %c0_38] : memref<1x18x18x32xf32, #tpu.memory_space<vmem>>, vector<1x16x16x32xf32>
    %42 = vector.shape_cast %41 : vector<1x16x16x32xf32> to vector<16x16x32xf32>
    %43 = vector.shape_cast %42 : vector<16x16x32xf32> to vector<256x32xf32>
    %44 = arith.truncf %43 : vector<256x32xf32> to vector<256x32xbf16>
    %c5 = arith.constant 5 : index
    %c0_39 = arith.constant 0 : index
    %c0_40 = arith.constant 0 : index
    %45 = vector.load %arg2[%c5, %c0_39, %c0_40] : memref<9x32x128xbf16, #tpu.memory_space<vmem>>, vector<1x32x128xbf16>
    %46 = vector.shape_cast %45 : vector<1x32x128xbf16> to vector<32x128xbf16>
    %cst_41 = arith.constant dense<0.000000e+00> : vector<256x128xf32>
    %47 = tpu.matmul %44, %46, %cst_41 {dimension_numbers = #tpu.dot_dimension_numbers<[1], [0], [0], [1], [0, 0, 1, 1], [], []>} : vector<256x32xbf16>, vector<32x128xbf16>, vector<256x128xf32> -> vector<256x128xf32>
    %48 = arith.addf %40, %47 : vector<256x128xf32>
    %c0_42 = arith.constant 0 : index
    %c2_43 = arith.constant 2 : index
    %c0_44 = arith.constant 0 : index
    %c0_45 = arith.constant 0 : index
    %49 = vector.load %arg1[%c0_42, %c2_43, %c0_44, %c0_45] : memref<1x18x18x32xf32, #tpu.memory_space<vmem>>, vector<1x16x16x32xf32>
    %50 = vector.shape_cast %49 : vector<1x16x16x32xf32> to vector<16x16x32xf32>
    %51 = vector.shape_cast %50 : vector<16x16x32xf32> to vector<256x32xf32>
    %52 = arith.truncf %51 : vector<256x32xf32> to vector<256x32xbf16>
    %c6 = arith.constant 6 : index
    %c0_46 = arith.constant 0 : index
    %c0_47 = arith.constant 0 : index
    %53 = vector.load %arg2[%c6, %c0_46, %c0_47] : memref<9x32x128xbf16, #tpu.memory_space<vmem>>, vector<1x32x128xbf16>
    %54 = vector.shape_cast %53 : vector<1x32x128xbf16> to vector<32x128xbf16>
    %cst_48 = arith.constant dense<0.000000e+00> : vector<256x128xf32>
    %55 = tpu.matmul %52, %54, %cst_48 {dimension_numbers = #tpu.dot_dimension_numbers<[1], [0], [0], [1], [0, 0, 1, 1], [], []>} : vector<256x32xbf16>, vector<32x128xbf16>, vector<256x128xf32> -> vector<256x128xf32>
    %56 = arith.addf %48, %55 : vector<256x128xf32>
    %c0_49 = arith.constant 0 : index
    %c2_50 = arith.constant 2 : index
    %c1_51 = arith.constant 1 : index
    %c0_52 = arith.constant 0 : index
    %57 = vector.load %arg1[%c0_49, %c2_50, %c1_51, %c0_52] : memref<1x18x18x32xf32, #tpu.memory_space<vmem>>, vector<1x16x16x32xf32>
    %58 = vector.shape_cast %57 : vector<1x16x16x32xf32> to vector<16x16x32xf32>
    %59 = vector.shape_cast %58 : vector<16x16x32xf32> to vector<256x32xf32>
    %60 = arith.truncf %59 : vector<256x32xf32> to vector<256x32xbf16>
    %c7 = arith.constant 7 : index
    %c0_53 = arith.constant 0 : index
    %c0_54 = arith.constant 0 : index
    %61 = vector.load %arg2[%c7, %c0_53, %c0_54] : memref<9x32x128xbf16, #tpu.memory_space<vmem>>, vector<1x32x128xbf16>
    %62 = vector.shape_cast %61 : vector<1x32x128xbf16> to vector<32x128xbf16>
    %cst_55 = arith.constant dense<0.000000e+00> : vector<256x128xf32>
    %63 = tpu.matmul %60, %62, %cst_55 {dimension_numbers = #tpu.dot_dimension_numbers<[1], [0], [0], [1], [0, 0, 1, 1], [], []>} : vector<256x32xbf16>, vector<32x128xbf16>, vector<256x128xf32> -> vector<256x128xf32>
    %64 = arith.addf %56, %63 : vector<256x128xf32>
    %c0_56 = arith.constant 0 : index
    %c2_57 = arith.constant 2 : index
    %c2_58 = arith.constant 2 : index
    %c0_59 = arith.constant 0 : index
    %65 = vector.load %arg1[%c0_56, %c2_57, %c2_58, %c0_59] : memref<1x18x18x32xf32, #tpu.memory_space<vmem>>, vector<1x16x16x32xf32>
    %66 = vector.shape_cast %65 : vector<1x16x16x32xf32> to vector<16x16x32xf32>
    %67 = vector.shape_cast %66 : vector<16x16x32xf32> to vector<256x32xf32>
    %68 = arith.truncf %67 : vector<256x32xf32> to vector<256x32xbf16>
    %c8 = arith.constant 8 : index
    %c0_60 = arith.constant 0 : index
    %c0_61 = arith.constant 0 : index
    %69 = vector.load %arg2[%c8, %c0_60, %c0_61] : memref<9x32x128xbf16, #tpu.memory_space<vmem>>, vector<1x32x128xbf16>
    %70 = vector.shape_cast %69 : vector<1x32x128xbf16> to vector<32x128xbf16>
    %cst_62 = arith.constant dense<0.000000e+00> : vector<256x128xf32>
    %71 = tpu.matmul %68, %70, %cst_62 {dimension_numbers = #tpu.dot_dimension_numbers<[1], [0], [0], [1], [0, 0, 1, 1], [], []>} : vector<256x32xbf16>, vector<32x128xbf16>, vector<256x128xf32> -> vector<256x128xf32>
    %72 = arith.addf %64, %71 : vector<256x128xf32>
    %c0_63 = arith.constant 0 : index
    %c0_64 = arith.constant 0 : index
    %73 = vector.load %arg3[%c0_63, %c0_64] : memref<1x128xf32, #tpu.memory_space<vmem>>, vector<1x128xf32>
    %74 = vector.broadcast %73 : vector<1x128xf32> to vector<256x128xf32>
    %75 = arith.addf %72, %74 : vector<256x128xf32>
    %76 = arith.truncf %75 : vector<256x128xf32> to vector<256x128xbf16>
    %c0_65 = arith.constant 0 : index
    %c0_66 = arith.constant 0 : index
    %c0_67 = arith.constant 0 : index
    %77 = vector.load %arg4[%c0_65, %c0_66, %c0_67] : memref<1x256x128xbf16, #tpu.memory_space<vmem>>, vector<1x256x128xbf16>
    %78 = vector.shape_cast %77 : vector<1x256x128xbf16> to vector<256x128xbf16>
    %79 = vector.shape_cast %76 : vector<256x128xbf16> to vector<1x256x128xbf16>
    tpu.vector_store %arg4[%c0_65, %c0_66, %c0_67], %79 {strides = array<i32>} : memref<1x256x128xbf16, #tpu.memory_space<vmem>>, vector<1x256x128xbf16>,
    return
  }
  func.func @transform_0(%arg0: i32) -> (i32, i32, i32, i32) {
    %c0_i32 = arith.constant 0 : i32
    %c0_i32_0 = arith.constant 0 : i32
    %c0_i32_1 = arith.constant 0 : i32
    %c0_i32_2 = arith.constant 0 : i32
    return %arg0, %c0_i32, %c0_i32_0, %c0_i32_1 : i32, i32, i32, i32
  }
  func.func @transform_1(%arg0: i32) -> (i32, i32, i32) {
    %c0_i32 = arith.constant 0 : i32
    %c0_i32_0 = arith.constant 0 : i32
    %c0_i32_1 = arith.constant 0 : i32
    %c0_i32_2 = arith.constant 0 : i32
    return %c0_i32, %c0_i32_0, %c0_i32_1 : i32, i32, i32
  }
  func.func @transform_2(%arg0: i32) -> (i32, i32) {
    %c0_i32 = arith.constant 0 : i32
    %c0_i32_0 = arith.constant 0 : i32
    %c0_i32_1 = arith.constant 0 : i32
    return %c0_i32, %c0_i32_0 : i32, i32
  }
  func.func @transform_3(%arg0: i32) -> (i32, i32, i32) {
    %c0_i32 = arith.constant 0 : i32
    %c0_i32_0 = arith.constant 0 : i32
    %c0_i32_1 = arith.constant 0 : i32
    return %arg0, %c0_i32, %c0_i32_0 : i32, i32, i32
  }
}

module attributes {stable_mosaic.version = 11 : i64} {
  func.func @_gfam_attention_kernel(%arg0: i32, %arg1: memref<1x32x512xbf16, #tpu.memory_space<vmem>>, %arg2: memref<1x2x16x512xbf16, #tpu.memory_space<vmem>>, %arg3: memref<32x512xbf16, #tpu.memory_space<vmem>>, %arg4: memref<1x512x64xbf16, #tpu.memory_space<vmem>>, %arg5: memref<1x1x64xf32, #tpu.memory_space<vmem>>, %arg6: memref<1x512x2xbf16, #tpu.memory_space<vmem>>, %arg7: memref<1x1x2xf32, #tpu.memory_space<vmem>>, %arg8: memref<1x512x512xbf16, #tpu.memory_space<vmem>>, %arg9: memref<1x32x512xbf16, #tpu.memory_space<vmem>>) attributes {dimension_semantics = [#tpu.dimension_semantics<parallel>], iteration_bounds = array<i64: 2>, scalar_prefetch = 0 : i64, scratch_operands = 0 : i64, tpu.core_type = #tpu.core_type<tc>, window_params = [{transform_indices = @transform_0, window_bounds = array<i64: 1, 32, 512>}, {transform_indices = @transform_1, window_bounds = array<i64: 1, 2, 16, 512>}, {pipeline_mode = #tpu.pipeline_mode<synchronous>, transform_indices = @transform_2, window_bounds = array<i64: 32, 512>}, {transform_indices = @transform_3, window_bounds = array<i64: 1, 512, 64>}, {transform_indices = @transform_4, window_bounds = array<i64: 1, 1, 64>}, {transform_indices = @transform_5, window_bounds = array<i64: 1, 512, 2>}, {transform_indices = @transform_6, window_bounds = array<i64: 1, 1, 2>}, {transform_indices = @transform_7, window_bounds = array<i64: 1, 512, 512>}, {transform_indices = @transform_8, window_bounds = array<i64: 1, 32, 512>}]} {
    %c0 = arith.constant 0 : index
    %c0_0 = arith.constant 0 : index
    %c0_1 = arith.constant 0 : index
    %0 = vector.load %arg1[%c0, %c0_0, %c0_1] : memref<1x32x512xbf16, #tpu.memory_space<vmem>>, vector<1x32x512xbf16>
    %1 = vector.shape_cast %0 : vector<1x32x512xbf16> to vector<32x512xbf16>
    %c0_2 = arith.constant 0 : index
    %c0_3 = arith.constant 0 : index
    %c0_4 = arith.constant 0 : index
    %2 = vector.load %arg4[%c0_2, %c0_3, %c0_4] : memref<1x512x64xbf16, #tpu.memory_space<vmem>>, vector<1x512x64xbf16>
    %3 = vector.shape_cast %2 : vector<1x512x64xbf16> to vector<512x64xbf16>
    %cst = arith.constant dense<0.000000e+00> : vector<32x64xf32>
    %4 = tpu.matmul %1, %3, %cst {dimension_numbers = #tpu.dot_dimension_numbers<[1], [0], [0], [1], [0, 0, 1, 1], [], []>} : vector<32x512xbf16>, vector<512x64xbf16>, vector<32x64xf32> -> vector<32x64xf32>
    %c0_5 = arith.constant 0 : index
    %c0_6 = arith.constant 0 : index
    %c0_7 = arith.constant 0 : index
    %5 = vector.load %arg5[%c0_5, %c0_6, %c0_7] : memref<1x1x64xf32, #tpu.memory_space<vmem>>, vector<1x1x64xf32>
    %6 = vector.shape_cast %5 : vector<1x1x64xf32> to vector<1x64xf32>
    %7 = vector.broadcast %6 : vector<1x64xf32> to vector<32x64xf32>
    %8 = arith.addf %4, %7 : vector<32x64xf32>
    %cst_8 = arith.constant 0.000000e+00 : f32
    %9 = vector.broadcast %cst_8 : f32 to vector<32x64xf32>
    %10 = arith.cmpf ogt, %8, %9 : vector<32x64xf32>
    %11 = math.exp %8 : vector<32x64xf32>
    %cst_9 = arith.constant 1.000000e+00 : f32
    %12 = vector.broadcast %cst_9 : f32 to vector<32x64xf32>
    %13 = arith.subf %11, %12 : vector<32x64xf32>
    %14 = arith.select %10, %8, %13 : vector<32x64xi1>, vector<32x64xf32>
    %15 = vector.extract_strided_slice %14 {offsets = [0, 0], sizes = [32, 32], strides = [1, 1]} : vector<32x64xf32> to vector<32x32xf32>
    %16 = arith.mulf %15, %15 : vector<32x32xf32>
    %cst_10 = arith.constant dense<0.000000e+00> : vector<32xf32>
    %17 = vector.multi_reduction <add>, %16, %cst_10 [1] : vector<32x32xf32> to vector<32xf32>
    %18 = vector.shape_cast %17 : vector<32xf32> to vector<32x1xf32>
    %cst_11 = arith.constant 1.000000e-24 : f32
    %19 = vector.broadcast %cst_11 : f32 to vector<32x1xf32>
    %20 = arith.maximumf %18, %19 : vector<32x1xf32>
    %21 = math.rsqrt %20 : vector<32x1xf32>
    %22 = vector.broadcast %21 : vector<32x1xf32> to vector<32x32xf32>
    %23 = arith.mulf %15, %22 : vector<32x32xf32>
    %24 = vector.shape_cast %23 : vector<32x32xf32> to vector<2x16x32xf32>
    %25 = arith.truncf %24 : vector<2x16x32xf32> to vector<2x16x32xbf16>
    %26 = vector.extract_strided_slice %14 {offsets = [0, 32], sizes = [32, 32], strides = [1, 1]} : vector<32x64xf32> to vector<32x32xf32>
    %27 = arith.mulf %26, %26 : vector<32x32xf32>
    %cst_12 = arith.constant dense<0.000000e+00> : vector<32xf32>
    %28 = vector.multi_reduction <add>, %27, %cst_12 [1] : vector<32x32xf32> to vector<32xf32>
    %29 = vector.shape_cast %28 : vector<32xf32> to vector<32x1xf32>
    %cst_13 = arith.constant 1.000000e-24 : f32
    %30 = vector.broadcast %cst_13 : f32 to vector<32x1xf32>
    %31 = arith.maximumf %29, %30 : vector<32x1xf32>
    %32 = math.rsqrt %31 : vector<32x1xf32>
    %33 = vector.broadcast %32 : vector<32x1xf32> to vector<32x32xf32>
    %34 = arith.mulf %26, %33 : vector<32x32xf32>
    %35 = vector.shape_cast %34 : vector<32x32xf32> to vector<2x16x32xf32>
    %36 = arith.truncf %35 : vector<2x16x32xf32> to vector<2x16x32xbf16>
    %c0_14 = arith.constant 0 : index
    %c0_15 = arith.constant 0 : index
    %37 = vector.load %arg3[%c0_14, %c0_15] : memref<32x512xbf16, #tpu.memory_space<vmem>>, vector<32x512xbf16>
    %c0_16 = arith.constant 0 : index
    %c0_17 = arith.constant 0 : index
    %c0_18 = arith.constant 0 : index
    %38 = vector.load %arg6[%c0_16, %c0_17, %c0_18] : memref<1x512x2xbf16, #tpu.memory_space<vmem>>, vector<1x512x2xbf16>
    %39 = vector.shape_cast %38 : vector<1x512x2xbf16> to vector<512x2xbf16>
    %cst_19 = arith.constant dense<0.000000e+00> : vector<32x2xf32>
    %40 = tpu.matmul %37, %39, %cst_19 {dimension_numbers = #tpu.dot_dimension_numbers<[1], [0], [0], [1], [0, 0, 1, 1], [], []>} : vector<32x512xbf16>, vector<512x2xbf16>, vector<32x2xf32> -> vector<32x2xf32>
    %c0_20 = arith.constant 0 : index
    %c0_21 = arith.constant 0 : index
    %c0_22 = arith.constant 0 : index
    %41 = vector.load %arg7[%c0_20, %c0_21, %c0_22] : memref<1x1x2xf32, #tpu.memory_space<vmem>>, vector<1x1x2xf32>
    %42 = vector.shape_cast %41 : vector<1x1x2xf32> to vector<1x2xf32>
    %43 = vector.broadcast %42 : vector<1x2xf32> to vector<32x2xf32>
    %44 = arith.addf %40, %43 : vector<32x2xf32>
    %45 = vector.extract_strided_slice %44 {offsets = [0, 0], sizes = [32, 1], strides = [1, 1]} : vector<32x2xf32> to vector<32x1xf32>
    %46 = vector.shape_cast %45 : vector<32x1xf32> to vector<2x16x1xf32>
    %47 = vector.extract_strided_slice %44 {offsets = [0, 1], sizes = [32, 1], strides = [1, 1]} : vector<32x2xf32> to vector<32x1xf32>
    %48 = vector.shape_cast %47 : vector<32x1xf32> to vector<2x16x1xf32>
    "tpu.trace_start"() <{level = 10 : i32, message = "bqd,bkd->bqk"}> : () -> ()
    %cst_23 = arith.constant dense<0.000000e+00> : vector<2x16x16xf32>
    %49 = tpu.matmul %25, %36, %cst_23 {dimension_numbers = #tpu.dot_dimension_numbers<[2], [2], [1], [1], [0, 0, 0, 1, 1, 1], [0], [0]>} : vector<2x16x32xbf16>, vector<2x16x32xbf16>, vector<2x16x16xf32> -> vector<2x16x16xf32>
    "tpu.trace_stop"() : () -> ()
    %cst_24 = arith.constant dense<0.000000e+00> : vector<2x16xf32>
    %50 = vector.multi_reduction <add>, %49, %cst_24 [2] : vector<2x16x16xf32> to vector<2x16xf32>
    %51 = vector.shape_cast %50 : vector<2x16xf32> to vector<2x16x1xf32>
    %cst_25 = arith.constant 1.600000e+01 : f32
    %52 = vector.broadcast %cst_25 : f32 to vector<2x16x1xf32>
    %53 = arith.divf %51, %52 : vector<2x16x1xf32>
    %54 = arith.mulf %53, %46 : vector<2x16x1xf32>
    %55 = vector.broadcast %54 : vector<2x16x1xf32> to vector<2x16x16xf32>
    %56 = arith.subf %49, %55 : vector<2x16x16xf32>
    %57 = vector.broadcast %48 : vector<2x16x1xf32> to vector<2x16x16xf32>
    %58 = arith.addf %56, %57 : vector<2x16x16xf32>
    %cst_26 = arith.constant 0.000000e+00 : f32
    %59 = vector.broadcast %cst_26 : f32 to vector<2x16x16xf32>
    %60 = arith.maximumf %58, %59 : vector<2x16x16xf32>
    %cst_27 = arith.constant 0.000000e+00 : f32
    %61 = vector.broadcast %cst_27 : f32 to vector<2x16x16xf32>
    %62 = arith.cmpf one, %60, %61 : vector<2x16x16xf32>
    %63 = arith.extui %62 : vector<2x16x16xi1> to vector<2x16x16xi32>
    %64 = arith.sitofp %63 : vector<2x16x16xi32> to vector<2x16x16xf32>
    %65 = arith.mulf %49, %60 : vector<2x16x16xf32>
    %cst_28 = arith.constant 1.000000e+01 : f32
    %66 = vector.broadcast %cst_28 : f32 to vector<2x16x16xf32>
    %67 = arith.mulf %65, %66 : vector<2x16x16xf32>
    %cst_29 = arith.constant dense<0xFF800000> : vector<2x16xf32>
    %68 = vector.multi_reduction <maximumf>, %67, %cst_29 [2] : vector<2x16x16xf32> to vector<2x16xf32>
    %69 = vector.shape_cast %68 : vector<2x16xf32> to vector<2x16x1xf32>
    %70 = vector.broadcast %69 : vector<2x16x1xf32> to vector<2x16x16xf32>
    %71 = arith.subf %67, %70 : vector<2x16x16xf32>
    %72 = math.exp %71 : vector<2x16x16xf32>
    %cst_30 = arith.constant dense<0.000000e+00> : vector<2x16xf32>
    %73 = vector.multi_reduction <add>, %72, %cst_30 [2] : vector<2x16x16xf32> to vector<2x16xf32>
    %74 = vector.shape_cast %73 : vector<2x16xf32> to vector<2x16x1xf32>
    %75 = tpu.reciprocal %74 {approx = true} : vector<2x16x1xf32> -> vector<2x16x1xf32>
    %76 = vector.broadcast %75 : vector<2x16x1xf32> to vector<2x16x16xf32>
    %77 = arith.mulf %72, %76 : vector<2x16x16xf32>
    %78 = arith.mulf %77, %64 : vector<2x16x16xf32>
    %79 = arith.truncf %78 : vector<2x16x16xf32> to vector<2x16x16xbf16>
    %c0_31 = arith.constant 0 : index
    %c0_32 = arith.constant 0 : index
    %c0_33 = arith.constant 0 : index
    %c0_34 = arith.constant 0 : index
    %80 = vector.load %arg2[%c0_31, %c0_32, %c0_33, %c0_34] : memref<1x2x16x512xbf16, #tpu.memory_space<vmem>>, vector<1x2x16x512xbf16>
    %81 = vector.shape_cast %80 : vector<1x2x16x512xbf16> to vector<2x16x512xbf16>
    "tpu.trace_start"() <{level = 10 : i32, message = "bqk,bkd->bqd"}> : () -> ()
    %cst_35 = arith.constant dense<0.000000e+00> : vector<2x16x512xf32>
    %82 = tpu.matmul %79, %81, %cst_35 {dimension_numbers = #tpu.dot_dimension_numbers<[2], [1], [1], [2], [0, 0, 0, 1, 1, 2], [0], [0]>} : vector<2x16x16xbf16>, vector<2x16x512xbf16>, vector<2x16x512xf32> -> vector<2x16x512xf32>
    "tpu.trace_stop"() : () -> ()
    %83 = vector.shape_cast %82 : vector<2x16x512xf32> to vector<32x512xf32>
    %84 = arith.truncf %83 : vector<32x512xf32> to vector<32x512xbf16>
    %c0_36 = arith.constant 0 : index
    %c0_37 = arith.constant 0 : index
    %c0_38 = arith.constant 0 : index
    %85 = vector.load %arg8[%c0_36, %c0_37, %c0_38] : memref<1x512x512xbf16, #tpu.memory_space<vmem>>, vector<1x512x512xbf16>
    %86 = vector.shape_cast %85 : vector<1x512x512xbf16> to vector<512x512xbf16>
    %cst_39 = arith.constant dense<0.000000e+00> : vector<32x512xf32>
    %87 = tpu.matmul %84, %86, %cst_39 {dimension_numbers = #tpu.dot_dimension_numbers<[1], [0], [0], [1], [0, 0, 1, 1], [], []>} : vector<32x512xbf16>, vector<512x512xbf16>, vector<32x512xf32> -> vector<32x512xf32>
    %88 = arith.truncf %87 : vector<32x512xf32> to vector<32x512xbf16>
    %c0_40 = arith.constant 0 : index
    %c0_41 = arith.constant 0 : index
    %c0_42 = arith.constant 0 : index
    %89 = vector.load %arg9[%c0_40, %c0_41, %c0_42] : memref<1x32x512xbf16, #tpu.memory_space<vmem>>, vector<1x32x512xbf16>
    %90 = vector.shape_cast %89 : vector<1x32x512xbf16> to vector<32x512xbf16>
    %91 = vector.shape_cast %88 : vector<32x512xbf16> to vector<1x32x512xbf16>
    tpu.vector_store %arg9[%c0_40, %c0_41, %c0_42], %91 {strides = array<i32>} : memref<1x32x512xbf16, #tpu.memory_space<vmem>>, vector<1x32x512xbf16>,
    return
  }
  func.func @transform_0(%arg0: i32) -> (i32, i32, i32) {
    %c0_i32 = arith.constant 0 : i32
    %c0_i32_0 = arith.constant 0 : i32
    %c0_i32_1 = arith.constant 0 : i32
    return %arg0, %c0_i32, %c0_i32_0 : i32, i32, i32
  }
  func.func @transform_1(%arg0: i32) -> (i32, i32, i32, i32) {
    %c0_i32 = arith.constant 0 : i32
    %c0_i32_0 = arith.constant 0 : i32
    %c0_i32_1 = arith.constant 0 : i32
    %c0_i32_2 = arith.constant 0 : i32
    return %arg0, %c0_i32, %c0_i32_0, %c0_i32_1 : i32, i32, i32, i32
  }
  func.func @transform_2(%arg0: i32) -> (i32, i32) {
    %c0_i32 = arith.constant 0 : i32
    %c0_i32_0 = arith.constant 0 : i32
    %c0_i32_1 = arith.constant 0 : i32
    return %c0_i32, %c0_i32_0 : i32, i32
  }
  func.func @transform_3(%arg0: i32) -> (i32, i32, i32) {
    %c0_i32 = arith.constant 0 : i32
    %c0_i32_0 = arith.constant 0 : i32
    %c0_i32_1 = arith.constant 0 : i32
    return %arg0, %c0_i32, %c0_i32_0 : i32, i32, i32
  }
  func.func @transform_4(%arg0: i32) -> (i32, i32, i32) {
    %c0_i32 = arith.constant 0 : i32
    %c0_i32_0 = arith.constant 0 : i32
    %c0_i32_1 = arith.constant 0 : i32
    return %arg0, %c0_i32, %c0_i32_0 : i32, i32, i32
  }
  func.func @transform_5(%arg0: i32) -> (i32, i32, i32) {
    %c0_i32 = arith.constant 0 : i32
    %c0_i32_0 = arith.constant 0 : i32
    %c0_i32_1 = arith.constant 0 : i32
    return %arg0, %c0_i32, %c0_i32_0 : i32, i32, i32
  }
  func.func @transform_6(%arg0: i32) -> (i32, i32, i32) {
    %c0_i32 = arith.constant 0 : i32
    %c0_i32_0 = arith.constant 0 : i32
    %c0_i32_1 = arith.constant 0 : i32
    return %arg0, %c0_i32, %c0_i32_0 : i32, i32, i32
  }
  func.func @transform_7(%arg0: i32) -> (i32, i32, i32) {
    %c0_i32 = arith.constant 0 : i32
    %c0_i32_0 = arith.constant 0 : i32
    %c0_i32_1 = arith.constant 0 : i32
    return %arg0, %c0_i32, %c0_i32_0 : i32, i32, i32
  }
  func.func @transform_8(%arg0: i32) -> (i32, i32, i32) {
    %c0_i32 = arith.constant 0 : i32
    %c0_i32_0 = arith.constant 0 : i32
    %c0_i32_1 = arith.constant 0 : i32
    return %arg0, %c0_i32, %c0_i32_0 : i32, i32, i32
  }
}

module attributes {stable_mosaic.version = 11 : i64} {
  func.func @_merge_residual_kernel(%arg0: i32, %arg1: memref<256x64xbf16, #tpu.memory_space<vmem>>, %arg2: memref<64x32xbf16, #tpu.memory_space<vmem>>, %arg3: memref<1x32xf32, #tpu.memory_space<vmem>>, %arg4: memref<256x32xf32, #tpu.memory_space<vmem>>, %arg5: memref<256x32xf32, #tpu.memory_space<vmem>>) attributes {dimension_semantics = [#tpu.dimension_semantics<parallel>], iteration_bounds = array<i64: 2>, scalar_prefetch = 0 : i64, scratch_operands = 0 : i64, tpu.core_type = #tpu.core_type<tc>, window_params = [{transform_indices = @transform_0, window_bounds = array<i64: 256, 64>}, {pipeline_mode = #tpu.pipeline_mode<synchronous>, transform_indices = @transform_1, window_bounds = array<i64: 64, 32>}, {pipeline_mode = #tpu.pipeline_mode<synchronous>, transform_indices = @transform_2, window_bounds = array<i64: 1, 32>}, {transform_indices = @transform_3, window_bounds = array<i64: 256, 32>}, {transform_indices = @transform_4, window_bounds = array<i64: 256, 32>}]} {
    %c0 = arith.constant 0 : index
    %c0_0 = arith.constant 0 : index
    %0 = vector.load %arg1[%c0, %c0_0] : memref<256x64xbf16, #tpu.memory_space<vmem>>, vector<256x64xbf16>
    %c0_1 = arith.constant 0 : index
    %c0_2 = arith.constant 0 : index
    %1 = vector.load %arg2[%c0_1, %c0_2] : memref<64x32xbf16, #tpu.memory_space<vmem>>, vector<64x32xbf16>
    %cst = arith.constant dense<0.000000e+00> : vector<256x32xf32>
    %2 = tpu.matmul %0, %1, %cst {dimension_numbers = #tpu.dot_dimension_numbers<[1], [0], [0], [1], [0, 0, 1, 1], [], []>} : vector<256x64xbf16>, vector<64x32xbf16>, vector<256x32xf32> -> vector<256x32xf32>
    %c0_3 = arith.constant 0 : index
    %c0_4 = arith.constant 0 : index
    %3 = vector.load %arg3[%c0_3, %c0_4] : memref<1x32xf32, #tpu.memory_space<vmem>>, vector<1x32xf32>
    %4 = vector.broadcast %3 : vector<1x32xf32> to vector<256x32xf32>
    %5 = arith.addf %2, %4 : vector<256x32xf32>
    %c0_5 = arith.constant 0 : index
    %c0_6 = arith.constant 0 : index
    %6 = vector.load %arg4[%c0_5, %c0_6] : memref<256x32xf32, #tpu.memory_space<vmem>>, vector<256x32xf32>
    %7 = arith.addf %5, %6 : vector<256x32xf32>
    %c0_7 = arith.constant 0 : index
    %c0_8 = arith.constant 0 : index
    %8 = vector.load %arg5[%c0_7, %c0_8] : memref<256x32xf32, #tpu.memory_space<vmem>>, vector<256x32xf32>
    tpu.vector_store %arg5[%c0_7, %c0_8], %7 {strides = array<i32>} : memref<256x32xf32, #tpu.memory_space<vmem>>, vector<256x32xf32>,
    return
  }
  func.func @transform_0(%arg0: i32) -> (i32, i32) {
    %c0_i32 = arith.constant 0 : i32
    %c0_i32_0 = arith.constant 0 : i32
    return %arg0, %c0_i32 : i32, i32
  }
  func.func @transform_1(%arg0: i32) -> (i32, i32) {
    %c0_i32 = arith.constant 0 : i32
    %c0_i32_0 = arith.constant 0 : i32
    %c0_i32_1 = arith.constant 0 : i32
    return %c0_i32, %c0_i32_0 : i32, i32
  }
  func.func @transform_2(%arg0: i32) -> (i32, i32) {
    %c0_i32 = arith.constant 0 : i32
    %c0_i32_0 = arith.constant 0 : i32
    %c0_i32_1 = arith.constant 0 : i32
    return %c0_i32, %c0_i32_0 : i32, i32
  }
  func.func @transform_3(%arg0: i32) -> (i32, i32) {
    %c0_i32 = arith.constant 0 : i32
    %c0_i32_0 = arith.constant 0 : i32
    return %arg0, %c0_i32 : i32, i32
  }
  func.func @transform_4(%arg0: i32) -> (i32, i32) {
    %c0_i32 = arith.constant 0 : i32
    %c0_i32_0 = arith.constant 0 : i32
    return %arg0, %c0_i32 : i32, i32
  }
}

</mosaic_0001>

<llo_original>
// kernel: fem_and_gfam_forward.3
$region0: #{fem_and_gfam_forward.3}
  #allocation0 [shape = 'u32[]', space=smem, size = 0x4, offset = 0x4, fixed_abs, tag = 'smem constant byte address 0x4 - core index']
  #allocation1 [shape = 'u32[144,128]{1,0:T(1,128)}', space=vmem, size = 0x12000, scoped, tag = 'internal scratch']
  %s0 = inlined_call_operand.vmem [shape: f32[2,18,18,32], index: 0, kind: input, shape index: {}]
  %s1 = inlined_call_operand.vmem [shape: bf16[9,32,128], index: 1, kind: input, shape index: {}]
  %s2 = inlined_call_operand.vmem [shape: f32[1,128], index: 2, kind: input, shape index: {}]
  %s3 = inlined_call_operand.vmem [shape: bf16[2,256,128], index: 3, kind: output, shape index: {}]
  %s4 = sld [smem:[#allocation0]]
  $region45: #{fem_and_gfam_forward.3} parent=0
    _
  %s6 = ssub.s32 1, %s4
  %s7 = scalar_select 0, %s6, %s4
  loop: start=0, step=1, limit=4
  $region2: #{fem_and_gfam_forward.3} parent=0 // loop_pre_header
    _
  $region3: #{fem_and_gfam_forward.3} parent=0 // loop_header
    %s9 = sphi 0, %s13
    %p10 = scmp.ge.s32.totalorder %s9, 4
    %s19 = sphi 0, %s21
    %s22 = sphi 0, %s19
    %s23 = sphi 0, %s22
    %s39 = sphi 0, %s23
    %s43 = sphi 0, %s43
    %s45 = sphi 0, %s43
    %s46 = sphi 0, %s45
    %s60 = sphi 0, %s46
    %s64 = sphi 0, %s64
    %s66 = sphi 0, %s64
    %s67 = sphi 0, %s66
    %s81 = sphi 0, %s67
    %s87 = sphi 0, %s89
    %s90 = sphi 0, %s87
    %s91 = sphi 0, %s90
    %s107 = sphi 0, %s91
  $region4: #{fem_and_gfam_forward.3} parent=0 // loop_header_branch
    %12 = sbr.rel (%p10) target = $region8
  $region5: #{fem_and_gfam_forward.3} parent=0 // loop_body
    %s14 = ssub.s32 %s9, 1
    %s15 = ssub.s32 %s9, 2
    %s16 = sadd.s32 %s9, 1
    %s17 = ssub.s32 %s9, %s16
    %p18 = scmp.eq.s32.totalorder %s17, 0
    %s20 = sadd.s32 %s19, 1
    %s21 = scalar_select %p18, %s19, %s20
    %p24 = pneg %p18
    %p25 = scmp.eq.s32.totalorder %s9, 1
    %p26 = por %p24, %p25
    %p27 = scmp.ne.s32.totalorder %s19, %s22
    %p28 = scmp.eq.s32.totalorder %s9, 0
    %p29 = por %p27, %p28
    %p30 = scmp.ne.s32.totalorder %s19, %s22
    %p31 = scmp.eq.s32.totalorder %s14, 1
    %p32 = por %p30, %p31
    %p33 = scmp.ne.s32.totalorder %s22, %s23
    %p34 = scmp.eq.s32.totalorder %s14, 0
    %p35 = por %p33, %p34
    %p36 = scmp.ne.s32.totalorder %s22, %s23
    %p37 = scmp.eq.s32.totalorder %s15, 1
    %p38 = por %p36, %p37
    %p40 = scmp.ne.s32.totalorder %s23, %s39
    %p41 = scmp.eq.s32.totalorder %s15, 0
    %p42 = por %p40, %p41
    %s44 = sadd.s32 %s43, 1
    %p47 = scmp.eq.s32.totalorder %s9, 1
    %p48 = scmp.ne.s32.totalorder %s43, %s45
    %p49 = scmp.eq.s32.totalorder %s9, 0
    %p50 = por %p48, %p49
    %p51 = scmp.ne.s32.totalorder %s43, %s45
    %p52 = scmp.eq.s32.totalorder %s14, 1
    %p53 = por %p51, %p52
    %p54 = scmp.ne.s32.totalorder %s45, %s46
    %p55 = scmp.eq.s32.totalorder %s14, 0
    %p56 = por %p54, %p55
    %p57 = scmp.ne.s32.totalorder %s45, %s46
    %p58 = scmp.eq.s32.totalorder %s15, 1
    %p59 = por %p57, %p58
    %p61 = scmp.ne.s32.totalorder %s46, %s60
    %p62 = scmp.eq.s32.totalorder %s15, 0
    %p63 = por %p61, %p62
    %s65 = sadd.s32 %s64, 1
    %p68 = scmp.eq.s32.totalorder %s9, 1
    %p69 = scmp.ne.s32.totalorder %s64, %s66
    %p70 = scmp.eq.s32.totalorder %s9, 0
    %p71 = por %p69, %p70
    %p72 = scmp.ne.s32.totalorder %s64, %s66
    %p73 = scmp.eq.s32.totalorder %s14, 1
    %p74 = por %p72, %p73
    %p75 = scmp.ne.s32.totalorder %s66, %s67
    %p76 = scmp.eq.s32.totalorder %s14, 0
    %p77 = por %p75, %p76
    %p78 = scmp.ne.s32.totalorder %s66, %s67
    %p79 = scmp.eq.s32.totalorder %s15, 1
    %p80 = por %p78, %p79
    %p82 = scmp.ne.s32.totalorder %s67, %s81
    %p83 = scmp.eq.s32.totalorder %s15, 0
    %p84 = por %p82, %p83
    %s85 = ssub.s32 %s9, %s16
    %p86 = scmp.eq.s32.totalorder %s85, 0
    %s88 = sadd.s32 %s87, 1
    %s89 = scalar_select %p86, %s87, %s88
    %p92 = pneg %p86
    %p93 = scmp.eq.s32.totalorder %s9, 1
    %p94 = por %p92, %p93
    %p95 = scmp.ne.s32.totalorder %s87, %s90
    %p96 = scmp.eq.s32.totalorder %s9, 0
    %p97 = por %p95, %p96
    %p98 = scmp.ne.s32.totalorder %s87, %s90
    %p99 = scmp.eq.s32.totalorder %s14, 1
    %p100 = por %p98, %p99
    %p101 = scmp.ne.s32.totalorder %s90, %s91
    %p102 = scmp.eq.s32.totalorder %s14, 0
    %p103 = por %p101, %p102
    %p104 = scmp.ne.s32.totalorder %s90, %s91
    %p105 = scmp.eq.s32.totalorder %s15, 1
    %p106 = por %p104, %p105
    %p108 = scmp.ne.s32.totalorder %s91, %s107
    %p109 = scmp.eq.s32.totalorder %s15, 0
    %p110 = por %p108, %p109
    %p111 = scmp.le.s32.totalorder 1, %s9
    %p112 = scmp.lt.s32.totalorder %s9, 3
    %p113 = pnand %p111, %p112
    %p114 = pneg %p113
    // Predicated region
    $region9: #{fem_and_gfam_forward.3} parent=5 // pred_check
      _
    $region10: #{fem_and_gfam_forward.3} parent=5 // pred_check_branch
      %116 = sbr.rel (%p113) target = $region12
    $region11: #{fem_and_gfam_forward.3} parent=5 // pred_region
      %s117 = ssub.s32 %s9, 1
      // Predicated region
      $region13: #{fem_and_gfam_forward.3} parent=11 // pred_check
        %p118 = pneg %p56
      $region14: #{fem_and_gfam_forward.3} parent=11 // pred_check_branch
        %120 = sbr.rel (%p118) target = $region16
      $region15: #{fem_and_gfam_forward.3} parent=11 // pred_region
        _
      $region16: #{fem_and_gfam_forward.3} parent=11 // pred_fallthru
        _
      // Predicated region
      $region17: #{fem_and_gfam_forward.3} parent=11 // pred_check
        %p121 = pneg %p77
      $region18: #{fem_and_gfam_forward.3} parent=11 // pred_check_branch
        %123 = sbr.rel (%p121) target = $region20
      $region19: #{fem_and_gfam_forward.3} parent=11 // pred_region
        _
      $region20: #{fem_and_gfam_forward.3} parent=11 // pred_fallthru
        _
    $region12: #{fem_and_gfam_forward.3} parent=5 // pred_fallthru
      _
    %p124 = scmp.lt.s32.totalorder %s9, 2
    // Predicated region
    $region21: #{fem_and_gfam_forward.3} parent=5 // pred_check
      %p125 = pneg %p124
    $region22: #{fem_and_gfam_forward.3} parent=5 // pred_check_branch
      %127 = sbr.rel (%p125) target = $region24
    $region23: #{fem_and_gfam_forward.3} parent=5 // pred_region
      // Predicated region
      $region25: #{fem_and_gfam_forward.3} parent=23 // pred_check
        %p128 = pneg %p29
      $region26: #{fem_and_gfam_forward.3} parent=23 // pred_check_branch
        %130 = sbr.rel (%p128) target = $region28
      $region27: #{fem_and_gfam_forward.3} parent=23 // pred_region
        %p131 = scmp.lt.s32.totalorder %s9, 1
        %s132 = scalar_select %p131, %s9, 1
        %s133 = smul.addr %s132, 54
        %s134 = smul.addr %s133, 8
        %s135 = scalar_lea.vmem %s0, %s134
      $region28: #{fem_and_gfam_forward.3} parent=23 // pred_fallthru
        _
    $region24: #{fem_and_gfam_forward.3} parent=5 // pred_fallthru
      _
    %p136 = scmp.le.s32.totalorder 1, %s9
    %p137 = scmp.lt.s32.totalorder %s9, 3
    %p138 = pnand %p136, %p137
    %p139 = pneg %p138
    // Predicated region
    $region29: #{fem_and_gfam_forward.3} parent=5 // pred_check
      _
    $region30: #{fem_and_gfam_forward.3} parent=5 // pred_check_branch
      %141 = sbr.rel (%p138) target = $region32
    $region31: #{fem_and_gfam_forward.3} parent=5 // pred_region
      %s142 = ssub.s32 %s9, 1
      %p143 = scmp.lt.s32.totalorder %s14, 1
      %s144 = scalar_select %p143, %s14, 1
      %s145 = smul.addr %s144, 54
      %s146 = smul.addr %s145, 8
      %s147 = scalar_lea.vmem %s0, %s146
      %p148 = pneg %p35
      %p149 = pneg %p32
      %p150 = pneg %p56
      %p151 = pneg %p53
      %p152 = pneg %p77
      %p153 = pneg %p74
      %p154 = pneg %p103
      %p155 = pneg %p100
      %p156 = scmp.lt.s32.totalorder %s14, 1
      %s157 = scalar_select %p156, %s14, 1
      %s158 = smul.addr %s157, 32
      %s159 = smul.addr %s158, 4
      %s160 = scalar_lea.vmem %s3, %s159
      %p161 = scmp.lt.s32.totalorder %s14, 1
      %s162 = scalar_select %p161, %s14, 1
      %s163 = smul.addr %s162, 54
      %s164 = smul.addr %s163, 8
      %s165 = scalar_lea.vmem %s0, %s164
      %p166 = scmp.lt.s32.totalorder %s14, 1
      %s167 = scalar_select %p166, %s14, 1
      %s168 = smul.addr %s167, 32
      %s169 = smul.addr %s168, 4
      %s170 = scalar_lea.vmem %s3, %s169
      %v172 = vld [vmem:[%s165] sm:$0xff]
      %v173 = vld [vmem:[%s165 + $0x8] sm:$0xff]
      %v174 = vld [vmem:[%s165 + $0x18] sm:$0xff]
      %v175 = vld [vmem:[%s165 + $0x20] sm:$0xff]
      %v176 = vld [vmem:[%s165 + $0x30] sm:$0xff]
      %v177 = vld [vmem:[%s165 + $0x38] sm:$0xff]
      %v178 = vld [vmem:[%s165 + $0x48] sm:$0xff]
      %v179 = vld [vmem:[%s165 + $0x50] sm:$0xff]
      %v180 = vld [vmem:[%s165 + $0x60] sm:$0xff]
      %v181 = vld [vmem:[%s165 + $0x68] sm:$0xff]
      %v182 = vld [vmem:[%s165 + $0x78] sm:$0xff]
      %v183 = vld [vmem:[%s165 + $0x80] sm:$0xff]
      %v184 = vld [vmem:[%s165 + $0x90] sm:$0xff]
      %v185 = vld [vmem:[%s165 + $0x98] sm:$0xff]
      %v186 = vld [vmem:[%s165 + $0xa8] sm:$0xff]
      %v187 = vld [vmem:[%s165 + $0xb0] sm:$0xff]
      %v188 = vld [vmem:[%s165 + $0xc0] sm:$0xff]
      %v189 = vld [vmem:[%s165 + $0xc8] sm:$0xff]
      %v190 = vld [vmem:[%s165 + $0xd8] sm:$0xff]
      %v191 = vld [vmem:[%s165 + $0xe0] sm:$0xff]
      %v192 = vld [vmem:[%s165 + $0xf0] sm:$0xff]
      %v193 = vld [vmem:[%s165 + $0xf8] sm:$0xff]
      %v194 = vld [vmem:[%s165 + $0x108] sm:$0xff]
      %v195 = vld [vmem:[%s165 + $0x110] sm:$0xff]
      %v196 = vld [vmem:[%s165 + $0x120] sm:$0xff]
      %v197 = vld [vmem:[%s165 + $0x128] sm:$0xff]
      %v198 = vld [vmem:[%s165 + $0x138] sm:$0xff]
      %v199 = vld [vmem:[%s165 + $0x140] sm:$0xff]
      %v200 = vld [vmem:[%s165 + $0x150] sm:$0xff]
      %v201 = vld [vmem:[%s165 + $0x158] sm:$0xff]
      %v202 = vld [vmem:[%s165 + $0x168] sm:$0xff]
      %v203 = vld [vmem:[%s165 + $0x170] sm:$0xff]
      %v204 = vpack.c.bf16 %v173, %v172
      %v205 = vpack.c.bf16 %v175, %v174
      %v206 = vpack.c.bf16 %v177, %v176
      %v207 = vpack.c.bf16 %v179, %v178
      %v208 = vpack.c.bf16 %v181, %v180
      %v209 = vpack.c.bf16 %v183, %v182
      %v210 = vpack.c.bf16 %v185, %v184
      %v211 = vpack.c.bf16 %v187, %v186
      %v212 = vpack.c.bf16 %v189, %v188
      %v213 = vpack.c.bf16 %v191, %v190
      %v214 = vpack.c.bf16 %v193, %v192
      %v215 = vpack.c.bf16 %v195, %v194
      %v216 = vpack.c.bf16 %v197, %v196
      %v217 = vpack.c.bf16 %v199, %v198
      %v218 = vpack.c.bf16 %v201, %v200
      %v219 = vpack.c.bf16 %v203, %v202
      %v220 = vld [vmem:[%s1] sm:$0xf]
      %v221 = vld [vmem:[%s1 + $0x4] sm:$0xf]
      %v222 = vld [vmem:[%s1 + $0x8] sm:$0xf]
      %v223 = vld [vmem:[%s1 + $0xc] sm:$0xf]
      %v224 = vld [vmem:[%s165 + $0x1] sm:$0xff]
      %v225 = vld [vmem:[%s165 + $0x9] sm:$0xff]
      %v226 = vld [vmem:[%s165 + $0x19] sm:$0xff]
      %v227 = vld [vmem:[%s165 + $0x21] sm:$0xff]
      %v228 = vld [vmem:[%s165 + $0x31] sm:$0xff]
      %v229 = vld [vmem:[%s165 + $0x39] sm:$0xff]
      %v230 = vld [vmem:[%s165 + $0x49] sm:$0xff]
      %v231 = vld [vmem:[%s165 + $0x51] sm:$0xff]
      %v232 = vld [vmem:[%s165 + $0x61] sm:$0xff]
      %v233 = vld [vmem:[%s165 + $0x69] sm:$0xff]
      %v234 = vld [vmem:[%s165 + $0x79] sm:$0xff]
      %v235 = vld [vmem:[%s165 + $0x81] sm:$0xff]
      %v236 = vld [vmem:[%s165 + $0x91] sm:$0xff]
      %v237 = vld [vmem:[%s165 + $0x99] sm:$0xff]
      %v238 = vld [vmem:[%s165 + $0xa9] sm:$0xff]
      %v239 = vld [vmem:[%s165 + $0xb1] sm:$0xff]
      %v240 = vld [vmem:[%s165 + $0xc1] sm:$0xff]
      %v241 = vld [vmem:[%s165 + $0xc9] sm:$0xff]
      %v242 = vld [vmem:[%s165 + $0xd9] sm:$0xff]
      %v243 = vld [vmem:[%s165 + $0xe1] sm:$0xff]
      %v244 = vld [vmem:[%s165 + $0xf1] sm:$0xff]
      %v245 = vld [vmem:[%s165 + $0xf9] sm:$0xff]
      %v246 = vld [vmem:[%s165 + $0x109] sm:$0xff]
      %v247 = vld [vmem:[%s165 + $0x111] sm:$0xff]
      %v248 = vld [vmem:[%s165 + $0x121] sm:$0xff]
      %v249 = vld [vmem:[%s165 + $0x129] sm:$0xff]
      %v250 = vld [vmem:[%s165 + $0x139] sm:$0xff]
      %v251 = vld [vmem:[%s165 + $0x141] sm:$0xff]
      %v252 = vld [vmem:[%s165 + $0x151] sm:$0xff]
      %v253 = vld [vmem:[%s165 + $0x159] sm:$0xff]
      %v254 = vld [vmem:[%s165 + $0x169] sm:$0xff]
      %v255 = vld [vmem:[%s165 + $0x171] sm:$0xff]
      %v256 = vpack.c.bf16 %v225, %v224
      %v257 = vpack.c.bf16 %v227, %v226
      %v258 = vpack.c.bf16 %v229, %v228
      %v259 = vpack.c.bf16 %v231, %v230
      %v260 = vpack.c.bf16 %v233, %v232
      %v261 = vpack.c.bf16 %v235, %v234
      %v262 = vpack.c.bf16 %v237, %v236
      %v263 = vpack.c.bf16 %v239, %v238
      %v264 = vpack.c.bf16 %v241, %v240
      %v265 = vpack.c.bf16 %v243, %v242
      %v266 = vpack.c.bf16 %v245, %v244
      %v267 = vpack.c.bf16 %v247, %v246
      %v268 = vpack.c.bf16 %v249, %v248
      %v269 = vpack.c.bf16 %v251, %v250
      %v270 = vpack.c.bf16 %v253, %v252
      %v271 = vpack.c.bf16 %v255, %v254
      %s272 = scalar_lea.vmem %s1, 16
      %v273 = vld [vmem:[%s272] sm:$0xf]
      %v274 = vld [vmem:[%s272 + $0x4] sm:$0xf]
      %v275 = vld [vmem:[%s272 + $0x8] sm:$0xf]
      %v276 = vld [vmem:[%s272 + $0xc] sm:$0xf]
      %v281 = vunpack.c.l.b16 %v273
      %v282 = vunpack.c.l.b16 %v274
      %v283 = vunpack.c.l.b16 %v275
      %v284 = vunpack.c.l.b16 %v276
      %v285 = vpack.c.b16 %v282, %v281
      %v286 = vpack.c.b16 %v284, %v283
      %vm289 = vcmask 261120
      %v291 = vsel %vm289, %v256, 0
      %v294 = vsel %vm289, %v257, 0
      %v297 = vsel %vm289, %v258, 0
      %v300 = vsel %vm289, %v259, 0
      %v303 = vsel %vm289, %v260, 0
      %v306 = vsel %vm289, %v261, 0
      %v309 = vsel %vm289, %v262, 0
      %v312 = vsel %vm289, %v263, 0
      %v315 = vsel %vm289, %v264, 0
      %v318 = vsel %vm289, %v265, 0
      %v321 = vsel %vm289, %v266, 0
      %v324 = vsel %vm289, %v267, 0
      %v327 = vsel %vm289, %v268, 0
      %v330 = vsel %vm289, %v269, 0
      %v333 = vsel %vm289, %v270, 0
      %v336 = vsel %vm289, %v271, 0
      %338 = vmatprep.subr.bf16.mxu0 0
      %339 = vmatpush1.bf16.msra.mxu0 0
      %340 = vmatprep.subr.bf16.mxu0 0
      %341 = vmatpush1.bf16.msra.mxu0 0
      %342 = vmatprep.subr.bf16.mxu0 0
      %343 = vmatpush1.bf16.msra.mxu0 0
      %344 = vmatprep.subr.bf16.mxu0 0
      %345 = vmatpush1.bf16.msra.mxu0 0
      %346 = vmatprep.subr.bf16.mxu0 0
      %347 = vmatpush1.bf16.msra.mxu0 0
      %348 = vmatprep.subr.bf16.mxu0 0
      %349 = vmatpush1.bf16.msra.mxu0 0
      %350 = vmatprep.subr.bf16.mxu0 0
      %351 = vmatpush1.bf16.msra.mxu0 %v286
      %352 = vmatprep.subr.bf16.mxu0 0
      %353 = vmatpush1.bf16.msra.mxu0 %v285
      %354 = vmatprep.subr.bf16.mxu0 0
      %355 = vmatpush2.bf16.msra.mxu0 0
      %356 = vmatprep.subr.bf16.mxu0 0
      %357 = vmatpush2.bf16.msra.mxu0 0
      %358 = vmatprep.subr.bf16.mxu0 0
      %359 = vmatpush2.bf16.msra.mxu0 0
      %360 = vmatprep.subr.bf16.mxu0 0
      %361 = vmatpush2.bf16.msra.mxu0 0
      %362 = vmatprep.subr.bf16.mxu0 0
      %363 = vmatpush2.bf16.msra.mxu0 0
      %364 = vmatprep.subr.bf16.mxu0 0
      %365 = vmatpush2.bf16.msra.mxu0 0
      %366 = vmatprep.subr.bf16.mxu0 0
      %367 = vmatpush2.bf16.msra.mxu0 0
      %368 = vmatprep.subr.bf16.mxu0 0
      %369 = vmatpush2.bf16.msra.mxu0 0
      %370 = vmatprep.mubr.bf16.mxu0 0
      %371 = vmatmul.mubr.bf16.gmra.mxu0 %v291
      %v372 = vpop.f32.mrf.mxu0
      %v373 = vadd.f32 0.0, %v372
      %v374 = vpop.f32.mrf.mxu0
      %v375 = vpop.f32.mrf.mxu0
      %v376 = vadd.f32 0.0, %v375
      %v377 = vpop.f32.mrf.mxu0
      %378 = vmatprep.mubr.bf16.mxu0 0
      %379 = vmatmul.mubr.bf16.gmra.mxu0 %v294
      %v380 = vpop.f32.mrf.mxu0
      %v381 = vadd.f32 0.0, %v380
      %v382 = vpop.f32.mrf.mxu0
      %v383 = vpop.f32.mrf.mxu0
      %v384 = vadd.f32 0.0, %v383
      %v385 = vpop.f32.mrf.mxu0
      %386 = vmatprep.mubr.bf16.mxu0 0
      %387 = vmatmul.mubr.bf16.gmra.mxu0 %v297
      %v388 = vpop.f32.mrf.mxu0
      %v389 = vadd.f32 0.0, %v388
      %v390 = vpop.f32.mrf.mxu0
      %v391 = vpop.f32.mrf.mxu0
      %v392 = vadd.f32 0.0, %v391
      %v393 = vpop.f32.mrf.mxu0
      %394 = vmatprep.mubr.bf16.mxu0 0
      %395 = vmatmul.mubr.bf16.gmra.mxu0 %v300
      %v396 = vpop.f32.mrf.mxu0
      %v397 = vadd.f32 0.0, %v396
      %v398 = vpop.f32.mrf.mxu0
      %v399 = vpop.f32.mrf.mxu0
      %v400 = vadd.f32 0.0, %v399
      %v401 = vpop.f32.mrf.mxu0
      %402 = vmatprep.mubr.bf16.mxu0 0
      %403 = vmatmul.mubr.bf16.gmra.mxu0 %v303
      %v404 = vpop.f32.mrf.mxu0
      %v405 = vadd.f32 0.0, %v404
      %v406 = vpop.f32.mrf.mxu0
      %v407 = vpop.f32.mrf.mxu0
      %v408 = vadd.f32 0.0, %v407
      %v409 = vpop.f32.mrf.mxu0
      %410 = vmatprep.mubr.bf16.mxu0 0
      %411 = vmatmul.mubr.bf16.gmra.mxu0 %v306
      %v412 = vpop.f32.mrf.mxu0
      %v413 = vadd.f32 0.0, %v412
      %v414 = vpop.f32.mrf.mxu0
      %v415 = vpop.f32.mrf.mxu0
      %v416 = vadd.f32 0.0, %v415
      %v417 = vpop.f32.mrf.mxu0
      %418 = vmatprep.mubr.bf16.mxu0 0
      %419 = vmatmul.mubr.bf16.gmra.mxu0 %v309
      %v420 = vpop.f32.mrf.mxu0
      %v421 = vadd.f32 0.0, %v420
      %v422 = vpop.f32.mrf.mxu0
      %v423 = vpop.f32.mrf.mxu0
      %v424 = vadd.f32 0.0, %v423
      %v425 = vpop.f32.mrf.mxu0
      %426 = vmatprep.mubr.bf16.mxu0 0
      %427 = vmatmul.mubr.bf16.gmra.mxu0 %v312
      %v428 = vpop.f32.mrf.mxu0
      %v429 = vadd.f32 0.0, %v428
      %v430 = vpop.f32.mrf.mxu0
      %v431 = vpop.f32.mrf.mxu0
      %v432 = vadd.f32 0.0, %v431
      %v433 = vpop.f32.mrf.mxu0
      %434 = vmatprep.mubr.bf16.mxu0 0
      %435 = vmatmul.mubr.bf16.gmra.mxu0 %v315
      %v436 = vpop.f32.mrf.mxu0
      %v437 = vadd.f32 0.0, %v436
      %v438 = vpop.f32.mrf.mxu0
      %v439 = vpop.f32.mrf.mxu0
      %v440 = vadd.f32 0.0, %v439
      %v441 = vpop.f32.mrf.mxu0
      %442 = vmatprep.mubr.bf16.mxu0 0
      %443 = vmatmul.mubr.bf16.gmra.mxu0 %v318
      %v444 = vpop.f32.mrf.mxu0
      %v445 = vadd.f32 0.0, %v444
      %v446 = vpop.f32.mrf.mxu0
      %v447 = vpop.f32.mrf.mxu0
      %v448 = vadd.f32 0.0, %v447
      %v449 = vpop.f32.mrf.mxu0
      %450 = vmatprep.mubr.bf16.mxu0 0
      %451 = vmatmul.mubr.bf16.gmra.mxu0 %v321
      %v452 = vpop.f32.mrf.mxu0
      %v453 = vadd.f32 0.0, %v452
      %v454 = vpop.f32.mrf.mxu0
      %v455 = vpop.f32.mrf.mxu0
      %v456 = vadd.f32 0.0, %v455
      %v457 = vpop.f32.mrf.mxu0
      %458 = vmatprep.mubr.bf16.mxu0 0
      %459 = vmatmul.mubr.bf16.gmra.mxu0 %v324
      %v460 = vpop.f32.mrf.mxu0
      %v461 = vadd.f32 0.0, %v460
      %v462 = vpop.f32.mrf.mxu0
      %v463 = vpop.f32.mrf.mxu0
      %v464 = vadd.f32 0.0, %v463
      %v465 = vpop.f32.mrf.mxu0
      %466 = vmatprep.mubr.bf16.mxu0 0
      %467 = vmatmul.mubr.bf16.gmra.mxu0 %v327
      %v468 = vpop.f32.mrf.mxu0
      %v469 = vadd.f32 0.0, %v468
      %v470 = vpop.f32.mrf.mxu0
      %v471 = vpop.f32.mrf.mxu0
      %v472 = vadd.f32 0.0, %v471
      %v473 = vpop.f32.mrf.mxu0
      %474 = vmatprep.mubr.bf16.mxu0 0
      %475 = vmatmul.mubr.bf16.gmra.mxu0 %v330
      %v476 = vpop.f32.mrf.mxu0
      %v477 = vadd.f32 0.0, %v476
      %v478 = vpop.f32.mrf.mxu0
      %v479 = vpop.f32.mrf.mxu0
      %v480 = vadd.f32 0.0, %v479
      %v481 = vpop.f32.mrf.mxu0
      %482 = vmatprep.mubr.bf16.mxu0 0
      %483 = vmatmul.mubr.bf16.gmra.mxu0 %v333
      %v484 = vpop.f32.mrf.mxu0
      %v485 = vadd.f32 0.0, %v484
      %v486 = vpop.f32.mrf.mxu0
      %v487 = vpop.f32.mrf.mxu0
      %v488 = vadd.f32 0.0, %v487
      %v489 = vpop.f32.mrf.mxu0
      %490 = vmatprep.mubr.bf16.mxu0 0
      %491 = vmatmul.mubr.bf16.gmra.mxu0 %v336
      %v492 = vpop.f32.mrf.mxu0
      %v493 = vadd.f32 0.0, %v492
      %v494 = vpop.f32.mrf.mxu0
      %v495 = vpop.f32.mrf.mxu0
      %v496 = vadd.f32 0.0, %v495
      %v497 = vpop.f32.mrf.mxu0
      %498 = vdwg.mxu0
      %v503 = vunpack.c.l.b16 %v220
      %v504 = vunpack.c.l.b16 %v221
      %v505 = vunpack.c.l.b16 %v222
      %v506 = vunpack.c.l.b16 %v223
      %v507 = vpack.c.b16 %v504, %v503
      %v508 = vpack.c.b16 %v506, %v505
      %v512 = vsel %vm289, %v204, 0
      %v515 = vsel %vm289, %v205, 0
      %v518 = vsel %vm289, %v206, 0
      %v521 = vsel %vm289, %v207, 0
      %v524 = vsel %vm289, %v208, 0
      %v527 = vsel %vm289, %v209, 0
      %v530 = vsel %vm289, %v210, 0
      %v533 = vsel %vm289, %v211, 0
      %v536 = vsel %vm289, %v212, 0
      %v539 = vsel %vm289, %v213, 0
      %v542 = vsel %vm289, %v214, 0
      %v545 = vsel %vm289, %v215, 0
      %v548 = vsel %vm289, %v216, 0
      %v551 = vsel %vm289, %v217, 0
      %v554 = vsel %vm289, %v218, 0
      %v557 = vsel %vm289, %v219, 0
      %559 = vmatprep.subr.bf16.mxu0 0
      %560 = vmatpush1.bf16.msra.mxu0 0
      %561 = vmatprep.subr.bf16.mxu0 0
      %562 = vmatpush1.bf16.msra.mxu0 0
      %563 = vmatprep.subr.bf16.mxu0 0
      %564 = vmatpush1.bf16.msra.mxu0 0
      %565 = vmatprep.subr.bf16.mxu0 0
      %566 = vmatpush1.bf16.msra.mxu0 0
      %567 = vmatprep.subr.bf16.mxu0 0
      %568 = vmatpush1.bf16.msra.mxu0 0
      %569 = vmatprep.subr.bf16.mxu0 0
      %570 = vmatpush1.bf16.msra.mxu0 0
      %571 = vmatprep.subr.bf16.mxu0 0
      %572 = vmatpush1.bf16.msra.mxu0 %v508
      %573 = vmatprep.subr.bf16.mxu0 0
      %574 = vmatpush1.bf16.msra.mxu0 %v507
      %575 = vmatprep.subr.bf16.mxu0 0
      %576 = vmatpush2.bf16.msra.mxu0 0
      %577 = vmatprep.subr.bf16.mxu0 0
      %578 = vmatpush2.bf16.msra.mxu0 0
      %579 = vmatprep.subr.bf16.mxu0 0
      %580 = vmatpush2.bf16.msra.mxu0 0
      %581 = vmatprep.subr.bf16.mxu0 0
      %582 = vmatpush2.bf16.msra.mxu0 0
      %583 = vmatprep.subr.bf16.mxu0 0
      %584 = vmatpush2.bf16.msra.mxu0 0
      %585 = vmatprep.subr.bf16.mxu0 0
      %586 = vmatpush2.bf16.msra.mxu0 0
      %587 = vmatprep.subr.bf16.mxu0 0
      %588 = vmatpush2.bf16.msra.mxu0 0
      %589 = vmatprep.subr.bf16.mxu0 0
      %590 = vmatpush2.bf16.msra.mxu0 0
      %591 = vmatprep.mubr.bf16.mxu0 0
      %592 = vmatmul.mubr.bf16.gmra.mxu0 %v512
      %v593 = vpop.f32.mrf.mxu0
      %v594 = vadd.f32 %v373, %v593
      %v595 = vpop.f32.mrf.mxu0
      %v596 = vpop.f32.mrf.mxu0
      %v597 = vadd.f32 %v376, %v596
      %v598 = vpop.f32.mrf.mxu0
      %599 = vmatprep.mubr.bf16.mxu0 0
      %600 = vmatmul.mubr.bf16.gmra.mxu0 %v515
      %v601 = vpop.f32.mrf.mxu0
      %v602 = vadd.f32 %v381, %v601
      %v603 = vpop.f32.mrf.mxu0
      %v604 = vpop.f32.mrf.mxu0
      %v605 = vadd.f32 %v384, %v604
      %v606 = vpop.f32.mrf.mxu0
      %607 = vmatprep.mubr.bf16.mxu0 0
      %608 = vmatmul.mubr.bf16.gmra.mxu0 %v518
      %v609 = vpop.f32.mrf.mxu0
      %v610 = vadd.f32 %v389, %v609
      %v611 = vpop.f32.mrf.mxu0
      %v612 = vpop.f32.mrf.mxu0
      %v613 = vadd.f32 %v392, %v612
      %v614 = vpop.f32.mrf.mxu0
      %615 = vmatprep.mubr.bf16.mxu0 0
      %616 = vmatmul.mubr.bf16.gmra.mxu0 %v521
      %v617 = vpop.f32.mrf.mxu0
      %v618 = vadd.f32 %v397, %v617
      %v619 = vpop.f32.mrf.mxu0
      %v620 = vpop.f32.mrf.mxu0
      %v621 = vadd.f32 %v400, %v620
      %v622 = vpop.f32.mrf.mxu0
      %623 = vmatprep.mubr.bf16.mxu0 0
      %624 = vmatmul.mubr.bf16.gmra.mxu0 %v524
      %v625 = vpop.f32.mrf.mxu0
      %v626 = vadd.f32 %v405, %v625
      %v627 = vpop.f32.mrf.mxu0
      %v628 = vpop.f32.mrf.mxu0
      %v629 = vadd.f32 %v408, %v628
      %v630 = vpop.f32.mrf.mxu0
      %631 = vmatprep.mubr.bf16.mxu0 0
      %632 = vmatmul.mubr.bf16.gmra.mxu0 %v527
      %v633 = vpop.f32.mrf.mxu0
      %v634 = vadd.f32 %v413, %v633
      %v635 = vpop.f32.mrf.mxu0
      %v636 = vpop.f32.mrf.mxu0
      %v637 = vadd.f32 %v416, %v636
      %v638 = vpop.f32.mrf.mxu0
      %639 = vmatprep.mubr.bf16.mxu0 0
      %640 = vmatmul.mubr.bf16.gmra.mxu0 %v530
      %v641 = vpop.f32.mrf.mxu0
      %v642 = vadd.f32 %v421, %v641
      %v643 = vpop.f32.mrf.mxu0
      %v644 = vpop.f32.mrf.mxu0
      %v645 = vadd.f32 %v424, %v644
      %v646 = vpop.f32.mrf.mxu0
      %647 = vmatprep.mubr.bf16.mxu0 0
      %648 = vmatmul.mubr.bf16.gmra.mxu0 %v533
      %v649 = vpop.f32.mrf.mxu0
      %v650 = vadd.f32 %v429, %v649
      %v651 = vpop.f32.mrf.mxu0
      %v652 = vpop.f32.mrf.mxu0
      %v653 = vadd.f32 %v432, %v652
      %v654 = vpop.f32.mrf.mxu0
      %655 = vmatprep.mubr.bf16.mxu0 0
      %656 = vmatmul.mubr.bf16.gmra.mxu0 %v536
      %v657 = vpop.f32.mrf.mxu0
      %v658 = vadd.f32 %v437, %v657
      %v659 = vpop.f32.mrf.mxu0
      %v660 = vpop.f32.mrf.mxu0
      %v661 = vadd.f32 %v440, %v660
      %v662 = vpop.f32.mrf.mxu0
      %663 = vmatprep.mubr.bf16.mxu0 0
      %664 = vmatmul.mubr.bf16.gmra.mxu0 %v539
      %v665 = vpop.f32.mrf.mxu0
      %v666 = vadd.f32 %v445, %v665
      %v667 = vpop.f32.mrf.mxu0
      %v668 = vpop.f32.mrf.mxu0
      %v669 = vadd.f32 %v448, %v668
      %v670 = vpop.f32.mrf.mxu0
      %671 = vmatprep.mubr.bf16.mxu0 0
      %672 = vmatmul.mubr.bf16.gmra.mxu0 %v542
      %v673 = vpop.f32.mrf.mxu0
      %v674 = vadd.f32 %v453, %v673
      %v675 = vpop.f32.mrf.mxu0
      %v676 = vpop.f32.mrf.mxu0
      %v677 = vadd.f32 %v456, %v676
      %v678 = vpop.f32.mrf.mxu0
      %679 = vmatprep.mubr.bf16.mxu0 0
      %680 = vmatmul.mubr.bf16.gmra.mxu0 %v545
      %v681 = vpop.f32.mrf.mxu0
      %v682 = vadd.f32 %v461, %v681
      %v683 = vpop.f32.mrf.mxu0
      %v684 = vpop.f32.mrf.mxu0
      %v685 = vadd.f32 %v464, %v684
      %v686 = vpop.f32.mrf.mxu0
      %687 = vmatprep.mubr.bf16.mxu0 0
      %688 = vmatmul.mubr.bf16.gmra.mxu0 %v548
      %v689 = vpop.f32.mrf.mxu0
      %v690 = vadd.f32 %v469, %v689
      %v691 = vpop.f32.mrf.mxu0
      %v692 = vpop.f32.mrf.mxu0
      %v693 = vadd.f32 %v472, %v692
      %v694 = vpop.f32.mrf.mxu0
      %695 = vmatprep.mubr.bf16.mxu0 0
      %696 = vmatmul.mubr.bf16.gmra.mxu0 %v551
      %v697 = vpop.f32.mrf.mxu0
      %v698 = vadd.f32 %v477, %v697
      %v699 = vpop.f32.mrf.mxu0
      %v700 = vpop.f32.mrf.mxu0
      %v701 = vadd.f32 %v480, %v700
      %v702 = vpop.f32.mrf.mxu0
      %703 = vmatprep.mubr.bf16.mxu0 0
      %704 = vmatmul.mubr.bf16.gmra.mxu0 %v554
      %v705 = vpop.f32.mrf.mxu0
      %v706 = vadd.f32 %v485, %v705
      %v707 = vpop.f32.mrf.mxu0
      %v708 = vpop.f32.mrf.mxu0
      %v709 = vadd.f32 %v488, %v708
      %v710 = vpop.f32.mrf.mxu0
      %711 = vmatprep.mubr.bf16.mxu0 0
      %712 = vmatmul.mubr.bf16.gmra.mxu0 %v557
      %v713 = vpop.f32.mrf.mxu0
      %v714 = vadd.f32 %v493, %v713
      %v715 = vpop.f32.mrf.mxu0
      %v716 = vpop.f32.mrf.mxu0
      %v717 = vadd.f32 %v496, %v716
      %v718 = vpop.f32.mrf.mxu0
      %719 = vdwg.mxu0
      %v720 = vld [vmem:[%s165 + $0x2] sm:$0xff]
      %v721 = vld [vmem:[%s165 + $0xa] sm:$0xff]
      %v722 = vld [vmem:[%s165 + $0x1a] sm:$0xff]
      %v723 = vld [vmem:[%s165 + $0x22] sm:$0xff]
      %v724 = vld [vmem:[%s165 + $0x32] sm:$0xff]
      %v725 = vld [vmem:[%s165 + $0x3a] sm:$0xff]
      %v726 = vld [vmem:[%s165 + $0x4a] sm:$0xff]
      %v727 = vld [vmem:[%s165 + $0x52] sm:$0xff]
      %v728 = vld [vmem:[%s165 + $0x62] sm:$0xff]
      %v729 = vld [vmem:[%s165 + $0x6a] sm:$0xff]
      %v730 = vld [vmem:[%s165 + $0x7a] sm:$0xff]
      %v731 = vld [vmem:[%s165 + $0x82] sm:$0xff]
      %v732 = vld [vmem:[%s165 + $0x92] sm:$0xff]
      %v733 = vld [vmem:[%s165 + $0x9a] sm:$0xff]
      %v734 = vld [vmem:[%s165 + $0xaa] sm:$0xff]
      %v735 = vld [vmem:[%s165 + $0xb2] sm:$0xff]
      %v736 = vld [vmem:[%s165 + $0xc2] sm:$0xff]
      %v737 = vld [vmem:[%s165 + $0xca] sm:$0xff]
      %v738 = vld [vmem:[%s165 + $0xda] sm:$0xff]
      %v739 = vld [vmem:[%s165 + $0xe2] sm:$0xff]
      %v740 = vld [vmem:[%s165 + $0xf2] sm:$0xff]
      %v741 = vld [vmem:[%s165 + $0xfa] sm:$0xff]
      %v742 = vld [vmem:[%s165 + $0x10a] sm:$0xff]
      %v743 = vld [vmem:[%s165 + $0x112] sm:$0xff]
      %v744 = vld [vmem:[%s165 + $0x122] sm:$0xff]
      %v745 = vld [vmem:[%s165 + $0x12a] sm:$0xff]
      %v746 = vld [vmem:[%s165 + $0x13a] sm:$0xff]
      %v747 = vld [vmem:[%s165 + $0x142] sm:$0xff]
      %v748 = vld [vmem:[%s165 + $0x152] sm:$0xff]
      %v749 = vld [vmem:[%s165 + $0x15a] sm:$0xff]
      %v750 = vld [vmem:[%s165 + $0x16a] sm:$0xff]
      %v751 = vld [vmem:[%s165 + $0x172] sm:$0xff]
      %v752 = vpack.c.bf16 %v721, %v720
      %v753 = vpack.c.bf16 %v723, %v722
      %v754 = vpack.c.bf16 %v725, %v724
      %v755 = vpack.c.bf16 %v727, %v726
      %v756 = vpack.c.bf16 %v729, %v728
      %v757 = vpack.c.bf16 %v731, %v730
      %v758 = vpack.c.bf16 %v733, %v732
      %v759 = vpack.c.bf16 %v735, %v734
      %v760 = vpack.c.bf16 %v737, %v736
      %v761 = vpack.c.bf16 %v739, %v738
      %v762 = vpack.c.bf16 %v741, %v740
      %v763 = vpack.c.bf16 %v743, %v742
      %v764 = vpack.c.bf16 %v745, %v744
      %v765 = vpack.c.bf16 %v747, %v746
      %v766 = vpack.c.bf16 %v749, %v748
      %v767 = vpack.c.bf16 %v751, %v750
      %s768 = scalar_lea.vmem %s1, 32
      %v769 = vld [vmem:[%s768] sm:$0xf]
      %v770 = vld [vmem:[%s768 + $0x4] sm:$0xf]
      %v771 = vld [vmem:[%s768 + $0x8] sm:$0xf]
      %v772 = vld [vmem:[%s768 + $0xc] sm:$0xf]
      %v777 = vunpack.c.l.b16 %v769
      %v778 = vunpack.c.l.b16 %v770
      %v779 = vunpack.c.l.b16 %v771
      %v780 = vunpack.c.l.b16 %v772
      %v781 = vpack.c.b16 %v778, %v777
      %v782 = vpack.c.b16 %v780, %v779
      %v786 = vsel %vm289, %v752, 0
      %v789 = vsel %vm289, %v753, 0
      %v792 = vsel %vm289, %v754, 0
      %v795 = vsel %vm289, %v755, 0
      %v798 = vsel %vm289, %v756, 0
      %v801 = vsel %vm289, %v757, 0
      %v804 = vsel %vm289, %v758, 0
      %v807 = vsel %vm289, %v759, 0
      %v810 = vsel %vm289, %v760, 0
      %v813 = vsel %vm289, %v761, 0
      %v816 = vsel %vm289, %v762, 0
      %v819 = vsel %vm289, %v763, 0
      %v822 = vsel %vm289, %v764, 0
      %v825 = vsel %vm289, %v765, 0
      %v828 = vsel %vm289, %v766, 0
      %v831 = vsel %vm289, %v767, 0
      %833 = vmatprep.subr.bf16.mxu0 0
      %834 = vmatpush1.bf16.msra.mxu0 0
      %835 = vmatprep.subr.bf16.mxu0 0
      %836 = vmatpush1.bf16.msra.mxu0 0
      %837 = vmatprep.subr.bf16.mxu0 0
      %838 = vmatpush1.bf16.msra.mxu0 0
      %839 = vmatprep.subr.bf16.mxu0 0
      %840 = vmatpush1.bf16.msra.mxu0 0
      %841 = vmatprep.subr.bf16.mxu0 0
      %842 = vmatpush1.bf16.msra.mxu0 0
      %843 = vmatprep.subr.bf16.mxu0 0
      %844 = vmatpush1.bf16.msra.mxu0 0
      %845 = vmatprep.subr.bf16.mxu0 0
      %846 = vmatpush1.bf16.msra.mxu0 %v782
      %847 = vmatprep.subr.bf16.mxu0 0
      %848 = vmatpush1.bf16.msra.mxu0 %v781
      %849 = vmatprep.subr.bf16.mxu0 0
      %850 = vmatpush2.bf16.msra.mxu0 0
      %851 = vmatprep.subr.bf16.mxu0 0
      %852 = vmatpush2.bf16.msra.mxu0 0
      %853 = vmatprep.subr.bf16.mxu0 0
      %854 = vmatpush2.bf16.msra.mxu0 0
      %855 = vmatprep.subr.bf16.mxu0 0
      %856 = vmatpush2.bf16.msra.mxu0 0
      %857 = vmatprep.subr.bf16.mxu0 0
      %858 = vmatpush2.bf16.msra.mxu0 0
      %859 = vmatprep.subr.bf16.mxu0 0
      %860 = vmatpush2.bf16.msra.mxu0 0
      %861 = vmatprep.subr.bf16.mxu0 0
      %862 = vmatpush2.bf16.msra.mxu0 0
      %863 = vmatprep.subr.bf16.mxu0 0
      %864 = vmatpush2.bf16.msra.mxu0 0
      %865 = vmatprep.mubr.bf16.mxu0 0
      %866 = vmatmul.mubr.bf16.gmra.mxu0 %v786
      %v867 = vpop.f32.mrf.mxu0
      %v868 = vadd.f32 0.0, %v867
      %v869 = vpop.f32.mrf.mxu0
      %v870 = vpop.f32.mrf.mxu0
      %v871 = vadd.f32 0.0, %v870
      %v872 = vpop.f32.mrf.mxu0
      %873 = vmatprep.mubr.bf16.mxu0 0
      %874 = vmatmul.mubr.bf16.gmra.mxu0 %v789
      %v875 = vpop.f32.mrf.mxu0
      %v876 = vadd.f32 0.0, %v875
      %v877 = vpop.f32.mrf.mxu0
      %v878 = vpop.f32.mrf.mxu0
      %v879 = vadd.f32 0.0, %v878
      %v880 = vpop.f32.mrf.mxu0
      %881 = vmatprep.mubr.bf16.mxu0 0
      %882 = vmatmul.mubr.bf16.gmra.mxu0 %v792
      %v883 = vpop.f32.mrf.mxu0
      %v884 = vadd.f32 0.0, %v883
      %v885 = vpop.f32.mrf.mxu0
      %v886 = vpop.f32.mrf.mxu0
      %v887 = vadd.f32 0.0, %v886
      %v888 = vpop.f32.mrf.mxu0
      %889 = vmatprep.mubr.bf16.mxu0 0
      %890 = vmatmul.mubr.bf16.gmra.mxu0 %v795
      %v891 = vpop.f32.mrf.mxu0
      %v892 = vadd.f32 0.0, %v891
      %v893 = vpop.f32.mrf.mxu0
      %v894 = vpop.f32.mrf.mxu0
      %v895 = vadd.f32 0.0, %v894
      %v896 = vpop.f32.mrf.mxu0
      %897 = vmatprep.mubr.bf16.mxu0 0
      %898 = vmatmul.mubr.bf16.gmra.mxu0 %v798
      %v899 = vpop.f32.mrf.mxu0
      %v900 = vadd.f32 0.0, %v899
      %v901 = vpop.f32.mrf.mxu0
      %v902 = vpop.f32.mrf.mxu0
      %v903 = vadd.f32 0.0, %v902
      %v904 = vpop.f32.mrf.mxu0
      %905 = vmatprep.mubr.bf16.mxu0 0
      %906 = vmatmul.mubr.bf16.gmra.mxu0 %v801
      %v907 = vpop.f32.mrf.mxu0
      %v908 = vadd.f32 0.0, %v907
      %v909 = vpop.f32.mrf.mxu0
      %v910 = vpop.f32.mrf.mxu0
      %v911 = vadd.f32 0.0, %v910
      %v912 = vpop.f32.mrf.mxu0
      %913 = vmatprep.mubr.bf16.mxu0 0
      %914 = vmatmul.mubr.bf16.gmra.mxu0 %v804
      %v915 = vpop.f32.mrf.mxu0
      %v916 = vadd.f32 0.0, %v915
      %v917 = vpop.f32.mrf.mxu0
      %v918 = vpop.f32.mrf.mxu0
      %v919 = vadd.f32 0.0, %v918
      %v920 = vpop.f32.mrf.mxu0
      %921 = vmatprep.mubr.bf16.mxu0 0
      %922 = vmatmul.mubr.bf16.gmra.mxu0 %v807
      %v923 = vpop.f32.mrf.mxu0
      %v924 = vadd.f32 0.0, %v923
      %v925 = vpop.f32.mrf.mxu0
      %v926 = vpop.f32.mrf.mxu0
      %v927 = vadd.f32 0.0, %v926
      %v928 = vpop.f32.mrf.mxu0
      %929 = vmatprep.mubr.bf16.mxu0 0
      %930 = vmatmul.mubr.bf16.gmra.mxu0 %v810
      %v931 = vpop.f32.mrf.mxu0
      %v932 = vadd.f32 0.0, %v931
      %v933 = vpop.f32.mrf.mxu0
      %v934 = vpop.f32.mrf.mxu0
      %v935 = vadd.f32 0.0, %v934
      %v936 = vpop.f32.mrf.mxu0
      %937 = vmatprep.mubr.bf16.mxu0 0
      %938 = vmatmul.mubr.bf16.gmra.mxu0 %v813
      %v939 = vpop.f32.mrf.mxu0
      %v940 = vadd.f32 0.0, %v939
      %v941 = vpop.f32.mrf.mxu0
      %v942 = vpop.f32.mrf.mxu0
      %v943 = vadd.f32 0.0, %v942
      %v944 = vpop.f32.mrf.mxu0
      %945 = vmatprep.mubr.bf16.mxu0 0
      %946 = vmatmul.mubr.bf16.gmra.mxu0 %v816
      %v947 = vpop.f32.mrf.mxu0
      %v948 = vadd.f32 0.0, %v947
      %v949 = vpop.f32.mrf.mxu0
      %v950 = vpop.f32.mrf.mxu0
      %v951 = vadd.f32 0.0, %v950
      %v952 = vpop.f32.mrf.mxu0
      %953 = vmatprep.mubr.bf16.mxu0 0
      %954 = vmatmul.mubr.bf16.gmra.mxu0 %v819
      %v955 = vpop.f32.mrf.mxu0
      %v956 = vadd.f32 0.0, %v955
      %v957 = vpop.f32.mrf.mxu0
      %v958 = vpop.f32.mrf.mxu0
      %v959 = vadd.f32 0.0, %v958
      %v960 = vpop.f32.mrf.mxu0
      %961 = vmatprep.mubr.bf16.mxu0 0
      %962 = vmatmul.mubr.bf16.gmra.mxu0 %v822
      %v963 = vpop.f32.mrf.mxu0
      %v964 = vadd.f32 0.0, %v963
      %v965 = vpop.f32.mrf.mxu0
      %v966 = vpop.f32.mrf.mxu0
      %v967 = vadd.f32 0.0, %v966
      %v968 = vpop.f32.mrf.mxu0
      %969 = vmatprep.mubr.bf16.mxu0 0
      %970 = vmatmul.mubr.bf16.gmra.mxu0 %v825
      %v971 = vpop.f32.mrf.mxu0
      %v972 = vadd.f32 0.0, %v971
      %v973 = vpop.f32.mrf.mxu0
      %v974 = vpop.f32.mrf.mxu0
      %v975 = vadd.f32 0.0, %v974
      %v976 = vpop.f32.mrf.mxu0
      %977 = vmatprep.mubr.bf16.mxu0 0
      %978 = vmatmul.mubr.bf16.gmra.mxu0 %v828
      %v979 = vpop.f32.mrf.mxu0
      %v980 = vadd.f32 0.0, %v979
      %v981 = vpop.f32.mrf.mxu0
      %v982 = vpop.f32.mrf.mxu0
      %v983 = vadd.f32 0.0, %v982
      %v984 = vpop.f32.mrf.mxu0
      %985 = vmatprep.mubr.bf16.mxu0 0
      %986 = vmatmul.mubr.bf16.gmra.mxu0 %v831
      %v987 = vpop.f32.mrf.mxu0
      %v988 = vadd.f32 0.0, %v987
      %v989 = vpop.f32.mrf.mxu0
      %v990 = vpop.f32.mrf.mxu0
      %v991 = vadd.f32 0.0, %v990
      %v992 = vpop.f32.mrf.mxu0
      %993 = vdwg.mxu0
      %v994 = vadd.f32 %v594, %v868
      %v995 = vadd.f32 %v597, %v871
      %v996 = vadd.f32 %v602, %v876
      %v997 = vadd.f32 %v605, %v879
      %v998 = vadd.f32 %v610, %v884
      %v999 = vadd.f32 %v613, %v887
      %v1000 = vadd.f32 %v618, %v892
      %v1001 = vadd.f32 %v621, %v895
      %v1002 = vadd.f32 %v626, %v900
      %v1003 = vadd.f32 %v629, %v903
      %v1004 = vadd.f32 %v634, %v908
      %v1005 = vadd.f32 %v637, %v911
      %v1006 = vadd.f32 %v642, %v916
      %v1007 = vadd.f32 %v645, %v919
      %v1008 = vadd.f32 %v650, %v924
      %v1009 = vadd.f32 %v653, %v927
      %v1010 = vadd.f32 %v658, %v932
      %v1011 = vadd.f32 %v661, %v935
      %v1012 = vadd.f32 %v666, %v940
      %v1013 = vadd.f32 %v669, %v943
      %v1014 = vadd.f32 %v674, %v948
      %v1015 = vadd.f32 %v677, %v951
      %v1016 = vadd.f32 %v682, %v956
      %v1017 = vadd.f32 %v685, %v959
      %v1018 = vadd.f32 %v690, %v964
      %v1019 = vadd.f32 %v693, %v967
      %v1020 = vadd.f32 %v698, %v972
      %v1021 = vadd.f32 %v701, %v975
      %v1022 = vadd.f32 %v706, %v980
      %v1023 = vadd.f32 %v709, %v983
      %v1024 = vadd.f32 %v714, %v988
      %v1025 = vadd.f32 %v717, %v991
      %s1026 = scalar_lea.vmem %s165, 24
      %v1027 = vld [vmem:[%s1026] sm:$0xff]
      %v1028 = vld [vmem:[%s1026 + $0x8] sm:$0xff]
      %v1029 = vld [vmem:[%s1026 + $0x18] sm:$0xff]
      %v1030 = vld [vmem:[%s1026 + $0x20] sm:$0xff]
      %v1031 = vld [vmem:[%s1026 + $0x30] sm:$0xff]
      %v1032 = vld [vmem:[%s1026 + $0x38] sm:$0xff]
      %v1033 = vld [vmem:[%s1026 + $0x48] sm:$0xff]
      %v1034 = vld [vmem:[%s1026 + $0x50] sm:$0xff]
      %v1035 = vld [vmem:[%s1026 + $0x60] sm:$0xff]
      %v1036 = vld [vmem:[%s1026 + $0x68] sm:$0xff]
      %v1037 = vld [vmem:[%s1026 + $0x78] sm:$0xff]
      %v1038 = vld [vmem:[%s1026 + $0x80] sm:$0xff]
      %v1039 = vld [vmem:[%s1026 + $0x90] sm:$0xff]
      %v1040 = vld [vmem:[%s1026 + $0x98] sm:$0xff]
      %v1041 = vld [vmem:[%s1026 + $0xa8] sm:$0xff]
      %v1042 = vld [vmem:[%s1026 + $0xb0] sm:$0xff]
      %v1043 = vld [vmem:[%s1026 + $0xc0] sm:$0xff]
      %v1044 = vld [vmem:[%s1026 + $0xc8] sm:$0xff]
      %v1045 = vld [vmem:[%s1026 + $0xd8] sm:$0xff]
      %v1046 = vld [vmem:[%s1026 + $0xe0] sm:$0xff]
      %v1047 = vld [vmem:[%s1026 + $0xf0] sm:$0xff]
      %v1048 = vld [vmem:[%s1026 + $0xf8] sm:$0xff]
      %v1049 = vld [vmem:[%s1026 + $0x108] sm:$0xff]
      %v1050 = vld [vmem:[%s1026 + $0x110] sm:$0xff]
      %v1051 = vld [vmem:[%s1026 + $0x120] sm:$0xff]
      %v1052 = vld [vmem:[%s1026 + $0x128] sm:$0xff]
      %v1053 = vld [vmem:[%s1026 + $0x138] sm:$0xff]
      %v1054 = vld [vmem:[%s1026 + $0x140] sm:$0xff]
      %v1055 = vld [vmem:[%s1026 + $0x150] sm:$0xff]
      %v1056 = vld [vmem:[%s1026 + $0x158] sm:$0xff]
      %v1057 = vld [vmem:[%s1026 + $0x168] sm:$0xff]
      %v1058 = vld [vmem:[%s1026 + $0x170] sm:$0xff]
      %v1059 = vpack.c.bf16 %v1028, %v1027
      %v1060 = vpack.c.bf16 %v1030, %v1029
      %v1061 = vpack.c.bf16 %v1032, %v1031
      %v1062 = vpack.c.bf16 %v1034, %v1033
      %v1063 = vpack.c.bf16 %v1036, %v1035
      %v1064 = vpack.c.bf16 %v1038, %v1037
      %v1065 = vpack.c.bf16 %v1040, %v1039
      %v1066 = vpack.c.bf16 %v1042, %v1041
      %v1067 = vpack.c.bf16 %v1044, %v1043
      %v1068 = vpack.c.bf16 %v1046, %v1045
      %v1069 = vpack.c.bf16 %v1048, %v1047
      %v1070 = vpack.c.bf16 %v1050, %v1049
      %v1071 = vpack.c.bf16 %v1052, %v1051
      %v1072 = vpack.c.bf16 %v1054, %v1053
      %v1073 = vpack.c.bf16 %v1056, %v1055
      %v1074 = vpack.c.bf16 %v1058, %v1057
      %s1075 = scalar_lea.vmem %s1, 48
      %v1076 = vld [vmem:[%s1075] sm:$0xf]
      %v1077 = vld [vmem:[%s1075 + $0x4] sm:$0xf]
      %v1078 = vld [vmem:[%s1075 + $0x8] sm:$0xf]
      %v1079 = vld [vmem:[%s1075 + $0xc] sm:$0xf]
      %v1084 = vunpack.c.l.b16 %v1076
      %v1085 = vunpack.c.l.b16 %v1077
      %v1086 = vunpack.c.l.b16 %v1078
      %v1087 = vunpack.c.l.b16 %v1079
      %v1088 = vpack.c.b16 %v1085, %v1084
      %v1089 = vpack.c.b16 %v1087, %v1086
      %v1093 = vsel %vm289, %v1059, 0
      %v1096 = vsel %vm289, %v1060, 0
      %v1099 = vsel %vm289, %v1061, 0
      %v1102 = vsel %vm289, %v1062, 0
      %v1105 = vsel %vm289, %v1063, 0
      %v1108 = vsel %vm289, %v1064, 0
      %v1111 = vsel %vm289, %v1065, 0
      %v1114 = vsel %vm289, %v1066, 0
      %v1117 = vsel %vm289, %v1067, 0
      %v1120 = vsel %vm289, %v1068, 0
      %v1123 = vsel %vm289, %v1069, 0
      %v1126 = vsel %vm289, %v1070, 0
      %v1129 = vsel %vm289, %v1071, 0
      %v1132 = vsel %vm289, %v1072, 0
      %v1135 = vsel %vm289, %v1073, 0
      %v1138 = vsel %vm289, %v1074, 0
      %1140 = vmatprep.subr.bf16.mxu0 0
      %1141 = vmatpush1.bf16.msra.mxu0 0
      %1142 = vmatprep.subr.bf16.mxu0 0
      %1143 = vmatpush1.bf16.msra.mxu0 0
      %1144 = vmatprep.subr.bf16.mxu0 0
      %1145 = vmatpush1.bf16.msra.mxu0 0
      %1146 = vmatprep.subr.bf16.mxu0 0
      %1147 = vmatpush1.bf16.msra.mxu0 0
      %1148 = vmatprep.subr.bf16.mxu0 0
      %1149 = vmatpush1.bf16.msra.mxu0 0
      %1150 = vmatprep.subr.bf16.mxu0 0
      %1151 = vmatpush1.bf16.msra.mxu0 0
      %1152 = vmatprep.subr.bf16.mxu0 0
      %1153 = vmatpush1.bf16.msra.mxu0 %v1089
      %1154 = vmatprep.subr.bf16.mxu0 0
      %1155 = vmatpush1.bf16.msra.mxu0 %v1088
      %1156 = vmatprep.subr.bf16.mxu0 0
      %1157 = vmatpush2.bf16.msra.mxu0 0
      %1158 = vmatprep.subr.bf16.mxu0 0
      %1159 = vmatpush2.bf16.msra.mxu0 0
      %1160 = vmatprep.subr.bf16.mxu0 0
      %1161 = vmatpush2.bf16.msra.mxu0 0
      %1162 = vmatprep.subr.bf16.mxu0 0
      %1163 = vmatpush2.bf16.msra.mxu0 0
      %1164 = vmatprep.subr.bf16.mxu0 0
      %1165 = vmatpush2.bf16.msra.mxu0 0
      %1166 = vmatprep.subr.bf16.mxu0 0
      %1167 = vmatpush2.bf16.msra.mxu0 0
      %1168 = vmatprep.subr.bf16.mxu0 0
      %1169 = vmatpush2.bf16.msra.mxu0 0
      %1170 = vmatprep.subr.bf16.mxu0 0
      %1171 = vmatpush2.bf16.msra.mxu0 0
      %1172 = vmatprep.mubr.bf16.mxu0 0
      %1173 = vmatmul.mubr.bf16.gmra.mxu0 %v1093
      %v1174 = vpop.f32.mrf.mxu0
      %v1175 = vadd.f32 0.0, %v1174
      %v1176 = vpop.f32.mrf.mxu0
      %v1177 = vpop.f32.mrf.mxu0
      %v1178 = vadd.f32 0.0, %v1177
      %v1179 = vpop.f32.mrf.mxu0
      %1180 = vmatprep.mubr.bf16.mxu0 0
      %1181 = vmatmul.mubr.bf16.gmra.mxu0 %v1096
      %v1182 = vpop.f32.mrf.mxu0
      %v1183 = vadd.f32 0.0, %v1182
      %v1184 = vpop.f32.mrf.mxu0
      %v1185 = vpop.f32.mrf.mxu0
      %v1186 = vadd.f32 0.0, %v1185
      %v1187 = vpop.f32.mrf.mxu0
      %1188 = vmatprep.mubr.bf16.mxu0 0
      %1189 = vmatmul.mubr.bf16.gmra.mxu0 %v1099
      %v1190 = vpop.f32.mrf.mxu0
      %v1191 = vadd.f32 0.0, %v1190
      %v1192 = vpop.f32.mrf.mxu0
      %v1193 = vpop.f32.mrf.mxu0
      %v1194 = vadd.f32 0.0, %v1193
      %v1195 = vpop.f32.mrf.mxu0
      %1196 = vmatprep.mubr.bf16.mxu0 0
      %1197 = vmatmul.mubr.bf16.gmra.mxu0 %v1102
      %v1198 = vpop.f32.mrf.mxu0
      %v1199 = vadd.f32 0.0, %v1198
      %v1200 = vpop.f32.mrf.mxu0
      %v1201 = vpop.f32.mrf.mxu0
      %v1202 = vadd.f32 0.0, %v1201
      %v1203 = vpop.f32.mrf.mxu0
      %1204 = vmatprep.mubr.bf16.mxu0 0
      %1205 = vmatmul.mubr.bf16.gmra.mxu0 %v1105
      %v1206 = vpop.f32.mrf.mxu0
      %v1207 = vadd.f32 0.0, %v1206
      %v1208 = vpop.f32.mrf.mxu0
      %v1209 = vpop.f32.mrf.mxu0
      %v1210 = vadd.f32 0.0, %v1209
      %v1211 = vpop.f32.mrf.mxu0
      %1212 = vmatprep.mubr.bf16.mxu0 0
      %1213 = vmatmul.mubr.bf16.gmra.mxu0 %v1108
      %v1214 = vpop.f32.mrf.mxu0
      %v1215 = vadd.f32 0.0, %v1214
      %v1216 = vpop.f32.mrf.mxu0
      %v1217 = vpop.f32.mrf.mxu0
      %v1218 = vadd.f32 0.0, %v1217
      %v1219 = vpop.f32.mrf.mxu0
      %1220 = vmatprep.mubr.bf16.mxu0 0
      %1221 = vmatmul.mubr.bf16.gmra.mxu0 %v1111
      %v1222 = vpop.f32.mrf.mxu0
      %v1223 = vadd.f32 0.0, %v1222
      %v1224 = vpop.f32.mrf.mxu0
      %v1225 = vpop.f32.mrf.mxu0
      %v1226 = vadd.f32 0.0, %v1225
      %v1227 = vpop.f32.mrf.mxu0
      %1228 = vmatprep.mubr.bf16.mxu0 0
      %1229 = vmatmul.mubr.bf16.gmra.mxu0 %v1114
      %v1230 = vpop.f32.mrf.mxu0
      %v1231 = vadd.f32 0.0, %v1230
      %v1232 = vpop.f32.mrf.mxu0
      %v1233 = vpop.f32.mrf.mxu0
      %v1234 = vadd.f32 0.0, %v1233
      %v1235 = vpop.f32.mrf.mxu0
      %1236 = vmatprep.mubr.bf16.mxu0 0
      %1237 = vmatmul.mubr.bf16.gmra.mxu0 %v1117
      %v1238 = vpop.f32.mrf.mxu0
      %v1239 = vadd.f32 0.0, %v1238
      %v1240 = vpop.f32.mrf.mxu0
      %v1241 = vpop.f32.mrf.mxu0
      %v1242 = vadd.f32 0.0, %v1241
      %v1243 = vpop.f32.mrf.mxu0
      %1244 = vmatprep.mubr.bf16.mxu0 0
      %1245 = vmatmul.mubr.bf16.gmra.mxu0 %v1120
      %v1246 = vpop.f32.mrf.mxu0
      %v1247 = vadd.f32 0.0, %v1246
      %v1248 = vpop.f32.mrf.mxu0
      %v1249 = vpop.f32.mrf.mxu0
      %v1250 = vadd.f32 0.0, %v1249
      %v1251 = vpop.f32.mrf.mxu0
      %1252 = vmatprep.mubr.bf16.mxu0 0
      %1253 = vmatmul.mubr.bf16.gmra.mxu0 %v1123
      %v1254 = vpop.f32.mrf.mxu0
      %v1255 = vadd.f32 0.0, %v1254
      %v1256 = vpop.f32.mrf.mxu0
      %v1257 = vpop.f32.mrf.mxu0
      %v1258 = vadd.f32 0.0, %v1257
      %v1259 = vpop.f32.mrf.mxu0
      %1260 = vmatprep.mubr.bf16.mxu0 0
      %1261 = vmatmul.mubr.bf16.gmra.mxu0 %v1126
      %v1262 = vpop.f32.mrf.mxu0
      %v1263 = vadd.f32 0.0, %v1262
      %v1264 = vpop.f32.mrf.mxu0
      %v1265 = vpop.f32.mrf.mxu0
      %v1266 = vadd.f32 0.0, %v1265
      %v1267 = vpop.f32.mrf.mxu0
      %1268 = vmatprep.mubr.bf16.mxu0 0
      %1269 = vmatmul.mubr.bf16.gmra.mxu0 %v1129
      %v1270 = vpop.f32.mrf.mxu0
      %v1271 = vadd.f32 0.0, %v1270
      %v1272 = vpop.f32.mrf.mxu0
      %v1273 = vpop.f32.mrf.mxu0
      %v1274 = vadd.f32 0.0, %v1273
      %v1275 = vpop.f32.mrf.mxu0
      %1276 = vmatprep.mubr.bf16.mxu0 0
      %1277 = vmatmul.mubr.bf16.gmra.mxu0 %v1132
      %v1278 = vpop.f32.mrf.mxu0
      %v1279 = vadd.f32 0.0, %v1278
      %v1280 = vpop.f32.mrf.mxu0
      %v1281 = vpop.f32.mrf.mxu0
      %v1282 = vadd.f32 0.0, %v1281
      %v1283 = vpop.f32.mrf.mxu0
      %1284 = vmatprep.mubr.bf16.mxu0 0
      %1285 = vmatmul.mubr.bf16.gmra.mxu0 %v1135
      %v1286 = vpop.f32.mrf.mxu0
      %v1287 = vadd.f32 0.0, %v1286
      %v1288 = vpop.f32.mrf.mxu0
      %v1289 = vpop.f32.mrf.mxu0
      %v1290 = vadd.f32 0.0, %v1289
      %v1291 = vpop.f32.mrf.mxu0
      %1292 = vmatprep.mubr.bf16.mxu0 0
      %1293 = vmatmul.mubr.bf16.gmra.mxu0 %v1138
      %v1294 = vpop.f32.mrf.mxu0
      %v1295 = vadd.f32 0.0, %v1294
      %v1296 = vpop.f32.mrf.mxu0
      %v1297 = vpop.f32.mrf.mxu0
      %v1298 = vadd.f32 0.0, %v1297
      %v1299 = vpop.f32.mrf.mxu0
      %1300 = vdwg.mxu0
      %v1301 = vadd.f32 %v994, %v1175
      %v1302 = vadd.f32 %v995, %v1178
      %v1303 = vadd.f32 %v996, %v1183
      %v1304 = vadd.f32 %v997, %v1186
      %v1305 = vadd.f32 %v998, %v1191
      %v1306 = vadd.f32 %v999, %v1194
      %v1307 = vadd.f32 %v1000, %v1199
      %v1308 = vadd.f32 %v1001, %v1202
      %v1309 = vadd.f32 %v1002, %v1207
      %v1310 = vadd.f32 %v1003, %v1210
      %v1311 = vadd.f32 %v1004, %v1215
      %v1312 = vadd.f32 %v1005, %v1218
      %v1313 = vadd.f32 %v1006, %v1223
      %v1314 = vadd.f32 %v1007, %v1226
      %v1315 = vadd.f32 %v1008, %v1231
      %v1316 = vadd.f32 %v1009, %v1234
      %v1317 = vadd.f32 %v1010, %v1239
      %v1318 = vadd.f32 %v1011, %v1242
      %v1319 = vadd.f32 %v1012, %v1247
      %v1320 = vadd.f32 %v1013, %v1250
      %v1321 = vadd.f32 %v1014, %v1255
      %v1322 = vadd.f32 %v1015, %v1258
      %v1323 = vadd.f32 %v1016, %v1263
      %v1324 = vadd.f32 %v1017, %v1266
      %v1325 = vadd.f32 %v1018, %v1271
      %v1326 = vadd.f32 %v1019, %v1274
      %v1327 = vadd.f32 %v1020, %v1279
      %v1328 = vadd.f32 %v1021, %v1282
      %v1329 = vadd.f32 %v1022, %v1287
      %v1330 = vadd.f32 %v1023, %v1290
      %v1331 = vadd.f32 %v1024, %v1295
      %v1332 = vadd.f32 %v1025, %v1298
      %v1333 = vld [vmem:[%s1026 + $0x1] sm:$0xff]
      %v1334 = vld [vmem:[%s1026 + $0x9] sm:$0xff]
      %v1335 = vld [vmem:[%s1026 + $0x19] sm:$0xff]
      %v1336 = vld [vmem:[%s1026 + $0x21] sm:$0xff]
      %v1337 = vld [vmem:[%s1026 + $0x31] sm:$0xff]
      %v1338 = vld [vmem:[%s1026 + $0x39] sm:$0xff]
      %v1339 = vld [vmem:[%s1026 + $0x49] sm:$0xff]
      %v1340 = vld [vmem:[%s1026 + $0x51] sm:$0xff]
      %v1341 = vld [vmem:[%s1026 + $0x61] sm:$0xff]
      %v1342 = vld [vmem:[%s1026 + $0x69] sm:$0xff]
      %v1343 = vld [vmem:[%s1026 + $0x79] sm:$0xff]
      %v1344 = vld [vmem:[%s1026 + $0x81] sm:$0xff]
      %v1345 = vld [vmem:[%s1026 + $0x91] sm:$0xff]
      %v1346 = vld [vmem:[%s1026 + $0x99] sm:$0xff]
      %v1347 = vld [vmem:[%s1026 + $0xa9] sm:$0xff]
      %v1348 = vld [vmem:[%s1026 + $0xb1] sm:$0xff]
      %v1349 = vld [vmem:[%s1026 + $0xc1] sm:$0xff]
      %v1350 = vld [vmem:[%s1026 + $0xc9] sm:$0xff]
      %v1351 = vld [vmem:[%s1026 + $0xd9] sm:$0xff]
      %v1352 = vld [vmem:[%s1026 + $0xe1] sm:$0xff]
      %v1353 = vld [vmem:[%s1026 + $0xf1] sm:$0xff]
      %v1354 = vld [vmem:[%s1026 + $0xf9] sm:$0xff]
      %v1355 = vld [vmem:[%s1026 + $0x109] sm:$0xff]
      %v1356 = vld [vmem:[%s1026 + $0x111] sm:$0xff]
      %v1357 = vld [vmem:[%s1026 + $0x121] sm:$0xff]
      %v1358 = vld [vmem:[%s1026 + $0x129] sm:$0xff]
      %v1359 = vld [vmem:[%s1026 + $0x139] sm:$0xff]
      %v1360 = vld [vmem:[%s1026 + $0x141] sm:$0xff]
      %v1361 = vld [vmem:[%s1026 + $0x151] sm:$0xff]
      %v1362 = vld [vmem:[%s1026 + $0x159] sm:$0xff]
      %v1363 = vld [vmem:[%s1026 + $0x169] sm:$0xff]
      %v1364 = vld [vmem:[%s1026 + $0x171] sm:$0xff]
      %v1365 = vpack.c.bf16 %v1334, %v1333
      %v1366 = vpack.c.bf16 %v1336, %v1335
      %v1367 = vpack.c.bf16 %v1338, %v1337
      %v1368 = vpack.c.bf16 %v1340, %v1339
      %v1369 = vpack.c.bf16 %v1342, %v1341
      %v1370 = vpack.c.bf16 %v1344, %v1343
      %v1371 = vpack.c.bf16 %v1346, %v1345
      %v1372 = vpack.c.bf16 %v1348, %v1347
      %v1373 = vpack.c.bf16 %v1350, %v1349
      %v1374 = vpack.c.bf16 %v1352, %v1351
      %v1375 = vpack.c.bf16 %v1354, %v1353
      %v1376 = vpack.c.bf16 %v1356, %v1355
      %v1377 = vpack.c.bf16 %v1358, %v1357
      %v1378 = vpack.c.bf16 %v1360, %v1359
      %v1379 = vpack.c.bf16 %v1362, %v1361
      %v1380 = vpack.c.bf16 %v1364, %v1363
      %s1381 = scalar_lea.vmem %s1, 64
      %v1382 = vld [vmem:[%s1381] sm:$0xf]
      %v1383 = vld [vmem:[%s1381 + $0x4] sm:$0xf]
      %v1384 = vld [vmem:[%s1381 + $0x8] sm:$0xf]
      %v1385 = vld [vmem:[%s1381 + $0xc] sm:$0xf]
      %v1390 = vunpack.c.l.b16 %v1382
      %v1391 = vunpack.c.l.b16 %v1383
      %v1392 = vunpack.c.l.b16 %v1384
      %v1393 = vunpack.c.l.b16 %v1385
      %v1394 = vpack.c.b16 %v1391, %v1390
      %v1395 = vpack.c.b16 %v1393, %v1392
      %v1399 = vsel %vm289, %v1365, 0
      %v1402 = vsel %vm289, %v1366, 0
      %v1405 = vsel %vm289, %v1367, 0
      %v1408 = vsel %vm289, %v1368, 0
      %v1411 = vsel %vm289, %v1369, 0
      %v1414 = vsel %vm289, %v1370, 0
      %v1417 = vsel %vm289, %v1371, 0
      %v1420 = vsel %vm289, %v1372, 0
      %v1423 = vsel %vm289, %v1373, 0
      %v1426 = vsel %vm289, %v1374, 0
      %v1429 = vsel %vm289, %v1375, 0
      %v1432 = vsel %vm289, %v1376, 0
      %v1435 = vsel %vm289, %v1377, 0
      %v1438 = vsel %vm289, %v1378, 0
      %v1441 = vsel %vm289, %v1379, 0
      %v1444 = vsel %vm289, %v1380, 0
      %1446 = vmatprep.subr.bf16.mxu0 0
      %1447 = vmatpush1.bf16.msra.mxu0 0
      %1448 = vmatprep.subr.bf16.mxu0 0
      %1449 = vmatpush1.bf16.msra.mxu0 0
      %1450 = vmatprep.subr.bf16.mxu0 0
      %1451 = vmatpush1.bf16.msra.mxu0 0
      %1452 = vmatprep.subr.bf16.mxu0 0
      %1453 = vmatpush1.bf16.msra.mxu0 0
      %1454 = vmatprep.subr.bf16.mxu0 0
      %1455 = vmatpush1.bf16.msra.mxu0 0
      %1456 = vmatprep.subr.bf16.mxu0 0
      %1457 = vmatpush1.bf16.msra.mxu0 0
      %1458 = vmatprep.subr.bf16.mxu0 0
      %1459 = vmatpush1.bf16.msra.mxu0 %v1395
      %1460 = vmatprep.subr.bf16.mxu0 0
      %1461 = vmatpush1.bf16.msra.mxu0 %v1394
      %1462 = vmatprep.subr.bf16.mxu0 0
      %1463 = vmatpush2.bf16.msra.mxu0 0
      %1464 = vmatprep.subr.bf16.mxu0 0
      %1465 = vmatpush2.bf16.msra.mxu0 0
      %1466 = vmatprep.subr.bf16.mxu0 0
      %1467 = vmatpush2.bf16.msra.mxu0 0
      %1468 = vmatprep.subr.bf16.mxu0 0
      %1469 = vmatpush2.bf16.msra.mxu0 0
      %1470 = vmatprep.subr.bf16.mxu0 0
      %1471 = vmatpush2.bf16.msra.mxu0 0
      %1472 = vmatprep.subr.bf16.mxu0 0
      %1473 = vmatpush2.bf16.msra.mxu0 0
      %1474 = vmatprep.subr.bf16.mxu0 0
      %1475 = vmatpush2.bf16.msra.mxu0 0
      %1476 = vmatprep.subr.bf16.mxu0 0
      %1477 = vmatpush2.bf16.msra.mxu0 0
      %1478 = vmatprep.mubr.bf16.mxu0 0
      %1479 = vmatmul.mubr.bf16.gmra.mxu0 %v1399
      %v1480 = vpop.f32.mrf.mxu0
      %v1481 = vadd.f32 0.0, %v1480
      %v1482 = vpop.f32.mrf.mxu0
      %v1483 = vpop.f32.mrf.mxu0
      %v1484 = vadd.f32 0.0, %v1483
      %v1485 = vpop.f32.mrf.mxu0
      %1486 = vmatprep.mubr.bf16.mxu0 0
      %1487 = vmatmul.mubr.bf16.gmra.mxu0 %v1402
      %v1488 = vpop.f32.mrf.mxu0
      %v1489 = vadd.f32 0.0, %v1488
      %v1490 = vpop.f32.mrf.mxu0
      %v1491 = vpop.f32.mrf.mxu0
      %v1492 = vadd.f32 0.0, %v1491
      %v1493 = vpop.f32.mrf.mxu0
      %1494 = vmatprep.mubr.bf16.mxu0 0
      %1495 = vmatmul.mubr.bf16.gmra.mxu0 %v1405
      %v1496 = vpop.f32.mrf.mxu0
      %v1497 = vadd.f32 0.0, %v1496
      %v1498 = vpop.f32.mrf.mxu0
      %v1499 = vpop.f32.mrf.mxu0
      %v1500 = vadd.f32 0.0, %v1499
      %v1501 = vpop.f32.mrf.mxu0
      %1502 = vmatprep.mubr.bf16.mxu0 0
      %1503 = vmatmul.mubr.bf16.gmra.mxu0 %v1408
      %v1504 = vpop.f32.mrf.mxu0
      %v1505 = vadd.f32 0.0, %v1504
      %v1506 = vpop.f32.mrf.mxu0
      %v1507 = vpop.f32.mrf.mxu0
      %v1508 = vadd.f32 0.0, %v1507
      %v1509 = vpop.f32.mrf.mxu0
      %1510 = vmatprep.mubr.bf16.mxu0 0
      %1511 = vmatmul.mubr.bf16.gmra.mxu0 %v1411
      %v1512 = vpop.f32.mrf.mxu0
      %v1513 = vadd.f32 0.0, %v1512
      %v1514 = vpop.f32.mrf.mxu0
      %v1515 = vpop.f32.mrf.mxu0
      %v1516 = vadd.f32 0.0, %v1515
      %v1517 = vpop.f32.mrf.mxu0
      %1518 = vmatprep.mubr.bf16.mxu0 0
      %1519 = vmatmul.mubr.bf16.gmra.mxu0 %v1414
      %v1520 = vpop.f32.mrf.mxu0
      %v1521 = vadd.f32 0.0, %v1520
      %v1522 = vpop.f32.mrf.mxu0
      %v1523 = vpop.f32.mrf.mxu0
      %v1524 = vadd.f32 0.0, %v1523
      %v1525 = vpop.f32.mrf.mxu0
      %1526 = vmatprep.mubr.bf16.mxu0 0
      %1527 = vmatmul.mubr.bf16.gmra.mxu0 %v1417
      %v1528 = vpop.f32.mrf.mxu0
      %v1529 = vadd.f32 0.0, %v1528
      %v1530 = vpop.f32.mrf.mxu0
      %v1531 = vpop.f32.mrf.mxu0
      %v1532 = vadd.f32 0.0, %v1531
      %v1533 = vpop.f32.mrf.mxu0
      %1534 = vmatprep.mubr.bf16.mxu0 0
      %1535 = vmatmul.mubr.bf16.gmra.mxu0 %v1420
      %v1536 = vpop.f32.mrf.mxu0
      %v1537 = vadd.f32 0.0, %v1536
      %v1538 = vpop.f32.mrf.mxu0
      %v1539 = vpop.f32.mrf.mxu0
      %v1540 = vadd.f32 0.0, %v1539
      %v1541 = vpop.f32.mrf.mxu0
      %1542 = vmatprep.mubr.bf16.mxu0 0
      %1543 = vmatmul.mubr.bf16.gmra.mxu0 %v1423
      %v1544 = vpop.f32.mrf.mxu0
      %v1545 = vadd.f32 0.0, %v1544
      %v1546 = vpop.f32.mrf.mxu0
      %v1547 = vpop.f32.mrf.mxu0
      %v1548 = vadd.f32 0.0, %v1547
      %v1549 = vpop.f32.mrf.mxu0
      %1550 = vmatprep.mubr.bf16.mxu0 0
      %1551 = vmatmul.mubr.bf16.gmra.mxu0 %v1426
      %v1552 = vpop.f32.mrf.mxu0
      %v1553 = vadd.f32 0.0, %v1552
      %v1554 = vpop.f32.mrf.mxu0
      %v1555 = vpop.f32.mrf.mxu0
      %v1556 = vadd.f32 0.0, %v1555
      %v1557 = vpop.f32.mrf.mxu0
      %1558 = vmatprep.mubr.bf16.mxu0 0
      %1559 = vmatmul.mubr.bf16.gmra.mxu0 %v1429
      %v1560 = vpop.f32.mrf.mxu0
      %v1561 = vadd.f32 0.0, %v1560
      %v1562 = vpop.f32.mrf.mxu0
      %v1563 = vpop.f32.mrf.mxu0
      %v1564 = vadd.f32 0.0, %v1563
      %v1565 = vpop.f32.mrf.mxu0
      %1566 = vmatprep.mubr.bf16.mxu0 0
      %1567 = vmatmul.mubr.bf16.gmra.mxu0 %v1432
      %v1568 = vpop.f32.mrf.mxu0
      %v1569 = vadd.f32 0.0, %v1568
      %v1570 = vpop.f32.mrf.mxu0
      %v1571 = vpop.f32.mrf.mxu0
      %v1572 = vadd.f32 0.0, %v1571
      %v1573 = vpop.f32.mrf.mxu0
      %1574 = vmatprep.mubr.bf16.mxu0 0
      %1575 = vmatmul.mubr.bf16.gmra.mxu0 %v1435
      %v1576 = vpop.f32.mrf.mxu0
      %v1577 = vadd.f32 0.0, %v1576
      %v1578 = vpop.f32.mrf.mxu0
      %v1579 = vpop.f32.mrf.mxu0
      %v1580 = vadd.f32 0.0, %v1579
      %v1581 = vpop.f32.mrf.mxu0
      %1582 = vmatprep.mubr.bf16.mxu0 0
      %1583 = vmatmul.mubr.bf16.gmra.mxu0 %v1438
      %v1584 = vpop.f32.mrf.mxu0
      %v1585 = vadd.f32 0.0, %v1584
      %v1586 = vpop.f32.mrf.mxu0
      %v1587 = vpop.f32.mrf.mxu0
      %v1588 = vadd.f32 0.0, %v1587
      %v1589 = vpop.f32.mrf.mxu0
      %1590 = vmatprep.mubr.bf16.mxu0 0
      %1591 = vmatmul.mubr.bf16.gmra.mxu0 %v1441
      %v1592 = vpop.f32.mrf.mxu0
      %v1593 = vadd.f32 0.0, %v1592
      %v1594 = vpop.f32.mrf.mxu0
      %v1595 = vpop.f32.mrf.mxu0
      %v1596 = vadd.f32 0.0, %v1595
      %v1597 = vpop.f32.mrf.mxu0
      %1598 = vmatprep.mubr.bf16.mxu0 0
      %1599 = vmatmul.mubr.bf16.gmra.mxu0 %v1444
      %v1600 = vpop.f32.mrf.mxu0
      %v1601 = vadd.f32 0.0, %v1600
      %v1602 = vpop.f32.mrf.mxu0
      %v1603 = vpop.f32.mrf.mxu0
      %v1604 = vadd.f32 0.0, %v1603
      %v1605 = vpop.f32.mrf.mxu0
      %1606 = vdwg.mxu0
      %v1607 = vadd.f32 %v1301, %v1481
      %v1608 = vadd.f32 %v1302, %v1484
      %v1609 = vadd.f32 %v1303, %v1489
      %v1610 = vadd.f32 %v1304, %v1492
      %v1611 = vadd.f32 %v1305, %v1497
      %v1612 = vadd.f32 %v1306, %v1500
      %v1613 = vadd.f32 %v1307, %v1505
      %v1614 = vadd.f32 %v1308, %v1508
      %v1615 = vadd.f32 %v1309, %v1513
      %v1616 = vadd.f32 %v1310, %v1516
      %v1617 = vadd.f32 %v1311, %v1521
      %v1618 = vadd.f32 %v1312, %v1524
      %v1619 = vadd.f32 %v1313, %v1529
      %v1620 = vadd.f32 %v1314, %v1532
      %v1621 = vadd.f32 %v1315, %v1537
      %v1622 = vadd.f32 %v1316, %v1540
      %v1623 = vadd.f32 %v1317, %v1545
      %v1624 = vadd.f32 %v1318, %v1548
      %v1625 = vadd.f32 %v1319, %v1553
      %v1626 = vadd.f32 %v1320, %v1556
      %v1627 = vadd.f32 %v1321, %v1561
      %v1628 = vadd.f32 %v1322, %v1564
      %v1629 = vadd.f32 %v1323, %v1569
      %v1630 = vadd.f32 %v1324, %v1572
      %v1631 = vadd.f32 %v1325, %v1577
      %v1632 = vadd.f32 %v1326, %v1580
      %v1633 = vadd.f32 %v1327, %v1585
      %v1634 = vadd.f32 %v1328, %v1588
      %v1635 = vadd.f32 %v1329, %v1593
      %v1636 = vadd.f32 %v1330, %v1596
      %v1637 = vadd.f32 %v1331, %v1601
      %v1638 = vadd.f32 %v1332, %v1604
      %v1639 = vld [vmem:[%s1026 + $0x2] sm:$0xff]
      %v1640 = vld [vmem:[%s1026 + $0xa] sm:$0xff]
      %v1641 = vld [vmem:[%s1026 + $0x1a] sm:$0xff]
      %v1642 = vld [vmem:[%s1026 + $0x22] sm:$0xff]
      %v1643 = vld [vmem:[%s1026 + $0x32] sm:$0xff]
      %v1644 = vld [vmem:[%s1026 + $0x3a] sm:$0xff]
      %v1645 = vld [vmem:[%s1026 + $0x4a] sm:$0xff]
      %v1646 = vld [vmem:[%s1026 + $0x52] sm:$0xff]
      %v1647 = vld [vmem:[%s1026 + $0x62] sm:$0xff]
      %v1648 = vld [vmem:[%s1026 + $0x6a] sm:$0xff]
      %v1649 = vld [vmem:[%s1026 + $0x7a] sm:$0xff]
      %v1650 = vld [vmem:[%s1026 + $0x82] sm:$0xff]
      %v1651 = vld [vmem:[%s1026 + $0x92] sm:$0xff]
      %v1652 = vld [vmem:[%s1026 + $0x9a] sm:$0xff]
      %v1653 = vld [vmem:[%s1026 + $0xaa] sm:$0xff]
      %v1654 = vld [vmem:[%s1026 + $0xb2] sm:$0xff]
      %v1655 = vld [vmem:[%s1026 + $0xc2] sm:$0xff]
      %v1656 = vld [vmem:[%s1026 + $0xca] sm:$0xff]
      %v1657 = vld [vmem:[%s1026 + $0xda] sm:$0xff]
      %v1658 = vld [vmem:[%s1026 + $0xe2] sm:$0xff]
      %v1659 = vld [vmem:[%s1026 + $0xf2] sm:$0xff]
      %v1660 = vld [vmem:[%s1026 + $0xfa] sm:$0xff]
      %v1661 = vld [vmem:[%s1026 + $0x10a] sm:$0xff]
      %v1662 = vld [vmem:[%s1026 + $0x112] sm:$0xff]
      %v1663 = vld [vmem:[%s1026 + $0x122] sm:$0xff]
      %v1664 = vld [vmem:[%s1026 + $0x12a] sm:$0xff]
      %v1665 = vld [vmem:[%s1026 + $0x13a] sm:$0xff]
      %v1666 = vld [vmem:[%s1026 + $0x142] sm:$0xff]
      %v1667 = vld [vmem:[%s1026 + $0x152] sm:$0xff]
      %v1668 = vld [vmem:[%s1026 + $0x15a] sm:$0xff]
      %v1669 = vld [vmem:[%s1026 + $0x16a] sm:$0xff]
      %v1670 = vld [vmem:[%s1026 + $0x172] sm:$0xff]
      %v1671 = vpack.c.bf16 %v1640, %v1639
      %v1672 = vpack.c.bf16 %v1642, %v1641
      %v1673 = vpack.c.bf16 %v1644, %v1643
      %v1674 = vpack.c.bf16 %v1646, %v1645
      %v1675 = vpack.c.bf16 %v1648, %v1647
      %v1676 = vpack.c.bf16 %v1650, %v1649
      %v1677 = vpack.c.bf16 %v1652, %v1651
      %v1678 = vpack.c.bf16 %v1654, %v1653
      %v1679 = vpack.c.bf16 %v1656, %v1655
      %v1680 = vpack.c.bf16 %v1658, %v1657
      %v1681 = vpack.c.bf16 %v1660, %v1659
      %v1682 = vpack.c.bf16 %v1662, %v1661
      %v1683 = vpack.c.bf16 %v1664, %v1663
      %v1684 = vpack.c.bf16 %v1666, %v1665
      %v1685 = vpack.c.bf16 %v1668, %v1667
      %v1686 = vpack.c.bf16 %v1670, %v1669
      %s1687 = scalar_lea.vmem %s1, 80
      %v1688 = vld [vmem:[%s1687] sm:$0xf]
      %v1689 = vld [vmem:[%s1687 + $0x4] sm:$0xf]
      %v1690 = vld [vmem:[%s1687 + $0x8] sm:$0xf]
      %v1691 = vld [vmem:[%s1687 + $0xc] sm:$0xf]
      %v1696 = vunpack.c.l.b16 %v1688
      %v1697 = vunpack.c.l.b16 %v1689
      %v1698 = vunpack.c.l.b16 %v1690
      %v1699 = vunpack.c.l.b16 %v1691
      %v1700 = vpack.c.b16 %v1697, %v1696
      %v1701 = vpack.c.b16 %v1699, %v1698
      %v1705 = vsel %vm289, %v1671, 0
      %v1708 = vsel %vm289, %v1672, 0
      %v1711 = vsel %vm289, %v1673, 0
      %v1714 = vsel %vm289, %v1674, 0
      %v1717 = vsel %vm289, %v1675, 0
      %v1720 = vsel %vm289, %v1676, 0
      %v1723 = vsel %vm289, %v1677, 0
      %v1726 = vsel %vm289, %v1678, 0
      %v1729 = vsel %vm289, %v1679, 0
      %v1732 = vsel %vm289, %v1680, 0
      %v1735 = vsel %vm289, %v1681, 0
      %v1738 = vsel %vm289, %v1682, 0
      %v1741 = vsel %vm289, %v1683, 0
      %v1744 = vsel %vm289, %v1684, 0
      %v1747 = vsel %vm289, %v1685, 0
      %v1750 = vsel %vm289, %v1686, 0
      %1752 = vmatprep.subr.bf16.mxu0 0
      %1753 = vmatpush1.bf16.msra.mxu0 0
      %1754 = vmatprep.subr.bf16.mxu0 0
      %1755 = vmatpush1.bf16.msra.mxu0 0
      %1756 = vmatprep.subr.bf16.mxu0 0
      %1757 = vmatpush1.bf16.msra.mxu0 0
      %1758 = vmatprep.subr.bf16.mxu0 0
      %1759 = vmatpush1.bf16.msra.mxu0 0
      %1760 = vmatprep.subr.bf16.mxu0 0
      %1761 = vmatpush1.bf16.msra.mxu0 0
      %1762 = vmatprep.subr.bf16.mxu0 0
      %1763 = vmatpush1.bf16.msra.mxu0 0
      %1764 = vmatprep.subr.bf16.mxu0 0
      %1765 = vmatpush1.bf16.msra.mxu0 %v1701
      %1766 = vmatprep.subr.bf16.mxu0 0
      %1767 = vmatpush1.bf16.msra.mxu0 %v1700
      %1768 = vmatprep.subr.bf16.mxu0 0
      %1769 = vmatpush2.bf16.msra.mxu0 0
      %1770 = vmatprep.subr.bf16.mxu0 0
      %1771 = vmatpush2.bf16.msra.mxu0 0
      %1772 = vmatprep.subr.bf16.mxu0 0
      %1773 = vmatpush2.bf16.msra.mxu0 0
      %1774 = vmatprep.subr.bf16.mxu0 0
      %1775 = vmatpush2.bf16.msra.mxu0 0
      %1776 = vmatprep.subr.bf16.mxu0 0
      %1777 = vmatpush2.bf16.msra.mxu0 0
      %1778 = vmatprep.subr.bf16.mxu0 0
      %1779 = vmatpush2.bf16.msra.mxu0 0
      %1780 = vmatprep.subr.bf16.mxu0 0
      %1781 = vmatpush2.bf16.msra.mxu0 0
      %1782 = vmatprep.subr.bf16.mxu0 0
      %1783 = vmatpush2.bf16.msra.mxu0 0
      %1784 = vmatprep.mubr.bf16.mxu0 0
      %1785 = vmatmul.mubr.bf16.gmra.mxu0 %v1705
      %v1786 = vpop.f32.mrf.mxu0
      %v1787 = vadd.f32 0.0, %v1786
      %v1788 = vpop.f32.mrf.mxu0
      %v1789 = vpop.f32.mrf.mxu0
      %v1790 = vadd.f32 0.0, %v1789
      %v1791 = vpop.f32.mrf.mxu0
      %1792 = vmatprep.mubr.bf16.mxu0 0
      %1793 = vmatmul.mubr.bf16.gmra.mxu0 %v1708
      %v1794 = vpop.f32.mrf.mxu0
      %v1795 = vadd.f32 0.0, %v1794
      %v1796 = vpop.f32.mrf.mxu0
      %v1797 = vpop.f32.mrf.mxu0
      %v1798 = vadd.f32 0.0, %v1797
      %v1799 = vpop.f32.mrf.mxu0
      %1800 = vmatprep.mubr.bf16.mxu0 0
      %1801 = vmatmul.mubr.bf16.gmra.mxu0 %v1711
      %v1802 = vpop.f32.mrf.mxu0
      %v1803 = vadd.f32 0.0, %v1802
      %v1804 = vpop.f32.mrf.mxu0
      %v1805 = vpop.f32.mrf.mxu0
      %v1806 = vadd.f32 0.0, %v1805
      %v1807 = vpop.f32.mrf.mxu0
      %1808 = vmatprep.mubr.bf16.mxu0 0
      %1809 = vmatmul.mubr.bf16.gmra.mxu0 %v1714
      %v1810 = vpop.f32.mrf.mxu0
      %v1811 = vadd.f32 0.0, %v1810
      %v1812 = vpop.f32.mrf.mxu0
      %v1813 = vpop.f32.mrf.mxu0
      %v1814 = vadd.f32 0.0, %v1813
      %v1815 = vpop.f32.mrf.mxu0
      %1816 = vmatprep.mubr.bf16.mxu0 0
      %1817 = vmatmul.mubr.bf16.gmra.mxu0 %v1717
      %v1818 = vpop.f32.mrf.mxu0
      %v1819 = vadd.f32 0.0, %v1818
      %v1820 = vpop.f32.mrf.mxu0
      %v1821 = vpop.f32.mrf.mxu0
      %v1822 = vadd.f32 0.0, %v1821
      %v1823 = vpop.f32.mrf.mxu0
      %1824 = vmatprep.mubr.bf16.mxu0 0
      %1825 = vmatmul.mubr.bf16.gmra.mxu0 %v1720
      %v1826 = vpop.f32.mrf.mxu0
      %v1827 = vadd.f32 0.0, %v1826
      %v1828 = vpop.f32.mrf.mxu0
      %v1829 = vpop.f32.mrf.mxu0
      %v1830 = vadd.f32 0.0, %v1829
      %v1831 = vpop.f32.mrf.mxu0
      %1832 = vmatprep.mubr.bf16.mxu0 0
      %1833 = vmatmul.mubr.bf16.gmra.mxu0 %v1723
      %v1834 = vpop.f32.mrf.mxu0
      %v1835 = vadd.f32 0.0, %v1834
      %v1836 = vpop.f32.mrf.mxu0
      %v1837 = vpop.f32.mrf.mxu0
      %v1838 = vadd.f32 0.0, %v1837
      %v1839 = vpop.f32.mrf.mxu0
      %1840 = vmatprep.mubr.bf16.mxu0 0
      %1841 = vmatmul.mubr.bf16.gmra.mxu0 %v1726
      %v1842 = vpop.f32.mrf.mxu0
      %v1843 = vadd.f32 0.0, %v1842
      %v1844 = vpop.f32.mrf.mxu0
      %v1845 = vpop.f32.mrf.mxu0
      %v1846 = vadd.f32 0.0, %v1845
      %v1847 = vpop.f32.mrf.mxu0
      %1848 = vmatprep.mubr.bf16.mxu0 0
      %1849 = vmatmul.mubr.bf16.gmra.mxu0 %v1729
      %v1850 = vpop.f32.mrf.mxu0
      %v1851 = vadd.f32 0.0, %v1850
      %v1852 = vpop.f32.mrf.mxu0
      %v1853 = vpop.f32.mrf.mxu0
      %v1854 = vadd.f32 0.0, %v1853
      %v1855 = vpop.f32.mrf.mxu0
      %1856 = vmatprep.mubr.bf16.mxu0 0
      %1857 = vmatmul.mubr.bf16.gmra.mxu0 %v1732
      %v1858 = vpop.f32.mrf.mxu0
      %v1859 = vadd.f32 0.0, %v1858
      %v1860 = vpop.f32.mrf.mxu0
      %v1861 = vpop.f32.mrf.mxu0
      %v1862 = vadd.f32 0.0, %v1861
      %v1863 = vpop.f32.mrf.mxu0
      %1864 = vmatprep.mubr.bf16.mxu0 0
      %1865 = vmatmul.mubr.bf16.gmra.mxu0 %v1735
      %v1866 = vpop.f32.mrf.mxu0
      %v1867 = vadd.f32 0.0, %v1866
      %v1868 = vpop.f32.mrf.mxu0
      %v1869 = vpop.f32.mrf.mxu0
      %v1870 = vadd.f32 0.0, %v1869
      %v1871 = vpop.f32.mrf.mxu0
      %1872 = vmatprep.mubr.bf16.mxu0 0
      %1873 = vmatmul.mubr.bf16.gmra.mxu0 %v1738
      %v1874 = vpop.f32.mrf.mxu0
      %v1875 = vadd.f32 0.0, %v1874
      %v1876 = vpop.f32.mrf.mxu0
      %v1877 = vpop.f32.mrf.mxu0
      %v1878 = vadd.f32 0.0, %v1877
      %v1879 = vpop.f32.mrf.mxu0
      %1880 = vmatprep.mubr.bf16.mxu0 0
      %1881 = vmatmul.mubr.bf16.gmra.mxu0 %v1741
      %v1882 = vpop.f32.mrf.mxu0
      %v1883 = vadd.f32 0.0, %v1882
      %v1884 = vpop.f32.mrf.mxu0
      %v1885 = vpop.f32.mrf.mxu0
      %v1886 = vadd.f32 0.0, %v1885
      %v1887 = vpop.f32.mrf.mxu0
      %1888 = vmatprep.mubr.bf16.mxu0 0
      %1889 = vmatmul.mubr.bf16.gmra.mxu0 %v1744
      %v1890 = vpop.f32.mrf.mxu0
      %v1891 = vadd.f32 0.0, %v1890
      %v1892 = vpop.f32.mrf.mxu0
      %v1893 = vpop.f32.mrf.mxu0
      %v1894 = vadd.f32 0.0, %v1893
      %v1895 = vpop.f32.mrf.mxu0
      %1896 = vmatprep.mubr.bf16.mxu0 0
      %1897 = vmatmul.mubr.bf16.gmra.mxu0 %v1747
      %v1898 = vpop.f32.mrf.mxu0
      %v1899 = vadd.f32 0.0, %v1898
      %v1900 = vpop.f32.mrf.mxu0
      %v1901 = vpop.f32.mrf.mxu0
      %v1902 = vadd.f32 0.0, %v1901
      %v1903 = vpop.f32.mrf.mxu0
      %1904 = vmatprep.mubr.bf16.mxu0 0
      %1905 = vmatmul.mubr.bf16.gmra.mxu0 %v1750
      %v1906 = vpop.f32.mrf.mxu0
      %v1907 = vadd.f32 0.0, %v1906
      %v1908 = vpop.f32.mrf.mxu0
      %v1909 = vpop.f32.mrf.mxu0
      %v1910 = vadd.f32 0.0, %v1909
      %v1911 = vpop.f32.mrf.mxu0
      %1912 = vdwg.mxu0
      %v1913 = vadd.f32 %v1607, %v1787
      %v1914 = vadd.f32 %v1608, %v1790
      %v1915 = vadd.f32 %v1609, %v1795
      %v1916 = vadd.f32 %v1610, %v1798
      %v1917 = vadd.f32 %v1611, %v1803
      %v1918 = vadd.f32 %v1612, %v1806
      %v1919 = vadd.f32 %v1613, %v1811
      %v1920 = vadd.f32 %v1614, %v1814
      %v1921 = vadd.f32 %v1615, %v1819
      %v1922 = vadd.f32 %v1616, %v1822
      %v1923 = vadd.f32 %v1617, %v1827
      %v1924 = vadd.f32 %v1618, %v1830
      %v1925 = vadd.f32 %v1619, %v1835
      %v1926 = vadd.f32 %v1620, %v1838
      %v1927 = vadd.f32 %v1621, %v1843
      %v1928 = vadd.f32 %v1622, %v1846
      %v1929 = vadd.f32 %v1623, %v1851
      %v1930 = vadd.f32 %v1624, %v1854
      %v1931 = vadd.f32 %v1625, %v1859
      %v1932 = vadd.f32 %v1626, %v1862
      %v1933 = vadd.f32 %v1627, %v1867
      %v1934 = vadd.f32 %v1628, %v1870
      %v1935 = vadd.f32 %v1629, %v1875
      %v1936 = vadd.f32 %v1630, %v1878
      %v1937 = vadd.f32 %v1631, %v1883
      %v1938 = vadd.f32 %v1632, %v1886
      %v1939 = vadd.f32 %v1633, %v1891
      %v1940 = vadd.f32 %v1634, %v1894
      %v1941 = vadd.f32 %v1635, %v1899
      %v1942 = vadd.f32 %v1636, %v1902
      %v1943 = vadd.f32 %v1637, %v1907
      %v1944 = vadd.f32 %v1638, %v1910
      %s1945 = scalar_lea.vmem %s165, 48
      %v1946 = vld [vmem:[%s1945] sm:$0xff]
      %v1947 = vld [vmem:[%s1945 + $0x8] sm:$0xff]
      %v1948 = vld [vmem:[%s1945 + $0x18] sm:$0xff]
      %v1949 = vld [vmem:[%s1945 + $0x20] sm:$0xff]
      %v1950 = vld [vmem:[%s1945 + $0x30] sm:$0xff]
      %v1951 = vld [vmem:[%s1945 + $0x38] sm:$0xff]
      %v1952 = vld [vmem:[%s1945 + $0x48] sm:$0xff]
      %v1953 = vld [vmem:[%s1945 + $0x50] sm:$0xff]
      %v1954 = vld [vmem:[%s1945 + $0x60] sm:$0xff]
      %v1955 = vld [vmem:[%s1945 + $0x68] sm:$0xff]
      %v1956 = vld [vmem:[%s1945 + $0x78] sm:$0xff]
      %v1957 = vld [vmem:[%s1945 + $0x80] sm:$0xff]
      %v1958 = vld [vmem:[%s1945 + $0x90] sm:$0xff]
      %v1959 = vld [vmem:[%s1945 + $0x98] sm:$0xff]
      %v1960 = vld [vmem:[%s1945 + $0xa8] sm:$0xff]
      %v1961 = vld [vmem:[%s1945 + $0xb0] sm:$0xff]
      %v1962 = vld [vmem:[%s1945 + $0xc0] sm:$0xff]
      %v1963 = vld [vmem:[%s1945 + $0xc8] sm:$0xff]
      %v1964 = vld [vmem:[%s1945 + $0xd8] sm:$0xff]
      %v1965 = vld [vmem:[%s1945 + $0xe0] sm:$0xff]
      %v1966 = vld [vmem:[%s1945 + $0xf0] sm:$0xff]
      %v1967 = vld [vmem:[%s1945 + $0xf8] sm:$0xff]
      %v1968 = vld [vmem:[%s1945 + $0x108] sm:$0xff]
      %v1969 = vld [vmem:[%s1945 + $0x110] sm:$0xff]
      %v1970 = vld [vmem:[%s1945 + $0x120] sm:$0xff]
      %v1971 = vld [vmem:[%s1945 + $0x128] sm:$0xff]
      %v1972 = vld [vmem:[%s1945 + $0x138] sm:$0xff]
      %v1973 = vld [vmem:[%s1945 + $0x140] sm:$0xff]
      %v1974 = vld [vmem:[%s1945 + $0x150] sm:$0xff]
      %v1975 = vld [vmem:[%s1945 + $0x158] sm:$0xff]
      %v1976 = vld [vmem:[%s1945 + $0x168] sm:$0xff]
      %v1977 = vld [vmem:[%s1945 + $0x170] sm:$0xff]
      %v1978 = vpack.c.bf16 %v1947, %v1946
      %v1979 = vpack.c.bf16 %v1949, %v1948
      %v1980 = vpack.c.bf16 %v1951, %v1950
      %v1981 = vpack.c.bf16 %v1953, %v1952
      %v1982 = vpack.c.bf16 %v1955, %v1954
      %v1983 = vpack.c.bf16 %v1957, %v1956
      %v1984 = vpack.c.bf16 %v1959, %v1958
      %v1985 = vpack.c.bf16 %v1961, %v1960
      %v1986 = vpack.c.bf16 %v1963, %v1962
      %v1987 = vpack.c.bf16 %v1965, %v1964
      %v1988 = vpack.c.bf16 %v1967, %v1966
      %v1989 = vpack.c.bf16 %v1969, %v1968
      %v1990 = vpack.c.bf16 %v1971, %v1970
      %v1991 = vpack.c.bf16 %v1973, %v1972
      %v1992 = vpack.c.bf16 %v1975, %v1974
      %v1993 = vpack.c.bf16 %v1977, %v1976
      %s1994 = scalar_lea.vmem %s1, 96
      %v1995 = vld [vmem:[%s1994] sm:$0xf]
      %v1996 = vld [vmem:[%s1994 + $0x4] sm:$0xf]
      %v1997 = vld [vmem:[%s1994 + $0x8] sm:$0xf]
      %v1998 = vld [vmem:[%s1994 + $0xc] sm:$0xf]
      %v2003 = vunpack.c.l.b16 %v1995
      %v2004 = vunpack.c.l.b16 %v1996
      %v2005 = vunpack.c.l.b16 %v1997
      %v2006 = vunpack.c.l.b16 %v1998
      %v2007 = vpack.c.b16 %v2004, %v2003
      %v2008 = vpack.c.b16 %v2006, %v2005
      %v2012 = vsel %vm289, %v1978, 0
      %v2015 = vsel %vm289, %v1979, 0
      %v2018 = vsel %vm289, %v1980, 0
      %v2021 = vsel %vm289, %v1981, 0
      %v2024 = vsel %vm289, %v1982, 0
      %v2027 = vsel %vm289, %v1983, 0
      %v2030 = vsel %vm289, %v1984, 0
      %v2033 = vsel %vm289, %v1985, 0
      %v2036 = vsel %vm289, %v1986, 0
      %v2039 = vsel %vm289, %v1987, 0
      %v2042 = vsel %vm289, %v1988, 0
      %v2045 = vsel %vm289, %v1989, 0
      %v2048 = vsel %vm289, %v1990, 0
      %v2051 = vsel %vm289, %v1991, 0
      %v2054 = vsel %vm289, %v1992, 0
      %v2057 = vsel %vm289, %v1993, 0
      %2059 = vmatprep.subr.bf16.mxu0 0
      %2060 = vmatpush1.bf16.msra.mxu0 0
      %2061 = vmatprep.subr.bf16.mxu0 0
      %2062 = vmatpush1.bf16.msra.mxu0 0
      %2063 = vmatprep.subr.bf16.mxu0 0
      %2064 = vmatpush1.bf16.msra.mxu0 0
      %2065 = vmatprep.subr.bf16.mxu0 0
      %2066 = vmatpush1.bf16.msra.mxu0 0
      %2067 = vmatprep.subr.bf16.mxu0 0
      %2068 = vmatpush1.bf16.msra.mxu0 0
      %2069 = vmatprep.subr.bf16.mxu0 0
      %2070 = vmatpush1.bf16.msra.mxu0 0
      %2071 = vmatprep.subr.bf16.mxu0 0
      %2072 = vmatpush1.bf16.msra.mxu0 %v2008
      %2073 = vmatprep.subr.bf16.mxu0 0
      %2074 = vmatpush1.bf16.msra.mxu0 %v2007
      %2075 = vmatprep.subr.bf16.mxu0 0
      %2076 = vmatpush2.bf16.msra.mxu0 0
      %2077 = vmatprep.subr.bf16.mxu0 0
      %2078 = vmatpush2.bf16.msra.mxu0 0
      %2079 = vmatprep.subr.bf16.mxu0 0
      %2080 = vmatpush2.bf16.msra.mxu0 0
      %2081 = vmatprep.subr.bf16.mxu0 0
      %2082 = vmatpush2.bf16.msra.mxu0 0
      %2083 = vmatprep.subr.bf16.mxu0 0
      %2084 = vmatpush2.bf16.msra.mxu0 0
      %2085 = vmatprep.subr.bf16.mxu0 0
      %2086 = vmatpush2.bf16.msra.mxu0 0
      %2087 = vmatprep.subr.bf16.mxu0 0
      %2088 = vmatpush2.bf16.msra.mxu0 0
      %2089 = vmatprep.subr.bf16.mxu0 0
      %2090 = vmatpush2.bf16.msra.mxu0 0
      %2091 = vmatprep.mubr.bf16.mxu0 0
      %2092 = vmatmul.mubr.bf16.gmra.mxu0 %v2012
      %v2093 = vpop.f32.mrf.mxu0
      %v2094 = vadd.f32 0.0, %v2093
      %v2095 = vpop.f32.mrf.mxu0
      %v2096 = vpop.f32.mrf.mxu0
      %v2097 = vadd.f32 0.0, %v2096
      %v2098 = vpop.f32.mrf.mxu0
      %2099 = vmatprep.mubr.bf16.mxu0 0
      %2100 = vmatmul.mubr.bf16.gmra.mxu0 %v2015
      %v2101 = vpop.f32.mrf.mxu0
      %v2102 = vadd.f32 0.0, %v2101
      %v2103 = vpop.f32.mrf.mxu0
      %v2104 = vpop.f32.mrf.mxu0
      %v2105 = vadd.f32 0.0, %v2104
      %v2106 = vpop.f32.mrf.mxu0
      %2107 = vmatprep.mubr.bf16.mxu0 0
      %2108 = vmatmul.mubr.bf16.gmra.mxu0 %v2018
      %v2109 = vpop.f32.mrf.mxu0
      %v2110 = vadd.f32 0.0, %v2109
      %v2111 = vpop.f32.mrf.mxu0
      %v2112 = vpop.f32.mrf.mxu0
      %v2113 = vadd.f32 0.0, %v2112
      %v2114 = vpop.f32.mrf.mxu0
      %2115 = vmatprep.mubr.bf16.mxu0 0
      %2116 = vmatmul.mubr.bf16.gmra.mxu0 %v2021
      %v2117 = vpop.f32.mrf.mxu0
      %v2118 = vadd.f32 0.0, %v2117
      %v2119 = vpop.f32.mrf.mxu0
      %v2120 = vpop.f32.mrf.mxu0
      %v2121 = vadd.f32 0.0, %v2120
      %v2122 = vpop.f32.mrf.mxu0
      %2123 = vmatprep.mubr.bf16.mxu0 0
      %2124 = vmatmul.mubr.bf16.gmra.mxu0 %v2024
      %v2125 = vpop.f32.mrf.mxu0
      %v2126 = vadd.f32 0.0, %v2125
      %v2127 = vpop.f32.mrf.mxu0
      %v2128 = vpop.f32.mrf.mxu0
      %v2129 = vadd.f32 0.0, %v2128
      %v2130 = vpop.f32.mrf.mxu0
      %2131 = vmatprep.mubr.bf16.mxu0 0
      %2132 = vmatmul.mubr.bf16.gmra.mxu0 %v2027
      %v2133 = vpop.f32.mrf.mxu0
      %v2134 = vadd.f32 0.0, %v2133
      %v2135 = vpop.f32.mrf.mxu0
      %v2136 = vpop.f32.mrf.mxu0
      %v2137 = vadd.f32 0.0, %v2136
      %v2138 = vpop.f32.mrf.mxu0
      %2139 = vmatprep.mubr.bf16.mxu0 0
      %2140 = vmatmul.mubr.bf16.gmra.mxu0 %v2030
      %v2141 = vpop.f32.mrf.mxu0
      %v2142 = vadd.f32 0.0, %v2141
      %v2143 = vpop.f32.mrf.mxu0
      %v2144 = vpop.f32.mrf.mxu0
      %v2145 = vadd.f32 0.0, %v2144
      %v2146 = vpop.f32.mrf.mxu0
      %2147 = vmatprep.mubr.bf16.mxu0 0
      %2148 = vmatmul.mubr.bf16.gmra.mxu0 %v2033
      %v2149 = vpop.f32.mrf.mxu0
      %v2150 = vadd.f32 0.0, %v2149
      %v2151 = vpop.f32.mrf.mxu0
      %v2152 = vpop.f32.mrf.mxu0
      %v2153 = vadd.f32 0.0, %v2152
      %v2154 = vpop.f32.mrf.mxu0
      %2155 = vmatprep.mubr.bf16.mxu0 0
      %2156 = vmatmul.mubr.bf16.gmra.mxu0 %v2036
      %v2157 = vpop.f32.mrf.mxu0
      %v2158 = vadd.f32 0.0, %v2157
      %v2159 = vpop.f32.mrf.mxu0
      %v2160 = vpop.f32.mrf.mxu0
      %v2161 = vadd.f32 0.0, %v2160
      %v2162 = vpop.f32.mrf.mxu0
      %2163 = vmatprep.mubr.bf16.mxu0 0
      %2164 = vmatmul.mubr.bf16.gmra.mxu0 %v2039
      %v2165 = vpop.f32.mrf.mxu0
      %v2166 = vadd.f32 0.0, %v2165
      %v2167 = vpop.f32.mrf.mxu0
      %v2168 = vpop.f32.mrf.mxu0
      %v2169 = vadd.f32 0.0, %v2168
      %v2170 = vpop.f32.mrf.mxu0
      %2171 = vmatprep.mubr.bf16.mxu0 0
      %2172 = vmatmul.mubr.bf16.gmra.mxu0 %v2042
      %v2173 = vpop.f32.mrf.mxu0
      %v2174 = vadd.f32 0.0, %v2173
      %v2175 = vpop.f32.mrf.mxu0
      %v2176 = vpop.f32.mrf.mxu0
      %v2177 = vadd.f32 0.0, %v2176
      %v2178 = vpop.f32.mrf.mxu0
      %2179 = vmatprep.mubr.bf16.mxu0 0
      %2180 = vmatmul.mubr.bf16.gmra.mxu0 %v2045
      %v2181 = vpop.f32.mrf.mxu0
      %v2182 = vadd.f32 0.0, %v2181
      %v2183 = vpop.f32.mrf.mxu0
      %v2184 = vpop.f32.mrf.mxu0
      %v2185 = vadd.f32 0.0, %v2184
      %v2186 = vpop.f32.mrf.mxu0
      %2187 = vmatprep.mubr.bf16.mxu0 0
      %2188 = vmatmul.mubr.bf16.gmra.mxu0 %v2048
      %v2189 = vpop.f32.mrf.mxu0
      %v2190 = vadd.f32 0.0, %v2189
      %v2191 = vpop.f32.mrf.mxu0
      %v2192 = vpop.f32.mrf.mxu0
      %v2193 = vadd.f32 0.0, %v2192
      %v2194 = vpop.f32.mrf.mxu0
      %2195 = vmatprep.mubr.bf16.mxu0 0
      %2196 = vmatmul.mubr.bf16.gmra.mxu0 %v2051
      %v2197 = vpop.f32.mrf.mxu0
      %v2198 = vadd.f32 0.0, %v2197
      %v2199 = vpop.f32.mrf.mxu0
      %v2200 = vpop.f32.mrf.mxu0
      %v2201 = vadd.f32 0.0, %v2200
      %v2202 = vpop.f32.mrf.mxu0
      %2203 = vmatprep.mubr.bf16.mxu0 0
      %2204 = vmatmul.mubr.bf16.gmra.mxu0 %v2054
      %v2205 = vpop.f32.mrf.mxu0
      %v2206 = vadd.f32 0.0, %v2205
      %v2207 = vpop.f32.mrf.mxu0
      %v2208 = vpop.f32.mrf.mxu0
      %v2209 = vadd.f32 0.0, %v2208
      %v2210 = vpop.f32.mrf.mxu0
      %2211 = vmatprep.mubr.bf16.mxu0 0
      %2212 = vmatmul.mubr.bf16.gmra.mxu0 %v2057
      %v2213 = vpop.f32.mrf.mxu0
      %v2214 = vadd.f32 0.0, %v2213
      %v2215 = vpop.f32.mrf.mxu0
      %v2216 = vpop.f32.mrf.mxu0
      %v2217 = vadd.f32 0.0, %v2216
      %v2218 = vpop.f32.mrf.mxu0
      %2219 = vdwg.mxu0
      %v2220 = vadd.f32 %v1913, %v2094
      %v2221 = vadd.f32 %v1914, %v2097
      %v2222 = vadd.f32 %v1915, %v2102
      %v2223 = vadd.f32 %v1916, %v2105
      %v2224 = vadd.f32 %v1917, %v2110
      %v2225 = vadd.f32 %v1918, %v2113
      %v2226 = vadd.f32 %v1919, %v2118
      %v2227 = vadd.f32 %v1920, %v2121
      %v2228 = vadd.f32 %v1921, %v2126
      %v2229 = vadd.f32 %v1922, %v2129
      %v2230 = vadd.f32 %v1923, %v2134
      %v2231 = vadd.f32 %v1924, %v2137
      %v2232 = vadd.f32 %v1925, %v2142
      %v2233 = vadd.f32 %v1926, %v2145
      %v2234 = vadd.f32 %v1927, %v2150
      %v2235 = vadd.f32 %v1928, %v2153
      %v2236 = vadd.f32 %v1929, %v2158
      %v2237 = vadd.f32 %v1930, %v2161
      %v2238 = vadd.f32 %v1931, %v2166
      %v2239 = vadd.f32 %v1932, %v2169
      %v2240 = vadd.f32 %v1933, %v2174
      %v2241 = vadd.f32 %v1934, %v2177
      %v2242 = vadd.f32 %v1935, %v2182
      %v2243 = vadd.f32 %v1936, %v2185
      %v2244 = vadd.f32 %v1937, %v2190
      %v2245 = vadd.f32 %v1938, %v2193
      %v2246 = vadd.f32 %v1939, %v2198
      %v2247 = vadd.f32 %v1940, %v2201
      %v2248 = vadd.f32 %v1941, %v2206
      %v2249 = vadd.f32 %v1942, %v2209
      %v2250 = vadd.f32 %v1943, %v2214
      %v2251 = vadd.f32 %v1944, %v2217
      %v2252 = vld [vmem:[%s1945 + $0x1] sm:$0xff]
      %v2253 = vld [vmem:[%s1945 + $0x9] sm:$0xff]
      %v2254 = vld [vmem:[%s1945 + $0x19] sm:$0xff]
      %v2255 = vld [vmem:[%s1945 + $0x21] sm:$0xff]
      %v2256 = vld [vmem:[%s1945 + $0x31] sm:$0xff]
      %v2257 = vld [vmem:[%s1945 + $0x39] sm:$0xff]
      %v2258 = vld [vmem:[%s1945 + $0x49] sm:$0xff]
      %v2259 = vld [vmem:[%s1945 + $0x51] sm:$0xff]
      %v2260 = vld [vmem:[%s1945 + $0x61] sm:$0xff]
      %v2261 = vld [vmem:[%s1945 + $0x69] sm:$0xff]
      %v2262 = vld [vmem:[%s1945 + $0x79] sm:$0xff]
      %v2263 = vld [vmem:[%s1945 + $0x81] sm:$0xff]
      %v2264 = vld [vmem:[%s1945 + $0x91] sm:$0xff]
      %v2265 = vld [vmem:[%s1945 + $0x99] sm:$0xff]
      %v2266 = vld [vmem:[%s1945 + $0xa9] sm:$0xff]
      %v2267 = vld [vmem:[%s1945 + $0xb1] sm:$0xff]
      %v2268 = vld [vmem:[%s1945 + $0xc1] sm:$0xff]
      %v2269 = vld [vmem:[%s1945 + $0xc9] sm:$0xff]
      %v2270 = vld [vmem:[%s1945 + $0xd9] sm:$0xff]
      %v2271 = vld [vmem:[%s1945 + $0xe1] sm:$0xff]
      %v2272 = vld [vmem:[%s1945 + $0xf1] sm:$0xff]
      %v2273 = vld [vmem:[%s1945 + $0xf9] sm:$0xff]
      %v2274 = vld [vmem:[%s1945 + $0x109] sm:$0xff]
      %v2275 = vld [vmem:[%s1945 + $0x111] sm:$0xff]
      %v2276 = vld [vmem:[%s1945 + $0x121] sm:$0xff]
      %v2277 = vld [vmem:[%s1945 + $0x129] sm:$0xff]
      %v2278 = vld [vmem:[%s1945 + $0x139] sm:$0xff]
      %v2279 = vld [vmem:[%s1945 + $0x141] sm:$0xff]
      %v2280 = vld [vmem:[%s1945 + $0x151] sm:$0xff]
      %v2281 = vld [vmem:[%s1945 + $0x159] sm:$0xff]
      %v2282 = vld [vmem:[%s1945 + $0x169] sm:$0xff]
      %v2283 = vld [vmem:[%s1945 + $0x171] sm:$0xff]
      %v2284 = vpack.c.bf16 %v2253, %v2252
      %v2285 = vpack.c.bf16 %v2255, %v2254
      %v2286 = vpack.c.bf16 %v2257, %v2256
      %v2287 = vpack.c.bf16 %v2259, %v2258
      %v2288 = vpack.c.bf16 %v2261, %v2260
      %v2289 = vpack.c.bf16 %v2263, %v2262
      %v2290 = vpack.c.bf16 %v2265, %v2264
      %v2291 = vpack.c.bf16 %v2267, %v2266
      %v2292 = vpack.c.bf16 %v2269, %v2268
      %v2293 = vpack.c.bf16 %v2271, %v2270
      %v2294 = vpack.c.bf16 %v2273, %v2272
      %v2295 = vpack.c.bf16 %v2275, %v2274
      %v2296 = vpack.c.bf16 %v2277, %v2276
      %v2297 = vpack.c.bf16 %v2279, %v2278
      %v2298 = vpack.c.bf16 %v2281, %v2280
      %v2299 = vpack.c.bf16 %v2283, %v2282
      %s2300 = scalar_lea.vmem %s1, 112
      %v2301 = vld [vmem:[%s2300] sm:$0xf]
      %v2302 = vld [vmem:[%s2300 + $0x4] sm:$0xf]
      %v2303 = vld [vmem:[%s2300 + $0x8] sm:$0xf]
      %v2304 = vld [vmem:[%s2300 + $0xc] sm:$0xf]
      %v2309 = vunpack.c.l.b16 %v2301
      %v2310 = vunpack.c.l.b16 %v2302
      %v2311 = vunpack.c.l.b16 %v2303
      %v2312 = vunpack.c.l.b16 %v2304
      %v2313 = vpack.c.b16 %v2310, %v2309
      %v2314 = vpack.c.b16 %v2312, %v2311
      %v2318 = vsel %vm289, %v2284, 0
      %v2321 = vsel %vm289, %v2285, 0
      %v2324 = vsel %vm289, %v2286, 0
      %v2327 = vsel %vm289, %v2287, 0
      %v2330 = vsel %vm289, %v2288, 0
      %v2333 = vsel %vm289, %v2289, 0
      %v2336 = vsel %vm289, %v2290, 0
      %v2339 = vsel %vm289, %v2291, 0
      %v2342 = vsel %vm289, %v2292, 0
      %v2345 = vsel %vm289, %v2293, 0
      %v2348 = vsel %vm289, %v2294, 0
      %v2351 = vsel %vm289, %v2295, 0
      %v2354 = vsel %vm289, %v2296, 0
      %v2357 = vsel %vm289, %v2297, 0
      %v2360 = vsel %vm289, %v2298, 0
      %v2363 = vsel %vm289, %v2299, 0
      %2365 = vmatprep.subr.bf16.mxu0 0
      %2366 = vmatpush1.bf16.msra.mxu0 0
      %2367 = vmatprep.subr.bf16.mxu0 0
      %2368 = vmatpush1.bf16.msra.mxu0 0
      %2369 = vmatprep.subr.bf16.mxu0 0
      %2370 = vmatpush1.bf16.msra.mxu0 0
      %2371 = vmatprep.subr.bf16.mxu0 0
      %2372 = vmatpush1.bf16.msra.mxu0 0
      %2373 = vmatprep.subr.bf16.mxu0 0
      %2374 = vmatpush1.bf16.msra.mxu0 0
      %2375 = vmatprep.subr.bf16.mxu0 0
      %2376 = vmatpush1.bf16.msra.mxu0 0
      %2377 = vmatprep.subr.bf16.mxu0 0
      %2378 = vmatpush1.bf16.msra.mxu0 %v2314
      %2379 = vmatprep.subr.bf16.mxu0 0
      %2380 = vmatpush1.bf16.msra.mxu0 %v2313
      %2381 = vmatprep.subr.bf16.mxu0 0
      %2382 = vmatpush2.bf16.msra.mxu0 0
      %2383 = vmatprep.subr.bf16.mxu0 0
      %2384 = vmatpush2.bf16.msra.mxu0 0
      %2385 = vmatprep.subr.bf16.mxu0 0
      %2386 = vmatpush2.bf16.msra.mxu0 0
      %2387 = vmatprep.subr.bf16.mxu0 0
      %2388 = vmatpush2.bf16.msra.mxu0 0
      %2389 = vmatprep.subr.bf16.mxu0 0
      %2390 = vmatpush2.bf16.msra.mxu0 0
      %2391 = vmatprep.subr.bf16.mxu0 0
      %2392 = vmatpush2.bf16.msra.mxu0 0
      %2393 = vmatprep.subr.bf16.mxu0 0
      %2394 = vmatpush2.bf16.msra.mxu0 0
      %2395 = vmatprep.subr.bf16.mxu0 0
      %2396 = vmatpush2.bf16.msra.mxu0 0
      %2397 = vmatprep.mubr.bf16.mxu0 0
      %2398 = vmatmul.mubr.bf16.gmra.mxu0 %v2318
      %v2399 = vpop.f32.mrf.mxu0
      %v2400 = vadd.f32 0.0, %v2399
      %v2401 = vpop.f32.mrf.mxu0
      %v2402 = vpop.f32.mrf.mxu0
      %v2403 = vadd.f32 0.0, %v2402
      %v2404 = vpop.f32.mrf.mxu0
      %2405 = vmatprep.mubr.bf16.mxu0 0
      %2406 = vmatmul.mubr.bf16.gmra.mxu0 %v2321
      %v2407 = vpop.f32.mrf.mxu0
      %v2408 = vadd.f32 0.0, %v2407
      %v2409 = vpop.f32.mrf.mxu0
      %v2410 = vpop.f32.mrf.mxu0
      %v2411 = vadd.f32 0.0, %v2410
      %v2412 = vpop.f32.mrf.mxu0
      %2413 = vmatprep.mubr.bf16.mxu0 0
      %2414 = vmatmul.mubr.bf16.gmra.mxu0 %v2324
      %v2415 = vpop.f32.mrf.mxu0
      %v2416 = vadd.f32 0.0, %v2415
      %v2417 = vpop.f32.mrf.mxu0
      %v2418 = vpop.f32.mrf.mxu0
      %v2419 = vadd.f32 0.0, %v2418
      %v2420 = vpop.f32.mrf.mxu0
      %2421 = vmatprep.mubr.bf16.mxu0 0
      %2422 = vmatmul.mubr.bf16.gmra.mxu0 %v2327
      %v2423 = vpop.f32.mrf.mxu0
      %v2424 = vadd.f32 0.0, %v2423
      %v2425 = vpop.f32.mrf.mxu0
      %v2426 = vpop.f32.mrf.mxu0
      %v2427 = vadd.f32 0.0, %v2426
      %v2428 = vpop.f32.mrf.mxu0
      %2429 = vmatprep.mubr.bf16.mxu0 0
      %2430 = vmatmul.mubr.bf16.gmra.mxu0 %v2330
      %v2431 = vpop.f32.mrf.mxu0
      %v2432 = vadd.f32 0.0, %v2431
      %v2433 = vpop.f32.mrf.mxu0
      %v2434 = vpop.f32.mrf.mxu0
      %v2435 = vadd.f32 0.0, %v2434
      %v2436 = vpop.f32.mrf.mxu0
      %2437 = vmatprep.mubr.bf16.mxu0 0
      %2438 = vmatmul.mubr.bf16.gmra.mxu0 %v2333
      %v2439 = vpop.f32.mrf.mxu0
      %v2440 = vadd.f32 0.0, %v2439
      %v2441 = vpop.f32.mrf.mxu0
      %v2442 = vpop.f32.mrf.mxu0
      %v2443 = vadd.f32 0.0, %v2442
      %v2444 = vpop.f32.mrf.mxu0
      %2445 = vmatprep.mubr.bf16.mxu0 0
      %2446 = vmatmul.mubr.bf16.gmra.mxu0 %v2336
      %v2447 = vpop.f32.mrf.mxu0
      %v2448 = vadd.f32 0.0, %v2447
      %v2449 = vpop.f32.mrf.mxu0
      %v2450 = vpop.f32.mrf.mxu0
      %v2451 = vadd.f32 0.0, %v2450
      %v2452 = vpop.f32.mrf.mxu0
      %2453 = vmatprep.mubr.bf16.mxu0 0
      %2454 = vmatmul.mubr.bf16.gmra.mxu0 %v2339
      %v2455 = vpop.f32.mrf.mxu0
      %v2456 = vadd.f32 0.0, %v2455
      %v2457 = vpop.f32.mrf.mxu0
      %v2458 = vpop.f32.mrf.mxu0
      %v2459 = vadd.f32 0.0, %v2458
      %v2460 = vpop.f32.mrf.mxu0
      %2461 = vmatprep.mubr.bf16.mxu0 0
      %2462 = vmatmul.mubr.bf16.gmra.mxu0 %v2342
      %v2463 = vpop.f32.mrf.mxu0
      %v2464 = vadd.f32 0.0, %v2463
      %v2465 = vpop.f32.mrf.mxu0
      %v2466 = vpop.f32.mrf.mxu0
      %v2467 = vadd.f32 0.0, %v2466
      %v2468 = vpop.f32.mrf.mxu0
      %2469 = vmatprep.mubr.bf16.mxu0 0
      %2470 = vmatmul.mubr.bf16.gmra.mxu0 %v2345
      %v2471 = vpop.f32.mrf.mxu0
      %v2472 = vadd.f32 0.0, %v2471
      %v2473 = vpop.f32.mrf.mxu0
      %v2474 = vpop.f32.mrf.mxu0
      %v2475 = vadd.f32 0.0, %v2474
      %v2476 = vpop.f32.mrf.mxu0
      %2477 = vmatprep.mubr.bf16.mxu0 0
      %2478 = vmatmul.mubr.bf16.gmra.mxu0 %v2348
      %v2479 = vpop.f32.mrf.mxu0
      %v2480 = vadd.f32 0.0, %v2479
      %v2481 = vpop.f32.mrf.mxu0
      %v2482 = vpop.f32.mrf.mxu0
      %v2483 = vadd.f32 0.0, %v2482
      %v2484 = vpop.f32.mrf.mxu0
      %2485 = vmatprep.mubr.bf16.mxu0 0
      %2486 = vmatmul.mubr.bf16.gmra.mxu0 %v2351
      %v2487 = vpop.f32.mrf.mxu0
      %v2488 = vadd.f32 0.0, %v2487
      %v2489 = vpop.f32.mrf.mxu0
      %v2490 = vpop.f32.mrf.mxu0
      %v2491 = vadd.f32 0.0, %v2490
      %v2492 = vpop.f32.mrf.mxu0
      %2493 = vmatprep.mubr.bf16.mxu0 0
      %2494 = vmatmul.mubr.bf16.gmra.mxu0 %v2354
      %v2495 = vpop.f32.mrf.mxu0
      %v2496 = vadd.f32 0.0, %v2495
      %v2497 = vpop.f32.mrf.mxu0
      %v2498 = vpop.f32.mrf.mxu0
      %v2499 = vadd.f32 0.0, %v2498
      %v2500 = vpop.f32.mrf.mxu0
      %2501 = vmatprep.mubr.bf16.mxu0 0
      %2502 = vmatmul.mubr.bf16.gmra.mxu0 %v2357
      %v2503 = vpop.f32.mrf.mxu0
      %v2504 = vadd.f32 0.0, %v2503
      %v2505 = vpop.f32.mrf.mxu0
      %v2506 = vpop.f32.mrf.mxu0
      %v2507 = vadd.f32 0.0, %v2506
      %v2508 = vpop.f32.mrf.mxu0
      %2509 = vmatprep.mubr.bf16.mxu0 0
      %2510 = vmatmul.mubr.bf16.gmra.mxu0 %v2360
      %v2511 = vpop.f32.mrf.mxu0
      %v2512 = vadd.f32 0.0, %v2511
      %v2513 = vpop.f32.mrf.mxu0
      %v2514 = vpop.f32.mrf.mxu0
      %v2515 = vadd.f32 0.0, %v2514
      %v2516 = vpop.f32.mrf.mxu0
      %2517 = vmatprep.mubr.bf16.mxu0 0
      %2518 = vmatmul.mubr.bf16.gmra.mxu0 %v2363
      %v2519 = vpop.f32.mrf.mxu0
      %v2520 = vadd.f32 0.0, %v2519
      %v2521 = vpop.f32.mrf.mxu0
      %v2522 = vpop.f32.mrf.mxu0
      %v2523 = vadd.f32 0.0, %v2522
      %v2524 = vpop.f32.mrf.mxu0
      %2525 = vdwg.mxu0
      %v2526 = vadd.f32 %v2220, %v2400
      %v2527 = vadd.f32 %v2221, %v2403
      %v2528 = vadd.f32 %v2222, %v2408
      %v2529 = vadd.f32 %v2223, %v2411
      %v2530 = vadd.f32 %v2224, %v2416
      %v2531 = vadd.f32 %v2225, %v2419
      %v2532 = vadd.f32 %v2226, %v2424
      %v2533 = vadd.f32 %v2227, %v2427
      %v2534 = vadd.f32 %v2228, %v2432
      %v2535 = vadd.f32 %v2229, %v2435
      %v2536 = vadd.f32 %v2230, %v2440
      %v2537 = vadd.f32 %v2231, %v2443
      %v2538 = vadd.f32 %v2232, %v2448
      %v2539 = vadd.f32 %v2233, %v2451
      %v2540 = vadd.f32 %v2234, %v2456
      %v2541 = vadd.f32 %v2235, %v2459
      %v2542 = vadd.f32 %v2236, %v2464
      %v2543 = vadd.f32 %v2237, %v2467
      %v2544 = vadd.f32 %v2238, %v2472
      %v2545 = vadd.f32 %v2239, %v2475
      %v2546 = vadd.f32 %v2240, %v2480
      %v2547 = vadd.f32 %v2241, %v2483
      %v2548 = vadd.f32 %v2242, %v2488
      %v2549 = vadd.f32 %v2243, %v2491
      %v2550 = vadd.f32 %v2244, %v2496
      %v2551 = vadd.f32 %v2245, %v2499
      %v2552 = vadd.f32 %v2246, %v2504
      %v2553 = vadd.f32 %v2247, %v2507
      %v2554 = vadd.f32 %v2248, %v2512
      %v2555 = vadd.f32 %v2249, %v2515
      %v2556 = vadd.f32 %v2250, %v2520
      %v2557 = vadd.f32 %v2251, %v2523
      %v2558 = vld [vmem:[%s1945 + $0x2] sm:$0xff]
      %v2559 = vld [vmem:[%s1945 + $0xa] sm:$0xff]
      %v2560 = vld [vmem:[%s1945 + $0x1a] sm:$0xff]
      %v2561 = vld [vmem:[%s1945 + $0x22] sm:$0xff]
      %v2562 = vld [vmem:[%s1945 + $0x32] sm:$0xff]
      %v2563 = vld [vmem:[%s1945 + $0x3a] sm:$0xff]
      %v2564 = vld [vmem:[%s1945 + $0x4a] sm:$0xff]
      %v2565 = vld [vmem:[%s1945 + $0x52] sm:$0xff]
      %v2566 = vld [vmem:[%s1945 + $0x62] sm:$0xff]
      %v2567 = vld [vmem:[%s1945 + $0x6a] sm:$0xff]
      %v2568 = vld [vmem:[%s1945 + $0x7a] sm:$0xff]
      %v2569 = vld [vmem:[%s1945 + $0x82] sm:$0xff]
      %v2570 = vld [vmem:[%s1945 + $0x92] sm:$0xff]
      %v2571 = vld [vmem:[%s1945 + $0x9a] sm:$0xff]
      %v2572 = vld [vmem:[%s1945 + $0xaa] sm:$0xff]
      %v2573 = vld [vmem:[%s1945 + $0xb2] sm:$0xff]
      %v2574 = vld [vmem:[%s1945 + $0xc2] sm:$0xff]
      %v2575 = vld [vmem:[%s1945 + $0xca] sm:$0xff]
      %v2576 = vld [vmem:[%s1945 + $0xda] sm:$0xff]
      %v2577 = vld [vmem:[%s1945 + $0xe2] sm:$0xff]
      %v2578 = vld [vmem:[%s1945 + $0xf2] sm:$0xff]
      %v2579 = vld [vmem:[%s1945 + $0xfa] sm:$0xff]
      %v2580 = vld [vmem:[%s1945 + $0x10a] sm:$0xff]
      %v2581 = vld [vmem:[%s1945 + $0x112] sm:$0xff]
      %v2582 = vld [vmem:[%s1945 + $0x122] sm:$0xff]
      %v2583 = vld [vmem:[%s1945 + $0x12a] sm:$0xff]
      %v2584 = vld [vmem:[%s1945 + $0x13a] sm:$0xff]
      %v2585 = vld [vmem:[%s1945 + $0x142] sm:$0xff]
      %v2586 = vld [vmem:[%s1945 + $0x152] sm:$0xff]
      %v2587 = vld [vmem:[%s1945 + $0x15a] sm:$0xff]
      %v2588 = vld [vmem:[%s1945 + $0x16a] sm:$0xff]
      %v2589 = vld [vmem:[%s1945 + $0x172] sm:$0xff]
      %v2590 = vpack.c.bf16 %v2559, %v2558
      %v2591 = vpack.c.bf16 %v2561, %v2560
      %v2592 = vpack.c.bf16 %v2563, %v2562
      %v2593 = vpack.c.bf16 %v2565, %v2564
      %v2594 = vpack.c.bf16 %v2567, %v2566
      %v2595 = vpack.c.bf16 %v2569, %v2568
      %v2596 = vpack.c.bf16 %v2571, %v2570
      %v2597 = vpack.c.bf16 %v2573, %v2572
      %v2598 = vpack.c.bf16 %v2575, %v2574
      %v2599 = vpack.c.bf16 %v2577, %v2576
      %v2600 = vpack.c.bf16 %v2579, %v2578
      %v2601 = vpack.c.bf16 %v2581, %v2580
      %v2602 = vpack.c.bf16 %v2583, %v2582
      %v2603 = vpack.c.bf16 %v2585, %v2584
      %v2604 = vpack.c.bf16 %v2587, %v2586
      %v2605 = vpack.c.bf16 %v2589, %v2588
      %s2606 = scalar_lea.vmem %s1, 128
      %v2607 = vld [vmem:[%s2606] sm:$0xf]
      %v2608 = vld [vmem:[%s2606 + $0x4] sm:$0xf]
      %v2609 = vld [vmem:[%s2606 + $0x8] sm:$0xf]
      %v2610 = vld [vmem:[%s2606 + $0xc] sm:$0xf]
      %v2615 = vunpack.c.l.b16 %v2607
      %v2616 = vunpack.c.l.b16 %v2608
      %v2617 = vunpack.c.l.b16 %v2609
      %v2618 = vunpack.c.l.b16 %v2610
      %v2619 = vpack.c.b16 %v2616, %v2615
      %v2620 = vpack.c.b16 %v2618, %v2617
      %v2624 = vsel %vm289, %v2590, 0
      %v2627 = vsel %vm289, %v2591, 0
      %v2630 = vsel %vm289, %v2592, 0
      %v2633 = vsel %vm289, %v2593, 0
      %v2636 = vsel %vm289, %v2594, 0
      %v2639 = vsel %vm289, %v2595, 0
      %v2642 = vsel %vm289, %v2596, 0
      %v2645 = vsel %vm289, %v2597, 0
      %v2648 = vsel %vm289, %v2598, 0
      %v2651 = vsel %vm289, %v2599, 0
      %v2654 = vsel %vm289, %v2600, 0
      %v2657 = vsel %vm289, %v2601, 0
      %v2660 = vsel %vm289, %v2602, 0
      %v2663 = vsel %vm289, %v2603, 0
      %v2666 = vsel %vm289, %v2604, 0
      %v2669 = vsel %vm289, %v2605, 0
      %2671 = vmatprep.subr.bf16.mxu0 0
      %2672 = vmatpush1.bf16.msra.mxu0 0
      %2673 = vmatprep.subr.bf16.mxu0 0
      %2674 = vmatpush1.bf16.msra.mxu0 0
      %2675 = vmatprep.subr.bf16.mxu0 0
      %2676 = vmatpush1.bf16.msra.mxu0 0
      %2677 = vmatprep.subr.bf16.mxu0 0
      %2678 = vmatpush1.bf16.msra.mxu0 0
      %2679 = vmatprep.subr.bf16.mxu0 0
      %2680 = vmatpush1.bf16.msra.mxu0 0
      %2681 = vmatprep.subr.bf16.mxu0 0
      %2682 = vmatpush1.bf16.msra.mxu0 0
      %2683 = vmatprep.subr.bf16.mxu0 0
      %2684 = vmatpush1.bf16.msra.mxu0 %v2620
      %2685 = vmatprep.subr.bf16.mxu0 0
      %2686 = vmatpush1.bf16.msra.mxu0 %v2619
      %2687 = vmatprep.subr.bf16.mxu0 0
      %2688 = vmatpush2.bf16.msra.mxu0 0
      %2689 = vmatprep.subr.bf16.mxu0 0
      %2690 = vmatpush2.bf16.msra.mxu0 0
      %2691 = vmatprep.subr.bf16.mxu0 0
      %2692 = vmatpush2.bf16.msra.mxu0 0
      %2693 = vmatprep.subr.bf16.mxu0 0
      %2694 = vmatpush2.bf16.msra.mxu0 0
      %2695 = vmatprep.subr.bf16.mxu0 0
      %2696 = vmatpush2.bf16.msra.mxu0 0
      %2697 = vmatprep.subr.bf16.mxu0 0
      %2698 = vmatpush2.bf16.msra.mxu0 0
      %2699 = vmatprep.subr.bf16.mxu0 0
      %2700 = vmatpush2.bf16.msra.mxu0 0
      %2701 = vmatprep.subr.bf16.mxu0 0
      %2702 = vmatpush2.bf16.msra.mxu0 0
      %2703 = vmatprep.mubr.bf16.mxu0 0
      %2704 = vmatmul.mubr.bf16.gmra.mxu0 %v2624
      %v2705 = vpop.f32.mrf.mxu0
      %v2706 = vadd.f32 0.0, %v2705
      %v2707 = vpop.f32.mrf.mxu0
      %v2708 = vpop.f32.mrf.mxu0
      %v2709 = vadd.f32 0.0, %v2708
      %v2710 = vpop.f32.mrf.mxu0
      %2711 = vmatprep.mubr.bf16.mxu0 0
      %2712 = vmatmul.mubr.bf16.gmra.mxu0 %v2627
      %v2713 = vpop.f32.mrf.mxu0
      %v2714 = vadd.f32 0.0, %v2713
      %v2715 = vpop.f32.mrf.mxu0
      %v2716 = vpop.f32.mrf.mxu0
      %v2717 = vadd.f32 0.0, %v2716
      %v2718 = vpop.f32.mrf.mxu0
      %2719 = vmatprep.mubr.bf16.mxu0 0
      %2720 = vmatmul.mubr.bf16.gmra.mxu0 %v2630
      %v2721 = vpop.f32.mrf.mxu0
      %v2722 = vadd.f32 0.0, %v2721
      %v2723 = vpop.f32.mrf.mxu0
      %v2724 = vpop.f32.mrf.mxu0
      %v2725 = vadd.f32 0.0, %v2724
      %v2726 = vpop.f32.mrf.mxu0
      %2727 = vmatprep.mubr.bf16.mxu0 0
      %2728 = vmatmul.mubr.bf16.gmra.mxu0 %v2633
      %v2729 = vpop.f32.mrf.mxu0
      %v2730 = vadd.f32 0.0, %v2729
      %v2731 = vpop.f32.mrf.mxu0
      %v2732 = vpop.f32.mrf.mxu0
      %v2733 = vadd.f32 0.0, %v2732
      %v2734 = vpop.f32.mrf.mxu0
      %2735 = vmatprep.mubr.bf16.mxu0 0
      %2736 = vmatmul.mubr.bf16.gmra.mxu0 %v2636
      %v2737 = vpop.f32.mrf.mxu0
      %v2738 = vadd.f32 0.0, %v2737
      %v2739 = vpop.f32.mrf.mxu0
      %v2740 = vpop.f32.mrf.mxu0
      %v2741 = vadd.f32 0.0, %v2740
      %v2742 = vpop.f32.mrf.mxu0
      %2743 = vmatprep.mubr.bf16.mxu0 0
      %2744 = vmatmul.mubr.bf16.gmra.mxu0 %v2639
      %v2745 = vpop.f32.mrf.mxu0
      %v2746 = vadd.f32 0.0, %v2745
      %v2747 = vpop.f32.mrf.mxu0
      %v2748 = vpop.f32.mrf.mxu0
      %v2749 = vadd.f32 0.0, %v2748
      %v2750 = vpop.f32.mrf.mxu0
      %2751 = vmatprep.mubr.bf16.mxu0 0
      %2752 = vmatmul.mubr.bf16.gmra.mxu0 %v2642
      %v2753 = vpop.f32.mrf.mxu0
      %v2754 = vadd.f32 0.0, %v2753
      %v2755 = vpop.f32.mrf.mxu0
      %v2756 = vpop.f32.mrf.mxu0
      %v2757 = vadd.f32 0.0, %v2756
      %v2758 = vpop.f32.mrf.mxu0
      %2759 = vmatprep.mubr.bf16.mxu0 0
      %2760 = vmatmul.mubr.bf16.gmra.mxu0 %v2645
      %v2761 = vpop.f32.mrf.mxu0
      %v2762 = vadd.f32 0.0, %v2761
      %v2763 = vpop.f32.mrf.mxu0
      %v2764 = vpop.f32.mrf.mxu0
      %v2765 = vadd.f32 0.0, %v2764
      %v2766 = vpop.f32.mrf.mxu0
      %2767 = vmatprep.mubr.bf16.mxu0 0
      %2768 = vmatmul.mubr.bf16.gmra.mxu0 %v2648
      %v2769 = vpop.f32.mrf.mxu0
      %v2770 = vadd.f32 0.0, %v2769
      %v2771 = vpop.f32.mrf.mxu0
      %v2772 = vpop.f32.mrf.mxu0
      %v2773 = vadd.f32 0.0, %v2772
      %v2774 = vpop.f32.mrf.mxu0
      %2775 = vmatprep.mubr.bf16.mxu0 0
      %2776 = vmatmul.mubr.bf16.gmra.mxu0 %v2651
      %v2777 = vpop.f32.mrf.mxu0
      %v2778 = vadd.f32 0.0, %v2777
      %v2779 = vpop.f32.mrf.mxu0
      %v2780 = vpop.f32.mrf.mxu0
      %v2781 = vadd.f32 0.0, %v2780
      %v2782 = vpop.f32.mrf.mxu0
      %2783 = vmatprep.mubr.bf16.mxu0 0
      %2784 = vmatmul.mubr.bf16.gmra.mxu0 %v2654
      %v2785 = vpop.f32.mrf.mxu0
      %v2786 = vadd.f32 0.0, %v2785
      %v2787 = vpop.f32.mrf.mxu0
      %v2788 = vpop.f32.mrf.mxu0
      %v2789 = vadd.f32 0.0, %v2788
      %v2790 = vpop.f32.mrf.mxu0
      %2791 = vmatprep.mubr.bf16.mxu0 0
      %2792 = vmatmul.mubr.bf16.gmra.mxu0 %v2657
      %v2793 = vpop.f32.mrf.mxu0
      %v2794 = vadd.f32 0.0, %v2793
      %v2795 = vpop.f32.mrf.mxu0
      %v2796 = vpop.f32.mrf.mxu0
      %v2797 = vadd.f32 0.0, %v2796
      %v2798 = vpop.f32.mrf.mxu0
      %2799 = vmatprep.mubr.bf16.mxu0 0
      %2800 = vmatmul.mubr.bf16.gmra.mxu0 %v2660
      %v2801 = vpop.f32.mrf.mxu0
      %v2802 = vadd.f32 0.0, %v2801
      %v2803 = vpop.f32.mrf.mxu0
      %v2804 = vpop.f32.mrf.mxu0
      %v2805 = vadd.f32 0.0, %v2804
      %v2806 = vpop.f32.mrf.mxu0
      %2807 = vmatprep.mubr.bf16.mxu0 0
      %2808 = vmatmul.mubr.bf16.gmra.mxu0 %v2663
      %v2809 = vpop.f32.mrf.mxu0
      %v2810 = vadd.f32 0.0, %v2809
      %v2811 = vpop.f32.mrf.mxu0
      %v2812 = vpop.f32.mrf.mxu0
      %v2813 = vadd.f32 0.0, %v2812
      %v2814 = vpop.f32.mrf.mxu0
      %2815 = vmatprep.mubr.bf16.mxu0 0
      %2816 = vmatmul.mubr.bf16.gmra.mxu0 %v2666
      %v2817 = vpop.f32.mrf.mxu0
      %v2818 = vadd.f32 0.0, %v2817
      %v2819 = vpop.f32.mrf.mxu0
      %v2820 = vpop.f32.mrf.mxu0
      %v2821 = vadd.f32 0.0, %v2820
      %v2822 = vpop.f32.mrf.mxu0
      %2823 = vmatprep.mubr.bf16.mxu0 0
      %2824 = vmatmul.mubr.bf16.gmra.mxu0 %v2669
      %v2825 = vpop.f32.mrf.mxu0
      %v2826 = vadd.f32 0.0, %v2825
      %v2827 = vpop.f32.mrf.mxu0
      %v2828 = vpop.f32.mrf.mxu0
      %v2829 = vadd.f32 0.0, %v2828
      %v2830 = vpop.f32.mrf.mxu0
      %2831 = vdwg.mxu0
      %v2832 = vadd.f32 %v2526, %v2706
      %v2833 = vadd.f32 %v2527, %v2709
      %v2834 = vadd.f32 %v2528, %v2714
      %v2835 = vadd.f32 %v2529, %v2717
      %v2836 = vadd.f32 %v2530, %v2722
      %v2837 = vadd.f32 %v2531, %v2725
      %v2838 = vadd.f32 %v2532, %v2730
      %v2839 = vadd.f32 %v2533, %v2733
      %v2840 = vadd.f32 %v2534, %v2738
      %v2841 = vadd.f32 %v2535, %v2741
      %v2842 = vadd.f32 %v2536, %v2746
      %v2843 = vadd.f32 %v2537, %v2749
      %v2844 = vadd.f32 %v2538, %v2754
      %v2845 = vadd.f32 %v2539, %v2757
      %v2846 = vadd.f32 %v2540, %v2762
      %v2847 = vadd.f32 %v2541, %v2765
      %v2848 = vadd.f32 %v2542, %v2770
      %v2849 = vadd.f32 %v2543, %v2773
      %v2850 = vadd.f32 %v2544, %v2778
      %v2851 = vadd.f32 %v2545, %v2781
      %v2852 = vadd.f32 %v2546, %v2786
      %v2853 = vadd.f32 %v2547, %v2789
      %v2854 = vadd.f32 %v2548, %v2794
      %v2855 = vadd.f32 %v2549, %v2797
      %v2856 = vadd.f32 %v2550, %v2802
      %v2857 = vadd.f32 %v2551, %v2805
      %v2858 = vadd.f32 %v2552, %v2810
      %v2859 = vadd.f32 %v2553, %v2813
      %v2860 = vadd.f32 %v2554, %v2818
      %v2861 = vadd.f32 %v2555, %v2821
      %v2862 = vadd.f32 %v2556, %v2826
      %v2863 = vadd.f32 %v2557, %v2829
      %v2864 = vld [vmem:[%s2] sm:$0x1]
      %v2866 = vlaneseq
      %v2867 = vshrl.u32 %v2866, 7
      %v2868 = vsub.s32 0, %v2867
      %v2869 = vrot.slane %v2864, %v2868
      %v2871 = vadd.f32 %v2832, %v2869
      %v2872 = vadd.f32 %v2833, %v2869
      %v2873 = vadd.f32 %v2834, %v2869
      %v2874 = vadd.f32 %v2835, %v2869
      %v2875 = vadd.f32 %v2836, %v2869
      %v2876 = vadd.f32 %v2837, %v2869
      %v2877 = vadd.f32 %v2838, %v2869
      %v2878 = vadd.f32 %v2839, %v2869
      %v2879 = vadd.f32 %v2840, %v2869
      %v2880 = vadd.f32 %v2841, %v2869
      %v2881 = vadd.f32 %v2842, %v2869
      %v2882 = vadd.f32 %v2843, %v2869
      %v2883 = vadd.f32 %v2844, %v2869
      %v2884 = vadd.f32 %v2845, %v2869
      %v2885 = vadd.f32 %v2846, %v2869
      %v2886 = vadd.f32 %v2847, %v2869
      %v2887 = vadd.f32 %v2848, %v2869
      %v2888 = vadd.f32 %v2849, %v2869
      %v2889 = vadd.f32 %v2850, %v2869
      %v2890 = vadd.f32 %v2851, %v2869
      %v2891 = vadd.f32 %v2852, %v2869
      %v2892 = vadd.f32 %v2853, %v2869
      %v2893 = vadd.f32 %v2854, %v2869
      %v2894 = vadd.f32 %v2855, %v2869
      %v2895 = vadd.f32 %v2856, %v2869
      %v2896 = vadd.f32 %v2857, %v2869
      %v2897 = vadd.f32 %v2858, %v2869
      %v2898 = vadd.f32 %v2859, %v2869
      %v2899 = vadd.f32 %v2860, %v2869
      %v2900 = vadd.f32 %v2861, %v2869
      %v2901 = vadd.f32 %v2862, %v2869
      %v2902 = vadd.f32 %v2863, %v2869
      %v2903 = vpack.c.bf16 %v2872, %v2871
      %v2904 = vpack.c.bf16 %v2874, %v2873
      %v2905 = vpack.c.bf16 %v2876, %v2875
      %v2906 = vpack.c.bf16 %v2878, %v2877
      %v2907 = vpack.c.bf16 %v2880, %v2879
      %v2908 = vpack.c.bf16 %v2882, %v2881
      %v2909 = vpack.c.bf16 %v2884, %v2883
      %v2910 = vpack.c.bf16 %v2886, %v2885
      %v2911 = vpack.c.bf16 %v2888, %v2887
      %v2912 = vpack.c.bf16 %v2890, %v2889
      %v2913 = vpack.c.bf16 %v2892, %v2891
      %v2914 = vpack.c.bf16 %v2894, %v2893
      %v2915 = vpack.c.bf16 %v2896, %v2895
      %v2916 = vpack.c.bf16 %v2898, %v2897
      %v2917 = vpack.c.bf16 %v2900, %v2899
      %v2918 = vpack.c.bf16 %v2902, %v2901
      %v2935 = vunpack.c.l.b16 %v2903
      %v2936 = vunpack.c.h.b16 %v2903
      %v2937 = vunpack.c.l.b16 %v2904
      %v2938 = vunpack.c.h.b16 %v2904
      %v2939 = vunpack.c.l.b16 %v2905
      %v2940 = vunpack.c.h.b16 %v2905
      %v2941 = vunpack.c.l.b16 %v2906
      %v2942 = vunpack.c.h.b16 %v2906
      %v2943 = vunpack.c.l.b16 %v2907
      %v2944 = vunpack.c.h.b16 %v2907
      %v2945 = vunpack.c.l.b16 %v2908
      %v2946 = vunpack.c.h.b16 %v2908
      %v2947 = vunpack.c.l.b16 %v2909
      %v2948 = vunpack.c.h.b16 %v2909
      %v2949 = vunpack.c.l.b16 %v2910
      %v2950 = vunpack.c.h.b16 %v2910
      %v2951 = vunpack.c.l.b16 %v2911
      %v2952 = vunpack.c.h.b16 %v2911
      %v2953 = vunpack.c.l.b16 %v2912
      %v2954 = vunpack.c.h.b16 %v2912
      %v2955 = vunpack.c.l.b16 %v2913
      %v2956 = vunpack.c.h.b16 %v2913
      %v2957 = vunpack.c.l.b16 %v2914
      %v2958 = vunpack.c.h.b16 %v2914
      %v2959 = vunpack.c.l.b16 %v2915
      %v2960 = vunpack.c.h.b16 %v2915
      %v2961 = vunpack.c.l.b16 %v2916
      %v2962 = vunpack.c.h.b16 %v2916
      %v2963 = vunpack.c.l.b16 %v2917
      %v2964 = vunpack.c.h.b16 %v2917
      %v2965 = vunpack.c.l.b16 %v2918
      %v2966 = vunpack.c.h.b16 %v2918
      %v2967 = vpack.c.b16 %v2935, %v2935
      %v2968 = vpack.c.b16 %v2936, %v2936
      %v2969 = vpack.c.b16 %v2937, %v2937
      %v2970 = vpack.c.b16 %v2938, %v2938
      %v2971 = vpack.c.b16 %v2939, %v2939
      %v2972 = vpack.c.b16 %v2940, %v2940
      %v2973 = vpack.c.b16 %v2941, %v2941
      %v2974 = vpack.c.b16 %v2942, %v2942
      %v2975 = vpack.c.b16 %v2943, %v2943
      %v2976 = vpack.c.b16 %v2944, %v2944
      %v2977 = vpack.c.b16 %v2945, %v2945
      %v2978 = vpack.c.b16 %v2946, %v2946
      %v2979 = vpack.c.b16 %v2947, %v2947
      %v2980 = vpack.c.b16 %v2948, %v2948
      %v2981 = vpack.c.b16 %v2949, %v2949
      %v2982 = vpack.c.b16 %v2950, %v2950
      %v2983 = vpack.c.b16 %v2951, %v2951
      %v2984 = vpack.c.b16 %v2952, %v2952
      %v2985 = vpack.c.b16 %v2953, %v2953
      %v2986 = vpack.c.b16 %v2954, %v2954
      %v2987 = vpack.c.b16 %v2955, %v2955
      %v2988 = vpack.c.b16 %v2956, %v2956
      %v2989 = vpack.c.b16 %v2957, %v2957
      %v2990 = vpack.c.b16 %v2958, %v2958
      %v2991 = vpack.c.b16 %v2959, %v2959
      %v2992 = vpack.c.b16 %v2960, %v2960
      %v2993 = vpack.c.b16 %v2961, %v2961
      %v2994 = vpack.c.b16 %v2962, %v2962
      %v2995 = vpack.c.b16 %v2963, %v2963
      %v2996 = vpack.c.b16 %v2964, %v2964
      %v2997 = vpack.c.b16 %v2965, %v2965
      %v2998 = vpack.c.b16 %v2966, %v2966
      %3031 = vst [vmem:[%s170] sm:$0xf] %v2967
      %3032 = vst [vmem:[%s170 + $0x4] sm:$0xf] %v2968
      %3033 = vst [vmem:[%s170 + $0x8] sm:$0xf] %v2969
      %3034 = vst [vmem:[%s170 + $0xc] sm:$0xf] %v2970
      %3035 = vst [vmem:[%s170 + $0x10] sm:$0xf] %v2971
      %3036 = vst [vmem:[%s170 + $0x14] sm:$0xf] %v2972
      %3037 = vst [vmem:[%s170 + $0x18] sm:$0xf] %v2973
      %3038 = vst [vmem:[%s170 + $0x1c] sm:$0xf] %v2974
      %3039 = vst [vmem:[%s170 + $0x20] sm:$0xf] %v2975
      %3040 = vst [vmem:[%s170 + $0x24] sm:$0xf] %v2976
      %3041 = vst [vmem:[%s170 + $0x28] sm:$0xf] %v2977
      %3042 = vst [vmem:[%s170 + $0x2c] sm:$0xf] %v2978
      %3043 = vst [vmem:[%s170 + $0x30] sm:$0xf] %v2979
      %3044 = vst [vmem:[%s170 + $0x34] sm:$0xf] %v2980
      %3045 = vst [vmem:[%s170 + $0x38] sm:$0xf] %v2981
      %3046 = vst [vmem:[%s170 + $0x3c] sm:$0xf] %v2982
      %3047 = vst [vmem:[%s170 + $0x40] sm:$0xf] %v2983
      %3048 = vst [vmem:[%s170 + $0x44] sm:$0xf] %v2984
      %3049 = vst [vmem:[%s170 + $0x48] sm:$0xf] %v2985
      %3050 = vst [vmem:[%s170 + $0x4c] sm:$0xf] %v2986
      %3051 = vst [vmem:[%s170 + $0x50] sm:$0xf] %v2987
      %3052 = vst [vmem:[%s170 + $0x54] sm:$0xf] %v2988
      %3053 = vst [vmem:[%s170 + $0x58] sm:$0xf] %v2989
      %3054 = vst [vmem:[%s170 + $0x5c] sm:$0xf] %v2990
      %3055 = vst [vmem:[%s170 + $0x60] sm:$0xf] %v2991
      %3056 = vst [vmem:[%s170 + $0x64] sm:$0xf] %v2992
      %3057 = vst [vmem:[%s170 + $0x68] sm:$0xf] %v2993
      %3058 = vst [vmem:[%s170 + $0x6c] sm:$0xf] %v2994
      %3059 = vst [vmem:[%s170 + $0x70] sm:$0xf] %v2995
      %3060 = vst [vmem:[%s170 + $0x74] sm:$0xf] %v2996
      %3061 = vst [vmem:[%s170 + $0x78] sm:$0xf] %v2997
      %3062 = vst [vmem:[%s170 + $0x7c] sm:$0xf] %v2998
      %p3063 = scmp.lt.s32.totalorder %s14, 1
      %s3064 = scalar_select %p3063, %s14, 1
      %s3065 = smul.addr %s3064, 32
      %s3066 = smul.addr %s3065, 4
      %s3067 = scalar_lea.vmem %s3, %s3066
      // Predicated region
      $region33: #{fem_and_gfam_forward.3} parent=31 // pred_check
        %p3068 = pneg %p100
      $region34: #{fem_and_gfam_forward.3} parent=31 // pred_check_branch
        %3070 = sbr.rel (%p3068) target = $region36
      $region35: #{fem_and_gfam_forward.3} parent=31 // pred_region
        _
      $region36: #{fem_and_gfam_forward.3} parent=31 // pred_fallthru
        _
    $region32: #{fem_and_gfam_forward.3} parent=5 // pred_fallthru
      _
    %p3071 = scmp.le.s32.totalorder 2, %s9
    // Predicated region
    $region37: #{fem_and_gfam_forward.3} parent=5 // pred_check
      %p3072 = pneg %p3071
    $region38: #{fem_and_gfam_forward.3} parent=5 // pred_check_branch
      %3074 = sbr.rel (%p3072) target = $region40
    $region39: #{fem_and_gfam_forward.3} parent=5 // pred_region
      %s3075 = ssub.s32 %s9, 2
      // Predicated region
      $region41: #{fem_and_gfam_forward.3} parent=39 // pred_check
        %p3076 = pneg %p106
      $region42: #{fem_and_gfam_forward.3} parent=39 // pred_check_branch
        %3078 = sbr.rel (%p3076) target = $region44
      $region43: #{fem_and_gfam_forward.3} parent=39 // pred_region
        %p3079 = scmp.lt.s32.totalorder %s15, 1
        %s3080 = scalar_select %p3079, %s15, 1
        %s3081 = smul.addr %s3080, 32
        %s3082 = smul.addr %s3081, 4
        %s3083 = scalar_lea.vmem %s3, %s3082
      $region44: #{fem_and_gfam_forward.3} parent=39 // pred_fallthru
        _
    $region40: #{fem_and_gfam_forward.3} parent=5 // pred_fallthru
      _
  $region6: #{fem_and_gfam_forward.3} parent=0 // loop_footer
    %s13 = sadd.s32 1, %s9
  $region7: #{fem_and_gfam_forward.3} parent=0 // loop_footer_branch
    %8 = sbr.rel target = $region3
  $region8: #{fem_and_gfam_forward.3} parent=0 // loop_exit
    _

// kernel: fem_and_gfam_forward.4
$region0: #{fem_and_gfam_forward.4}
  #allocation0 [shape = 'u32[]', space=smem, size = 0x4, offset = 0x4, fixed_abs, tag = 'smem constant byte address 0x4 - core index']
  #allocation1 [shape = 'u32[144,128]{1,0:T(1,128)}', space=vmem, size = 0x12000, scoped, tag = 'internal scratch']
  %s0 = inlined_call_operand.vmem [shape: bf16[2,32,512], index: 0, kind: input, shape index: {}]
  %s1 = inlined_call_operand.vmem [shape: bf16[2,2,16,512], index: 1, kind: input, shape index: {}]
  %s2 = inlined_call_operand.vmem [shape: bf16[32,512], index: 2, kind: input, shape index: {}]
  %s3 = inlined_call_operand.vmem [shape: bf16[2,512,64], index: 3, kind: input, shape index: {}]
  %s4 = inlined_call_operand.vmem [shape: f32[2,1,64], index: 4, kind: input, shape index: {}]
  %s5 = inlined_call_operand.vmem [shape: bf16[2,512,2], index: 5, kind: input, shape index: {}]
  %s6 = inlined_call_operand.vmem [shape: f32[2,1,2], index: 6, kind: input, shape index: {}]
  %s7 = inlined_call_operand.vmem [shape: bf16[2,512,512], index: 7, kind: input, shape index: {}]
  %s8 = inlined_call_operand.vmem [shape: bf16[2,32,512], index: 8, kind: output, shape index: {}]
  %s9 = sld [smem:[#allocation0]]
  $region65: #{fem_and_gfam_forward.4} parent=0
    _
  %s11 = ssub.s32 1, %s9
  %s12 = scalar_select 0, %s11, %s9
  loop: start=0, step=1, limit=4
  $region2: #{fem_and_gfam_forward.4} parent=0 // loop_pre_header
    _
  $region3: #{fem_and_gfam_forward.4} parent=0 // loop_header
    %s14 = sphi 0, %s18
    %p15 = scmp.ge.s32.totalorder %s14, 4
    %s24 = sphi 0, %s26
    %s27 = sphi 0, %s24
    %s28 = sphi 0, %s27
    %s44 = sphi 0, %s28
    %s50 = sphi 0, %s52
    %s53 = sphi 0, %s50
    %s54 = sphi 0, %s53
    %s70 = sphi 0, %s54
    %s74 = sphi 0, %s74
    %s76 = sphi 0, %s74
    %s77 = sphi 0, %s76
    %s91 = sphi 0, %s77
    %s97 = sphi 0, %s99
    %s100 = sphi 0, %s97
    %s101 = sphi 0, %s100
    %s117 = sphi 0, %s101
    %s123 = sphi 0, %s125
    %s126 = sphi 0, %s123
    %s127 = sphi 0, %s126
    %s143 = sphi 0, %s127
    %s149 = sphi 0, %s151
    %s152 = sphi 0, %s149
    %s153 = sphi 0, %s152
    %s169 = sphi 0, %s153
    %s175 = sphi 0, %s177
    %s178 = sphi 0, %s175
    %s179 = sphi 0, %s178
    %s195 = sphi 0, %s179
    %s201 = sphi 0, %s203
    %s204 = sphi 0, %s201
    %s205 = sphi 0, %s204
    %s221 = sphi 0, %s205
    %s227 = sphi 0, %s229
    %s230 = sphi 0, %s227
    %s231 = sphi 0, %s230
    %s247 = sphi 0, %s231
  $region4: #{fem_and_gfam_forward.4} parent=0 // loop_header_branch
    %17 = sbr.rel (%p15) target = $region8
  $region5: #{fem_and_gfam_forward.4} parent=0 // loop_body
    %s19 = ssub.s32 %s14, 1
    %s20 = ssub.s32 %s14, 2
    %s21 = sadd.s32 %s14, 1
    %s22 = ssub.s32 %s14, %s21
    %p23 = scmp.eq.s32.totalorder %s22, 0
    %s25 = sadd.s32 %s24, 1
    %s26 = scalar_select %p23, %s24, %s25
    %p29 = pneg %p23
    %p30 = scmp.eq.s32.totalorder %s14, 1
    %p31 = por %p29, %p30
    %p32 = scmp.ne.s32.totalorder %s24, %s27
    %p33 = scmp.eq.s32.totalorder %s14, 0
    %p34 = por %p32, %p33
    %p35 = scmp.ne.s32.totalorder %s24, %s27
    %p36 = scmp.eq.s32.totalorder %s19, 1
    %p37 = por %p35, %p36
    %p38 = scmp.ne.s32.totalorder %s27, %s28
    %p39 = scmp.eq.s32.totalorder %s19, 0
    %p40 = por %p38, %p39
    %p41 = scmp.ne.s32.totalorder %s27, %s28
    %p42 = scmp.eq.s32.totalorder %s20, 1
    %p43 = por %p41, %p42
    %p45 = scmp.ne.s32.totalorder %s28, %s44
    %p46 = scmp.eq.s32.totalorder %s20, 0
    %p47 = por %p45, %p46
    %s48 = ssub.s32 %s14, %s21
    %p49 = scmp.eq.s32.totalorder %s48, 0
    %s51 = sadd.s32 %s50, 1
    %s52 = scalar_select %p49, %s50, %s51
    %p55 = pneg %p49
    %p56 = scmp.eq.s32.totalorder %s14, 1
    %p57 = por %p55, %p56
    %p58 = scmp.ne.s32.totalorder %s50, %s53
    %p59 = scmp.eq.s32.totalorder %s14, 0
    %p60 = por %p58, %p59
    %p61 = scmp.ne.s32.totalorder %s50, %s53
    %p62 = scmp.eq.s32.totalorder %s19, 1
    %p63 = por %p61, %p62
    %p64 = scmp.ne.s32.totalorder %s53, %s54
    %p65 = scmp.eq.s32.totalorder %s19, 0
    %p66 = por %p64, %p65
    %p67 = scmp.ne.s32.totalorder %s53, %s54
    %p68 = scmp.eq.s32.totalorder %s20, 1
    %p69 = por %p67, %p68
    %p71 = scmp.ne.s32.totalorder %s54, %s70
    %p72 = scmp.eq.s32.totalorder %s20, 0
    %p73 = por %p71, %p72
    %s75 = sadd.s32 %s74, 1
    %p78 = scmp.eq.s32.totalorder %s14, 1
    %p79 = scmp.ne.s32.totalorder %s74, %s76
    %p80 = scmp.eq.s32.totalorder %s14, 0
    %p81 = por %p79, %p80
    %p82 = scmp.ne.s32.totalorder %s74, %s76
    %p83 = scmp.eq.s32.totalorder %s19, 1
    %p84 = por %p82, %p83
    %p85 = scmp.ne.s32.totalorder %s76, %s77
    %p86 = scmp.eq.s32.totalorder %s19, 0
    %p87 = por %p85, %p86
    %p88 = scmp.ne.s32.totalorder %s76, %s77
    %p89 = scmp.eq.s32.totalorder %s20, 1
    %p90 = por %p88, %p89
    %p92 = scmp.ne.s32.totalorder %s77, %s91
    %p93 = scmp.eq.s32.totalorder %s20, 0
    %p94 = por %p92, %p93
    %s95 = ssub.s32 %s14, %s21
    %p96 = scmp.eq.s32.totalorder %s95, 0
    %s98 = sadd.s32 %s97, 1
    %s99 = scalar_select %p96, %s97, %s98
    %p102 = pneg %p96
    %p103 = scmp.eq.s32.totalorder %s14, 1
    %p104 = por %p102, %p103
    %p105 = scmp.ne.s32.totalorder %s97, %s100
    %p106 = scmp.eq.s32.totalorder %s14, 0
    %p107 = por %p105, %p106
    %p108 = scmp.ne.s32.totalorder %s97, %s100
    %p109 = scmp.eq.s32.totalorder %s19, 1
    %p110 = por %p108, %p109
    %p111 = scmp.ne.s32.totalorder %s100, %s101
    %p112 = scmp.eq.s32.totalorder %s19, 0
    %p113 = por %p111, %p112
    %p114 = scmp.ne.s32.totalorder %s100, %s101
    %p115 = scmp.eq.s32.totalorder %s20, 1
    %p116 = por %p114, %p115
    %p118 = scmp.ne.s32.totalorder %s101, %s117
    %p119 = scmp.eq.s32.totalorder %s20, 0
    %p120 = por %p118, %p119
    %s121 = ssub.s32 %s14, %s21
    %p122 = scmp.eq.s32.totalorder %s121, 0
    %s124 = sadd.s32 %s123, 1
    %s125 = scalar_select %p122, %s123, %s124
    %p128 = pneg %p122
    %p129 = scmp.eq.s32.totalorder %s14, 1
    %p130 = por %p128, %p129
    %p131 = scmp.ne.s32.totalorder %s123, %s126
    %p132 = scmp.eq.s32.totalorder %s14, 0
    %p133 = por %p131, %p132
    %p134 = scmp.ne.s32.totalorder %s123, %s126
    %p135 = scmp.eq.s32.totalorder %s19, 1
    %p136 = por %p134, %p135
    %p137 = scmp.ne.s32.totalorder %s126, %s127
    %p138 = scmp.eq.s32.totalorder %s19, 0
    %p139 = por %p137, %p138
    %p140 = scmp.ne.s32.totalorder %s126, %s127
    %p141 = scmp.eq.s32.totalorder %s20, 1
    %p142 = por %p140, %p141
    %p144 = scmp.ne.s32.totalorder %s127, %s143
    %p145 = scmp.eq.s32.totalorder %s20, 0
    %p146 = por %p144, %p145
    %s147 = ssub.s32 %s14, %s21
    %p148 = scmp.eq.s32.totalorder %s147, 0
    %s150 = sadd.s32 %s149, 1
    %s151 = scalar_select %p148, %s149, %s150
    %p154 = pneg %p148
    %p155 = scmp.eq.s32.totalorder %s14, 1
    %p156 = por %p154, %p155
    %p157 = scmp.ne.s32.totalorder %s149, %s152
    %p158 = scmp.eq.s32.totalorder %s14, 0
    %p159 = por %p157, %p158
    %p160 = scmp.ne.s32.totalorder %s149, %s152
    %p161 = scmp.eq.s32.totalorder %s19, 1
    %p162 = por %p160, %p161
    %p163 = scmp.ne.s32.totalorder %s152, %s153
    %p164 = scmp.eq.s32.totalorder %s19, 0
    %p165 = por %p163, %p164
    %p166 = scmp.ne.s32.totalorder %s152, %s153
    %p167 = scmp.eq.s32.totalorder %s20, 1
    %p168 = por %p166, %p167
    %p170 = scmp.ne.s32.totalorder %s153, %s169
    %p171 = scmp.eq.s32.totalorder %s20, 0
    %p172 = por %p170, %p171
    %s173 = ssub.s32 %s14, %s21
    %p174 = scmp.eq.s32.totalorder %s173, 0
    %s176 = sadd.s32 %s175, 1
    %s177 = scalar_select %p174, %s175, %s176
    %p180 = pneg %p174
    %p181 = scmp.eq.s32.totalorder %s14, 1
    %p182 = por %p180, %p181
    %p183 = scmp.ne.s32.totalorder %s175, %s178
    %p184 = scmp.eq.s32.totalorder %s14, 0
    %p185 = por %p183, %p184
    %p186 = scmp.ne.s32.totalorder %s175, %s178
    %p187 = scmp.eq.s32.totalorder %s19, 1
    %p188 = por %p186, %p187
    %p189 = scmp.ne.s32.totalorder %s178, %s179
    %p190 = scmp.eq.s32.totalorder %s19, 0
    %p191 = por %p189, %p190
    %p192 = scmp.ne.s32.totalorder %s178, %s179
    %p193 = scmp.eq.s32.totalorder %s20, 1
    %p194 = por %p192, %p193
    %p196 = scmp.ne.s32.totalorder %s179, %s195
    %p197 = scmp.eq.s32.totalorder %s20, 0
    %p198 = por %p196, %p197
    %s199 = ssub.s32 %s14, %s21
    %p200 = scmp.eq.s32.totalorder %s199, 0
    %s202 = sadd.s32 %s201, 1
    %s203 = scalar_select %p200, %s201, %s202
    %p206 = pneg %p200
    %p207 = scmp.eq.s32.totalorder %s14, 1
    %p208 = por %p206, %p207
    %p209 = scmp.ne.s32.totalorder %s201, %s204
    %p210 = scmp.eq.s32.totalorder %s14, 0
    %p211 = por %p209, %p210
    %p212 = scmp.ne.s32.totalorder %s201, %s204
    %p213 = scmp.eq.s32.totalorder %s19, 1
    %p214 = por %p212, %p213
    %p215 = scmp.ne.s32.totalorder %s204, %s205
    %p216 = scmp.eq.s32.totalorder %s19, 0
    %p217 = por %p215, %p216
    %p218 = scmp.ne.s32.totalorder %s204, %s205
    %p219 = scmp.eq.s32.totalorder %s20, 1
    %p220 = por %p218, %p219
    %p222 = scmp.ne.s32.totalorder %s205, %s221
    %p223 = scmp.eq.s32.totalorder %s20, 0
    %p224 = por %p222, %p223
    %s225 = ssub.s32 %s14, %s21
    %p226 = scmp.eq.s32.totalorder %s225, 0
    %s228 = sadd.s32 %s227, 1
    %s229 = scalar_select %p226, %s227, %s228
    %p232 = pneg %p226
    %p233 = scmp.eq.s32.totalorder %s14, 1
    %p234 = por %p232, %p233
    %p235 = scmp.ne.s32.totalorder %s227, %s230
    %p236 = scmp.eq.s32.totalorder %s14, 0
    %p237 = por %p235, %p236
    %p238 = scmp.ne.s32.totalorder %s227, %s230
    %p239 = scmp.eq.s32.totalorder %s19, 1
    %p240 = por %p238, %p239
    %p241 = scmp.ne.s32.totalorder %s230, %s231
    %p242 = scmp.eq.s32.totalorder %s19, 0
    %p243 = por %p241, %p242
    %p244 = scmp.ne.s32.totalorder %s230, %s231
    %p245 = scmp.eq.s32.totalorder %s20, 1
    %p246 = por %p244, %p245
    %p248 = scmp.ne.s32.totalorder %s231, %s247
    %p249 = scmp.eq.s32.totalorder %s20, 0
    %p250 = por %p248, %p249
    %p251 = scmp.le.s32.totalorder 1, %s14
    %p252 = scmp.lt.s32.totalorder %s14, 3
    %p253 = pnand %p251, %p252
    %p254 = pneg %p253
    // Predicated region
    $region9: #{fem_and_gfam_forward.4} parent=5 // pred_check
      _
    $region10: #{fem_and_gfam_forward.4} parent=5 // pred_check_branch
      %256 = sbr.rel (%p253) target = $region12
    $region11: #{fem_and_gfam_forward.4} parent=5 // pred_region
      %s257 = ssub.s32 %s14, 1
      // Predicated region
      $region13: #{fem_and_gfam_forward.4} parent=11 // pred_check
        %p258 = pneg %p87
      $region14: #{fem_and_gfam_forward.4} parent=11 // pred_check_branch
        %260 = sbr.rel (%p258) target = $region16
      $region15: #{fem_and_gfam_forward.4} parent=11 // pred_region
        _
      $region16: #{fem_and_gfam_forward.4} parent=11 // pred_fallthru
        _
    $region12: #{fem_and_gfam_forward.4} parent=5 // pred_fallthru
      _
    %p261 = scmp.lt.s32.totalorder %s14, 2
    // Predicated region
    $region17: #{fem_and_gfam_forward.4} parent=5 // pred_check
      %p262 = pneg %p261
    $region18: #{fem_and_gfam_forward.4} parent=5 // pred_check_branch
      %264 = sbr.rel (%p262) target = $region20
    $region19: #{fem_and_gfam_forward.4} parent=5 // pred_region
      // Predicated region
      $region21: #{fem_and_gfam_forward.4} parent=19 // pred_check
        %p265 = pneg %p34
      $region22: #{fem_and_gfam_forward.4} parent=19 // pred_check_branch
        %267 = sbr.rel (%p265) target = $region24
      $region23: #{fem_and_gfam_forward.4} parent=19 // pred_region
        %p268 = scmp.lt.s32.totalorder %s14, 1
        %s269 = scalar_select %p268, %s14, 1
        %s270 = smul.addr %s269, 16
        %s271 = smul.addr %s270, 4
        %s272 = scalar_lea.vmem %s0, %s271
      $region24: #{fem_and_gfam_forward.4} parent=19 // pred_fallthru
        _
      // Predicated region
      $region25: #{fem_and_gfam_forward.4} parent=19 // pred_check
        %p273 = pneg %p60
      $region26: #{fem_and_gfam_forward.4} parent=19 // pred_check_branch
        %275 = sbr.rel (%p273) target = $region28
      $region27: #{fem_and_gfam_forward.4} parent=19 // pred_region
        %p276 = scmp.lt.s32.totalorder %s14, 1
        %s277 = scalar_select %p276, %s14, 1
        %s278 = smul.addr %s277, 16
        %s279 = smul.addr %s278, 4
        %s280 = scalar_lea.vmem %s1, %s279
      $region28: #{fem_and_gfam_forward.4} parent=19 // pred_fallthru
        _
      // Predicated region
      $region29: #{fem_and_gfam_forward.4} parent=19 // pred_check
        %p281 = pneg %p107
      $region30: #{fem_and_gfam_forward.4} parent=19 // pred_check_branch
        %283 = sbr.rel (%p281) target = $region32
      $region31: #{fem_and_gfam_forward.4} parent=19 // pred_region
        %p284 = scmp.lt.s32.totalorder %s14, 1
        %s285 = scalar_select %p284, %s14, 1
        %s286 = smul.addr %s285, 64
        %s287 = smul.addr %s286, 4
        %s288 = scalar_lea.vmem %s3, %s287
      $region32: #{fem_and_gfam_forward.4} parent=19 // pred_fallthru
        _
      // Predicated region
      $region33: #{fem_and_gfam_forward.4} parent=19 // pred_check
        %p289 = pneg %p133
      $region34: #{fem_and_gfam_forward.4} parent=19 // pred_check_branch
        %291 = sbr.rel (%p289) target = $region36
      $region35: #{fem_and_gfam_forward.4} parent=19 // pred_region
        %p292 = scmp.lt.s32.totalorder %s14, 1
        %s293 = scalar_select %p292, %s14, 1
        %s294 = scalar_lea.vmem %s4, %s293
      $region36: #{fem_and_gfam_forward.4} parent=19 // pred_fallthru
        _
      // Predicated region
      $region37: #{fem_and_gfam_forward.4} parent=19 // pred_check
        %p295 = pneg %p159
      $region38: #{fem_and_gfam_forward.4} parent=19 // pred_check_branch
        %297 = sbr.rel (%p295) target = $region40
      $region39: #{fem_and_gfam_forward.4} parent=19 // pred_region
        %p298 = scmp.lt.s32.totalorder %s14, 1
        %s299 = scalar_select %p298, %s14, 1
        %s300 = smul.addr %s299, 64
        %s301 = smul.addr %s300, 4
        %s302 = scalar_lea.vmem %s5, %s301
      $region40: #{fem_and_gfam_forward.4} parent=19 // pred_fallthru
        _
      // Predicated region
      $region41: #{fem_and_gfam_forward.4} parent=19 // pred_check
        %p303 = pneg %p185
      $region42: #{fem_and_gfam_forward.4} parent=19 // pred_check_branch
        %305 = sbr.rel (%p303) target = $region44
      $region43: #{fem_and_gfam_forward.4} parent=19 // pred_region
        %p306 = scmp.lt.s32.totalorder %s14, 1
        %s307 = scalar_select %p306, %s14, 1
        %s308 = scalar_lea.vmem %s6, %s307
      $region44: #{fem_and_gfam_forward.4} parent=19 // pred_fallthru
        _
      // Predicated region
      $region45: #{fem_and_gfam_forward.4} parent=19 // pred_check
        %p309 = pneg %p211
      $region46: #{fem_and_gfam_forward.4} parent=19 // pred_check_branch
        %311 = sbr.rel (%p309) target = $region48
      $region47: #{fem_and_gfam_forward.4} parent=19 // pred_region
        %p312 = scmp.lt.s32.totalorder %s14, 1
        %s313 = scalar_select %p312, %s14, 1
        %s314 = smul.addr %s313, 256
        %s315 = smul.addr %s314, 4
        %s316 = scalar_lea.vmem %s7, %s315
      $region48: #{fem_and_gfam_forward.4} parent=19 // pred_fallthru
        _
    $region20: #{fem_and_gfam_forward.4} parent=5 // pred_fallthru
      _
    %p317 = scmp.le.s32.totalorder 1, %s14
    %p318 = scmp.lt.s32.totalorder %s14, 3
    %p319 = pnand %p317, %p318
    %p320 = pneg %p319
    // Predicated region
    $region49: #{fem_and_gfam_forward.4} parent=5 // pred_check
      _
    $region50: #{fem_and_gfam_forward.4} parent=5 // pred_check_branch
      %322 = sbr.rel (%p319) target = $region52
    $region51: #{fem_and_gfam_forward.4} parent=5 // pred_region
      %s323 = ssub.s32 %s14, 1
      %p324 = scmp.lt.s32.totalorder %s19, 1
      %s325 = scalar_select %p324, %s19, 1
      %s326 = smul.addr %s325, 16
      %s327 = smul.addr %s326, 4
      %s328 = scalar_lea.vmem %s0, %s327
      %p329 = pneg %p40
      %p330 = pneg %p37
      %p331 = scmp.lt.s32.totalorder %s19, 1
      %s332 = scalar_select %p331, %s19, 1
      %s333 = smul.addr %s332, 16
      %s334 = smul.addr %s333, 4
      %s335 = scalar_lea.vmem %s1, %s334
      %p336 = pneg %p66
      %p337 = pneg %p63
      %p338 = pneg %p87
      %p339 = pneg %p84
      %p340 = scmp.lt.s32.totalorder %s19, 1
      %s341 = scalar_select %p340, %s19, 1
      %s342 = smul.addr %s341, 64
      %s343 = smul.addr %s342, 4
      %s344 = scalar_lea.vmem %s3, %s343
      %p345 = pneg %p113
      %p346 = pneg %p110
      %p347 = scmp.lt.s32.totalorder %s19, 1
      %s348 = scalar_select %p347, %s19, 1
      %s349 = scalar_lea.vmem %s4, %s348
      %p350 = pneg %p139
      %p351 = pneg %p136
      %p352 = scmp.lt.s32.totalorder %s19, 1
      %s353 = scalar_select %p352, %s19, 1
      %s354 = smul.addr %s353, 64
      %s355 = smul.addr %s354, 4
      %s356 = scalar_lea.vmem %s5, %s355
      %p357 = pneg %p165
      %p358 = pneg %p162
      %p359 = scmp.lt.s32.totalorder %s19, 1
      %s360 = scalar_select %p359, %s19, 1
      %s361 = scalar_lea.vmem %s6, %s360
      %p362 = pneg %p191
      %p363 = pneg %p188
      %p364 = scmp.lt.s32.totalorder %s19, 1
      %s365 = scalar_select %p364, %s19, 1
      %s366 = smul.addr %s365, 256
      %s367 = smul.addr %s366, 4
      %s368 = scalar_lea.vmem %s7, %s367
      %p369 = pneg %p217
      %p370 = pneg %p214
      %p371 = pneg %p243
      %p372 = pneg %p240
      %p373 = scmp.lt.s32.totalorder %s19, 1
      %s374 = scalar_select %p373, %s19, 1
      %s375 = smul.addr %s374, 16
      %s376 = smul.addr %s375, 4
      %s377 = scalar_lea.vmem %s8, %s376
      %p378 = scmp.lt.s32.totalorder %s19, 1
      %s379 = scalar_select %p378, %s19, 1
      %s380 = smul.addr %s379, 16
      %s381 = smul.addr %s380, 4
      %s382 = scalar_lea.vmem %s0, %s381
      %p383 = scmp.lt.s32.totalorder %s19, 1
      %s384 = scalar_select %p383, %s19, 1
      %s385 = smul.addr %s384, 16
      %s386 = smul.addr %s385, 4
      %s387 = scalar_lea.vmem %s1, %s386
      %p388 = scmp.lt.s32.totalorder %s19, 1
      %s389 = scalar_select %p388, %s19, 1
      %s390 = smul.addr %s389, 64
      %s391 = smul.addr %s390, 4
      %s392 = scalar_lea.vmem %s3, %s391
      %p393 = scmp.lt.s32.totalorder %s19, 1
      %s394 = scalar_select %p393, %s19, 1
      %s395 = scalar_lea.vmem %s4, %s394
      %p396 = scmp.lt.s32.totalorder %s19, 1
      %s397 = scalar_select %p396, %s19, 1
      %s398 = smul.addr %s397, 64
      %s399 = smul.addr %s398, 4
      %s400 = scalar_lea.vmem %s5, %s399
      %p401 = scmp.lt.s32.totalorder %s19, 1
      %s402 = scalar_select %p401, %s19, 1
      %s403 = scalar_lea.vmem %s6, %s402
      %p404 = scmp.lt.s32.totalorder %s19, 1
      %s405 = scalar_select %p404, %s19, 1
      %s406 = smul.addr %s405, 256
      %s407 = smul.addr %s406, 4
      %s408 = scalar_lea.vmem %s7, %s407
      %p409 = scmp.lt.s32.totalorder %s19, 1
      %s410 = scalar_select %p409, %s19, 1
      %s411 = smul.addr %s410, 16
      %s412 = smul.addr %s411, 4
      %s413 = scalar_lea.vmem %s8, %s412
      %v415 = vld [vmem:[%s382] sm:$0xff]
      %v416 = vld [vmem:[%s382 + $0x8] sm:$0xff]
      %v417 = vld [vmem:[%s382 + $0x10] sm:$0xff]
      %v418 = vld [vmem:[%s382 + $0x18] sm:$0xff]
      %v419 = vld [vmem:[%s382 + $0x20] sm:$0xff]
      %v420 = vld [vmem:[%s382 + $0x28] sm:$0xff]
      %v421 = vld [vmem:[%s382 + $0x30] sm:$0xff]
      %v422 = vld [vmem:[%s382 + $0x38] sm:$0xff]
      %v423 = vld [vmem:[%s392] sm:$0xf]
      %v424 = vld [vmem:[%s392 + $0x4] sm:$0xf]
      %v425 = vld [vmem:[%s392 + $0x8] sm:$0xf]
      %v426 = vld [vmem:[%s392 + $0xc] sm:$0xf]
      %v427 = vld [vmem:[%s392 + $0x10] sm:$0xf]
      %v428 = vld [vmem:[%s392 + $0x14] sm:$0xf]
      %v429 = vld [vmem:[%s392 + $0x18] sm:$0xf]
      %v430 = vld [vmem:[%s392 + $0x1c] sm:$0xf]
      %v431 = vld [vmem:[%s392 + $0x20] sm:$0xf]
      %v432 = vld [vmem:[%s392 + $0x24] sm:$0xf]
      %v433 = vld [vmem:[%s392 + $0x28] sm:$0xf]
      %v434 = vld [vmem:[%s392 + $0x2c] sm:$0xf]
      %v435 = vld [vmem:[%s392 + $0x30] sm:$0xf]
      %v436 = vld [vmem:[%s392 + $0x34] sm:$0xf]
      %v437 = vld [vmem:[%s392 + $0x38] sm:$0xf]
      %v438 = vld [vmem:[%s392 + $0x3c] sm:$0xf]
      %v439 = vld [vmem:[%s392 + $0x40] sm:$0xf]
      %v440 = vld [vmem:[%s392 + $0x44] sm:$0xf]
      %v441 = vld [vmem:[%s392 + $0x48] sm:$0xf]
      %v442 = vld [vmem:[%s392 + $0x4c] sm:$0xf]
      %v443 = vld [vmem:[%s392 + $0x50] sm:$0xf]
      %v444 = vld [vmem:[%s392 + $0x54] sm:$0xf]
      %v445 = vld [vmem:[%s392 + $0x58] sm:$0xf]
      %v446 = vld [vmem:[%s392 + $0x5c] sm:$0xf]
      %v447 = vld [vmem:[%s392 + $0x60] sm:$0xf]
      %v448 = vld [vmem:[%s392 + $0x64] sm:$0xf]
      %v449 = vld [vmem:[%s392 + $0x68] sm:$0xf]
      %v450 = vld [vmem:[%s392 + $0x6c] sm:$0xf]
      %v451 = vld [vmem:[%s392 + $0x70] sm:$0xf]
      %v452 = vld [vmem:[%s392 + $0x74] sm:$0xf]
      %v453 = vld [vmem:[%s392 + $0x78] sm:$0xf]
      %v454 = vld [vmem:[%s392 + $0x7c] sm:$0xf]
      %v455 = vld [vmem:[%s392 + $0x80] sm:$0xf]
      %v456 = vld [vmem:[%s392 + $0x84] sm:$0xf]
      %v457 = vld [vmem:[%s392 + $0x88] sm:$0xf]
      %v458 = vld [vmem:[%s392 + $0x8c] sm:$0xf]
      %v459 = vld [vmem:[%s392 + $0x90] sm:$0xf]
      %v460 = vld [vmem:[%s392 + $0x94] sm:$0xf]
      %v461 = vld [vmem:[%s392 + $0x98] sm:$0xf]
      %v462 = vld [vmem:[%s392 + $0x9c] sm:$0xf]
      %v463 = vld [vmem:[%s392 + $0xa0] sm:$0xf]
      %v464 = vld [vmem:[%s392 + $0xa4] sm:$0xf]
      %v465 = vld [vmem:[%s392 + $0xa8] sm:$0xf]
      %v466 = vld [vmem:[%s392 + $0xac] sm:$0xf]
      %v467 = vld [vmem:[%s392 + $0xb0] sm:$0xf]
      %v468 = vld [vmem:[%s392 + $0xb4] sm:$0xf]
      %v469 = vld [vmem:[%s392 + $0xb8] sm:$0xf]
      %v470 = vld [vmem:[%s392 + $0xbc] sm:$0xf]
      %v471 = vld [vmem:[%s392 + $0xc0] sm:$0xf]
      %v472 = vld [vmem:[%s392 + $0xc4] sm:$0xf]
      %v473 = vld [vmem:[%s392 + $0xc8] sm:$0xf]
      %v474 = vld [vmem:[%s392 + $0xcc] sm:$0xf]
      %v475 = vld [vmem:[%s392 + $0xd0] sm:$0xf]
      %v476 = vld [vmem:[%s392 + $0xd4] sm:$0xf]
      %v477 = vld [vmem:[%s392 + $0xd8] sm:$0xf]
      %v478 = vld [vmem:[%s392 + $0xdc] sm:$0xf]
      %v479 = vld [vmem:[%s392 + $0xe0] sm:$0xf]
      %v480 = vld [vmem:[%s392 + $0xe4] sm:$0xf]
      %v481 = vld [vmem:[%s392 + $0xe8] sm:$0xf]
      %v482 = vld [vmem:[%s392 + $0xec] sm:$0xf]
      %v483 = vld [vmem:[%s392 + $0xf0] sm:$0xf]
      %v484 = vld [vmem:[%s392 + $0xf4] sm:$0xf]
      %v485 = vld [vmem:[%s392 + $0xf8] sm:$0xf]
      %v486 = vld [vmem:[%s392 + $0xfc] sm:$0xf]
      %v487 = vld [vmem:[%s395] sm:$0x1]
      %v489 = vlaneseq
      %v490 = vshrl.u32 %v489, 7
      %v491 = vsub.s32 0, %v490
      %v492 = vrot.slane %v487, %v491
      %v502 = vunpack.c.l.b16 %v415
      %v503 = vunpack.c.h.b16 %v415
      %v504 = vunpack.c.l.b16 %v416
      %v505 = vunpack.c.h.b16 %v416
      %v506 = vunpack.c.l.b16 %v417
      %v507 = vunpack.c.h.b16 %v417
      %v508 = vunpack.c.l.b16 %v418
      %v509 = vunpack.c.h.b16 %v418
      %v510 = vunpack.c.l.b16 %v419
      %v511 = vunpack.c.h.b16 %v419
      %v512 = vunpack.c.l.b16 %v420
      %v513 = vunpack.c.h.b16 %v420
      %v514 = vunpack.c.l.b16 %v421
      %v515 = vunpack.c.h.b16 %v421
      %v516 = vunpack.c.l.b16 %v422
      %v517 = vunpack.c.h.b16 %v422
      %v518 = vpack.c.b16 %v506, %v502
      %v519 = vpack.c.b16 %v507, %v503
      %v520 = vpack.c.b16 %v508, %v504
      %v521 = vpack.c.b16 %v509, %v505
      %v522 = vpack.c.b16 %v514, %v510
      %v523 = vpack.c.b16 %v515, %v511
      %v524 = vpack.c.b16 %v516, %v512
      %v525 = vpack.c.b16 %v517, %v513
      %v598 = vunpack.c.l.b16 %v423
      %v599 = vunpack.c.l.b16 %v424
      %v600 = vunpack.c.l.b16 %v425
      %v601 = vunpack.c.l.b16 %v426
      %v602 = vunpack.c.l.b16 %v427
      %v603 = vunpack.c.l.b16 %v428
      %v604 = vunpack.c.l.b16 %v429
      %v605 = vunpack.c.l.b16 %v430
      %v606 = vunpack.c.l.b16 %v431
      %v607 = vunpack.c.l.b16 %v432
      %v608 = vunpack.c.l.b16 %v433
      %v609 = vunpack.c.l.b16 %v434
      %v610 = vunpack.c.l.b16 %v435
      %v611 = vunpack.c.l.b16 %v436
      %v612 = vunpack.c.l.b16 %v437
      %v613 = vunpack.c.l.b16 %v438
      %v614 = vunpack.c.l.b16 %v439
      %v615 = vunpack.c.l.b16 %v440
      %v616 = vunpack.c.l.b16 %v441
      %v617 = vunpack.c.l.b16 %v442
      %v618 = vunpack.c.l.b16 %v443
      %v619 = vunpack.c.l.b16 %v444
      %v620 = vunpack.c.l.b16 %v445
      %v621 = vunpack.c.l.b16 %v446
      %v622 = vunpack.c.l.b16 %v447
      %v623 = vunpack.c.l.b16 %v448
      %v624 = vunpack.c.l.b16 %v449
      %v625 = vunpack.c.l.b16 %v450
      %v626 = vunpack.c.l.b16 %v451
      %v627 = vunpack.c.l.b16 %v452
      %v628 = vunpack.c.l.b16 %v453
      %v629 = vunpack.c.l.b16 %v454
      %v630 = vunpack.c.l.b16 %v455
      %v631 = vunpack.c.l.b16 %v456
      %v632 = vunpack.c.l.b16 %v457
      %v633 = vunpack.c.l.b16 %v458
      %v634 = vunpack.c.l.b16 %v459
      %v635 = vunpack.c.l.b16 %v460
      %v636 = vunpack.c.l.b16 %v461
      %v637 = vunpack.c.l.b16 %v462
      %v638 = vunpack.c.l.b16 %v463
      %v639 = vunpack.c.l.b16 %v464
      %v640 = vunpack.c.l.b16 %v465
      %v641 = vunpack.c.l.b16 %v466
      %v642 = vunpack.c.l.b16 %v467
      %v643 = vunpack.c.l.b16 %v468
      %v644 = vunpack.c.l.b16 %v469
      %v645 = vunpack.c.l.b16 %v470
      %v646 = vunpack.c.l.b16 %v471
      %v647 = vunpack.c.l.b16 %v472
      %v648 = vunpack.c.l.b16 %v473
      %v649 = vunpack.c.l.b16 %v474
      %v650 = vunpack.c.l.b16 %v475
      %v651 = vunpack.c.l.b16 %v476
      %v652 = vunpack.c.l.b16 %v477
      %v653 = vunpack.c.l.b16 %v478
      %v654 = vunpack.c.l.b16 %v479
      %v655 = vunpack.c.l.b16 %v480
      %v656 = vunpack.c.l.b16 %v481
      %v657 = vunpack.c.l.b16 %v482
      %v658 = vunpack.c.l.b16 %v483
      %v659 = vunpack.c.l.b16 %v484
      %v660 = vunpack.c.l.b16 %v485
      %v661 = vunpack.c.l.b16 %v486
      %v662 = vpack.c.b16 %v599, %v598
      %v663 = vpack.c.b16 %v601, %v600
      %v664 = vpack.c.b16 %v603, %v602
      %v665 = vpack.c.b16 %v605, %v604
      %v666 = vpack.c.b16 %v607, %v606
      %v667 = vpack.c.b16 %v609, %v608
      %v668 = vpack.c.b16 %v611, %v610
      %v669 = vpack.c.b16 %v613, %v612
      %v670 = vpack.c.b16 %v615, %v614
      %v671 = vpack.c.b16 %v617, %v616
      %v672 = vpack.c.b16 %v619, %v618
      %v673 = vpack.c.b16 %v621, %v620
      %v674 = vpack.c.b16 %v623, %v622
      %v675 = vpack.c.b16 %v625, %v624
      %v676 = vpack.c.b16 %v627, %v626
      %v677 = vpack.c.b16 %v629, %v628
      %v678 = vpack.c.b16 %v631, %v630
      %v679 = vpack.c.b16 %v633, %v632
      %v680 = vpack.c.b16 %v635, %v634
      %v681 = vpack.c.b16 %v637, %v636
      %v682 = vpack.c.b16 %v639, %v638
      %v683 = vpack.c.b16 %v641, %v640
      %v684 = vpack.c.b16 %v643, %v642
      %v685 = vpack.c.b16 %v645, %v644
      %v686 = vpack.c.b16 %v647, %v646
      %v687 = vpack.c.b16 %v649, %v648
      %v688 = vpack.c.b16 %v651, %v650
      %v689 = vpack.c.b16 %v653, %v652
      %v690 = vpack.c.b16 %v655, %v654
      %v691 = vpack.c.b16 %v657, %v656
      %v692 = vpack.c.b16 %v659, %v658
      %v693 = vpack.c.b16 %v661, %v660
      %726 = vmatprep.subr.bf16.mxu0 0
      %727 = vmatpush1.bf16.msra.mxu0 %v669
      %728 = vmatprep.subr.bf16.mxu0 0
      %729 = vmatpush1.bf16.msra.mxu0 %v668
      %730 = vmatprep.subr.bf16.mxu0 0
      %731 = vmatpush1.bf16.msra.mxu0 %v667
      %732 = vmatprep.subr.bf16.mxu0 0
      %733 = vmatpush1.bf16.msra.mxu0 %v666
      %734 = vmatprep.subr.bf16.mxu0 0
      %735 = vmatpush1.bf16.msra.mxu0 %v665
      %736 = vmatprep.subr.bf16.mxu0 0
      %737 = vmatpush1.bf16.msra.mxu0 %v664
      %738 = vmatprep.subr.bf16.mxu0 0
      %739 = vmatpush1.bf16.msra.mxu0 %v663
      %740 = vmatprep.subr.bf16.mxu0 0
      %741 = vmatpush1.bf16.msra.mxu0 %v662
      %742 = vmatprep.subr.bf16.mxu0 0
      %743 = vmatpush2.bf16.msra.mxu0 %v677
      %744 = vmatprep.subr.bf16.mxu0 0
      %745 = vmatpush2.bf16.msra.mxu0 %v676
      %746 = vmatprep.subr.bf16.mxu0 0
      %747 = vmatpush2.bf16.msra.mxu0 %v675
      %748 = vmatprep.subr.bf16.mxu0 0
      %749 = vmatpush2.bf16.msra.mxu0 %v674
      %750 = vmatprep.subr.bf16.mxu0 0
      %751 = vmatpush2.bf16.msra.mxu0 %v673
      %752 = vmatprep.subr.bf16.mxu0 0
      %753 = vmatpush2.bf16.msra.mxu0 %v672
      %754 = vmatprep.subr.bf16.mxu0 0
      %755 = vmatpush2.bf16.msra.mxu0 %v671
      %756 = vmatprep.subr.bf16.mxu0 0
      %757 = vmatpush2.bf16.msra.mxu0 %v670
      %758 = vmatprep.mubr.bf16.mxu0 %v519
      %759 = vmatmul.mubr.bf16.gmra.mxu0 %v518
      %v760 = vpop.f32.mrf.mxu0
      %v761 = vadd.f32 %v492, %v760
      %v762 = vpop.f32.mrf.mxu0
      %v763 = vpop.f32.mrf.mxu0
      %v764 = vadd.f32 %v492, %v763
      %v765 = vpop.f32.mrf.mxu0
      %766 = vmatprep.mubr.bf16.mxu0 %v523
      %767 = vmatmul.mubr.bf16.gmra.mxu0 %v522
      %v768 = vpop.f32.mrf.mxu0
      %v769 = vadd.f32 %v492, %v768
      %v770 = vpop.f32.mrf.mxu0
      %v771 = vpop.f32.mrf.mxu0
      %v772 = vadd.f32 %v492, %v771
      %v773 = vpop.f32.mrf.mxu0
      %774 = vdwg.mxu0
      %775 = vmatprep.subr.bf16.mxu0 0
      %776 = vmatpush1.bf16.msra.mxu0 %v685
      %777 = vmatprep.subr.bf16.mxu0 0
      %778 = vmatpush1.bf16.msra.mxu0 %v684
      %779 = vmatprep.subr.bf16.mxu0 0
      %780 = vmatpush1.bf16.msra.mxu0 %v683
      %781 = vmatprep.subr.bf16.mxu0 0
      %782 = vmatpush1.bf16.msra.mxu0 %v682
      %783 = vmatprep.subr.bf16.mxu0 0
      %784 = vmatpush1.bf16.msra.mxu0 %v681
      %785 = vmatprep.subr.bf16.mxu0 0
      %786 = vmatpush1.bf16.msra.mxu0 %v680
      %787 = vmatprep.subr.bf16.mxu0 0
      %788 = vmatpush1.bf16.msra.mxu0 %v679
      %789 = vmatprep.subr.bf16.mxu0 0
      %790 = vmatpush1.bf16.msra.mxu0 %v678
      %791 = vmatprep.subr.bf16.mxu0 0
      %792 = vmatpush2.bf16.msra.mxu0 %v693
      %793 = vmatprep.subr.bf16.mxu0 0
      %794 = vmatpush2.bf16.msra.mxu0 %v692
      %795 = vmatprep.subr.bf16.mxu0 0
      %796 = vmatpush2.bf16.msra.mxu0 %v691
      %797 = vmatprep.subr.bf16.mxu0 0
      %798 = vmatpush2.bf16.msra.mxu0 %v690
      %799 = vmatprep.subr.bf16.mxu0 0
      %800 = vmatpush2.bf16.msra.mxu0 %v689
      %801 = vmatprep.subr.bf16.mxu0 0
      %802 = vmatpush2.bf16.msra.mxu0 %v688
      %803 = vmatprep.subr.bf16.mxu0 0
      %804 = vmatpush2.bf16.msra.mxu0 %v687
      %805 = vmatprep.subr.bf16.mxu0 0
      %806 = vmatpush2.bf16.msra.mxu0 %v686
      %807 = vmatprep.mubr.bf16.mxu0 %v521
      %808 = vmatmul.mubr.bf16.gmra.mxu0 %v520
      %v809 = vpop.f32.mrf.mxu0
      %v810 = vadd.f32 %v761, %v809
      %v811 = vpop.f32.mrf.mxu0
      %v812 = vpop.f32.mrf.mxu0
      %v813 = vadd.f32 %v764, %v812
      %v814 = vpop.f32.mrf.mxu0
      %815 = vmatprep.mubr.bf16.mxu0 %v525
      %816 = vmatmul.mubr.bf16.gmra.mxu0 %v524
      %v817 = vpop.f32.mrf.mxu0
      %v818 = vadd.f32 %v769, %v817
      %v819 = vpop.f32.mrf.mxu0
      %v820 = vpop.f32.mrf.mxu0
      %v821 = vadd.f32 %v772, %v820
      %v822 = vpop.f32.mrf.mxu0
      %823 = vdwg.mxu0
      %vm824 = vcmp.gt.f32.partialorder %v810, 0.0
      %vm825 = vcmp.gt.f32.partialorder %v813, 0.0
      %vm826 = vcmp.gt.f32.partialorder %v818, 0.0
      %vm827 = vcmp.gt.f32.partialorder %v821, 0.0
      %v828 = vmul.f32 %v810, 1.442695
      %v829 = vpow.pop %v828
      %v830 = vmul.f32 %v813, 1.442695
      %v831 = vpow.pop %v830
      %v832 = vmul.f32 %v818, 1.442695
      %v833 = vpow.pop %v832
      %v834 = vmul.f32 %v821, 1.442695
      %v835 = vpow.pop %v834
      %v836 = vsub.f32 %v829, 1.0
      %v837 = vsub.f32 %v831, 1.0
      %v838 = vsub.f32 %v833, 1.0
      %v839 = vsub.f32 %v835, 1.0
      %v840 = vsel %vm824, %v810, %v836
      %v841 = vsel %vm825, %v813, %v837
      %v842 = vsel %vm826, %v818, %v838
      %v843 = vsel %vm827, %v821, %v839
      %v844 = vmul.f32 %v840, %v840
      %v845 = vmul.f32 %v841, %v841
      %v846 = vmul.f32 %v842, %v842
      %v847 = vmul.f32 %v843, %v843
      %vm848 = vcmask 261120
      %v849 = vsel %vm848, %v844, 0.0
      %850 = vadd.xlane.f32.xlu0 %v849
      %v851 = vpop.xlane.xlu0 %850
      %v852 = vsel %vm848, %v845, 0.0
      %853 = vadd.xlane.f32.xlu0 %v852
      %v854 = vpop.xlane.xlu0 %853
      %v855 = vsel %vm848, %v846, 0.0
      %856 = vadd.xlane.f32.xlu0 %v855
      %v857 = vpop.xlane.xlu0 %856
      %v858 = vsel %vm848, %v847, 0.0
      %859 = vadd.xlane.f32.xlu0 %v858
      %v860 = vpop.xlane.xlu0 %859
      %v861 = vmax.f32 %v851, 1e-24
      %v862 = vmax.f32 %v854, 1e-24
      %v863 = vmax.f32 %v857, 1e-24
      %v864 = vmax.f32 %v860, 1e-24
      %v865 = vrsqrt.pop %v861
      %v866 = vrsqrt.pop %v862
      %v867 = vrsqrt.pop %v863
      %v868 = vrsqrt.pop %v864
      %v869 = vmul.f32 %v840, %v865
      %v870 = vmul.f32 %v841, %v866
      %v871 = vmul.f32 %v842, %v867
      %v872 = vmul.f32 %v843, %v868
      %v873 = vpack.c.bf16 %v870, %v869
      %v874 = vpack.c.bf16 %v872, %v871
      %879 = vrot.lane.b32.xlu0 %v844, 96
      %v880 = vpop.permute.xlu0 %879
      %881 = vrot.lane.b32.xlu0 %v845, 96
      %v882 = vpop.permute.xlu0 %881
      %883 = vrot.lane.b32.xlu0 %v846, 96
      %v884 = vpop.permute.xlu0 %883
      %885 = vrot.lane.b32.xlu0 %v847, 96
      %v886 = vpop.permute.xlu0 %885
      %v891 = vsel %vm848, %v880, 0.0
      %892 = vadd.xlane.f32.xlu0 %v891
      %v893 = vpop.xlane.xlu0 %892
      %v894 = vsel %vm848, %v882, 0.0
      %895 = vadd.xlane.f32.xlu0 %v894
      %v896 = vpop.xlane.xlu0 %895
      %v897 = vsel %vm848, %v884, 0.0
      %898 = vadd.xlane.f32.xlu0 %v897
      %v899 = vpop.xlane.xlu0 %898
      %v900 = vsel %vm848, %v886, 0.0
      %901 = vadd.xlane.f32.xlu0 %v900
      %v902 = vpop.xlane.xlu0 %901
      %v903 = vmax.f32 %v893, 1e-24
      %v904 = vmax.f32 %v896, 1e-24
      %v905 = vmax.f32 %v899, 1e-24
      %v906 = vmax.f32 %v902, 1e-24
      %v907 = vrsqrt.pop %v903
      %v908 = vrsqrt.pop %v904
      %v909 = vrsqrt.pop %v905
      %v910 = vrsqrt.pop %v906
      %v911 = vmul.f32 %v840, %v907
      %v912 = vmul.f32 %v841, %v908
      %v913 = vmul.f32 %v842, %v909
      %v914 = vmul.f32 %v843, %v910
      %v915 = vpack.c.bf16 %v912, %v911
      %v916 = vpack.c.bf16 %v914, %v913
      %v917 = vld [vmem:[%s2] sm:$0xff]
      %v918 = vld [vmem:[%s2 + $0x8] sm:$0xff]
      %v919 = vld [vmem:[%s2 + $0x10] sm:$0xff]
      %v920 = vld [vmem:[%s2 + $0x18] sm:$0xff]
      %v921 = vld [vmem:[%s2 + $0x20] sm:$0xff]
      %v922 = vld [vmem:[%s2 + $0x28] sm:$0xff]
      %v923 = vld [vmem:[%s2 + $0x30] sm:$0xff]
      %v924 = vld [vmem:[%s2 + $0x38] sm:$0xff]
      %v925 = vld [vmem:[%s400] sm:$0xf]
      %v926 = vld [vmem:[%s400 + $0x4] sm:$0xf]
      %v927 = vld [vmem:[%s400 + $0x8] sm:$0xf]
      %v928 = vld [vmem:[%s400 + $0xc] sm:$0xf]
      %v929 = vld [vmem:[%s400 + $0x10] sm:$0xf]
      %v930 = vld [vmem:[%s400 + $0x14] sm:$0xf]
      %v931 = vld [vmem:[%s400 + $0x18] sm:$0xf]
      %v932 = vld [vmem:[%s400 + $0x1c] sm:$0xf]
      %v933 = vld [vmem:[%s400 + $0x20] sm:$0xf]
      %v934 = vld [vmem:[%s400 + $0x24] sm:$0xf]
      %v935 = vld [vmem:[%s400 + $0x28] sm:$0xf]
      %v936 = vld [vmem:[%s400 + $0x2c] sm:$0xf]
      %v937 = vld [vmem:[%s400 + $0x30] sm:$0xf]
      %v938 = vld [vmem:[%s400 + $0x34] sm:$0xf]
      %v939 = vld [vmem:[%s400 + $0x38] sm:$0xf]
      %v940 = vld [vmem:[%s400 + $0x3c] sm:$0xf]
      %v941 = vld [vmem:[%s400 + $0x40] sm:$0xf]
      %v942 = vld [vmem:[%s400 + $0x44] sm:$0xf]
      %v943 = vld [vmem:[%s400 + $0x48] sm:$0xf]
      %v944 = vld [vmem:[%s400 + $0x4c] sm:$0xf]
      %v945 = vld [vmem:[%s400 + $0x50] sm:$0xf]
      %v946 = vld [vmem:[%s400 + $0x54] sm:$0xf]
      %v947 = vld [vmem:[%s400 + $0x58] sm:$0xf]
      %v948 = vld [vmem:[%s400 + $0x5c] sm:$0xf]
      %v949 = vld [vmem:[%s400 + $0x60] sm:$0xf]
      %v950 = vld [vmem:[%s400 + $0x64] sm:$0xf]
      %v951 = vld [vmem:[%s400 + $0x68] sm:$0xf]
      %v952 = vld [vmem:[%s400 + $0x6c] sm:$0xf]
      %v953 = vld [vmem:[%s400 + $0x70] sm:$0xf]
      %v954 = vld [vmem:[%s400 + $0x74] sm:$0xf]
      %v955 = vld [vmem:[%s400 + $0x78] sm:$0xf]
      %v956 = vld [vmem:[%s400 + $0x7c] sm:$0xf]
      %v957 = vld [vmem:[%s400 + $0x80] sm:$0xf]
      %v958 = vld [vmem:[%s400 + $0x84] sm:$0xf]
      %v959 = vld [vmem:[%s400 + $0x88] sm:$0xf]
      %v960 = vld [vmem:[%s400 + $0x8c] sm:$0xf]
      %v961 = vld [vmem:[%s400 + $0x90] sm:$0xf]
      %v962 = vld [vmem:[%s400 + $0x94] sm:$0xf]
      %v963 = vld [vmem:[%s400 + $0x98] sm:$0xf]
      %v964 = vld [vmem:[%s400 + $0x9c] sm:$0xf]
      %v965 = vld [vmem:[%s400 + $0xa0] sm:$0xf]
      %v966 = vld [vmem:[%s400 + $0xa4] sm:$0xf]
      %v967 = vld [vmem:[%s400 + $0xa8] sm:$0xf]
      %v968 = vld [vmem:[%s400 + $0xac] sm:$0xf]
      %v969 = vld [vmem:[%s400 + $0xb0] sm:$0xf]
      %v970 = vld [vmem:[%s400 + $0xb4] sm:$0xf]
      %v971 = vld [vmem:[%s400 + $0xb8] sm:$0xf]
      %v972 = vld [vmem:[%s400 + $0xbc] sm:$0xf]
      %v973 = vld [vmem:[%s400 + $0xc0] sm:$0xf]
      %v974 = vld [vmem:[%s400 + $0xc4] sm:$0xf]
      %v975 = vld [vmem:[%s400 + $0xc8] sm:$0xf]
      %v976 = vld [vmem:[%s400 + $0xcc] sm:$0xf]
      %v977 = vld [vmem:[%s400 + $0xd0] sm:$0xf]
      %v978 = vld [vmem:[%s400 + $0xd4] sm:$0xf]
      %v979 = vld [vmem:[%s400 + $0xd8] sm:$0xf]
      %v980 = vld [vmem:[%s400 + $0xdc] sm:$0xf]
      %v981 = vld [vmem:[%s400 + $0xe0] sm:$0xf]
      %v982 = vld [vmem:[%s400 + $0xe4] sm:$0xf]
      %v983 = vld [vmem:[%s400 + $0xe8] sm:$0xf]
      %v984 = vld [vmem:[%s400 + $0xec] sm:$0xf]
      %v985 = vld [vmem:[%s400 + $0xf0] sm:$0xf]
      %v986 = vld [vmem:[%s400 + $0xf4] sm:$0xf]
      %v987 = vld [vmem:[%s400 + $0xf8] sm:$0xf]
      %v988 = vld [vmem:[%s400 + $0xfc] sm:$0xf]
      %v989 = vld [vmem:[%s403] sm:$0x1]
      %v991 = vlaneseq
      %v992 = vshrl.u32 %v991, 7
      %v993 = vsub.s32 0, %v992
      %v994 = vrot.slane %v989, %v993
      %v1004 = vunpack.c.l.b16 %v917
      %v1005 = vunpack.c.h.b16 %v917
      %v1006 = vunpack.c.l.b16 %v918
      %v1007 = vunpack.c.h.b16 %v918
      %v1008 = vunpack.c.l.b16 %v919
      %v1009 = vunpack.c.h.b16 %v919
      %v1010 = vunpack.c.l.b16 %v920
      %v1011 = vunpack.c.h.b16 %v920
      %v1012 = vunpack.c.l.b16 %v921
      %v1013 = vunpack.c.h.b16 %v921
      %v1014 = vunpack.c.l.b16 %v922
      %v1015 = vunpack.c.h.b16 %v922
      %v1016 = vunpack.c.l.b16 %v923
      %v1017 = vunpack.c.h.b16 %v923
      %v1018 = vunpack.c.l.b16 %v924
      %v1019 = vunpack.c.h.b16 %v924
      %v1020 = vpack.c.b16 %v1008, %v1004
      %v1021 = vpack.c.b16 %v1009, %v1005
      %v1022 = vpack.c.b16 %v1010, %v1006
      %v1023 = vpack.c.b16 %v1011, %v1007
      %v1024 = vpack.c.b16 %v1016, %v1012
      %v1025 = vpack.c.b16 %v1017, %v1013
      %v1026 = vpack.c.b16 %v1018, %v1014
      %v1027 = vpack.c.b16 %v1019, %v1015
      %v1100 = vunpack.c.l.b16 %v925
      %v1101 = vunpack.c.l.b16 %v926
      %v1102 = vunpack.c.l.b16 %v927
      %v1103 = vunpack.c.l.b16 %v928
      %v1104 = vunpack.c.l.b16 %v929
      %v1105 = vunpack.c.l.b16 %v930
      %v1106 = vunpack.c.l.b16 %v931
      %v1107 = vunpack.c.l.b16 %v932
      %v1108 = vunpack.c.l.b16 %v933
      %v1109 = vunpack.c.l.b16 %v934
      %v1110 = vunpack.c.l.b16 %v935
      %v1111 = vunpack.c.l.b16 %v936
      %v1112 = vunpack.c.l.b16 %v937
      %v1113 = vunpack.c.l.b16 %v938
      %v1114 = vunpack.c.l.b16 %v939
      %v1115 = vunpack.c.l.b16 %v940
      %v1116 = vunpack.c.l.b16 %v941
      %v1117 = vunpack.c.l.b16 %v942
      %v1118 = vunpack.c.l.b16 %v943
      %v1119 = vunpack.c.l.b16 %v944
      %v1120 = vunpack.c.l.b16 %v945
      %v1121 = vunpack.c.l.b16 %v946
      %v1122 = vunpack.c.l.b16 %v947
      %v1123 = vunpack.c.l.b16 %v948
      %v1124 = vunpack.c.l.b16 %v949
      %v1125 = vunpack.c.l.b16 %v950
      %v1126 = vunpack.c.l.b16 %v951
      %v1127 = vunpack.c.l.b16 %v952
      %v1128 = vunpack.c.l.b16 %v953
      %v1129 = vunpack.c.l.b16 %v954
      %v1130 = vunpack.c.l.b16 %v955
      %v1131 = vunpack.c.l.b16 %v956
      %v1132 = vunpack.c.l.b16 %v957
      %v1133 = vunpack.c.l.b16 %v958
      %v1134 = vunpack.c.l.b16 %v959
      %v1135 = vunpack.c.l.b16 %v960
      %v1136 = vunpack.c.l.b16 %v961
      %v1137 = vunpack.c.l.b16 %v962
      %v1138 = vunpack.c.l.b16 %v963
      %v1139 = vunpack.c.l.b16 %v964
      %v1140 = vunpack.c.l.b16 %v965
      %v1141 = vunpack.c.l.b16 %v966
      %v1142 = vunpack.c.l.b16 %v967
      %v1143 = vunpack.c.l.b16 %v968
      %v1144 = vunpack.c.l.b16 %v969
      %v1145 = vunpack.c.l.b16 %v970
      %v1146 = vunpack.c.l.b16 %v971
      %v1147 = vunpack.c.l.b16 %v972
      %v1148 = vunpack.c.l.b16 %v973
      %v1149 = vunpack.c.l.b16 %v974
      %v1150 = vunpack.c.l.b16 %v975
      %v1151 = vunpack.c.l.b16 %v976
      %v1152 = vunpack.c.l.b16 %v977
      %v1153 = vunpack.c.l.b16 %v978
      %v1154 = vunpack.c.l.b16 %v979
      %v1155 = vunpack.c.l.b16 %v980
      %v1156 = vunpack.c.l.b16 %v981
      %v1157 = vunpack.c.l.b16 %v982
      %v1158 = vunpack.c.l.b16 %v983
      %v1159 = vunpack.c.l.b16 %v984
      %v1160 = vunpack.c.l.b16 %v985
      %v1161 = vunpack.c.l.b16 %v986
      %v1162 = vunpack.c.l.b16 %v987
      %v1163 = vunpack.c.l.b16 %v988
      %v1164 = vpack.c.b16 %v1101, %v1100
      %v1165 = vpack.c.b16 %v1103, %v1102
      %v1166 = vpack.c.b16 %v1105, %v1104
      %v1167 = vpack.c.b16 %v1107, %v1106
      %v1168 = vpack.c.b16 %v1109, %v1108
      %v1169 = vpack.c.b16 %v1111, %v1110
      %v1170 = vpack.c.b16 %v1113, %v1112
      %v1171 = vpack.c.b16 %v1115, %v1114
      %v1172 = vpack.c.b16 %v1117, %v1116
      %v1173 = vpack.c.b16 %v1119, %v1118
      %v1174 = vpack.c.b16 %v1121, %v1120
      %v1175 = vpack.c.b16 %v1123, %v1122
      %v1176 = vpack.c.b16 %v1125, %v1124
      %v1177 = vpack.c.b16 %v1127, %v1126
      %v1178 = vpack.c.b16 %v1129, %v1128
      %v1179 = vpack.c.b16 %v1131, %v1130
      %v1180 = vpack.c.b16 %v1133, %v1132
      %v1181 = vpack.c.b16 %v1135, %v1134
      %v1182 = vpack.c.b16 %v1137, %v1136
      %v1183 = vpack.c.b16 %v1139, %v1138
      %v1184 = vpack.c.b16 %v1141, %v1140
      %v1185 = vpack.c.b16 %v1143, %v1142
      %v1186 = vpack.c.b16 %v1145, %v1144
      %v1187 = vpack.c.b16 %v1147, %v1146
      %v1188 = vpack.c.b16 %v1149, %v1148
      %v1189 = vpack.c.b16 %v1151, %v1150
      %v1190 = vpack.c.b16 %v1153, %v1152
      %v1191 = vpack.c.b16 %v1155, %v1154
      %v1192 = vpack.c.b16 %v1157, %v1156
      %v1193 = vpack.c.b16 %v1159, %v1158
      %v1194 = vpack.c.b16 %v1161, %v1160
      %v1195 = vpack.c.b16 %v1163, %v1162
      %1228 = vmatprep.subr.bf16.mxu0 0
      %1229 = vmatpush1.bf16.msra.mxu0 %v1171
      %1230 = vmatprep.subr.bf16.mxu0 0
      %1231 = vmatpush1.bf16.msra.mxu0 %v1170
      %1232 = vmatprep.subr.bf16.mxu0 0
      %1233 = vmatpush1.bf16.msra.mxu0 %v1169
      %1234 = vmatprep.subr.bf16.mxu0 0
      %1235 = vmatpush1.bf16.msra.mxu0 %v1168
      %1236 = vmatprep.subr.bf16.mxu0 0
      %1237 = vmatpush1.bf16.msra.mxu0 %v1167
      %1238 = vmatprep.subr.bf16.mxu0 0
      %1239 = vmatpush1.bf16.msra.mxu0 %v1166
      %1240 = vmatprep.subr.bf16.mxu0 0
      %1241 = vmatpush1.bf16.msra.mxu0 %v1165
      %1242 = vmatprep.subr.bf16.mxu0 0
      %1243 = vmatpush1.bf16.msra.mxu0 %v1164
      %1244 = vmatprep.subr.bf16.mxu0 0
      %1245 = vmatpush2.bf16.msra.mxu0 %v1179
      %1246 = vmatprep.subr.bf16.mxu0 0
      %1247 = vmatpush2.bf16.msra.mxu0 %v1178
      %1248 = vmatprep.subr.bf16.mxu0 0
      %1249 = vmatpush2.bf16.msra.mxu0 %v1177
      %1250 = vmatprep.subr.bf16.mxu0 0
      %1251 = vmatpush2.bf16.msra.mxu0 %v1176
      %1252 = vmatprep.subr.bf16.mxu0 0
      %1253 = vmatpush2.bf16.msra.mxu0 %v1175
      %1254 = vmatprep.subr.bf16.mxu0 0
      %1255 = vmatpush2.bf16.msra.mxu0 %v1174
      %1256 = vmatprep.subr.bf16.mxu0 0
      %1257 = vmatpush2.bf16.msra.mxu0 %v1173
      %1258 = vmatprep.subr.bf16.mxu0 0
      %1259 = vmatpush2.bf16.msra.mxu0 %v1172
      %1260 = vmatprep.mubr.bf16.mxu0 %v1021
      %1261 = vmatmul.mubr.bf16.gmra.mxu0 %v1020
      %v1262 = vpop.f32.mrf.mxu0
      %v1263 = vadd.f32 %v994, %v1262
      %v1264 = vpop.f32.mrf.mxu0
      %v1265 = vpop.f32.mrf.mxu0
      %v1266 = vadd.f32 %v994, %v1265
      %v1267 = vpop.f32.mrf.mxu0
      %1268 = vmatprep.mubr.bf16.mxu0 %v1025
      %1269 = vmatmul.mubr.bf16.gmra.mxu0 %v1024
      %v1270 = vpop.f32.mrf.mxu0
      %v1271 = vadd.f32 %v994, %v1270
      %v1272 = vpop.f32.mrf.mxu0
      %v1273 = vpop.f32.mrf.mxu0
      %v1274 = vadd.f32 %v994, %v1273
      %v1275 = vpop.f32.mrf.mxu0
      %1276 = vdwg.mxu0
      %1277 = vmatprep.subr.bf16.mxu0 0
      %1278 = vmatpush1.bf16.msra.mxu0 %v1187
      %1279 = vmatprep.subr.bf16.mxu0 0
      %1280 = vmatpush1.bf16.msra.mxu0 %v1186
      %1281 = vmatprep.subr.bf16.mxu0 0
      %1282 = vmatpush1.bf16.msra.mxu0 %v1185
      %1283 = vmatprep.subr.bf16.mxu0 0
      %1284 = vmatpush1.bf16.msra.mxu0 %v1184
      %1285 = vmatprep.subr.bf16.mxu0 0
      %1286 = vmatpush1.bf16.msra.mxu0 %v1183
      %1287 = vmatprep.subr.bf16.mxu0 0
      %1288 = vmatpush1.bf16.msra.mxu0 %v1182
      %1289 = vmatprep.subr.bf16.mxu0 0
      %1290 = vmatpush1.bf16.msra.mxu0 %v1181
      %1291 = vmatprep.subr.bf16.mxu0 0
      %1292 = vmatpush1.bf16.msra.mxu0 %v1180
      %1293 = vmatprep.subr.bf16.mxu0 0
      %1294 = vmatpush2.bf16.msra.mxu0 %v1195
      %1295 = vmatprep.subr.bf16.mxu0 0
      %1296 = vmatpush2.bf16.msra.mxu0 %v1194
      %1297 = vmatprep.subr.bf16.mxu0 0
      %1298 = vmatpush2.bf16.msra.mxu0 %v1193
      %1299 = vmatprep.subr.bf16.mxu0 0
      %1300 = vmatpush2.bf16.msra.mxu0 %v1192
      %1301 = vmatprep.subr.bf16.mxu0 0
      %1302 = vmatpush2.bf16.msra.mxu0 %v1191
      %1303 = vmatprep.subr.bf16.mxu0 0
      %1304 = vmatpush2.bf16.msra.mxu0 %v1190
      %1305 = vmatprep.subr.bf16.mxu0 0
      %1306 = vmatpush2.bf16.msra.mxu0 %v1189
      %1307 = vmatprep.subr.bf16.mxu0 0
      %1308 = vmatpush2.bf16.msra.mxu0 %v1188
      %1309 = vmatprep.mubr.bf16.mxu0 %v1023
      %1310 = vmatmul.mubr.bf16.gmra.mxu0 %v1022
      %v1311 = vpop.f32.mrf.mxu0
      %v1312 = vadd.f32 %v1263, %v1311
      %v1313 = vpop.f32.mrf.mxu0
      %v1314 = vpop.f32.mrf.mxu0
      %v1315 = vadd.f32 %v1266, %v1314
      %v1316 = vpop.f32.mrf.mxu0
      %1317 = vmatprep.mubr.bf16.mxu0 %v1027
      %1318 = vmatmul.mubr.bf16.gmra.mxu0 %v1026
      %v1319 = vpop.f32.mrf.mxu0
      %v1320 = vadd.f32 %v1271, %v1319
      %v1321 = vpop.f32.mrf.mxu0
      %v1322 = vpop.f32.mrf.mxu0
      %v1323 = vadd.f32 %v1274, %v1322
      %v1324 = vpop.f32.mrf.mxu0
      %1325 = vdwg.mxu0
      %1327 = vrot.lane.b32.xlu0 %v915, 96
      %v1328 = vpop.permute.xlu0 %1327
      %v1330 = vsel %vm848, %v873, 0
      %v1333 = vsel %vm848, %v1328, 0
      %1335 = vmatprep.subr.bf16.mxu0 0
      %1336 = vmatpush1.bf16.xpose.msra.mxu0 0
      %1337 = vmatprep.subr.bf16.mxu0 0
      %1338 = vmatpush1.bf16.xpose.msra.mxu0 0
      %1339 = vmatprep.subr.bf16.mxu0 0
      %1340 = vmatpush1.bf16.xpose.msra.mxu0 0
      %1341 = vmatprep.subr.bf16.mxu0 0
      %1342 = vmatpush1.bf16.xpose.msra.mxu0 0
      %1343 = vmatprep.subr.bf16.mxu0 0
      %1344 = vmatpush1.bf16.xpose.msra.mxu0 0
      %1345 = vmatprep.subr.bf16.mxu0 0
      %1346 = vmatpush1.bf16.xpose.msra.mxu0 0
      %1347 = vmatprep.subr.bf16.mxu0 0
      %1348 = vmatpush1.bf16.xpose.msra.mxu0 0
      %1349 = vmatprep.subr.bf16.mxu0 0
      %1350 = vmatpush1.bf16.xpose.msra.mxu0 %v1333
      %1351 = vmatprep.subr.bf16.mxu0 0
      %1352 = vmatpush2.bf16.xpose.msra.mxu0 0
      %1353 = vmatprep.subr.bf16.mxu0 0
      %1354 = vmatpush2.bf16.xpose.msra.mxu0 0
      %1355 = vmatprep.subr.bf16.mxu0 0
      %1356 = vmatpush2.bf16.xpose.msra.mxu0 0
      %1357 = vmatprep.subr.bf16.mxu0 0
      %1358 = vmatpush2.bf16.xpose.msra.mxu0 0
      %1359 = vmatprep.subr.bf16.mxu0 0
      %1360 = vmatpush2.bf16.xpose.msra.mxu0 0
      %1361 = vmatprep.subr.bf16.mxu0 0
      %1362 = vmatpush2.bf16.xpose.msra.mxu0 0
      %1363 = vmatprep.subr.bf16.mxu0 0
      %1364 = vmatpush2.bf16.xpose.msra.mxu0 0
      %1365 = vmatprep.subr.bf16.mxu0 0
      %1366 = vmatpush2.bf16.xpose.msra.mxu0 0
      %1367 = vmatprep.mubr.bf16.mxu0 0
      %1368 = vmatmul.mubr.bf16.gmra.mxu0 %v1330
      %v1369 = vpop.f32.mrf.mxu0
      %v1370 = vadd.f32 0.0, %v1369
      %v1371 = vpop.f32.mrf.mxu0
      %v1372 = vpop.f32.mrf.mxu0
      %v1373 = vadd.f32 0.0, %v1372
      %v1374 = vpop.f32.mrf.mxu0
      %1375 = vdwg.mxu0
      %1377 = vrot.lane.b32.xlu0 %v916, 96
      %v1378 = vpop.permute.xlu0 %1377
      %v1380 = vsel %vm848, %v874, 0
      %v1383 = vsel %vm848, %v1378, 0
      %1385 = vmatprep.subr.bf16.mxu0 0
      %1386 = vmatpush1.bf16.xpose.msra.mxu0 0
      %1387 = vmatprep.subr.bf16.mxu0 0
      %1388 = vmatpush1.bf16.xpose.msra.mxu0 0
      %1389 = vmatprep.subr.bf16.mxu0 0
      %1390 = vmatpush1.bf16.xpose.msra.mxu0 0
      %1391 = vmatprep.subr.bf16.mxu0 0
      %1392 = vmatpush1.bf16.xpose.msra.mxu0 0
      %1393 = vmatprep.subr.bf16.mxu0 0
      %1394 = vmatpush1.bf16.xpose.msra.mxu0 0
      %1395 = vmatprep.subr.bf16.mxu0 0
      %1396 = vmatpush1.bf16.xpose.msra.mxu0 0
      %1397 = vmatprep.subr.bf16.mxu0 0
      %1398 = vmatpush1.bf16.xpose.msra.mxu0 0
      %1399 = vmatprep.subr.bf16.mxu0 0
      %1400 = vmatpush1.bf16.xpose.msra.mxu0 %v1383
      %1401 = vmatprep.subr.bf16.mxu0 0
      %1402 = vmatpush2.bf16.xpose.msra.mxu0 0
      %1403 = vmatprep.subr.bf16.mxu0 0
      %1404 = vmatpush2.bf16.xpose.msra.mxu0 0
      %1405 = vmatprep.subr.bf16.mxu0 0
      %1406 = vmatpush2.bf16.xpose.msra.mxu0 0
      %1407 = vmatprep.subr.bf16.mxu0 0
      %1408 = vmatpush2.bf16.xpose.msra.mxu0 0
      %1409 = vmatprep.subr.bf16.mxu0 0
      %1410 = vmatpush2.bf16.xpose.msra.mxu0 0
      %1411 = vmatprep.subr.bf16.mxu0 0
      %1412 = vmatpush2.bf16.xpose.msra.mxu0 0
      %1413 = vmatprep.subr.bf16.mxu0 0
      %1414 = vmatpush2.bf16.xpose.msra.mxu0 0
      %1415 = vmatprep.subr.bf16.mxu0 0
      %1416 = vmatpush2.bf16.xpose.msra.mxu0 0
      %1417 = vmatprep.mubr.bf16.mxu0 0
      %1418 = vmatmul.mubr.bf16.gmra.mxu0 %v1380
      %v1419 = vpop.f32.mrf.mxu0
      %v1420 = vadd.f32 0.0, %v1419
      %v1421 = vpop.f32.mrf.mxu0
      %v1422 = vpop.f32.mrf.mxu0
      %v1423 = vadd.f32 0.0, %v1422
      %v1424 = vpop.f32.mrf.mxu0
      %1425 = vdwg.mxu0
      %vm1426 = vcmask 130048
      %v1427 = vsel %vm1426, %v1370, 0.0
      %1428 = vadd.xlane.f32.xlu0 %v1427
      %v1429 = vpop.xlane.xlu0 %1428
      %v1430 = vsel %vm1426, %v1373, 0.0
      %1431 = vadd.xlane.f32.xlu0 %v1430
      %v1432 = vpop.xlane.xlu0 %1431
      %v1433 = vsel %vm1426, %v1420, 0.0
      %1434 = vadd.xlane.f32.xlu0 %v1433
      %v1435 = vpop.xlane.xlu0 %1434
      %v1436 = vsel %vm1426, %v1423, 0.0
      %1437 = vadd.xlane.f32.xlu0 %v1436
      %v1438 = vpop.xlane.xlu0 %1437
      %v1439 = vrcp.pop 16.0
      %v1440 = vmul.f32 %v1429, %v1439
      %v1441 = vmul.f32 %v1432, %v1439
      %v1442 = vmul.f32 %v1435, %v1439
      %v1443 = vmul.f32 %v1438, %v1439
      %v1444 = vmul.f32 %v1440, %v1312
      %v1445 = vmul.f32 %v1441, %v1315
      %v1446 = vmul.f32 %v1442, %v1320
      %v1447 = vmul.f32 %v1443, %v1323
      %1449 = vset.pattern.permute.xlu0 0
      %1450 = vperm.xlu0 %1449, %v1444
      %v1451 = vpop.permute.xlu0 %1450
      %1454 = vset.pattern.permute.xlu0 0
      %1455 = vperm.xlu0 %1454, %v1445
      %v1456 = vpop.permute.xlu0 %1455
      %1459 = vset.pattern.permute.xlu0 0
      %1460 = vperm.xlu0 %1459, %v1446
      %v1461 = vpop.permute.xlu0 %1460
      %1464 = vset.pattern.permute.xlu0 0
      %1465 = vperm.xlu0 %1464, %v1447
      %v1466 = vpop.permute.xlu0 %1465
      %v1468 = vsub.f32 %v1370, %v1451
      %v1469 = vsub.f32 %v1373, %v1456
      %v1470 = vsub.f32 %v1420, %v1461
      %v1471 = vsub.f32 %v1423, %v1466
      %1473 = vset.pattern.permute.xlu0 1
      %1474 = vperm.xlu0 %1473, %v1312
      %v1475 = vpop.permute.xlu0 %1474
      %1478 = vset.pattern.permute.xlu0 1
      %1479 = vperm.xlu0 %1478, %v1315
      %v1480 = vpop.permute.xlu0 %1479
      %1483 = vset.pattern.permute.xlu0 1
      %1484 = vperm.xlu0 %1483, %v1320
      %v1485 = vpop.permute.xlu0 %1484
      %1488 = vset.pattern.permute.xlu0 1
      %1489 = vperm.xlu0 %1488, %v1323
      %v1490 = vpop.permute.xlu0 %1489
      %v1492 = vadd.f32 %v1468, %v1475
      %v1493 = vadd.f32 %v1469, %v1480
      %v1494 = vadd.f32 %v1470, %v1485
      %v1495 = vadd.f32 %v1471, %v1490
      %v1496 = vmax.f32 %v1492, 0.0
      %v1497 = vmax.f32 %v1493, 0.0
      %v1498 = vmax.f32 %v1494, 0.0
      %v1499 = vmax.f32 %v1495, 0.0
      %vm1500 = vcmp.ne.f32.partialorder %v1496, 0.0
      %vm1501 = vcmp.ne.f32.partialorder %v1497, 0.0
      %vm1502 = vcmp.ne.f32.partialorder %v1498, 0.0
      %vm1503 = vcmp.ne.f32.partialorder %v1499, 0.0
      %v1504 = vsel %vm1500, 1, 0
      %v1505 = vsel %vm1501, 1, 0
      %v1506 = vsel %vm1502, 1, 0
      %v1507 = vsel %vm1503, 1, 0
      %v1508 = vcvt.s32.f32 %v1504
      %v1509 = vcvt.s32.f32 %v1505
      %v1510 = vcvt.s32.f32 %v1506
      %v1511 = vcvt.s32.f32 %v1507
      %v1512 = vmul.f32 %v1370, %v1496
      %v1513 = vmul.f32 %v1373, %v1497
      %v1514 = vmul.f32 %v1420, %v1498
      %v1515 = vmul.f32 %v1423, %v1499
      %v1516 = vmul.f32 %v1512, 10.0
      %v1517 = vmul.f32 %v1513, 10.0
      %v1518 = vmul.f32 %v1514, 10.0
      %v1519 = vmul.f32 %v1515, 10.0
      %v1520 = vsel %vm1426, %v1516, -inf
      %1521 = vmax.xlane.f32.xlu0 %v1520
      %v1522 = vpop.xlane.xlu0 %1521
      %v1523 = vsel %vm1426, %v1517, -inf
      %1524 = vmax.xlane.f32.xlu0 %v1523
      %v1525 = vpop.xlane.xlu0 %1524
      %v1526 = vsel %vm1426, %v1518, -inf
      %1527 = vmax.xlane.f32.xlu0 %v1526
      %v1528 = vpop.xlane.xlu0 %1527
      %v1529 = vsel %vm1426, %v1519, -inf
      %1530 = vmax.xlane.f32.xlu0 %v1529
      %v1531 = vpop.xlane.xlu0 %1530
      %v1532 = vsub.f32 %v1516, %v1522
      %v1533 = vsub.f32 %v1517, %v1525
      %v1534 = vsub.f32 %v1518, %v1528
      %v1535 = vsub.f32 %v1519, %v1531
      %v1536 = vmul.f32 %v1532, 1.442695
      %v1537 = vpow.pop %v1536
      %v1538 = vmul.f32 %v1533, 1.442695
      %v1539 = vpow.pop %v1538
      %v1540 = vmul.f32 %v1534, 1.442695
      %v1541 = vpow.pop %v1540
      %v1542 = vmul.f32 %v1535, 1.442695
      %v1543 = vpow.pop %v1542
      %v1544 = vsel %vm1426, %v1537, 0.0
      %1545 = vadd.xlane.f32.xlu0 %v1544
      %v1546 = vpop.xlane.xlu0 %1545
      %v1547 = vsel %vm1426, %v1539, 0.0
      %1548 = vadd.xlane.f32.xlu0 %v1547
      %v1549 = vpop.xlane.xlu0 %1548
      %v1550 = vsel %vm1426, %v1541, 0.0
      %1551 = vadd.xlane.f32.xlu0 %v1550
      %v1552 = vpop.xlane.xlu0 %1551
      %v1553 = vsel %vm1426, %v1543, 0.0
      %1554 = vadd.xlane.f32.xlu0 %v1553
      %v1555 = vpop.xlane.xlu0 %1554
      %v1556 = vrcp.pop %v1546
      %v1557 = vrcp.pop %v1549
      %v1558 = vrcp.pop %v1552
      %v1559 = vrcp.pop %v1555
      %v1560 = vmul.f32 %v1537, %v1556
      %v1561 = vmul.f32 %v1539, %v1557
      %v1562 = vmul.f32 %v1541, %v1558
      %v1563 = vmul.f32 %v1543, %v1559
      %v1564 = vmul.f32 %v1560, %v1508
      %v1565 = vmul.f32 %v1561, %v1509
      %v1566 = vmul.f32 %v1562, %v1510
      %v1567 = vmul.f32 %v1563, %v1511
      %v1568 = vpack.c.bf16 %v1565, %v1564
      %v1569 = vpack.c.bf16 %v1567, %v1566
      %v1570 = vld [vmem:[%s387] sm:$0xff]
      %v1571 = vld [vmem:[%s387 + $0x8] sm:$0xff]
      %v1572 = vld [vmem:[%s387 + $0x10] sm:$0xff]
      %v1573 = vld [vmem:[%s387 + $0x18] sm:$0xff]
      %v1574 = vld [vmem:[%s387 + $0x20] sm:$0xff]
      %v1575 = vld [vmem:[%s387 + $0x28] sm:$0xff]
      %v1576 = vld [vmem:[%s387 + $0x30] sm:$0xff]
      %v1577 = vld [vmem:[%s387 + $0x38] sm:$0xff]
      %v1582 = vunpack.c.l.b16 %v1570
      %v1583 = vunpack.c.h.b16 %v1570
      %v1584 = vunpack.c.l.b16 %v1571
      %v1585 = vunpack.c.h.b16 %v1571
      %v1586 = vunpack.c.l.b16 %v1572
      %v1587 = vunpack.c.h.b16 %v1572
      %v1588 = vunpack.c.l.b16 %v1573
      %v1589 = vunpack.c.h.b16 %v1573
      %v1590 = vpack.c.b16 %v1586, %v1582
      %v1591 = vpack.c.b16 %v1587, %v1583
      %v1592 = vpack.c.b16 %v1588, %v1584
      %v1593 = vpack.c.b16 %v1589, %v1585
      %v1599 = vsel %vm1426, %v1568, 0
      %1601 = vmatprep.subr.bf16.mxu0 0
      %1602 = vmatpush1.bf16.msra.mxu0 0
      %1603 = vmatprep.subr.bf16.mxu0 0
      %1604 = vmatpush1.bf16.msra.mxu0 0
      %1605 = vmatprep.subr.bf16.mxu0 0
      %1606 = vmatpush1.bf16.msra.mxu0 0
      %1607 = vmatprep.subr.bf16.mxu0 0
      %1608 = vmatpush1.bf16.msra.mxu0 0
      %1609 = vmatprep.subr.bf16.mxu0 0
      %1610 = vmatpush1.bf16.msra.mxu0 0
      %1611 = vmatprep.subr.bf16.mxu0 0
      %1612 = vmatpush1.bf16.msra.mxu0 0
      %1613 = vmatprep.subr.bf16.mxu0 0
      %1614 = vmatpush1.bf16.msra.mxu0 0
      %1615 = vmatprep.subr.bf16.mxu0 %v1591
      %1616 = vmatpush1.bf16.msra.mxu0 %v1590
      %1617 = vmatprep.subr.bf16.mxu0 0
      %1618 = vmatpush2.bf16.msra.mxu0 0
      %1619 = vmatprep.subr.bf16.mxu0 0
      %1620 = vmatpush2.bf16.msra.mxu0 0
      %1621 = vmatprep.subr.bf16.mxu0 0
      %1622 = vmatpush2.bf16.msra.mxu0 0
      %1623 = vmatprep.subr.bf16.mxu0 0
      %1624 = vmatpush2.bf16.msra.mxu0 0
      %1625 = vmatprep.subr.bf16.mxu0 0
      %1626 = vmatpush2.bf16.msra.mxu0 0
      %1627 = vmatprep.subr.bf16.mxu0 0
      %1628 = vmatpush2.bf16.msra.mxu0 0
      %1629 = vmatprep.subr.bf16.mxu0 0
      %1630 = vmatpush2.bf16.msra.mxu0 0
      %1631 = vmatprep.subr.bf16.mxu0 0
      %1632 = vmatpush2.bf16.msra.mxu0 0
      %1633 = vmatprep.mubr.bf16.mxu0 0
      %1634 = vmatmul.mubr.bf16.gmra.mxu0 %v1599
      %v1635 = vpop.f32.mrf.mxu0
      %v1636 = vadd.f32 0.0, %v1635
      %v1637 = vpop.f32.mrf.mxu0
      %v1638 = vadd.f32 0.0, %v1637
      %v1639 = vpop.f32.mrf.mxu0
      %v1640 = vadd.f32 0.0, %v1639
      %v1641 = vpop.f32.mrf.mxu0
      %v1642 = vadd.f32 0.0, %v1641
      %1643 = vdwg.mxu0
      %1644 = vmatprep.subr.bf16.mxu0 0
      %1645 = vmatpush1.bf16.msra.mxu0 0
      %1646 = vmatprep.subr.bf16.mxu0 0
      %1647 = vmatpush1.bf16.msra.mxu0 0
      %1648 = vmatprep.subr.bf16.mxu0 0
      %1649 = vmatpush1.bf16.msra.mxu0 0
      %1650 = vmatprep.subr.bf16.mxu0 0
      %1651 = vmatpush1.bf16.msra.mxu0 0
      %1652 = vmatprep.subr.bf16.mxu0 0
      %1653 = vmatpush1.bf16.msra.mxu0 0
      %1654 = vmatprep.subr.bf16.mxu0 0
      %1655 = vmatpush1.bf16.msra.mxu0 0
      %1656 = vmatprep.subr.bf16.mxu0 0
      %1657 = vmatpush1.bf16.msra.mxu0 0
      %1658 = vmatprep.subr.bf16.mxu0 %v1593
      %1659 = vmatpush1.bf16.msra.mxu0 %v1592
      %1660 = vmatprep.subr.bf16.mxu0 0
      %1661 = vmatpush2.bf16.msra.mxu0 0
      %1662 = vmatprep.subr.bf16.mxu0 0
      %1663 = vmatpush2.bf16.msra.mxu0 0
      %1664 = vmatprep.subr.bf16.mxu0 0
      %1665 = vmatpush2.bf16.msra.mxu0 0
      %1666 = vmatprep.subr.bf16.mxu0 0
      %1667 = vmatpush2.bf16.msra.mxu0 0
      %1668 = vmatprep.subr.bf16.mxu0 0
      %1669 = vmatpush2.bf16.msra.mxu0 0
      %1670 = vmatprep.subr.bf16.mxu0 0
      %1671 = vmatpush2.bf16.msra.mxu0 0
      %1672 = vmatprep.subr.bf16.mxu0 0
      %1673 = vmatpush2.bf16.msra.mxu0 0
      %1674 = vmatprep.subr.bf16.mxu0 0
      %1675 = vmatpush2.bf16.msra.mxu0 0
      %1676 = vmatprep.mubr.bf16.mxu0 0
      %1677 = vmatmul.mubr.bf16.gmra.mxu0 %v1599
      %v1678 = vpop.f32.mrf.mxu0
      %v1679 = vadd.f32 0.0, %v1678
      %v1680 = vpop.f32.mrf.mxu0
      %v1681 = vadd.f32 0.0, %v1680
      %v1682 = vpop.f32.mrf.mxu0
      %v1683 = vadd.f32 0.0, %v1682
      %v1684 = vpop.f32.mrf.mxu0
      %v1685 = vadd.f32 0.0, %v1684
      %1686 = vdwg.mxu0
      %v1691 = vunpack.c.l.b16 %v1574
      %v1692 = vunpack.c.h.b16 %v1574
      %v1693 = vunpack.c.l.b16 %v1575
      %v1694 = vunpack.c.h.b16 %v1575
      %v1695 = vunpack.c.l.b16 %v1576
      %v1696 = vunpack.c.h.b16 %v1576
      %v1697 = vunpack.c.l.b16 %v1577
      %v1698 = vunpack.c.h.b16 %v1577
      %v1699 = vpack.c.b16 %v1695, %v1691
      %v1700 = vpack.c.b16 %v1696, %v1692
      %v1701 = vpack.c.b16 %v1697, %v1693
      %v1702 = vpack.c.b16 %v1698, %v1694
      %v1708 = vsel %vm1426, %v1569, 0
      %1710 = vmatprep.subr.bf16.mxu0 0
      %1711 = vmatpush1.bf16.msra.mxu0 0
      %1712 = vmatprep.subr.bf16.mxu0 0
      %1713 = vmatpush1.bf16.msra.mxu0 0
      %1714 = vmatprep.subr.bf16.mxu0 0
      %1715 = vmatpush1.bf16.msra.mxu0 0
      %1716 = vmatprep.subr.bf16.mxu0 0
      %1717 = vmatpush1.bf16.msra.mxu0 0
      %1718 = vmatprep.subr.bf16.mxu0 0
      %1719 = vmatpush1.bf16.msra.mxu0 0
      %1720 = vmatprep.subr.bf16.mxu0 0
      %1721 = vmatpush1.bf16.msra.mxu0 0
      %1722 = vmatprep.subr.bf16.mxu0 0
      %1723 = vmatpush1.bf16.msra.mxu0 0
      %1724 = vmatprep.subr.bf16.mxu0 %v1700
      %1725 = vmatpush1.bf16.msra.mxu0 %v1699
      %1726 = vmatprep.subr.bf16.mxu0 0
      %1727 = vmatpush2.bf16.msra.mxu0 0
      %1728 = vmatprep.subr.bf16.mxu0 0
      %1729 = vmatpush2.bf16.msra.mxu0 0
      %1730 = vmatprep.subr.bf16.mxu0 0
      %1731 = vmatpush2.bf16.msra.mxu0 0
      %1732 = vmatprep.subr.bf16.mxu0 0
      %1733 = vmatpush2.bf16.msra.mxu0 0
      %1734 = vmatprep.subr.bf16.mxu0 0
      %1735 = vmatpush2.bf16.msra.mxu0 0
      %1736 = vmatprep.subr.bf16.mxu0 0
      %1737 = vmatpush2.bf16.msra.mxu0 0
      %1738 = vmatprep.subr.bf16.mxu0 0
      %1739 = vmatpush2.bf16.msra.mxu0 0
      %1740 = vmatprep.subr.bf16.mxu0 0
      %1741 = vmatpush2.bf16.msra.mxu0 0
      %1742 = vmatprep.mubr.bf16.mxu0 0
      %1743 = vmatmul.mubr.bf16.gmra.mxu0 %v1708
      %v1744 = vpop.f32.mrf.mxu0
      %v1745 = vadd.f32 0.0, %v1744
      %v1746 = vpop.f32.mrf.mxu0
      %v1747 = vadd.f32 0.0, %v1746
      %v1748 = vpop.f32.mrf.mxu0
      %v1749 = vadd.f32 0.0, %v1748
      %v1750 = vpop.f32.mrf.mxu0
      %v1751 = vadd.f32 0.0, %v1750
      %1752 = vdwg.mxu0
      %1753 = vmatprep.subr.bf16.mxu0 0
      %1754 = vmatpush1.bf16.msra.mxu0 0
      %1755 = vmatprep.subr.bf16.mxu0 0
      %1756 = vmatpush1.bf16.msra.mxu0 0
      %1757 = vmatprep.subr.bf16.mxu0 0
      %1758 = vmatpush1.bf16.msra.mxu0 0
      %1759 = vmatprep.subr.bf16.mxu0 0
      %1760 = vmatpush1.bf16.msra.mxu0 0
      %1761 = vmatprep.subr.bf16.mxu0 0
      %1762 = vmatpush1.bf16.msra.mxu0 0
      %1763 = vmatprep.subr.bf16.mxu0 0
      %1764 = vmatpush1.bf16.msra.mxu0 0
      %1765 = vmatprep.subr.bf16.mxu0 0
      %1766 = vmatpush1.bf16.msra.mxu0 0
      %1767 = vmatprep.subr.bf16.mxu0 %v1702
      %1768 = vmatpush1.bf16.msra.mxu0 %v1701
      %1769 = vmatprep.subr.bf16.mxu0 0
      %1770 = vmatpush2.bf16.msra.mxu0 0
      %1771 = vmatprep.subr.bf16.mxu0 0
      %1772 = vmatpush2.bf16.msra.mxu0 0
      %1773 = vmatprep.subr.bf16.mxu0 0
      %1774 = vmatpush2.bf16.msra.mxu0 0
      %1775 = vmatprep.subr.bf16.mxu0 0
      %1776 = vmatpush2.bf16.msra.mxu0 0
      %1777 = vmatprep.subr.bf16.mxu0 0
      %1778 = vmatpush2.bf16.msra.mxu0 0
      %1779 = vmatprep.subr.bf16.mxu0 0
      %1780 = vmatpush2.bf16.msra.mxu0 0
      %1781 = vmatprep.subr.bf16.mxu0 0
      %1782 = vmatpush2.bf16.msra.mxu0 0
      %1783 = vmatprep.subr.bf16.mxu0 0
      %1784 = vmatpush2.bf16.msra.mxu0 0
      %1785 = vmatprep.mubr.bf16.mxu0 0
      %1786 = vmatmul.mubr.bf16.gmra.mxu0 %v1708
      %v1787 = vpop.f32.mrf.mxu0
      %v1788 = vadd.f32 0.0, %v1787
      %v1789 = vpop.f32.mrf.mxu0
      %v1790 = vadd.f32 0.0, %v1789
      %v1791 = vpop.f32.mrf.mxu0
      %v1792 = vadd.f32 0.0, %v1791
      %v1793 = vpop.f32.mrf.mxu0
      %v1794 = vadd.f32 0.0, %v1793
      %1795 = vdwg.mxu0
      %v1796 = vpack.c.bf16 %v1640, %v1636
      %v1797 = vpack.c.bf16 %v1642, %v1638
      %v1798 = vpack.c.bf16 %v1683, %v1679
      %v1799 = vpack.c.bf16 %v1685, %v1681
      %v1800 = vpack.c.bf16 %v1749, %v1745
      %v1801 = vpack.c.bf16 %v1751, %v1747
      %v1802 = vpack.c.bf16 %v1792, %v1788
      %v1803 = vpack.c.bf16 %v1794, %v1790
      %v1804 = vld [vmem:[%s408] sm:$0xff]
      %v1805 = vld [vmem:[%s408 + $0x8] sm:$0xff]
      %v1806 = vld [vmem:[%s408 + $0x10] sm:$0xff]
      %v1807 = vld [vmem:[%s408 + $0x18] sm:$0xff]
      %v1808 = vld [vmem:[%s408 + $0x20] sm:$0xff]
      %v1809 = vld [vmem:[%s408 + $0x28] sm:$0xff]
      %v1810 = vld [vmem:[%s408 + $0x30] sm:$0xff]
      %v1811 = vld [vmem:[%s408 + $0x38] sm:$0xff]
      %v1812 = vld [vmem:[%s408 + $0x40] sm:$0xff]
      %v1813 = vld [vmem:[%s408 + $0x48] sm:$0xff]
      %v1814 = vld [vmem:[%s408 + $0x50] sm:$0xff]
      %v1815 = vld [vmem:[%s408 + $0x58] sm:$0xff]
      %v1816 = vld [vmem:[%s408 + $0x60] sm:$0xff]
      %v1817 = vld [vmem:[%s408 + $0x68] sm:$0xff]
      %v1818 = vld [vmem:[%s408 + $0x70] sm:$0xff]
      %v1819 = vld [vmem:[%s408 + $0x78] sm:$0xff]
      %v1820 = vld [vmem:[%s408 + $0x80] sm:$0xff]
      %v1821 = vld [vmem:[%s408 + $0x88] sm:$0xff]
      %v1822 = vld [vmem:[%s408 + $0x90] sm:$0xff]
      %v1823 = vld [vmem:[%s408 + $0x98] sm:$0xff]
      %v1824 = vld [vmem:[%s408 + $0xa0] sm:$0xff]
      %v1825 = vld [vmem:[%s408 + $0xa8] sm:$0xff]
      %v1826 = vld [vmem:[%s408 + $0xb0] sm:$0xff]
      %v1827 = vld [vmem:[%s408 + $0xb8] sm:$0xff]
      %v1828 = vld [vmem:[%s408 + $0xc0] sm:$0xff]
      %v1829 = vld [vmem:[%s408 + $0xc8] sm:$0xff]
      %v1830 = vld [vmem:[%s408 + $0xd0] sm:$0xff]
      %v1831 = vld [vmem:[%s408 + $0xd8] sm:$0xff]
      %v1832 = vld [vmem:[%s408 + $0xe0] sm:$0xff]
      %v1833 = vld [vmem:[%s408 + $0xe8] sm:$0xff]
      %v1834 = vld [vmem:[%s408 + $0xf0] sm:$0xff]
      %v1835 = vld [vmem:[%s408 + $0xf8] sm:$0xff]
      %v1836 = vld [vmem:[%s408 + $0x100] sm:$0xff]
      %v1837 = vld [vmem:[%s408 + $0x108] sm:$0xff]
      %v1838 = vld [vmem:[%s408 + $0x110] sm:$0xff]
      %v1839 = vld [vmem:[%s408 + $0x118] sm:$0xff]
      %v1840 = vld [vmem:[%s408 + $0x120] sm:$0xff]
      %v1841 = vld [vmem:[%s408 + $0x128] sm:$0xff]
      %v1842 = vld [vmem:[%s408 + $0x130] sm:$0xff]
      %v1843 = vld [vmem:[%s408 + $0x138] sm:$0xff]
      %v1844 = vld [vmem:[%s408 + $0x140] sm:$0xff]
      %v1845 = vld [vmem:[%s408 + $0x148] sm:$0xff]
      %v1846 = vld [vmem:[%s408 + $0x150] sm:$0xff]
      %v1847 = vld [vmem:[%s408 + $0x158] sm:$0xff]
      %v1848 = vld [vmem:[%s408 + $0x160] sm:$0xff]
      %v1849 = vld [vmem:[%s408 + $0x168] sm:$0xff]
      %v1850 = vld [vmem:[%s408 + $0x170] sm:$0xff]
      %v1851 = vld [vmem:[%s408 + $0x178] sm:$0xff]
      %v1852 = vld [vmem:[%s408 + $0x180] sm:$0xff]
      %v1853 = vld [vmem:[%s408 + $0x188] sm:$0xff]
      %v1854 = vld [vmem:[%s408 + $0x190] sm:$0xff]
      %v1855 = vld [vmem:[%s408 + $0x198] sm:$0xff]
      %v1856 = vld [vmem:[%s408 + $0x1a0] sm:$0xff]
      %v1857 = vld [vmem:[%s408 + $0x1a8] sm:$0xff]
      %v1858 = vld [vmem:[%s408 + $0x1b0] sm:$0xff]
      %v1859 = vld [vmem:[%s408 + $0x1b8] sm:$0xff]
      %v1860 = vld [vmem:[%s408 + $0x1c0] sm:$0xff]
      %v1861 = vld [vmem:[%s408 + $0x1c8] sm:$0xff]
      %v1862 = vld [vmem:[%s408 + $0x1d0] sm:$0xff]
      %v1863 = vld [vmem:[%s408 + $0x1d8] sm:$0xff]
      %v1864 = vld [vmem:[%s408 + $0x1e0] sm:$0xff]
      %v1865 = vld [vmem:[%s408 + $0x1e8] sm:$0xff]
      %v1866 = vld [vmem:[%s408 + $0x1f0] sm:$0xff]
      %v1867 = vld [vmem:[%s408 + $0x1f8] sm:$0xff]
      %v1868 = vld [vmem:[%s408 + $0x200] sm:$0xff]
      %v1869 = vld [vmem:[%s408 + $0x208] sm:$0xff]
      %v1870 = vld [vmem:[%s408 + $0x210] sm:$0xff]
      %v1871 = vld [vmem:[%s408 + $0x218] sm:$0xff]
      %v1872 = vld [vmem:[%s408 + $0x220] sm:$0xff]
      %v1873 = vld [vmem:[%s408 + $0x228] sm:$0xff]
      %v1874 = vld [vmem:[%s408 + $0x230] sm:$0xff]
      %v1875 = vld [vmem:[%s408 + $0x238] sm:$0xff]
      %v1876 = vld [vmem:[%s408 + $0x240] sm:$0xff]
      %v1877 = vld [vmem:[%s408 + $0x248] sm:$0xff]
      %v1878 = vld [vmem:[%s408 + $0x250] sm:$0xff]
      %v1879 = vld [vmem:[%s408 + $0x258] sm:$0xff]
      %v1880 = vld [vmem:[%s408 + $0x260] sm:$0xff]
      %v1881 = vld [vmem:[%s408 + $0x268] sm:$0xff]
      %v1882 = vld [vmem:[%s408 + $0x270] sm:$0xff]
      %v1883 = vld [vmem:[%s408 + $0x278] sm:$0xff]
      %v1884 = vld [vmem:[%s408 + $0x280] sm:$0xff]
      %v1885 = vld [vmem:[%s408 + $0x288] sm:$0xff]
      %v1886 = vld [vmem:[%s408 + $0x290] sm:$0xff]
      %v1887 = vld [vmem:[%s408 + $0x298] sm:$0xff]
      %v1888 = vld [vmem:[%s408 + $0x2a0] sm:$0xff]
      %v1889 = vld [vmem:[%s408 + $0x2a8] sm:$0xff]
      %v1890 = vld [vmem:[%s408 + $0x2b0] sm:$0xff]
      %v1891 = vld [vmem:[%s408 + $0x2b8] sm:$0xff]
      %v1892 = vld [vmem:[%s408 + $0x2c0] sm:$0xff]
      %v1893 = vld [vmem:[%s408 + $0x2c8] sm:$0xff]
      %v1894 = vld [vmem:[%s408 + $0x2d0] sm:$0xff]
      %v1895 = vld [vmem:[%s408 + $0x2d8] sm:$0xff]
      %v1896 = vld [vmem:[%s408 + $0x2e0] sm:$0xff]
      %v1897 = vld [vmem:[%s408 + $0x2e8] sm:$0xff]
      %v1898 = vld [vmem:[%s408 + $0x2f0] sm:$0xff]
      %v1899 = vld [vmem:[%s408 + $0x2f8] sm:$0xff]
      %v1900 = vld [vmem:[%s408 + $0x300] sm:$0xff]
      %v1901 = vld [vmem:[%s408 + $0x308] sm:$0xff]
      %v1902 = vld [vmem:[%s408 + $0x310] sm:$0xff]
      %v1903 = vld [vmem:[%s408 + $0x318] sm:$0xff]
      %v1904 = vld [vmem:[%s408 + $0x320] sm:$0xff]
      %v1905 = vld [vmem:[%s408 + $0x328] sm:$0xff]
      %v1906 = vld [vmem:[%s408 + $0x330] sm:$0xff]
      %v1907 = vld [vmem:[%s408 + $0x338] sm:$0xff]
      %v1908 = vld [vmem:[%s408 + $0x340] sm:$0xff]
      %v1909 = vld [vmem:[%s408 + $0x348] sm:$0xff]
      %v1910 = vld [vmem:[%s408 + $0x350] sm:$0xff]
      %v1911 = vld [vmem:[%s408 + $0x358] sm:$0xff]
      %v1912 = vld [vmem:[%s408 + $0x360] sm:$0xff]
      %v1913 = vld [vmem:[%s408 + $0x368] sm:$0xff]
      %v1914 = vld [vmem:[%s408 + $0x370] sm:$0xff]
      %v1915 = vld [vmem:[%s408 + $0x378] sm:$0xff]
      %v1916 = vld [vmem:[%s408 + $0x380] sm:$0xff]
      %v1917 = vld [vmem:[%s408 + $0x388] sm:$0xff]
      %v1918 = vld [vmem:[%s408 + $0x390] sm:$0xff]
      %v1919 = vld [vmem:[%s408 + $0x398] sm:$0xff]
      %v1920 = vld [vmem:[%s408 + $0x3a0] sm:$0xff]
      %v1921 = vld [vmem:[%s408 + $0x3a8] sm:$0xff]
      %v1922 = vld [vmem:[%s408 + $0x3b0] sm:$0xff]
      %v1923 = vld [vmem:[%s408 + $0x3b8] sm:$0xff]
      %v1924 = vld [vmem:[%s408 + $0x3c0] sm:$0xff]
      %v1925 = vld [vmem:[%s408 + $0x3c8] sm:$0xff]
      %v1926 = vld [vmem:[%s408 + $0x3d0] sm:$0xff]
      %v1927 = vld [vmem:[%s408 + $0x3d8] sm:$0xff]
      %v1928 = vld [vmem:[%s408 + $0x3e0] sm:$0xff]
      %v1929 = vld [vmem:[%s408 + $0x3e8] sm:$0xff]
      %v1930 = vld [vmem:[%s408 + $0x3f0] sm:$0xff]
      %v1931 = vld [vmem:[%s408 + $0x3f8] sm:$0xff]
      %v2060 = vunpack.c.l.b16 %v1804
      %v2061 = vunpack.c.h.b16 %v1804
      %v2062 = vunpack.c.l.b16 %v1805
      %v2063 = vunpack.c.h.b16 %v1805
      %v2064 = vunpack.c.l.b16 %v1806
      %v2065 = vunpack.c.h.b16 %v1806
      %v2066 = vunpack.c.l.b16 %v1807
      %v2067 = vunpack.c.h.b16 %v1807
      %v2068 = vunpack.c.l.b16 %v1808
      %v2069 = vunpack.c.h.b16 %v1808
      %v2070 = vunpack.c.l.b16 %v1809
      %v2071 = vunpack.c.h.b16 %v1809
      %v2072 = vunpack.c.l.b16 %v1810
      %v2073 = vunpack.c.h.b16 %v1810
      %v2074 = vunpack.c.l.b16 %v1811
      %v2075 = vunpack.c.h.b16 %v1811
      %v2076 = vunpack.c.l.b16 %v1812
      %v2077 = vunpack.c.h.b16 %v1812
      %v2078 = vunpack.c.l.b16 %v1813
      %v2079 = vunpack.c.h.b16 %v1813
      %v2080 = vunpack.c.l.b16 %v1814
      %v2081 = vunpack.c.h.b16 %v1814
      %v2082 = vunpack.c.l.b16 %v1815
      %v2083 = vunpack.c.h.b16 %v1815
      %v2084 = vunpack.c.l.b16 %v1816
      %v2085 = vunpack.c.h.b16 %v1816
      %v2086 = vunpack.c.l.b16 %v1817
      %v2087 = vunpack.c.h.b16 %v1817
      %v2088 = vunpack.c.l.b16 %v1818
      %v2089 = vunpack.c.h.b16 %v1818
      %v2090 = vunpack.c.l.b16 %v1819
      %v2091 = vunpack.c.h.b16 %v1819
      %v2092 = vunpack.c.l.b16 %v1820
      %v2093 = vunpack.c.h.b16 %v1820
      %v2094 = vunpack.c.l.b16 %v1821
      %v2095 = vunpack.c.h.b16 %v1821
      %v2096 = vunpack.c.l.b16 %v1822
      %v2097 = vunpack.c.h.b16 %v1822
      %v2098 = vunpack.c.l.b16 %v1823
      %v2099 = vunpack.c.h.b16 %v1823
      %v2100 = vunpack.c.l.b16 %v1824
      %v2101 = vunpack.c.h.b16 %v1824
      %v2102 = vunpack.c.l.b16 %v1825
      %v2103 = vunpack.c.h.b16 %v1825
      %v2104 = vunpack.c.l.b16 %v1826
      %v2105 = vunpack.c.h.b16 %v1826
      %v2106 = vunpack.c.l.b16 %v1827
      %v2107 = vunpack.c.h.b16 %v1827
      %v2108 = vunpack.c.l.b16 %v1828
      %v2109 = vunpack.c.h.b16 %v1828
      %v2110 = vunpack.c.l.b16 %v1829
      %v2111 = vunpack.c.h.b16 %v1829
      %v2112 = vunpack.c.l.b16 %v1830
      %v2113 = vunpack.c.h.b16 %v1830
      %v2114 = vunpack.c.l.b16 %v1831
      %v2115 = vunpack.c.h.b16 %v1831
      %v2116 = vunpack.c.l.b16 %v1832
      %v2117 = vunpack.c.h.b16 %v1832
      %v2118 = vunpack.c.l.b16 %v1833
      %v2119 = vunpack.c.h.b16 %v1833
      %v2120 = vunpack.c.l.b16 %v1834
      %v2121 = vunpack.c.h.b16 %v1834
      %v2122 = vunpack.c.l.b16 %v1835
      %v2123 = vunpack.c.h.b16 %v1835
      %v2124 = vunpack.c.l.b16 %v1836
      %v2125 = vunpack.c.h.b16 %v1836
      %v2126 = vunpack.c.l.b16 %v1837
      %v2127 = vunpack.c.h.b16 %v1837
      %v2128 = vunpack.c.l.b16 %v1838
      %v2129 = vunpack.c.h.b16 %v1838
      %v2130 = vunpack.c.l.b16 %v1839
      %v2131 = vunpack.c.h.b16 %v1839
      %v2132 = vunpack.c.l.b16 %v1840
      %v2133 = vunpack.c.h.b16 %v1840
      %v2134 = vunpack.c.l.b16 %v1841
      %v2135 = vunpack.c.h.b16 %v1841
      %v2136 = vunpack.c.l.b16 %v1842
      %v2137 = vunpack.c.h.b16 %v1842
      %v2138 = vunpack.c.l.b16 %v1843
      %v2139 = vunpack.c.h.b16 %v1843
      %v2140 = vunpack.c.l.b16 %v1844
      %v2141 = vunpack.c.h.b16 %v1844
      %v2142 = vunpack.c.l.b16 %v1845
      %v2143 = vunpack.c.h.b16 %v1845
      %v2144 = vunpack.c.l.b16 %v1846
      %v2145 = vunpack.c.h.b16 %v1846
      %v2146 = vunpack.c.l.b16 %v1847
      %v2147 = vunpack.c.h.b16 %v1847
      %v2148 = vunpack.c.l.b16 %v1848
      %v2149 = vunpack.c.h.b16 %v1848
      %v2150 = vunpack.c.l.b16 %v1849
      %v2151 = vunpack.c.h.b16 %v1849
      %v2152 = vunpack.c.l.b16 %v1850
      %v2153 = vunpack.c.h.b16 %v1850
      %v2154 = vunpack.c.l.b16 %v1851
      %v2155 = vunpack.c.h.b16 %v1851
      %v2156 = vunpack.c.l.b16 %v1852
      %v2157 = vunpack.c.h.b16 %v1852
      %v2158 = vunpack.c.l.b16 %v1853
      %v2159 = vunpack.c.h.b16 %v1853
      %v2160 = vunpack.c.l.b16 %v1854
      %v2161 = vunpack.c.h.b16 %v1854
      %v2162 = vunpack.c.l.b16 %v1855
      %v2163 = vunpack.c.h.b16 %v1855
      %v2164 = vunpack.c.l.b16 %v1856
      %v2165 = vunpack.c.h.b16 %v1856
      %v2166 = vunpack.c.l.b16 %v1857
      %v2167 = vunpack.c.h.b16 %v1857
      %v2168 = vunpack.c.l.b16 %v1858
      %v2169 = vunpack.c.h.b16 %v1858
      %v2170 = vunpack.c.l.b16 %v1859
      %v2171 = vunpack.c.h.b16 %v1859
      %v2172 = vunpack.c.l.b16 %v1860
      %v2173 = vunpack.c.h.b16 %v1860
      %v2174 = vunpack.c.l.b16 %v1861
      %v2175 = vunpack.c.h.b16 %v1861
      %v2176 = vunpack.c.l.b16 %v1862
      %v2177 = vunpack.c.h.b16 %v1862
      %v2178 = vunpack.c.l.b16 %v1863
      %v2179 = vunpack.c.h.b16 %v1863
      %v2180 = vunpack.c.l.b16 %v1864
      %v2181 = vunpack.c.h.b16 %v1864
      %v2182 = vunpack.c.l.b16 %v1865
      %v2183 = vunpack.c.h.b16 %v1865
      %v2184 = vunpack.c.l.b16 %v1866
      %v2185 = vunpack.c.h.b16 %v1866
      %v2186 = vunpack.c.l.b16 %v1867
      %v2187 = vunpack.c.h.b16 %v1867
      %v2188 = vunpack.c.l.b16 %v1868
      %v2189 = vunpack.c.h.b16 %v1868
      %v2190 = vunpack.c.l.b16 %v1869
      %v2191 = vunpack.c.h.b16 %v1869
      %v2192 = vunpack.c.l.b16 %v1870
      %v2193 = vunpack.c.h.b16 %v1870
      %v2194 = vunpack.c.l.b16 %v1871
      %v2195 = vunpack.c.h.b16 %v1871
      %v2196 = vunpack.c.l.b16 %v1872
      %v2197 = vunpack.c.h.b16 %v1872
      %v2198 = vunpack.c.l.b16 %v1873
      %v2199 = vunpack.c.h.b16 %v1873
      %v2200 = vunpack.c.l.b16 %v1874
      %v2201 = vunpack.c.h.b16 %v1874
      %v2202 = vunpack.c.l.b16 %v1875
      %v2203 = vunpack.c.h.b16 %v1875
      %v2204 = vunpack.c.l.b16 %v1876
      %v2205 = vunpack.c.h.b16 %v1876
      %v2206 = vunpack.c.l.b16 %v1877
      %v2207 = vunpack.c.h.b16 %v1877
      %v2208 = vunpack.c.l.b16 %v1878
      %v2209 = vunpack.c.h.b16 %v1878
      %v2210 = vunpack.c.l.b16 %v1879
      %v2211 = vunpack.c.h.b16 %v1879
      %v2212 = vunpack.c.l.b16 %v1880
      %v2213 = vunpack.c.h.b16 %v1880
      %v2214 = vunpack.c.l.b16 %v1881
      %v2215 = vunpack.c.h.b16 %v1881
      %v2216 = vunpack.c.l.b16 %v1882
      %v2217 = vunpack.c.h.b16 %v1882
      %v2218 = vunpack.c.l.b16 %v1883
      %v2219 = vunpack.c.h.b16 %v1883
      %v2220 = vunpack.c.l.b16 %v1884
      %v2221 = vunpack.c.h.b16 %v1884
      %v2222 = vunpack.c.l.b16 %v1885
      %v2223 = vunpack.c.h.b16 %v1885
      %v2224 = vunpack.c.l.b16 %v1886
      %v2225 = vunpack.c.h.b16 %v1886
      %v2226 = vunpack.c.l.b16 %v1887
      %v2227 = vunpack.c.h.b16 %v1887
      %v2228 = vunpack.c.l.b16 %v1888
      %v2229 = vunpack.c.h.b16 %v1888
      %v2230 = vunpack.c.l.b16 %v1889
      %v2231 = vunpack.c.h.b16 %v1889
      %v2232 = vunpack.c.l.b16 %v1890
      %v2233 = vunpack.c.h.b16 %v1890
      %v2234 = vunpack.c.l.b16 %v1891
      %v2235 = vunpack.c.h.b16 %v1891
      %v2236 = vunpack.c.l.b16 %v1892
      %v2237 = vunpack.c.h.b16 %v1892
      %v2238 = vunpack.c.l.b16 %v1893
      %v2239 = vunpack.c.h.b16 %v1893
      %v2240 = vunpack.c.l.b16 %v1894
      %v2241 = vunpack.c.h.b16 %v1894
      %v2242 = vunpack.c.l.b16 %v1895
      %v2243 = vunpack.c.h.b16 %v1895
      %v2244 = vunpack.c.l.b16 %v1896
      %v2245 = vunpack.c.h.b16 %v1896
      %v2246 = vunpack.c.l.b16 %v1897
      %v2247 = vunpack.c.h.b16 %v1897
      %v2248 = vunpack.c.l.b16 %v1898
      %v2249 = vunpack.c.h.b16 %v1898
      %v2250 = vunpack.c.l.b16 %v1899
      %v2251 = vunpack.c.h.b16 %v1899
      %v2252 = vunpack.c.l.b16 %v1900
      %v2253 = vunpack.c.h.b16 %v1900
      %v2254 = vunpack.c.l.b16 %v1901
      %v2255 = vunpack.c.h.b16 %v1901
      %v2256 = vunpack.c.l.b16 %v1902
      %v2257 = vunpack.c.h.b16 %v1902
      %v2258 = vunpack.c.l.b16 %v1903
      %v2259 = vunpack.c.h.b16 %v1903
      %v2260 = vunpack.c.l.b16 %v1904
      %v2261 = vunpack.c.h.b16 %v1904
      %v2262 = vunpack.c.l.b16 %v1905
      %v2263 = vunpack.c.h.b16 %v1905
      %v2264 = vunpack.c.l.b16 %v1906
      %v2265 = vunpack.c.h.b16 %v1906
      %v2266 = vunpack.c.l.b16 %v1907
      %v2267 = vunpack.c.h.b16 %v1907
      %v2268 = vunpack.c.l.b16 %v1908
      %v2269 = vunpack.c.h.b16 %v1908
      %v2270 = vunpack.c.l.b16 %v1909
      %v2271 = vunpack.c.h.b16 %v1909
      %v2272 = vunpack.c.l.b16 %v1910
      %v2273 = vunpack.c.h.b16 %v1910
      %v2274 = vunpack.c.l.b16 %v1911
      %v2275 = vunpack.c.h.b16 %v1911
      %v2276 = vunpack.c.l.b16 %v1912
      %v2277 = vunpack.c.h.b16 %v1912
      %v2278 = vunpack.c.l.b16 %v1913
      %v2279 = vunpack.c.h.b16 %v1913
      %v2280 = vunpack.c.l.b16 %v1914
      %v2281 = vunpack.c.h.b16 %v1914
      %v2282 = vunpack.c.l.b16 %v1915
      %v2283 = vunpack.c.h.b16 %v1915
      %v2284 = vunpack.c.l.b16 %v1916
      %v2285 = vunpack.c.h.b16 %v1916
      %v2286 = vunpack.c.l.b16 %v1917
      %v2287 = vunpack.c.h.b16 %v1917
      %v2288 = vunpack.c.l.b16 %v1918
      %v2289 = vunpack.c.h.b16 %v1918
      %v2290 = vunpack.c.l.b16 %v1919
      %v2291 = vunpack.c.h.b16 %v1919
      %v2292 = vunpack.c.l.b16 %v1920
      %v2293 = vunpack.c.h.b16 %v1920
      %v2294 = vunpack.c.l.b16 %v1921
      %v2295 = vunpack.c.h.b16 %v1921
      %v2296 = vunpack.c.l.b16 %v1922
      %v2297 = vunpack.c.h.b16 %v1922
      %v2298 = vunpack.c.l.b16 %v1923
      %v2299 = vunpack.c.h.b16 %v1923
      %v2300 = vunpack.c.l.b16 %v1924
      %v2301 = vunpack.c.h.b16 %v1924
      %v2302 = vunpack.c.l.b16 %v1925
      %v2303 = vunpack.c.h.b16 %v1925
      %v2304 = vunpack.c.l.b16 %v1926
      %v2305 = vunpack.c.h.b16 %v1926
      %v2306 = vunpack.c.l.b16 %v1927
      %v2307 = vunpack.c.h.b16 %v1927
      %v2308 = vunpack.c.l.b16 %v1928
      %v2309 = vunpack.c.h.b16 %v1928
      %v2310 = vunpack.c.l.b16 %v1929
      %v2311 = vunpack.c.h.b16 %v1929
      %v2312 = vunpack.c.l.b16 %v1930
      %v2313 = vunpack.c.h.b16 %v1930
      %v2314 = vunpack.c.l.b16 %v1931
      %v2315 = vunpack.c.h.b16 %v1931
      %v2316 = vpack.c.b16 %v2064, %v2060
      %v2317 = vpack.c.b16 %v2065, %v2061
      %v2318 = vpack.c.b16 %v2066, %v2062
      %v2319 = vpack.c.b16 %v2067, %v2063
      %v2320 = vpack.c.b16 %v2072, %v2068
      %v2321 = vpack.c.b16 %v2073, %v2069
      %v2322 = vpack.c.b16 %v2074, %v2070
      %v2323 = vpack.c.b16 %v2075, %v2071
      %v2324 = vpack.c.b16 %v2080, %v2076
      %v2325 = vpack.c.b16 %v2081, %v2077
      %v2326 = vpack.c.b16 %v2082, %v2078
      %v2327 = vpack.c.b16 %v2083, %v2079
      %v2328 = vpack.c.b16 %v2088, %v2084
      %v2329 = vpack.c.b16 %v2089, %v2085
      %v2330 = vpack.c.b16 %v2090, %v2086
      %v2331 = vpack.c.b16 %v2091, %v2087
      %v2332 = vpack.c.b16 %v2096, %v2092
      %v2333 = vpack.c.b16 %v2097, %v2093
      %v2334 = vpack.c.b16 %v2098, %v2094
      %v2335 = vpack.c.b16 %v2099, %v2095
      %v2336 = vpack.c.b16 %v2104, %v2100
      %v2337 = vpack.c.b16 %v2105, %v2101
      %v2338 = vpack.c.b16 %v2106, %v2102
      %v2339 = vpack.c.b16 %v2107, %v2103
      %v2340 = vpack.c.b16 %v2112, %v2108
      %v2341 = vpack.c.b16 %v2113, %v2109
      %v2342 = vpack.c.b16 %v2114, %v2110
      %v2343 = vpack.c.b16 %v2115, %v2111
      %v2344 = vpack.c.b16 %v2120, %v2116
      %v2345 = vpack.c.b16 %v2121, %v2117
      %v2346 = vpack.c.b16 %v2122, %v2118
      %v2347 = vpack.c.b16 %v2123, %v2119
      %v2348 = vpack.c.b16 %v2128, %v2124
      %v2349 = vpack.c.b16 %v2129, %v2125
      %v2350 = vpack.c.b16 %v2130, %v2126
      %v2351 = vpack.c.b16 %v2131, %v2127
      %v2352 = vpack.c.b16 %v2136, %v2132
      %v2353 = vpack.c.b16 %v2137, %v2133
      %v2354 = vpack.c.b16 %v2138, %v2134
      %v2355 = vpack.c.b16 %v2139, %v2135
      %v2356 = vpack.c.b16 %v2144, %v2140
      %v2357 = vpack.c.b16 %v2145, %v2141
      %v2358 = vpack.c.b16 %v2146, %v2142
      %v2359 = vpack.c.b16 %v2147, %v2143
      %v2360 = vpack.c.b16 %v2152, %v2148
      %v2361 = vpack.c.b16 %v2153, %v2149
      %v2362 = vpack.c.b16 %v2154, %v2150
      %v2363 = vpack.c.b16 %v2155, %v2151
      %v2364 = vpack.c.b16 %v2160, %v2156
      %v2365 = vpack.c.b16 %v2161, %v2157
      %v2366 = vpack.c.b16 %v2162, %v2158
      %v2367 = vpack.c.b16 %v2163, %v2159
      %v2368 = vpack.c.b16 %v2168, %v2164
      %v2369 = vpack.c.b16 %v2169, %v2165
      %v2370 = vpack.c.b16 %v2170, %v2166
      %v2371 = vpack.c.b16 %v2171, %v2167
      %v2372 = vpack.c.b16 %v2176, %v2172
      %v2373 = vpack.c.b16 %v2177, %v2173
      %v2374 = vpack.c.b16 %v2178, %v2174
      %v2375 = vpack.c.b16 %v2179, %v2175
      %v2376 = vpack.c.b16 %v2184, %v2180
      %v2377 = vpack.c.b16 %v2185, %v2181
      %v2378 = vpack.c.b16 %v2186, %v2182
      %v2379 = vpack.c.b16 %v2187, %v2183
      %v2380 = vpack.c.b16 %v2192, %v2188
      %v2381 = vpack.c.b16 %v2193, %v2189
      %v2382 = vpack.c.b16 %v2194, %v2190
      %v2383 = vpack.c.b16 %v2195, %v2191
      %v2384 = vpack.c.b16 %v2200, %v2196
      %v2385 = vpack.c.b16 %v2201, %v2197
      %v2386 = vpack.c.b16 %v2202, %v2198
      %v2387 = vpack.c.b16 %v2203, %v2199
      %v2388 = vpack.c.b16 %v2208, %v2204
      %v2389 = vpack.c.b16 %v2209, %v2205
      %v2390 = vpack.c.b16 %v2210, %v2206
      %v2391 = vpack.c.b16 %v2211, %v2207
      %v2392 = vpack.c.b16 %v2216, %v2212
      %v2393 = vpack.c.b16 %v2217, %v2213
      %v2394 = vpack.c.b16 %v2218, %v2214
      %v2395 = vpack.c.b16 %v2219, %v2215
      %v2396 = vpack.c.b16 %v2224, %v2220
      %v2397 = vpack.c.b16 %v2225, %v2221
      %v2398 = vpack.c.b16 %v2226, %v2222
      %v2399 = vpack.c.b16 %v2227, %v2223
      %v2400 = vpack.c.b16 %v2232, %v2228
      %v2401 = vpack.c.b16 %v2233, %v2229
      %v2402 = vpack.c.b16 %v2234, %v2230
      %v2403 = vpack.c.b16 %v2235, %v2231
      %v2404 = vpack.c.b16 %v2240, %v2236
      %v2405 = vpack.c.b16 %v2241, %v2237
      %v2406 = vpack.c.b16 %v2242, %v2238
      %v2407 = vpack.c.b16 %v2243, %v2239
      %v2408 = vpack.c.b16 %v2248, %v2244
      %v2409 = vpack.c.b16 %v2249, %v2245
      %v2410 = vpack.c.b16 %v2250, %v2246
      %v2411 = vpack.c.b16 %v2251, %v2247
      %v2412 = vpack.c.b16 %v2256, %v2252
      %v2413 = vpack.c.b16 %v2257, %v2253
      %v2414 = vpack.c.b16 %v2258, %v2254
      %v2415 = vpack.c.b16 %v2259, %v2255
      %v2416 = vpack.c.b16 %v2264, %v2260
      %v2417 = vpack.c.b16 %v2265, %v2261
      %v2418 = vpack.c.b16 %v2266, %v2262
      %v2419 = vpack.c.b16 %v2267, %v2263
      %v2420 = vpack.c.b16 %v2272, %v2268
      %v2421 = vpack.c.b16 %v2273, %v2269
      %v2422 = vpack.c.b16 %v2274, %v2270
      %v2423 = vpack.c.b16 %v2275, %v2271
      %v2424 = vpack.c.b16 %v2280, %v2276
      %v2425 = vpack.c.b16 %v2281, %v2277
      %v2426 = vpack.c.b16 %v2282, %v2278
      %v2427 = vpack.c.b16 %v2283, %v2279
      %v2428 = vpack.c.b16 %v2288, %v2284
      %v2429 = vpack.c.b16 %v2289, %v2285
      %v2430 = vpack.c.b16 %v2290, %v2286
      %v2431 = vpack.c.b16 %v2291, %v2287
      %v2432 = vpack.c.b16 %v2296, %v2292
      %v2433 = vpack.c.b16 %v2297, %v2293
      %v2434 = vpack.c.b16 %v2298, %v2294
      %v2435 = vpack.c.b16 %v2299, %v2295
      %v2436 = vpack.c.b16 %v2304, %v2300
      %v2437 = vpack.c.b16 %v2305, %v2301
      %v2438 = vpack.c.b16 %v2306, %v2302
      %v2439 = vpack.c.b16 %v2307, %v2303
      %v2440 = vpack.c.b16 %v2312, %v2308
      %v2441 = vpack.c.b16 %v2313, %v2309
      %v2442 = vpack.c.b16 %v2314, %v2310
      %v2443 = vpack.c.b16 %v2315, %v2311
      %2572 = vmatprep.subr.bf16.mxu0 %v2345
      %2573 = vmatpush1.bf16.msra.mxu0 %v2344
      %2574 = vmatprep.subr.bf16.mxu0 %v2341
      %2575 = vmatpush1.bf16.msra.mxu0 %v2340
      %2576 = vmatprep.subr.bf16.mxu0 %v2337
      %2577 = vmatpush1.bf16.msra.mxu0 %v2336
      %2578 = vmatprep.subr.bf16.mxu0 %v2333
      %2579 = vmatpush1.bf16.msra.mxu0 %v2332
      %2580 = vmatprep.subr.bf16.mxu0 %v2329
      %2581 = vmatpush1.bf16.msra.mxu0 %v2328
      %2582 = vmatprep.subr.bf16.mxu0 %v2325
      %2583 = vmatpush1.bf16.msra.mxu0 %v2324
      %2584 = vmatprep.subr.bf16.mxu0 %v2321
      %2585 = vmatpush1.bf16.msra.mxu0 %v2320
      %2586 = vmatprep.subr.bf16.mxu0 %v2317
      %2587 = vmatpush1.bf16.msra.mxu0 %v2316
      %2588 = vmatprep.subr.bf16.mxu0 %v2377
      %2589 = vmatpush2.bf16.msra.mxu0 %v2376
      %2590 = vmatprep.subr.bf16.mxu0 %v2373
      %2591 = vmatpush2.bf16.msra.mxu0 %v2372
      %2592 = vmatprep.subr.bf16.mxu0 %v2369
      %2593 = vmatpush2.bf16.msra.mxu0 %v2368
      %2594 = vmatprep.subr.bf16.mxu0 %v2365
      %2595 = vmatpush2.bf16.msra.mxu0 %v2364
      %2596 = vmatprep.subr.bf16.mxu0 %v2361
      %2597 = vmatpush2.bf16.msra.mxu0 %v2360
      %2598 = vmatprep.subr.bf16.mxu0 %v2357
      %2599 = vmatpush2.bf16.msra.mxu0 %v2356
      %2600 = vmatprep.subr.bf16.mxu0 %v2353
      %2601 = vmatpush2.bf16.msra.mxu0 %v2352
      %2602 = vmatprep.subr.bf16.mxu0 %v2349
      %2603 = vmatpush2.bf16.msra.mxu0 %v2348
      %2604 = vmatprep.mubr.bf16.mxu0 %v1797
      %2605 = vmatmul.mubr.bf16.gmra.mxu0 %v1796
      %v2606 = vpop.f32.mrf.mxu0
      %v2607 = vadd.f32 0.0, %v2606
      %v2608 = vpop.f32.mrf.mxu0
      %v2609 = vadd.f32 0.0, %v2608
      %v2610 = vpop.f32.mrf.mxu0
      %v2611 = vadd.f32 0.0, %v2610
      %v2612 = vpop.f32.mrf.mxu0
      %v2613 = vadd.f32 0.0, %v2612
      %2614 = vmatprep.mubr.bf16.mxu0 %v1801
      %2615 = vmatmul.mubr.bf16.gmra.mxu0 %v1800
      %v2616 = vpop.f32.mrf.mxu0
      %v2617 = vadd.f32 0.0, %v2616
      %v2618 = vpop.f32.mrf.mxu0
      %v2619 = vadd.f32 0.0, %v2618
      %v2620 = vpop.f32.mrf.mxu0
      %v2621 = vadd.f32 0.0, %v2620
      %v2622 = vpop.f32.mrf.mxu0
      %v2623 = vadd.f32 0.0, %v2622
      %2624 = vdwg.mxu0
      %2625 = vmatprep.subr.bf16.mxu0 %v2409
      %2626 = vmatpush1.bf16.msra.mxu0 %v2408
      %2627 = vmatprep.subr.bf16.mxu0 %v2405
      %2628 = vmatpush1.bf16.msra.mxu0 %v2404
      %2629 = vmatprep.subr.bf16.mxu0 %v2401
      %2630 = vmatpush1.bf16.msra.mxu0 %v2400
      %2631 = vmatprep.subr.bf16.mxu0 %v2397
      %2632 = vmatpush1.bf16.msra.mxu0 %v2396
      %2633 = vmatprep.subr.bf16.mxu0 %v2393
      %2634 = vmatpush1.bf16.msra.mxu0 %v2392
      %2635 = vmatprep.subr.bf16.mxu0 %v2389
      %2636 = vmatpush1.bf16.msra.mxu0 %v2388
      %2637 = vmatprep.subr.bf16.mxu0 %v2385
      %2638 = vmatpush1.bf16.msra.mxu0 %v2384
      %2639 = vmatprep.subr.bf16.mxu0 %v2381
      %2640 = vmatpush1.bf16.msra.mxu0 %v2380
      %2641 = vmatprep.subr.bf16.mxu0 %v2441
      %2642 = vmatpush2.bf16.msra.mxu0 %v2440
      %2643 = vmatprep.subr.bf16.mxu0 %v2437
      %2644 = vmatpush2.bf16.msra.mxu0 %v2436
      %2645 = vmatprep.subr.bf16.mxu0 %v2433
      %2646 = vmatpush2.bf16.msra.mxu0 %v2432
      %2647 = vmatprep.subr.bf16.mxu0 %v2429
      %2648 = vmatpush2.bf16.msra.mxu0 %v2428
      %2649 = vmatprep.subr.bf16.mxu0 %v2425
      %2650 = vmatpush2.bf16.msra.mxu0 %v2424
      %2651 = vmatprep.subr.bf16.mxu0 %v2421
      %2652 = vmatpush2.bf16.msra.mxu0 %v2420
      %2653 = vmatprep.subr.bf16.mxu0 %v2417
      %2654 = vmatpush2.bf16.msra.mxu0 %v2416
      %2655 = vmatprep.subr.bf16.mxu0 %v2413
      %2656 = vmatpush2.bf16.msra.mxu0 %v2412
      %2657 = vmatprep.mubr.bf16.mxu0 %v1799
      %2658 = vmatmul.mubr.bf16.gmra.mxu0 %v1798
      %v2659 = vpop.f32.mrf.mxu0
      %v2660 = vadd.f32 %v2607, %v2659
      %v2661 = vpop.f32.mrf.mxu0
      %v2662 = vadd.f32 %v2609, %v2661
      %v2663 = vpop.f32.mrf.mxu0
      %v2664 = vadd.f32 %v2611, %v2663
      %v2665 = vpop.f32.mrf.mxu0
      %v2666 = vadd.f32 %v2613, %v2665
      %2667 = vmatprep.mubr.bf16.mxu0 %v1803
      %2668 = vmatmul.mubr.bf16.gmra.mxu0 %v1802
      %v2669 = vpop.f32.mrf.mxu0
      %v2670 = vadd.f32 %v2617, %v2669
      %v2671 = vpop.f32.mrf.mxu0
      %v2672 = vadd.f32 %v2619, %v2671
      %v2673 = vpop.f32.mrf.mxu0
      %v2674 = vadd.f32 %v2621, %v2673
      %v2675 = vpop.f32.mrf.mxu0
      %v2676 = vadd.f32 %v2623, %v2675
      %2677 = vdwg.mxu0
      %2678 = vmatprep.subr.bf16.mxu0 %v2347
      %2679 = vmatpush1.bf16.msra.mxu0 %v2346
      %2680 = vmatprep.subr.bf16.mxu0 %v2343
      %2681 = vmatpush1.bf16.msra.mxu0 %v2342
      %2682 = vmatprep.subr.bf16.mxu0 %v2339
      %2683 = vmatpush1.bf16.msra.mxu0 %v2338
      %2684 = vmatprep.subr.bf16.mxu0 %v2335
      %2685 = vmatpush1.bf16.msra.mxu0 %v2334
      %2686 = vmatprep.subr.bf16.mxu0 %v2331
      %2687 = vmatpush1.bf16.msra.mxu0 %v2330
      %2688 = vmatprep.subr.bf16.mxu0 %v2327
      %2689 = vmatpush1.bf16.msra.mxu0 %v2326
      %2690 = vmatprep.subr.bf16.mxu0 %v2323
      %2691 = vmatpush1.bf16.msra.mxu0 %v2322
      %2692 = vmatprep.subr.bf16.mxu0 %v2319
      %2693 = vmatpush1.bf16.msra.mxu0 %v2318
      %2694 = vmatprep.subr.bf16.mxu0 %v2379
      %2695 = vmatpush2.bf16.msra.mxu0 %v2378
      %2696 = vmatprep.subr.bf16.mxu0 %v2375
      %2697 = vmatpush2.bf16.msra.mxu0 %v2374
      %2698 = vmatprep.subr.bf16.mxu0 %v2371
      %2699 = vmatpush2.bf16.msra.mxu0 %v2370
      %2700 = vmatprep.subr.bf16.mxu0 %v2367
      %2701 = vmatpush2.bf16.msra.mxu0 %v2366
      %2702 = vmatprep.subr.bf16.mxu0 %v2363
      %2703 = vmatpush2.bf16.msra.mxu0 %v2362
      %2704 = vmatprep.subr.bf16.mxu0 %v2359
      %2705 = vmatpush2.bf16.msra.mxu0 %v2358
      %2706 = vmatprep.subr.bf16.mxu0 %v2355
      %2707 = vmatpush2.bf16.msra.mxu0 %v2354
      %2708 = vmatprep.subr.bf16.mxu0 %v2351
      %2709 = vmatpush2.bf16.msra.mxu0 %v2350
      %2710 = vmatprep.mubr.bf16.mxu0 %v1797
      %2711 = vmatmul.mubr.bf16.gmra.mxu0 %v1796
      %v2712 = vpop.f32.mrf.mxu0
      %v2713 = vadd.f32 0.0, %v2712
      %v2714 = vpop.f32.mrf.mxu0
      %v2715 = vadd.f32 0.0, %v2714
      %v2716 = vpop.f32.mrf.mxu0
      %v2717 = vadd.f32 0.0, %v2716
      %v2718 = vpop.f32.mrf.mxu0
      %v2719 = vadd.f32 0.0, %v2718
      %2720 = vmatprep.mubr.bf16.mxu0 %v1801
      %2721 = vmatmul.mubr.bf16.gmra.mxu0 %v1800
      %v2722 = vpop.f32.mrf.mxu0
      %v2723 = vadd.f32 0.0, %v2722
      %v2724 = vpop.f32.mrf.mxu0
      %v2725 = vadd.f32 0.0, %v2724
      %v2726 = vpop.f32.mrf.mxu0
      %v2727 = vadd.f32 0.0, %v2726
      %v2728 = vpop.f32.mrf.mxu0
      %v2729 = vadd.f32 0.0, %v2728
      %2730 = vdwg.mxu0
      %2731 = vmatprep.subr.bf16.mxu0 %v2411
      %2732 = vmatpush1.bf16.msra.mxu0 %v2410
      %2733 = vmatprep.subr.bf16.mxu0 %v2407
      %2734 = vmatpush1.bf16.msra.mxu0 %v2406
      %2735 = vmatprep.subr.bf16.mxu0 %v2403
      %2736 = vmatpush1.bf16.msra.mxu0 %v2402
      %2737 = vmatprep.subr.bf16.mxu0 %v2399
      %2738 = vmatpush1.bf16.msra.mxu0 %v2398
      %2739 = vmatprep.subr.bf16.mxu0 %v2395
      %2740 = vmatpush1.bf16.msra.mxu0 %v2394
      %2741 = vmatprep.subr.bf16.mxu0 %v2391
      %2742 = vmatpush1.bf16.msra.mxu0 %v2390
      %2743 = vmatprep.subr.bf16.mxu0 %v2387
      %2744 = vmatpush1.bf16.msra.mxu0 %v2386
      %2745 = vmatprep.subr.bf16.mxu0 %v2383
      %2746 = vmatpush1.bf16.msra.mxu0 %v2382
      %2747 = vmatprep.subr.bf16.mxu0 %v2443
      %2748 = vmatpush2.bf16.msra.mxu0 %v2442
      %2749 = vmatprep.subr.bf16.mxu0 %v2439
      %2750 = vmatpush2.bf16.msra.mxu0 %v2438
      %2751 = vmatprep.subr.bf16.mxu0 %v2435
      %2752 = vmatpush2.bf16.msra.mxu0 %v2434
      %2753 = vmatprep.subr.bf16.mxu0 %v2431
      %2754 = vmatpush2.bf16.msra.mxu0 %v2430
      %2755 = vmatprep.subr.bf16.mxu0 %v2427
      %2756 = vmatpush2.bf16.msra.mxu0 %v2426
      %2757 = vmatprep.subr.bf16.mxu0 %v2423
      %2758 = vmatpush2.bf16.msra.mxu0 %v2422
      %2759 = vmatprep.subr.bf16.mxu0 %v2419
      %2760 = vmatpush2.bf16.msra.mxu0 %v2418
      %2761 = vmatprep.subr.bf16.mxu0 %v2415
      %2762 = vmatpush2.bf16.msra.mxu0 %v2414
      %2763 = vmatprep.mubr.bf16.mxu0 %v1799
      %2764 = vmatmul.mubr.bf16.gmra.mxu0 %v1798
      %v2765 = vpop.f32.mrf.mxu0
      %v2766 = vadd.f32 %v2713, %v2765
      %v2767 = vpop.f32.mrf.mxu0
      %v2768 = vadd.f32 %v2715, %v2767
      %v2769 = vpop.f32.mrf.mxu0
      %v2770 = vadd.f32 %v2717, %v2769
      %v2771 = vpop.f32.mrf.mxu0
      %v2772 = vadd.f32 %v2719, %v2771
      %2773 = vmatprep.mubr.bf16.mxu0 %v1803
      %2774 = vmatmul.mubr.bf16.gmra.mxu0 %v1802
      %v2775 = vpop.f32.mrf.mxu0
      %v2776 = vadd.f32 %v2723, %v2775
      %v2777 = vpop.f32.mrf.mxu0
      %v2778 = vadd.f32 %v2725, %v2777
      %v2779 = vpop.f32.mrf.mxu0
      %v2780 = vadd.f32 %v2727, %v2779
      %v2781 = vpop.f32.mrf.mxu0
      %v2782 = vadd.f32 %v2729, %v2781
      %2783 = vdwg.mxu0
      %v2784 = vpack.c.bf16 %v2664, %v2660
      %v2785 = vpack.c.bf16 %v2666, %v2662
      %v2786 = vpack.c.bf16 %v2770, %v2766
      %v2787 = vpack.c.bf16 %v2772, %v2768
      %v2788 = vpack.c.bf16 %v2674, %v2670
      %v2789 = vpack.c.bf16 %v2676, %v2672
      %v2790 = vpack.c.bf16 %v2780, %v2776
      %v2791 = vpack.c.bf16 %v2782, %v2778
      %v2800 = vunpack.c.l.b16 %v2784
      %v2801 = vunpack.c.l.b16 %v2785
      %v2802 = vunpack.c.l.b16 %v2786
      %v2803 = vunpack.c.l.b16 %v2787
      %v2804 = vunpack.c.h.b16 %v2784
      %v2805 = vunpack.c.h.b16 %v2785
      %v2806 = vunpack.c.h.b16 %v2786
      %v2807 = vunpack.c.h.b16 %v2787
      %v2808 = vunpack.c.l.b16 %v2788
      %v2809 = vunpack.c.l.b16 %v2789
      %v2810 = vunpack.c.l.b16 %v2790
      %v2811 = vunpack.c.l.b16 %v2791
      %v2812 = vunpack.c.h.b16 %v2788
      %v2813 = vunpack.c.h.b16 %v2789
      %v2814 = vunpack.c.h.b16 %v2790
      %v2815 = vunpack.c.h.b16 %v2791
      %v2816 = vpack.c.b16 %v2801, %v2800
      %v2817 = vpack.c.b16 %v2803, %v2802
      %v2818 = vpack.c.b16 %v2805, %v2804
      %v2819 = vpack.c.b16 %v2807, %v2806
      %v2820 = vpack.c.b16 %v2809, %v2808
      %v2821 = vpack.c.b16 %v2811, %v2810
      %v2822 = vpack.c.b16 %v2813, %v2812
      %v2823 = vpack.c.b16 %v2815, %v2814
      %2832 = vst [vmem:[%s413] sm:$0xff] %v2816
      %2833 = vst [vmem:[%s413 + $0x8] sm:$0xff] %v2817
      %2834 = vst [vmem:[%s413 + $0x10] sm:$0xff] %v2818
      %2835 = vst [vmem:[%s413 + $0x18] sm:$0xff] %v2819
      %2836 = vst [vmem:[%s413 + $0x20] sm:$0xff] %v2820
      %2837 = vst [vmem:[%s413 + $0x28] sm:$0xff] %v2821
      %2838 = vst [vmem:[%s413 + $0x30] sm:$0xff] %v2822
      %2839 = vst [vmem:[%s413 + $0x38] sm:$0xff] %v2823
      %p2840 = scmp.lt.s32.totalorder %s19, 1
      %s2841 = scalar_select %p2840, %s19, 1
      %s2842 = smul.addr %s2841, 16
      %s2843 = smul.addr %s2842, 4
      %s2844 = scalar_lea.vmem %s8, %s2843
      // Predicated region
      $region53: #{fem_and_gfam_forward.4} parent=51 // pred_check
        %p2845 = pneg %p240
      $region54: #{fem_and_gfam_forward.4} parent=51 // pred_check_branch
        %2847 = sbr.rel (%p2845) target = $region56
      $region55: #{fem_and_gfam_forward.4} parent=51 // pred_region
        _
      $region56: #{fem_and_gfam_forward.4} parent=51 // pred_fallthru
        _
    $region52: #{fem_and_gfam_forward.4} parent=5 // pred_fallthru
      _
    %p2848 = scmp.le.s32.totalorder 2, %s14
    // Predicated region
    $region57: #{fem_and_gfam_forward.4} parent=5 // pred_check
      %p2849 = pneg %p2848
    $region58: #{fem_and_gfam_forward.4} parent=5 // pred_check_branch
      %2851 = sbr.rel (%p2849) target = $region60
    $region59: #{fem_and_gfam_forward.4} parent=5 // pred_region
      %s2852 = ssub.s32 %s14, 2
      // Predicated region
      $region61: #{fem_and_gfam_forward.4} parent=59 // pred_check
        %p2853 = pneg %p246
      $region62: #{fem_and_gfam_forward.4} parent=59 // pred_check_branch
        %2855 = sbr.rel (%p2853) target = $region64
      $region63: #{fem_and_gfam_forward.4} parent=59 // pred_region
        %p2856 = scmp.lt.s32.totalorder %s20, 1
        %s2857 = scalar_select %p2856, %s20, 1
        %s2858 = smul.addr %s2857, 16
        %s2859 = smul.addr %s2858, 4
        %s2860 = scalar_lea.vmem %s8, %s2859
      $region64: #{fem_and_gfam_forward.4} parent=59 // pred_fallthru
        _
    $region60: #{fem_and_gfam_forward.4} parent=5 // pred_fallthru
      _
  $region6: #{fem_and_gfam_forward.4} parent=0 // loop_footer
    %s18 = sadd.s32 1, %s14
  $region7: #{fem_and_gfam_forward.4} parent=0 // loop_footer_branch
    %13 = sbr.rel target = $region3
  $region8: #{fem_and_gfam_forward.4} parent=0 // loop_exit
    _

// kernel: fem_and_gfam_forward.5
$region0: #{fem_and_gfam_forward.5}
  #allocation0 [shape = 'u32[]', space=smem, size = 0x4, offset = 0x4, fixed_abs, tag = 'smem constant byte address 0x4 - core index']
  #allocation1 [shape = 'u32[144,128]{1,0:T(1,128)}', space=vmem, size = 0x12000, scoped, tag = 'internal scratch']
  %s0 = inlined_call_operand.vmem [shape: bf16[512,64], index: 0, kind: input, shape index: {}]
  %s1 = inlined_call_operand.vmem [shape: bf16[64,32], index: 1, kind: input, shape index: {}]
  %s2 = inlined_call_operand.vmem [shape: f32[1,32], index: 2, kind: input, shape index: {}]
  %s3 = inlined_call_operand.vmem [shape: f32[512,32], index: 3, kind: input, shape index: {}]
  %s4 = inlined_call_operand.hbm [shape: f32[512,32], index: 4, kind: output, shape index: {}]
  %s5 = sld [smem:[#allocation0]]
  $region49: #{fem_and_gfam_forward.5} parent=0
    _
  %s7 = ssub.s32 1, %s5
  %s8 = scalar_select 0, %s7, %s5
  $region1: #{fem_and_gfam_forward.5} parent=0
    #allocation2 [shape = 'u8[262144]{0}', space=vmem, size = 0x40000, scoped, tag = 'output window, operand 0']
    #allocation3 [shape = 's32[2]{0}', space=sflag, size = 0x8, scoped, tag = 'scoped memory for fem_and_gfam_forward.5']
    %9 = vsyncpa [#allocation3], 0
    %s10 = scalar_lea.sflag [#allocation3], 1
    %11 = vsyncpa %s10, 0
    loop: start=0, step=1, limit=4
    $region2: #{fem_and_gfam_forward.5} parent=1 // loop_pre_header
      _
    $region3: #{fem_and_gfam_forward.5} parent=1 // loop_header
      %s13 = sphi 0, %s17
      %p14 = scmp.ge.s32.totalorder %s13, 4
      %s23 = sphi 0, %s25
      %s26 = sphi 0, %s23
      %s27 = sphi 0, %s26
      %s43 = sphi 0, %s27
      %s47 = sphi 0, %s47
      %s49 = sphi 0, %s47
      %s50 = sphi 0, %s49
      %s64 = sphi 0, %s50
      %s68 = sphi 0, %s68
      %s70 = sphi 0, %s68
      %s71 = sphi 0, %s70
      %s85 = sphi 0, %s71
      %s91 = sphi 0, %s93
      %s94 = sphi 0, %s91
      %s95 = sphi 0, %s94
      %s111 = sphi 0, %s95
      %s117 = sphi 0, %s119
      %s120 = sphi 0, %s117
      %s121 = sphi 0, %s120
      %s137 = sphi 0, %s121
    $region4: #{fem_and_gfam_forward.5} parent=1 // loop_header_branch
      %16 = sbr.rel (%p14) target = $region8
    $region5: #{fem_and_gfam_forward.5} parent=1 // loop_body
      %s18 = ssub.s32 %s13, 1
      %s19 = ssub.s32 %s13, 2
      %s20 = sadd.s32 %s13, 1
      %s21 = ssub.s32 %s13, %s20
      %p22 = scmp.eq.s32.totalorder %s21, 0
      %s24 = sadd.s32 %s23, 1
      %s25 = scalar_select %p22, %s23, %s24
      %p28 = pneg %p22
      %p29 = scmp.eq.s32.totalorder %s13, 1
      %p30 = por %p28, %p29
      %p31 = scmp.ne.s32.totalorder %s23, %s26
      %p32 = scmp.eq.s32.totalorder %s13, 0
      %p33 = por %p31, %p32
      %p34 = scmp.ne.s32.totalorder %s23, %s26
      %p35 = scmp.eq.s32.totalorder %s18, 1
      %p36 = por %p34, %p35
      %p37 = scmp.ne.s32.totalorder %s26, %s27
      %p38 = scmp.eq.s32.totalorder %s18, 0
      %p39 = por %p37, %p38
      %p40 = scmp.ne.s32.totalorder %s26, %s27
      %p41 = scmp.eq.s32.totalorder %s19, 1
      %p42 = por %p40, %p41
      %p44 = scmp.ne.s32.totalorder %s27, %s43
      %p45 = scmp.eq.s32.totalorder %s19, 0
      %p46 = por %p44, %p45
      %s48 = sadd.s32 %s47, 1
      %p51 = scmp.eq.s32.totalorder %s13, 1
      %p52 = scmp.ne.s32.totalorder %s47, %s49
      %p53 = scmp.eq.s32.totalorder %s13, 0
      %p54 = por %p52, %p53
      %p55 = scmp.ne.s32.totalorder %s47, %s49
      %p56 = scmp.eq.s32.totalorder %s18, 1
      %p57 = por %p55, %p56
      %p58 = scmp.ne.s32.totalorder %s49, %s50
      %p59 = scmp.eq.s32.totalorder %s18, 0
      %p60 = por %p58, %p59
      %p61 = scmp.ne.s32.totalorder %s49, %s50
      %p62 = scmp.eq.s32.totalorder %s19, 1
      %p63 = por %p61, %p62
      %p65 = scmp.ne.s32.totalorder %s50, %s64
      %p66 = scmp.eq.s32.totalorder %s19, 0
      %p67 = por %p65, %p66
      %s69 = sadd.s32 %s68, 1
      %p72 = scmp.eq.s32.totalorder %s13, 1
      %p73 = scmp.ne.s32.totalorder %s68, %s70
      %p74 = scmp.eq.s32.totalorder %s13, 0
      %p75 = por %p73, %p74
      %p76 = scmp.ne.s32.totalorder %s68, %s70
      %p77 = scmp.eq.s32.totalorder %s18, 1
      %p78 = por %p76, %p77
      %p79 = scmp.ne.s32.totalorder %s70, %s71
      %p80 = scmp.eq.s32.totalorder %s18, 0
      %p81 = por %p79, %p80
      %p82 = scmp.ne.s32.totalorder %s70, %s71
      %p83 = scmp.eq.s32.totalorder %s19, 1
      %p84 = por %p82, %p83
      %p86 = scmp.ne.s32.totalorder %s71, %s85
      %p87 = scmp.eq.s32.totalorder %s19, 0
      %p88 = por %p86, %p87
      %s89 = ssub.s32 %s13, %s20
      %p90 = scmp.eq.s32.totalorder %s89, 0
      %s92 = sadd.s32 %s91, 1
      %s93 = scalar_select %p90, %s91, %s92
      %p96 = pneg %p90
      %p97 = scmp.eq.s32.totalorder %s13, 1
      %p98 = por %p96, %p97
      %p99 = scmp.ne.s32.totalorder %s91, %s94
      %p100 = scmp.eq.s32.totalorder %s13, 0
      %p101 = por %p99, %p100
      %p102 = scmp.ne.s32.totalorder %s91, %s94
      %p103 = scmp.eq.s32.totalorder %s18, 1
      %p104 = por %p102, %p103
      %p105 = scmp.ne.s32.totalorder %s94, %s95
      %p106 = scmp.eq.s32.totalorder %s18, 0
      %p107 = por %p105, %p106
      %p108 = scmp.ne.s32.totalorder %s94, %s95
      %p109 = scmp.eq.s32.totalorder %s19, 1
      %p110 = por %p108, %p109
      %p112 = scmp.ne.s32.totalorder %s95, %s111
      %p113 = scmp.eq.s32.totalorder %s19, 0
      %p114 = por %p112, %p113
      %s115 = ssub.s32 %s13, %s20
      %p116 = scmp.eq.s32.totalorder %s115, 0
      %s118 = sadd.s32 %s117, 1
      %s119 = scalar_select %p116, %s117, %s118
      %p122 = pneg %p116
      %p123 = scmp.eq.s32.totalorder %s13, 1
      %p124 = por %p122, %p123
      %p125 = scmp.ne.s32.totalorder %s117, %s120
      %p126 = scmp.eq.s32.totalorder %s13, 0
      %p127 = por %p125, %p126
      %p128 = scmp.ne.s32.totalorder %s117, %s120
      %p129 = scmp.eq.s32.totalorder %s18, 1
      %p130 = por %p128, %p129
      %p131 = scmp.ne.s32.totalorder %s120, %s121
      %p132 = scmp.eq.s32.totalorder %s18, 0
      %p133 = por %p131, %p132
      %p134 = scmp.ne.s32.totalorder %s120, %s121
      %p135 = scmp.eq.s32.totalorder %s19, 1
      %p136 = por %p134, %p135
      %p138 = scmp.ne.s32.totalorder %s121, %s137
      %p139 = scmp.eq.s32.totalorder %s19, 0
      %p140 = por %p138, %p139
      %p141 = scmp.le.s32.totalorder 1, %s13
      %p142 = scmp.lt.s32.totalorder %s13, 3
      %p143 = pnand %p141, %p142
      %p144 = pneg %p143
      // Predicated region
      $region9: #{fem_and_gfam_forward.5} parent=5 // pred_check
        _
      $region10: #{fem_and_gfam_forward.5} parent=5 // pred_check_branch
        %146 = sbr.rel (%p143) target = $region12
      $region11: #{fem_and_gfam_forward.5} parent=5 // pred_region
        %s147 = ssub.s32 %s13, 1
        // Predicated region
        $region13: #{fem_and_gfam_forward.5} parent=11 // pred_check
          %p148 = pneg %p60
        $region14: #{fem_and_gfam_forward.5} parent=11 // pred_check_branch
          %150 = sbr.rel (%p148) target = $region16
        $region15: #{fem_and_gfam_forward.5} parent=11 // pred_region
          _
        $region16: #{fem_and_gfam_forward.5} parent=11 // pred_fallthru
          _
        // Predicated region
        $region17: #{fem_and_gfam_forward.5} parent=11 // pred_check
          %p151 = pneg %p81
        $region18: #{fem_and_gfam_forward.5} parent=11 // pred_check_branch
          %153 = sbr.rel (%p151) target = $region20
        $region19: #{fem_and_gfam_forward.5} parent=11 // pred_region
          _
        $region20: #{fem_and_gfam_forward.5} parent=11 // pred_fallthru
          _
      $region12: #{fem_and_gfam_forward.5} parent=5 // pred_fallthru
        _
      %p154 = scmp.lt.s32.totalorder %s13, 2
      // Predicated region
      $region21: #{fem_and_gfam_forward.5} parent=5 // pred_check
        %p155 = pneg %p154
      $region22: #{fem_and_gfam_forward.5} parent=5 // pred_check_branch
        %157 = sbr.rel (%p155) target = $region24
      $region23: #{fem_and_gfam_forward.5} parent=5 // pred_region
        // Predicated region
        $region25: #{fem_and_gfam_forward.5} parent=23 // pred_check
          %p158 = pneg %p33
        $region26: #{fem_and_gfam_forward.5} parent=23 // pred_check_branch
          %160 = sbr.rel (%p158) target = $region28
        $region27: #{fem_and_gfam_forward.5} parent=23 // pred_region
          %s161 = smul.u32 32, %s13
          %p162 = scmp.lt.s32.totalorder %s161, 63
          %s163 = scalar_select %p162, %s161, 63
          %s164 = smul.addr %s163, 4
          %s165 = scalar_lea.vmem %s0, %s164
          %s166 = smul.u32 32, %s13
        $region28: #{fem_and_gfam_forward.5} parent=23 // pred_fallthru
          _
        // Predicated region
        $region29: #{fem_and_gfam_forward.5} parent=23 // pred_check
          %p167 = pneg %p101
        $region30: #{fem_and_gfam_forward.5} parent=23 // pred_check_branch
          %169 = sbr.rel (%p167) target = $region32
        $region31: #{fem_and_gfam_forward.5} parent=23 // pred_region
          %s170 = smul.u32 32, %s13
          %p171 = scmp.lt.s32.totalorder %s170, 63
          %s172 = scalar_select %p171, %s170, 63
          %s173 = smul.addr %s172, 8
          %s174 = scalar_lea.vmem %s3, %s173
          %s175 = smul.u32 32, %s13
        $region32: #{fem_and_gfam_forward.5} parent=23 // pred_fallthru
          _
      $region24: #{fem_and_gfam_forward.5} parent=5 // pred_fallthru
        _
      %p176 = scmp.le.s32.totalorder 1, %s13
      %p177 = scmp.lt.s32.totalorder %s13, 3
      %p178 = pnand %p176, %p177
      %p179 = pneg %p178
      // Predicated region
      $region33: #{fem_and_gfam_forward.5} parent=5 // pred_check
        _
      $region34: #{fem_and_gfam_forward.5} parent=5 // pred_check_branch
        %181 = sbr.rel (%p178) target = $region36
      $region35: #{fem_and_gfam_forward.5} parent=5 // pred_region
        %s182 = ssub.s32 %s13, 1
        %s183 = smul.u32 32, %s18
        %p184 = scmp.lt.s32.totalorder %s183, 63
        %s185 = scalar_select %p184, %s183, 63
        %s186 = smul.addr %s185, 4
        %s187 = scalar_lea.vmem %s0, %s186
        %p188 = pneg %p39
        %p189 = pneg %p36
        %p190 = pneg %p60
        %p191 = pneg %p57
        %p192 = pneg %p81
        %p193 = pneg %p78
        %s194 = smul.u32 32, %s18
        %p195 = scmp.lt.s32.totalorder %s194, 63
        %s196 = scalar_select %p195, %s194, 63
        %s197 = smul.addr %s196, 8
        %s198 = scalar_lea.vmem %s3, %s197
        %p199 = pneg %p107
        %p200 = pneg %p104
        %p201 = pneg %p133
        %p202 = pneg %p130
        %s203 = sand.u32 %s120, 1
        %s204 = scalar_lea.sflag [#allocation3], %s203
        %s205 = sand.u32 %s120, 1
        %s206 = smul.addr %s205, 256
        %s207 = scalar_lea.vmem [#allocation2], %s206
        %s208 = smul.u32 32, %s18
        %p209 = scmp.lt.s32.totalorder %s208, 63
        %s210 = scalar_select %p209, %s208, 63
        %s211 = smul.addr %s210, 4
        %s212 = scalar_lea.vmem %s0, %s211
        %s213 = smul.u32 32, %s18
        %s214 = smul.u32 32, %s18
        %p215 = scmp.lt.s32.totalorder %s214, 63
        %s216 = scalar_select %p215, %s214, 63
        %s217 = smul.addr %s216, 8
        %s218 = scalar_lea.vmem %s3, %s217
        %s219 = smul.u32 32, %s18
        %s220 = smul.u32 32, %s18
        %v222 = vld [vmem:[%s212] sm:$0xf]
        %v223 = vld [vmem:[%s212 + $0x4] sm:$0xf]
        %v224 = vld [vmem:[%s212 + $0x8] sm:$0xf]
        %v225 = vld [vmem:[%s212 + $0xc] sm:$0xf]
        %v226 = vld [vmem:[%s212 + $0x10] sm:$0xf]
        %v227 = vld [vmem:[%s212 + $0x14] sm:$0xf]
        %v228 = vld [vmem:[%s212 + $0x18] sm:$0xf]
        %v229 = vld [vmem:[%s212 + $0x1c] sm:$0xf]
        %v230 = vld [vmem:[%s212 + $0x20] sm:$0xf]
        %v231 = vld [vmem:[%s212 + $0x24] sm:$0xf]
        %v232 = vld [vmem:[%s212 + $0x28] sm:$0xf]
        %v233 = vld [vmem:[%s212 + $0x2c] sm:$0xf]
        %v234 = vld [vmem:[%s212 + $0x30] sm:$0xf]
        %v235 = vld [vmem:[%s212 + $0x34] sm:$0xf]
        %v236 = vld [vmem:[%s212 + $0x38] sm:$0xf]
        %v237 = vld [vmem:[%s212 + $0x3c] sm:$0xf]
        %v238 = vld [vmem:[%s212 + $0x40] sm:$0xf]
        %v239 = vld [vmem:[%s212 + $0x44] sm:$0xf]
        %v240 = vld [vmem:[%s212 + $0x48] sm:$0xf]
        %v241 = vld [vmem:[%s212 + $0x4c] sm:$0xf]
        %v242 = vld [vmem:[%s212 + $0x50] sm:$0xf]
        %v243 = vld [vmem:[%s212 + $0x54] sm:$0xf]
        %v244 = vld [vmem:[%s212 + $0x58] sm:$0xf]
        %v245 = vld [vmem:[%s212 + $0x5c] sm:$0xf]
        %v246 = vld [vmem:[%s212 + $0x60] sm:$0xf]
        %v247 = vld [vmem:[%s212 + $0x64] sm:$0xf]
        %v248 = vld [vmem:[%s212 + $0x68] sm:$0xf]
        %v249 = vld [vmem:[%s212 + $0x6c] sm:$0xf]
        %v250 = vld [vmem:[%s212 + $0x70] sm:$0xf]
        %v251 = vld [vmem:[%s212 + $0x74] sm:$0xf]
        %v252 = vld [vmem:[%s212 + $0x78] sm:$0xf]
        %v253 = vld [vmem:[%s212 + $0x7c] sm:$0xf]
        %v254 = vld [vmem:[%s1] sm:$0xf]
        %v255 = vld [vmem:[%s1 + $0x4] sm:$0xf]
        %v256 = vld [vmem:[%s1 + $0x8] sm:$0xf]
        %v257 = vld [vmem:[%s1 + $0xc] sm:$0xf]
        %v258 = vld [vmem:[%s1 + $0x10] sm:$0xf]
        %v259 = vld [vmem:[%s1 + $0x14] sm:$0xf]
        %v260 = vld [vmem:[%s1 + $0x18] sm:$0xf]
        %v261 = vld [vmem:[%s1 + $0x1c] sm:$0xf]
        %v262 = vld [vmem:[%s2] sm:$0x1]
        %v264 = vlaneseq
        %v265 = vshrl.u32 %v264, 7
        %v266 = vsub.s32 0, %v265
        %v267 = vrot.slane %v262, %v266
        %v301 = vunpack.c.l.b16 %v222
        %v302 = vunpack.c.l.b16 %v223
        %v303 = vunpack.c.l.b16 %v224
        %v304 = vunpack.c.l.b16 %v225
        %v305 = vunpack.c.l.b16 %v226
        %v306 = vunpack.c.l.b16 %v227
        %v307 = vunpack.c.l.b16 %v228
        %v308 = vunpack.c.l.b16 %v229
        %v309 = vunpack.c.l.b16 %v230
        %v310 = vunpack.c.l.b16 %v231
        %v311 = vunpack.c.l.b16 %v232
        %v312 = vunpack.c.l.b16 %v233
        %v313 = vunpack.c.l.b16 %v234
        %v314 = vunpack.c.l.b16 %v235
        %v315 = vunpack.c.l.b16 %v236
        %v316 = vunpack.c.l.b16 %v237
        %v317 = vunpack.c.l.b16 %v238
        %v318 = vunpack.c.l.b16 %v239
        %v319 = vunpack.c.l.b16 %v240
        %v320 = vunpack.c.l.b16 %v241
        %v321 = vunpack.c.l.b16 %v242
        %v322 = vunpack.c.l.b16 %v243
        %v323 = vunpack.c.l.b16 %v244
        %v324 = vunpack.c.l.b16 %v245
        %v325 = vunpack.c.l.b16 %v246
        %v326 = vunpack.c.l.b16 %v247
        %v327 = vunpack.c.l.b16 %v248
        %v328 = vunpack.c.l.b16 %v249
        %v329 = vunpack.c.l.b16 %v250
        %v330 = vunpack.c.l.b16 %v251
        %v331 = vunpack.c.l.b16 %v252
        %v332 = vunpack.c.l.b16 %v253
        %v333 = vpack.c.b16 %v302, %v301
        %v334 = vpack.c.b16 %v304, %v303
        %v335 = vpack.c.b16 %v306, %v305
        %v336 = vpack.c.b16 %v308, %v307
        %v337 = vpack.c.b16 %v310, %v309
        %v338 = vpack.c.b16 %v312, %v311
        %v339 = vpack.c.b16 %v314, %v313
        %v340 = vpack.c.b16 %v316, %v315
        %v341 = vpack.c.b16 %v318, %v317
        %v342 = vpack.c.b16 %v320, %v319
        %v343 = vpack.c.b16 %v322, %v321
        %v344 = vpack.c.b16 %v324, %v323
        %v345 = vpack.c.b16 %v326, %v325
        %v346 = vpack.c.b16 %v328, %v327
        %v347 = vpack.c.b16 %v330, %v329
        %v348 = vpack.c.b16 %v332, %v331
        %v357 = vunpack.c.l.b16 %v254
        %v358 = vunpack.c.l.b16 %v255
        %v359 = vunpack.c.l.b16 %v256
        %v360 = vunpack.c.l.b16 %v257
        %v361 = vunpack.c.l.b16 %v258
        %v362 = vunpack.c.l.b16 %v259
        %v363 = vunpack.c.l.b16 %v260
        %v364 = vunpack.c.l.b16 %v261
        %v365 = vpack.c.b16 %v358, %v357
        %v366 = vpack.c.b16 %v360, %v359
        %v367 = vpack.c.b16 %v362, %v361
        %v368 = vpack.c.b16 %v364, %v363
        %vm373 = vcmask 523264
        %v375 = vsel %vm373, %v333, 0
        %v378 = vsel %vm373, %v334, 0
        %v381 = vsel %vm373, %v335, 0
        %v384 = vsel %vm373, %v336, 0
        %v387 = vsel %vm373, %v337, 0
        %v390 = vsel %vm373, %v338, 0
        %v393 = vsel %vm373, %v339, 0
        %v396 = vsel %vm373, %v340, 0
        %v399 = vsel %vm373, %v341, 0
        %v402 = vsel %vm373, %v342, 0
        %v405 = vsel %vm373, %v343, 0
        %v408 = vsel %vm373, %v344, 0
        %v411 = vsel %vm373, %v345, 0
        %v414 = vsel %vm373, %v346, 0
        %v417 = vsel %vm373, %v347, 0
        %v420 = vsel %vm373, %v348, 0
        %422 = vmatprep.subr.bf16.mxu0 0
        %423 = vmatpush1.bf16.msra.mxu0 0
        %424 = vmatprep.subr.bf16.mxu0 0
        %425 = vmatpush1.bf16.msra.mxu0 0
        %426 = vmatprep.subr.bf16.mxu0 0
        %427 = vmatpush1.bf16.msra.mxu0 0
        %428 = vmatprep.subr.bf16.mxu0 0
        %429 = vmatpush1.bf16.msra.mxu0 0
        %430 = vmatprep.subr.bf16.mxu0 0
        %431 = vmatpush1.bf16.msra.mxu0 %v368
        %432 = vmatprep.subr.bf16.mxu0 0
        %433 = vmatpush1.bf16.msra.mxu0 %v367
        %434 = vmatprep.subr.bf16.mxu0 0
        %435 = vmatpush1.bf16.msra.mxu0 %v366
        %436 = vmatprep.subr.bf16.mxu0 0
        %437 = vmatpush1.bf16.msra.mxu0 %v365
        %438 = vmatprep.subr.bf16.mxu0 0
        %439 = vmatpush2.bf16.msra.mxu0 0
        %440 = vmatprep.subr.bf16.mxu0 0
        %441 = vmatpush2.bf16.msra.mxu0 0
        %442 = vmatprep.subr.bf16.mxu0 0
        %443 = vmatpush2.bf16.msra.mxu0 0
        %444 = vmatprep.subr.bf16.mxu0 0
        %445 = vmatpush2.bf16.msra.mxu0 0
        %446 = vmatprep.subr.bf16.mxu0 0
        %447 = vmatpush2.bf16.msra.mxu0 0
        %448 = vmatprep.subr.bf16.mxu0 0
        %449 = vmatpush2.bf16.msra.mxu0 0
        %450 = vmatprep.subr.bf16.mxu0 0
        %451 = vmatpush2.bf16.msra.mxu0 0
        %452 = vmatprep.subr.bf16.mxu0 0
        %453 = vmatpush2.bf16.msra.mxu0 0
        %454 = vmatprep.mubr.bf16.mxu0 0
        %455 = vmatmul.mubr.bf16.gmra.mxu0 %v375
        %v456 = vpop.f32.mrf.mxu0
        %v457 = vadd.f32 %v267, %v456
        %v458 = vpop.f32.mrf.mxu0
        %v459 = vpop.f32.mrf.mxu0
        %v460 = vadd.f32 %v267, %v459
        %v461 = vpop.f32.mrf.mxu0
        %462 = vmatprep.mubr.bf16.mxu0 0
        %463 = vmatmul.mubr.bf16.gmra.mxu0 %v378
        %v464 = vpop.f32.mrf.mxu0
        %v465 = vadd.f32 %v267, %v464
        %v466 = vpop.f32.mrf.mxu0
        %v467 = vpop.f32.mrf.mxu0
        %v468 = vadd.f32 %v267, %v467
        %v469 = vpop.f32.mrf.mxu0
        %470 = vmatprep.mubr.bf16.mxu0 0
        %471 = vmatmul.mubr.bf16.gmra.mxu0 %v381
        %v472 = vpop.f32.mrf.mxu0
        %v473 = vadd.f32 %v267, %v472
        %v474 = vpop.f32.mrf.mxu0
        %v475 = vpop.f32.mrf.mxu0
        %v476 = vadd.f32 %v267, %v475
        %v477 = vpop.f32.mrf.mxu0
        %478 = vmatprep.mubr.bf16.mxu0 0
        %479 = vmatmul.mubr.bf16.gmra.mxu0 %v384
        %v480 = vpop.f32.mrf.mxu0
        %v481 = vadd.f32 %v267, %v480
        %v482 = vpop.f32.mrf.mxu0
        %v483 = vpop.f32.mrf.mxu0
        %v484 = vadd.f32 %v267, %v483
        %v485 = vpop.f32.mrf.mxu0
        %486 = vmatprep.mubr.bf16.mxu0 0
        %487 = vmatmul.mubr.bf16.gmra.mxu0 %v387
        %v488 = vpop.f32.mrf.mxu0
        %v489 = vadd.f32 %v267, %v488
        %v490 = vpop.f32.mrf.mxu0
        %v491 = vpop.f32.mrf.mxu0
        %v492 = vadd.f32 %v267, %v491
        %v493 = vpop.f32.mrf.mxu0
        %494 = vmatprep.mubr.bf16.mxu0 0
        %495 = vmatmul.mubr.bf16.gmra.mxu0 %v390
        %v496 = vpop.f32.mrf.mxu0
        %v497 = vadd.f32 %v267, %v496
        %v498 = vpop.f32.mrf.mxu0
        %v499 = vpop.f32.mrf.mxu0
        %v500 = vadd.f32 %v267, %v499
        %v501 = vpop.f32.mrf.mxu0
        %502 = vmatprep.mubr.bf16.mxu0 0
        %503 = vmatmul.mubr.bf16.gmra.mxu0 %v393
        %v504 = vpop.f32.mrf.mxu0
        %v505 = vadd.f32 %v267, %v504
        %v506 = vpop.f32.mrf.mxu0
        %v507 = vpop.f32.mrf.mxu0
        %v508 = vadd.f32 %v267, %v507
        %v509 = vpop.f32.mrf.mxu0
        %510 = vmatprep.mubr.bf16.mxu0 0
        %511 = vmatmul.mubr.bf16.gmra.mxu0 %v396
        %v512 = vpop.f32.mrf.mxu0
        %v513 = vadd.f32 %v267, %v512
        %v514 = vpop.f32.mrf.mxu0
        %v515 = vpop.f32.mrf.mxu0
        %v516 = vadd.f32 %v267, %v515
        %v517 = vpop.f32.mrf.mxu0
        %518 = vmatprep.mubr.bf16.mxu0 0
        %519 = vmatmul.mubr.bf16.gmra.mxu0 %v399
        %v520 = vpop.f32.mrf.mxu0
        %v521 = vadd.f32 %v267, %v520
        %v522 = vpop.f32.mrf.mxu0
        %v523 = vpop.f32.mrf.mxu0
        %v524 = vadd.f32 %v267, %v523
        %v525 = vpop.f32.mrf.mxu0
        %526 = vmatprep.mubr.bf16.mxu0 0
        %527 = vmatmul.mubr.bf16.gmra.mxu0 %v402
        %v528 = vpop.f32.mrf.mxu0
        %v529 = vadd.f32 %v267, %v528
        %v530 = vpop.f32.mrf.mxu0
        %v531 = vpop.f32.mrf.mxu0
        %v532 = vadd.f32 %v267, %v531
        %v533 = vpop.f32.mrf.mxu0
        %534 = vmatprep.mubr.bf16.mxu0 0
        %535 = vmatmul.mubr.bf16.gmra.mxu0 %v405
        %v536 = vpop.f32.mrf.mxu0
        %v537 = vadd.f32 %v267, %v536
        %v538 = vpop.f32.mrf.mxu0
        %v539 = vpop.f32.mrf.mxu0
        %v540 = vadd.f32 %v267, %v539
        %v541 = vpop.f32.mrf.mxu0
        %542 = vmatprep.mubr.bf16.mxu0 0
        %543 = vmatmul.mubr.bf16.gmra.mxu0 %v408
        %v544 = vpop.f32.mrf.mxu0
        %v545 = vadd.f32 %v267, %v544
        %v546 = vpop.f32.mrf.mxu0
        %v547 = vpop.f32.mrf.mxu0
        %v548 = vadd.f32 %v267, %v547
        %v549 = vpop.f32.mrf.mxu0
        %550 = vmatprep.mubr.bf16.mxu0 0
        %551 = vmatmul.mubr.bf16.gmra.mxu0 %v411
        %v552 = vpop.f32.mrf.mxu0
        %v553 = vadd.f32 %v267, %v552
        %v554 = vpop.f32.mrf.mxu0
        %v555 = vpop.f32.mrf.mxu0
        %v556 = vadd.f32 %v267, %v555
        %v557 = vpop.f32.mrf.mxu0
        %558 = vmatprep.mubr.bf16.mxu0 0
        %559 = vmatmul.mubr.bf16.gmra.mxu0 %v414
        %v560 = vpop.f32.mrf.mxu0
        %v561 = vadd.f32 %v267, %v560
        %v562 = vpop.f32.mrf.mxu0
        %v563 = vpop.f32.mrf.mxu0
        %v564 = vadd.f32 %v267, %v563
        %v565 = vpop.f32.mrf.mxu0
        %566 = vmatprep.mubr.bf16.mxu0 0
        %567 = vmatmul.mubr.bf16.gmra.mxu0 %v417
        %v568 = vpop.f32.mrf.mxu0
        %v569 = vadd.f32 %v267, %v568
        %v570 = vpop.f32.mrf.mxu0
        %v571 = vpop.f32.mrf.mxu0
        %v572 = vadd.f32 %v267, %v571
        %v573 = vpop.f32.mrf.mxu0
        %574 = vmatprep.mubr.bf16.mxu0 0
        %575 = vmatmul.mubr.bf16.gmra.mxu0 %v420
        %v576 = vpop.f32.mrf.mxu0
        %v577 = vadd.f32 %v267, %v576
        %v578 = vpop.f32.mrf.mxu0
        %v579 = vpop.f32.mrf.mxu0
        %v580 = vadd.f32 %v267, %v579
        %v581 = vpop.f32.mrf.mxu0
        %582 = vdwg.mxu0
        %v583 = vld [vmem:[%s218] sm:$0xff]
        %v584 = vld [vmem:[%s218 + $0x8] sm:$0xff]
        %v585 = vld [vmem:[%s218 + $0x10] sm:$0xff]
        %v586 = vld [vmem:[%s218 + $0x18] sm:$0xff]
        %v587 = vld [vmem:[%s218 + $0x20] sm:$0xff]
        %v588 = vld [vmem:[%s218 + $0x28] sm:$0xff]
        %v589 = vld [vmem:[%s218 + $0x30] sm:$0xff]
        %v590 = vld [vmem:[%s218 + $0x38] sm:$0xff]
        %v591 = vld [vmem:[%s218 + $0x40] sm:$0xff]
        %v592 = vld [vmem:[%s218 + $0x48] sm:$0xff]
        %v593 = vld [vmem:[%s218 + $0x50] sm:$0xff]
        %v594 = vld [vmem:[%s218 + $0x58] sm:$0xff]
        %v595 = vld [vmem:[%s218 + $0x60] sm:$0xff]
        %v596 = vld [vmem:[%s218 + $0x68] sm:$0xff]
        %v597 = vld [vmem:[%s218 + $0x70] sm:$0xff]
        %v598 = vld [vmem:[%s218 + $0x78] sm:$0xff]
        %v599 = vld [vmem:[%s218 + $0x80] sm:$0xff]
        %v600 = vld [vmem:[%s218 + $0x88] sm:$0xff]
        %v601 = vld [vmem:[%s218 + $0x90] sm:$0xff]
        %v602 = vld [vmem:[%s218 + $0x98] sm:$0xff]
        %v603 = vld [vmem:[%s218 + $0xa0] sm:$0xff]
        %v604 = vld [vmem:[%s218 + $0xa8] sm:$0xff]
        %v605 = vld [vmem:[%s218 + $0xb0] sm:$0xff]
        %v606 = vld [vmem:[%s218 + $0xb8] sm:$0xff]
        %v607 = vld [vmem:[%s218 + $0xc0] sm:$0xff]
        %v608 = vld [vmem:[%s218 + $0xc8] sm:$0xff]
        %v609 = vld [vmem:[%s218 + $0xd0] sm:$0xff]
        %v610 = vld [vmem:[%s218 + $0xd8] sm:$0xff]
        %v611 = vld [vmem:[%s218 + $0xe0] sm:$0xff]
        %v612 = vld [vmem:[%s218 + $0xe8] sm:$0xff]
        %v613 = vld [vmem:[%s218 + $0xf0] sm:$0xff]
        %v614 = vld [vmem:[%s218 + $0xf8] sm:$0xff]
        %v615 = vadd.f32 %v457, %v583
        %v616 = vadd.f32 %v460, %v584
        %v617 = vadd.f32 %v465, %v585
        %v618 = vadd.f32 %v468, %v586
        %v619 = vadd.f32 %v473, %v587
        %v620 = vadd.f32 %v476, %v588
        %v621 = vadd.f32 %v481, %v589
        %v622 = vadd.f32 %v484, %v590
        %v623 = vadd.f32 %v489, %v591
        %v624 = vadd.f32 %v492, %v592
        %v625 = vadd.f32 %v497, %v593
        %v626 = vadd.f32 %v500, %v594
        %v627 = vadd.f32 %v505, %v595
        %v628 = vadd.f32 %v508, %v596
        %v629 = vadd.f32 %v513, %v597
        %v630 = vadd.f32 %v516, %v598
        %v631 = vadd.f32 %v521, %v599
        %v632 = vadd.f32 %v524, %v600
        %v633 = vadd.f32 %v529, %v601
        %v634 = vadd.f32 %v532, %v602
        %v635 = vadd.f32 %v537, %v603
        %v636 = vadd.f32 %v540, %v604
        %v637 = vadd.f32 %v545, %v605
        %v638 = vadd.f32 %v548, %v606
        %v639 = vadd.f32 %v553, %v607
        %v640 = vadd.f32 %v556, %v608
        %v641 = vadd.f32 %v561, %v609
        %v642 = vadd.f32 %v564, %v610
        %v643 = vadd.f32 %v569, %v611
        %v644 = vadd.f32 %v572, %v612
        %v645 = vadd.f32 %v577, %v613
        %v646 = vadd.f32 %v580, %v614
        %vm647 = vcmask 261120
        %648 = vst.msk [vmem:[%s207] sm:$0xff] %vm647, %v615
        %649 = vst.msk [vmem:[%s207 + $0x8] sm:$0xff] %vm647, %v616
        %650 = vst.msk [vmem:[%s207 + $0x10] sm:$0xff] %vm647, %v617
        %651 = vst.msk [vmem:[%s207 + $0x18] sm:$0xff] %vm647, %v618
        %652 = vst.msk [vmem:[%s207 + $0x20] sm:$0xff] %vm647, %v619
        %653 = vst.msk [vmem:[%s207 + $0x28] sm:$0xff] %vm647, %v620
        %654 = vst.msk [vmem:[%s207 + $0x30] sm:$0xff] %vm647, %v621
        %655 = vst.msk [vmem:[%s207 + $0x38] sm:$0xff] %vm647, %v622
        %656 = vst.msk [vmem:[%s207 + $0x40] sm:$0xff] %vm647, %v623
        %657 = vst.msk [vmem:[%s207 + $0x48] sm:$0xff] %vm647, %v624
        %658 = vst.msk [vmem:[%s207 + $0x50] sm:$0xff] %vm647, %v625
        %659 = vst.msk [vmem:[%s207 + $0x58] sm:$0xff] %vm647, %v626
        %660 = vst.msk [vmem:[%s207 + $0x60] sm:$0xff] %vm647, %v627
        %661 = vst.msk [vmem:[%s207 + $0x68] sm:$0xff] %vm647, %v628
        %662 = vst.msk [vmem:[%s207 + $0x70] sm:$0xff] %vm647, %v629
        %663 = vst.msk [vmem:[%s207 + $0x78] sm:$0xff] %vm647, %v630
        %664 = vst.msk [vmem:[%s207 + $0x80] sm:$0xff] %vm647, %v631
        %665 = vst.msk [vmem:[%s207 + $0x88] sm:$0xff] %vm647, %v632
        %666 = vst.msk [vmem:[%s207 + $0x90] sm:$0xff] %vm647, %v633
        %667 = vst.msk [vmem:[%s207 + $0x98] sm:$0xff] %vm647, %v634
        %668 = vst.msk [vmem:[%s207 + $0xa0] sm:$0xff] %vm647, %v635
        %669 = vst.msk [vmem:[%s207 + $0xa8] sm:$0xff] %vm647, %v636
        %670 = vst.msk [vmem:[%s207 + $0xb0] sm:$0xff] %vm647, %v637
        %671 = vst.msk [vmem:[%s207 + $0xb8] sm:$0xff] %vm647, %v638
        %672 = vst.msk [vmem:[%s207 + $0xc0] sm:$0xff] %vm647, %v639
        %673 = vst.msk [vmem:[%s207 + $0xc8] sm:$0xff] %vm647, %v640
        %674 = vst.msk [vmem:[%s207 + $0xd0] sm:$0xff] %vm647, %v641
        %675 = vst.msk [vmem:[%s207 + $0xd8] sm:$0xff] %vm647, %v642
        %676 = vst.msk [vmem:[%s207 + $0xe0] sm:$0xff] %vm647, %v643
        %677 = vst.msk [vmem:[%s207 + $0xe8] sm:$0xff] %vm647, %v644
        %678 = vst.msk [vmem:[%s207 + $0xf0] sm:$0xff] %vm647, %v645
        %679 = vst.msk [vmem:[%s207 + $0xf8] sm:$0xff] %vm647, %v646
        %s680 = sand.u32 %s120, 1
        %s681 = scalar_lea.sflag [#allocation3], %s680
        %s682 = sand.u32 %s120, 1
        %s683 = smul.addr %s682, 256
        %s684 = scalar_lea.vmem [#allocation2], %s683
        // Predicated region
        $region37: #{fem_and_gfam_forward.5} parent=35 // pred_check
          %p685 = pneg %p130
        $region38: #{fem_and_gfam_forward.5} parent=35 // pred_check_branch
          %687 = sbr.rel (%p685) target = $region40
        $region39: #{fem_and_gfam_forward.5} parent=35 // pred_region
          %s688 = smul.u32 32, %s18
          %s690 = ssub.s32 4096, 4096
          %691 = vsyncadd %s681, %s690
          %s692 = smul.addr %s688, 128
          %s693 = scalar_lea.hbm %s4, %s692
          %s694 = sshll.u32 %s684, 4
          %s695 = int_to_ptr.vmem [resolvable:$true] %s694
          %700 = dma.vmem_to_hbm [thread:$0]  %s695, 4096, %s693, %s681, 128, 128, 8
        $region40: #{fem_and_gfam_forward.5} parent=35 // pred_fallthru
          _
      $region36: #{fem_and_gfam_forward.5} parent=5 // pred_fallthru
        _
      %p701 = scmp.le.s32.totalorder 2, %s13
      // Predicated region
      $region41: #{fem_and_gfam_forward.5} parent=5 // pred_check
        %p702 = pneg %p701
      $region42: #{fem_and_gfam_forward.5} parent=5 // pred_check_branch
        %704 = sbr.rel (%p702) target = $region44
      $region43: #{fem_and_gfam_forward.5} parent=5 // pred_region
        %s705 = ssub.s32 %s13, 2
        // Predicated region
        $region45: #{fem_and_gfam_forward.5} parent=43 // pred_check
          %p706 = pneg %p136
        $region46: #{fem_and_gfam_forward.5} parent=43 // pred_check_branch
          %708 = sbr.rel (%p706) target = $region48
        $region47: #{fem_and_gfam_forward.5} parent=43 // pred_region
          %s709 = sand.u32 %s121, 1
          %s710 = scalar_lea.sflag [#allocation3], %s709
          %s711 = sand.u32 %s121, 1
          %s712 = smul.addr %s711, 256
          %s713 = scalar_lea.vmem [#allocation2], %s712
          %714 = dma.done %s710, 4096
        $region48: #{fem_and_gfam_forward.5} parent=43 // pred_fallthru
          _
      $region44: #{fem_and_gfam_forward.5} parent=5 // pred_fallthru
        _
    $region6: #{fem_and_gfam_forward.5} parent=1 // loop_footer
      %s17 = sadd.s32 1, %s13
    $region7: #{fem_and_gfam_forward.5} parent=1 // loop_footer_branch
      %12 = sbr.rel target = $region3
    $region8: #{fem_and_gfam_forward.5} parent=1 // loop_exit
      _
    %715 = vsyncpa [#allocation3], 1
    %s716 = scalar_lea.sflag [#allocation3], 1
    %717 = vsyncpa %s716, 1

</llo_original>
